<compile_context>
chip_gen: v6e
topology: v6e:2x2x1
jax: 0.10.0
libtpu: 0.0.40
codegen_flags: <defaults>
</compile_context>

<pallas_src>
import functools
import math

import jax
import jax.numpy as jnp
from jax import lax
from jax.experimental import pallas as pl
from jax.experimental.pallas import tpu as pltpu

NEG_SLOPE = 0.2
BN_EPS = 1e-5


# ------------------------------ Pallas kernels ------------------------------ #

def _conv_tap_kernel(*refs, taps, tr, wo, ho_valid, apply_lrelu, has_bias,
                     emit_stats, vpu_cout1):
    """Direct tap-decomposed conv over a band of output rows.

    refs = (x_ref, w_ref, [b_ref], o_ref, [stats_ref])
      x_ref : (1, Hx, Wx, CC)  whole padded (s2d for stride-2) image, bf16
      w_ref : (T, CC, Cout) or (T, Cout, CC) when vpu_cout1, bf16
      o_ref : (1, tr, Wo, Cout)
      stats_ref : (1, 1, 2, Cout) f32  (sum / sum-of-squares, masked to valid rows)
    """
    idx = 0
    x_ref = refs[idx]; idx += 1
    w_ref = refs[idx]; idx += 1
    b_ref = None
    if has_bias:
        b_ref = refs[idx]; idx += 1
    o_ref = refs[idx]; idx += 1
    st_ref = refs[idx] if emit_stats else None

    band = pl.program_id(1)
    r0 = band * tr
    cout = o_ref.shape[-1]

    if emit_stats:
        s_acc = jnp.zeros((1, cout), jnp.float32)
        sq_acc = jnp.zeros((1, cout), jnp.float32)

    for r in range(tr):                       # static unrolled row loop
        acc = None
        for t, (dh, dw) in enumerate(taps):   # 4 taps (stride 2) / 16 (stride 1)
            slab = x_ref[0, r0 + r + dh, dw:dw + wo, :]        # (wo, CC) bf16
            if vpu_cout1:
                # Cout == 1: VPU multiply + lane reduce instead of 1-col MXU GEMM.
                w_row = w_ref[t].astype(jnp.float32)            # (1, CC)
                contrib = jnp.sum(slab.astype(jnp.float32) * w_row,
                                  axis=-1, keepdims=True)       # (wo, 1)
            else:
                contrib = jnp.dot(slab, w_ref[t],
                                  preferred_element_type=jnp.float32)
            acc = contrib if acc is None else acc + contrib
        if has_bias:
            acc = acc + b_ref[...]
        if apply_lrelu:
            acc = jnp.where(acc >= 0, acc, NEG_SLOPE * acc)
        if emit_stats:
            # Mask rows beyond the valid output height (band padding) so BN
            # statistics are exact.
            valid = (r0 + r < ho_valid).astype(jnp.float32)
            s_acc = s_acc + valid * jnp.sum(acc, axis=0, keepdims=True)
            sq_acc = sq_acc + valid * jnp.sum(acc * acc, axis=0, keepdims=True)
        o_ref[0, r, :, :] = acc.astype(o_ref.dtype)

    if emit_stats:
        st_ref[0, 0, 0:1, :] = s_acc
        st_ref[0, 0, 1:2, :] = sq_acc


def _bn_lrelu_kernel(x_ref, scale_ref, shift_ref, o_ref):
    # Folded BatchNorm affine + LeakyReLU(0.2), f32 math on bf16 activations.
    y = x_ref[...].astype(jnp.float32) * scale_ref[...] + shift_ref[...]
    o_ref[...] = jnp.where(y >= 0, y, NEG_SLOPE * y).astype(o_ref.dtype)


# -------------------------------- JAX glue ---------------------------------- #

def conv2d_tap_pallas(x_nhwc, w, b=None, *, stride, apply_lrelu=False,
                      emit_stats=False, out_dtype=jnp.bfloat16,
                      rows_per_band=16):
    """4x4 conv, padding=1, stride in {1,2}.  x_nhwc: (N,H,W,Cin). w: OIHW.

    Returns (y, stats, (Ho, Wo)); y is (N, R, Wo, Cout) with R >= Ho (rows >= Ho
    are band padding and must be sliced off by the caller).
    """
    Cout, Cin, kh, kw = w.shape
    assert (kh, kw) == (4, 4) and stride in (1, 2)
    N, H, W, _ = x_nhwc.shape
    Ho = (H + 2 - kh) // stride + 1
    Wo = (W + 2 - kw) // stride + 1

    tr = max(1, min(rows_per_band, Ho))
    if stride == 1:
        tr = min(tr, 8)                 # cap unroll: 16 taps per row
    nb = -(-Ho // tr)
    R = nb * tr

    xb = x_nhwc.astype(jnp.bfloat16)
    if stride == 2:
        # Space-to-depth by 2: the stride-2 4x4 conv becomes a stride-1 2x2 conv
        # over (N, Hq, Wq, 4*Cin); taps are then plain contiguous slices.
        taps = tuple((a, bb) for a in range(2) for bb in range(2))
        CC = 4 * Cin
        Hq, Wq = R + 1, Wo + 1
        Hp, Wp = 2 * Hq, 2 * Wq
        xp = jnp.pad(xb, ((0, 0), (1, Hp - 1 - H), (1, Wp - 1 - W), (0, 0)))
        xin = (xp.reshape(N, Hq, 2, Wq, 2, Cin)
                 .transpose(0, 1, 3, 2, 4, 5)
                 .reshape(N, Hq, Wq, CC))
        if Cout == 1:
            wk = (w.reshape(Cout, Cin, 2, 2, 2, 2)
                    .transpose(2, 4, 0, 3, 5, 1).reshape(4, Cout, CC))
        else:
            wk = (w.reshape(Cout, Cin, 2, 2, 2, 2)
                    .transpose(2, 4, 3, 5, 1, 0).reshape(4, CC, Cout))
    else:
        taps = tuple((i, j) for i in range(4) for j in range(4))
        CC = Cin
        Hp, Wp = R + 3, Wo + 3
        xin = jnp.pad(xb, ((0, 0), (1, Hp - 1 - H), (1, Wp - 1 - W), (0, 0)))
        if Cout == 1:
            wk = jnp.transpose(w, (2, 3, 0, 1)).reshape(16, Cout, CC)
        else:
            wk = jnp.transpose(w, (2, 3, 1, 0)).reshape(16, CC, Cout)
    wk = wk.astype(jnp.bfloat16)

    Hx, Wx = xin.shape[1], xin.shape[2]

    in_specs = [
        # Whole per-sample image resident in VMEM; revisited across the band axis.
        pl.BlockSpec((1, Hx, Wx, CC), lambda n, bidx: (n, 0, 0, 0)),
        pl.BlockSpec(wk.shape, lambda n, bidx: (0, 0, 0)),
    ]
    operands = [xin, wk]
    if b is not None:
        in_specs.append(pl.BlockSpec((1, Cout), lambda n, bidx: (0, 0)))
        operands.append(b.astype(jnp.float32).reshape(1, Cout))

    out_shape = [jax.ShapeDtypeStruct((N, R, Wo, Cout), out_dtype)]
    out_specs = [pl.BlockSpec((1, tr, Wo, Cout), lambda n, bidx: (n, bidx, 0, 0))]
    if emit_stats:
        out_shape.append(jax.ShapeDtypeStruct((N, nb, 2, Cout), jnp.float32))
        out_specs.append(pl.BlockSpec((1, 1, 2, Cout),
                                      lambda n, bidx: (n, bidx, 0, 0)))

    kernel = functools.partial(
        _conv_tap_kernel, taps=taps, tr=tr, wo=Wo, ho_valid=Ho,
        apply_lrelu=apply_lrelu, has_bias=(b is not None),
        emit_stats=emit_stats, vpu_cout1=(Cout == 1))

    res = pl.pallas_call(
        kernel,
        out_shape=tuple(out_shape) if emit_stats else out_shape[0],
        grid=(N, nb),
        in_specs=in_specs,
        out_specs=tuple(out_specs) if emit_stats else out_specs[0],
        compiler_params=pltpu.CompilerParams(
            dimension_semantics=("parallel", "parallel")),
    )(*operands)

    if emit_stats:
        y, stats = res
    else:
        y, stats = res, None
    return y, stats, (Ho, Wo)


def bn_lrelu_pallas(y, stats, count, gamma, beta):
    """Train-mode BatchNorm2d (batch stats over N,H,W) + LeakyReLU(0.2)."""
    N, R, Wo, C = y.shape
    s = jnp.sum(stats[:, :, 0, :], axis=(0, 1))          # (C,) f32
    ss = jnp.sum(stats[:, :, 1, :], axis=(0, 1))         # (C,) f32
    mean = s / count
    var = jnp.maximum(ss / count - mean * mean, 0.0)      # biased, like torch BN
    scale = (gamma / jnp.sqrt(var + BN_EPS)).astype(jnp.float32)
    shift = (beta - mean * scale).astype(jnp.float32)

    M = N * R * Wo
    x2 = y.reshape(M, C)                                  # free collapse reshape
    tq = math.gcd(M, 512)
    if tq < 8:
        tq = M

    out = pl.pallas_call(
        _bn_lrelu_kernel,
        out_shape=jax.ShapeDtypeStruct((M, C), y.dtype),
        grid=(M // tq,),
        in_specs=[pl.BlockSpec((tq, C), lambda i: (i, 0)),
                  pl.BlockSpec((1, C), lambda i: (0, 0)),
                  pl.BlockSpec((1, C), lambda i: (0, 0))],
        out_specs=pl.BlockSpec((tq, C), lambda i: (i, 0)),
        compiler_params=pltpu.CompilerParams(dimension_semantics=("parallel",)),
    )(x2, scale.reshape(1, C), shift.reshape(1, C))
    return out.reshape(N, R, Wo, C)


def discriminator_forward(params, x, y, *, rows_per_band=16):
    """Equivalent of Discriminator.forward(x, y); x, y in NCHW (PyTorch)."""
    inp = jnp.concatenate([x, y], axis=1)
    h = jnp.transpose(inp, (0, 2, 3, 1))                  # -> NHWC once
    N = h.shape[0]

    # block 1: conv(s=2, bias=False) + LeakyReLU   (no BN, fused in epilogue)
    o, _, (Ho, Wo) = conv2d_tap_pallas(h, params['w1'], stride=2,
                                       apply_lrelu=True,
                                       rows_per_band=rows_per_band)
    h = o[:, :Ho]
    # block 2: conv(s=2, bias=False) + BN + LeakyReLU (stats fused into conv)
    o, st, (Ho, Wo) = conv2d_tap_pallas(h, params['w2'], stride=2,
                                        emit_stats=True,
                                        rows_per_band=rows_per_band)
    h = bn_lrelu_pallas(o, st, N * Ho * Wo, params['g2'], params['be2'])[:, :Ho]
    # block 3: conv(s=2, bias=False) + BN + LeakyReLU
    o, st, (Ho, Wo) = conv2d_tap_pallas(h, params['w3'], stride=2,
                                        emit_stats=True,
                                        rows_per_band=rows_per_band)
    h = bn_lrelu_pallas(o, st, N * Ho * Wo, params['g3'], params['be3'])[:, :Ho]
    # final: conv(s=1) with bias, Cout=1 (VPU dot path), f32 output
    o, _, (Ho, Wo) = conv2d_tap_pallas(h, params['w4'], params['b4'], stride=1,
                                       out_dtype=jnp.float32,
                                       rows_per_band=rows_per_band)
    out = o[:, :Ho]                                        # (N, Ho, Wo, 1)
    return jnp.transpose(out, (0, 3, 1, 2))                # -> NCHW


# --------------------------- pure-JAX reference ------------------------------ #

def reference_forward(params, x, y):
    def conv(h, w, b, s, p):
        out = lax.conv_general_dilated(h, w, (s, s), [(p, p), (p, p)],
                                       dimension_numbers=('NCHW', 'OIHW', 'NCHW'),
                                       precision=lax.Precision.HIGHEST)
        return out if b is None else out + b.reshape(1, -1, 1, 1)

    def lrelu(h):
        return jnp.where(h >= 0, h, NEG_SLOPE * h)

    def bn(h, g, be):
        mu = jnp.mean(h, axis=(0, 2, 3), keepdims=True)
        va = jnp.var(h, axis=(0, 2, 3), keepdims=True)
        return (h - mu) / jnp.sqrt(va + BN_EPS) * g.reshape(1, -1, 1, 1) \
            + be.reshape(1, -1, 1, 1)

    inp = jnp.concatenate([x, y], axis=1)
    h = lrelu(conv(inp, params['w1'], None, 2, 1))
    h = lrelu(bn(conv(h, params['w2'], None, 2, 1), params['g2'], params['be2']))
    h = lrelu(bn(conv(h, params['w3'], None, 2, 1), params['g3'], params['be3']))
    return conv(h, params['w4'], params['b4'], 1, 1)


# ----------------------------------- main ------------------------------------ #

if __name__ == "__main__":
    C_IN, F = 3, 8            # small config: in_channels=3, features=8
    N, H, W = 2, 32, 32

    key = jax.random.PRNGKey(0)
    ks = jax.random.split(key, 11)
    params = {
        'w1': 0.05 * jax.random.normal(ks[0], (F, 2 * C_IN, 4, 4), jnp.float32),
        'w2': 0.05 * jax.random.normal(ks[1], (2 * F, F, 4, 4), jnp.float32),
        'g2': 1.0 + 0.1 * jax.random.normal(ks[2], (2 * F,), jnp.float32),
        'be2': 0.1 * jax.random.normal(ks[3], (2 * F,), jnp.float32),
        'w3': 0.05 * jax.random.normal(ks[4], (4 * F, 2 * F, 4, 4), jnp.float32),
        'g3': 1.0 + 0.1 * jax.random.normal(ks[5], (4 * F,), jnp.float32),
        'be3': 0.1 * jax.random.normal(ks[6], (4 * F,), jnp.float32),
        'w4': 0.05 * jax.random.normal(ks[7], (1, 4 * F, 4, 4), jnp.float32),
        'b4': 0.1 * jax.random.normal(ks[8], (1,), jnp.float32),
    }
    x = jax.random.normal(ks[9], (N, C_IN, H, W), jnp.float32)
    y = jax.random.normal(ks[10], (N, C_IN, H, W), jnp.float32)

    # rows_per_band=3 so the tiny test exercises multi-band grids, padded
    # (masked) band rows, and BN stats accumulated across bands; real workloads
    # use the default of 16.
    fwd = jax.jit(lambda p, a, b: discriminator_forward(p, a, b, rows_per_band=3))
    out = jax.block_until_ready(fwd(params, x, y))
    ref = reference_forward(params, x, y)

    assert out.shape == (N, 1, 3, 3), out.shape
    err = float(jnp.max(jnp.abs(out - ref)))
    scale = float(jnp.max(jnp.abs(ref)))
    # bf16 GEMM inputs / bf16 activations with f32 accumulation: allow a few %.
    assert err <= 4e-2 * scale + 1e-2, (err, scale)
    print("KERNEL_OK")
</pallas_src>

<mosaic_0001>
module attributes {stable_mosaic.version = 11 : i64} {
  func.func @_conv_tap_kernel(%arg0: i32, %arg1: i32, %arg2: memref<1x19x17x24xbf16, #tpu.memory_space<vmem>>, %arg3: memref<4x24x8xbf16, #tpu.memory_space<vmem>>, %arg4: memref<1x3x16x8xbf16, #tpu.memory_space<vmem>>) attributes {dimension_semantics = [#tpu.dimension_semantics<parallel>, #tpu.dimension_semantics<parallel>], iteration_bounds = array<i64: 2, 6>, scalar_prefetch = 0 : i64, scratch_operands = 0 : i64, tpu.core_type = #tpu.core_type<tc>, window_params = [{transform_indices = @transform_0, window_bounds = array<i64: 1, 19, 17, 24>}, {pipeline_mode = #tpu.pipeline_mode<synchronous>, transform_indices = @transform_1, window_bounds = array<i64: 4, 24, 8>}, {transform_indices = @transform_2, window_bounds = array<i64: 1, 3, 16, 8>}]} {
    %c3_i32 = arith.constant 3 : i32
    %0 = arith.muli %arg1, %c3_i32 : i32
    %c0_i32 = arith.constant 0 : i32
    %1 = arith.addi %0, %c0_i32 : i32
    %c0_i32_0 = arith.constant 0 : i32
    %2 = arith.addi %1, %c0_i32_0 : i32
    %c0 = arith.constant 0 : index
    %3 = arith.index_cast %2 : i32 to index
    %c0_1 = arith.constant 0 : index
    %c0_2 = arith.constant 0 : index
    %4 = vector.load %arg2[%c0, %3, %c0_1, %c0_2] : memref<1x19x17x24xbf16, #tpu.memory_space<vmem>>, vector<1x1x16x24xbf16>
    %5 = vector.shape_cast %4 : vector<1x1x16x24xbf16> to vector<16x24xbf16>
    %c0_3 = arith.constant 0 : index
    %c0_4 = arith.constant 0 : index
    %c0_5 = arith.constant 0 : index
    %6 = vector.load %arg3[%c0_3, %c0_4, %c0_5] : memref<4x24x8xbf16, #tpu.memory_space<vmem>>, vector<1x24x8xbf16>
    %7 = vector.shape_cast %6 : vector<1x24x8xbf16> to vector<24x8xbf16>
    %cst = arith.constant dense<0.000000e+00> : vector<16x8xf32>
    %8 = tpu.matmul %5, %7, %cst {dimension_numbers = #tpu.dot_dimension_numbers<[1], [0], [0], [1], [0, 0, 1, 1], [], []>} : vector<16x24xbf16>, vector<24x8xbf16>, vector<16x8xf32> -> vector<16x8xf32>
    %c0_i32_6 = arith.constant 0 : i32
    %9 = arith.addi %0, %c0_i32_6 : i32
    %c0_i32_7 = arith.constant 0 : i32
    %10 = arith.addi %9, %c0_i32_7 : i32
    %c0_8 = arith.constant 0 : index
    %11 = arith.index_cast %10 : i32 to index
    %c1 = arith.constant 1 : index
    %c0_9 = arith.constant 0 : index
    %12 = vector.load %arg2[%c0_8, %11, %c1, %c0_9] : memref<1x19x17x24xbf16, #tpu.memory_space<vmem>>, vector<1x1x16x24xbf16>
    %13 = vector.shape_cast %12 : vector<1x1x16x24xbf16> to vector<16x24xbf16>
    %c1_10 = arith.constant 1 : index
    %c0_11 = arith.constant 0 : index
    %c0_12 = arith.constant 0 : index
    %14 = vector.load %arg3[%c1_10, %c0_11, %c0_12] : memref<4x24x8xbf16, #tpu.memory_space<vmem>>, vector<1x24x8xbf16>
    %15 = vector.shape_cast %14 : vector<1x24x8xbf16> to vector<24x8xbf16>
    %cst_13 = arith.constant dense<0.000000e+00> : vector<16x8xf32>
    %16 = tpu.matmul %13, %15, %cst_13 {dimension_numbers = #tpu.dot_dimension_numbers<[1], [0], [0], [1], [0, 0, 1, 1], [], []>} : vector<16x24xbf16>, vector<24x8xbf16>, vector<16x8xf32> -> vector<16x8xf32>
    %17 = arith.addf %8, %16 : vector<16x8xf32>
    %c0_i32_14 = arith.constant 0 : i32
    %18 = arith.addi %0, %c0_i32_14 : i32
    %c1_i32 = arith.constant 1 : i32
    %19 = arith.addi %18, %c1_i32 : i32
    %c0_15 = arith.constant 0 : index
    %20 = arith.index_cast %19 : i32 to index
    %c0_16 = arith.constant 0 : index
    %c0_17 = arith.constant 0 : index
    %21 = vector.load %arg2[%c0_15, %20, %c0_16, %c0_17] : memref<1x19x17x24xbf16, #tpu.memory_space<vmem>>, vector<1x1x16x24xbf16>
    %22 = vector.shape_cast %21 : vector<1x1x16x24xbf16> to vector<16x24xbf16>
    %c2 = arith.constant 2 : index
    %c0_18 = arith.constant 0 : index
    %c0_19 = arith.constant 0 : index
    %23 = vector.load %arg3[%c2, %c0_18, %c0_19] : memref<4x24x8xbf16, #tpu.memory_space<vmem>>, vector<1x24x8xbf16>
    %24 = vector.shape_cast %23 : vector<1x24x8xbf16> to vector<24x8xbf16>
    %cst_20 = arith.constant dense<0.000000e+00> : vector<16x8xf32>
    %25 = tpu.matmul %22, %24, %cst_20 {dimension_numbers = #tpu.dot_dimension_numbers<[1], [0], [0], [1], [0, 0, 1, 1], [], []>} : vector<16x24xbf16>, vector<24x8xbf16>, vector<16x8xf32> -> vector<16x8xf32>
    %26 = arith.addf %17, %25 : vector<16x8xf32>
    %c0_i32_21 = arith.constant 0 : i32
    %27 = arith.addi %0, %c0_i32_21 : i32
    %c1_i32_22 = arith.constant 1 : i32
    %28 = arith.addi %27, %c1_i32_22 : i32
    %c0_23 = arith.constant 0 : index
    %29 = arith.index_cast %28 : i32 to index
    %c1_24 = arith.constant 1 : index
    %c0_25 = arith.constant 0 : index
    %30 = vector.load %arg2[%c0_23, %29, %c1_24, %c0_25] : memref<1x19x17x24xbf16, #tpu.memory_space<vmem>>, vector<1x1x16x24xbf16>
    %31 = vector.shape_cast %30 : vector<1x1x16x24xbf16> to vector<16x24xbf16>
    %c3 = arith.constant 3 : index
    %c0_26 = arith.constant 0 : index
    %c0_27 = arith.constant 0 : index
    %32 = vector.load %arg3[%c3, %c0_26, %c0_27] : memref<4x24x8xbf16, #tpu.memory_space<vmem>>, vector<1x24x8xbf16>
    %33 = vector.shape_cast %32 : vector<1x24x8xbf16> to vector<24x8xbf16>
    %cst_28 = arith.constant dense<0.000000e+00> : vector<16x8xf32>
    %34 = tpu.matmul %31, %33, %cst_28 {dimension_numbers = #tpu.dot_dimension_numbers<[1], [0], [0], [1], [0, 0, 1, 1], [], []>} : vector<16x24xbf16>, vector<24x8xbf16>, vector<16x8xf32> -> vector<16x8xf32>
    %35 = arith.addf %26, %34 : vector<16x8xf32>
    %cst_29 = arith.constant 0.000000e+00 : f32
    %36 = vector.broadcast %cst_29 : f32 to vector<16x8xf32>
    %37 = arith.cmpf oge, %35, %36 : vector<16x8xf32>
    %cst_30 = arith.constant 2.000000e-01 : f32
    %38 = vector.broadcast %cst_30 : f32 to vector<16x8xf32>
    %39 = arith.mulf %38, %35 : vector<16x8xf32>
    %40 = arith.select %37, %35, %39 : vector<16x8xi1>, vector<16x8xf32>
    %41 = arith.truncf %40 : vector<16x8xf32> to vector<16x8xbf16>
    %c0_31 = arith.constant 0 : index
    %c0_32 = arith.constant 0 : index
    %c0_33 = arith.constant 0 : index
    %c0_34 = arith.constant 0 : index
    %42 = vector.load %arg4[%c0_31, %c0_32, %c0_33, %c0_34] : memref<1x3x16x8xbf16, #tpu.memory_space<vmem>>, vector<1x1x16x8xbf16>
    %43 = vector.shape_cast %42 : vector<1x1x16x8xbf16> to vector<16x8xbf16>
    %44 = vector.shape_cast %41 : vector<16x8xbf16> to vector<1x1x16x8xbf16>
    tpu.vector_store %arg4[%c0_31, %c0_32, %c0_33, %c0_34], %44 {strides = array<i32>} : memref<1x3x16x8xbf16, #tpu.memory_space<vmem>>, vector<1x1x16x8xbf16>,
    %c1_i32_35 = arith.constant 1 : i32
    %45 = arith.addi %0, %c1_i32_35 : i32
    %c0_i32_36 = arith.constant 0 : i32
    %46 = arith.addi %45, %c0_i32_36 : i32
    %c0_37 = arith.constant 0 : index
    %47 = arith.index_cast %46 : i32 to index
    %c0_38 = arith.constant 0 : index
    %c0_39 = arith.constant 0 : index
    %48 = vector.load %arg2[%c0_37, %47, %c0_38, %c0_39] : memref<1x19x17x24xbf16, #tpu.memory_space<vmem>>, vector<1x1x16x24xbf16>
    %49 = vector.shape_cast %48 : vector<1x1x16x24xbf16> to vector<16x24xbf16>
    %c0_40 = arith.constant 0 : index
    %c0_41 = arith.constant 0 : index
    %c0_42 = arith.constant 0 : index
    %50 = vector.load %arg3[%c0_40, %c0_41, %c0_42] : memref<4x24x8xbf16, #tpu.memory_space<vmem>>, vector<1x24x8xbf16>
    %51 = vector.shape_cast %50 : vector<1x24x8xbf16> to vector<24x8xbf16>
    %cst_43 = arith.constant dense<0.000000e+00> : vector<16x8xf32>
    %52 = tpu.matmul %49, %51, %cst_43 {dimension_numbers = #tpu.dot_dimension_numbers<[1], [0], [0], [1], [0, 0, 1, 1], [], []>} : vector<16x24xbf16>, vector<24x8xbf16>, vector<16x8xf32> -> vector<16x8xf32>
    %c1_i32_44 = arith.constant 1 : i32
    %53 = arith.addi %0, %c1_i32_44 : i32
    %c0_i32_45 = arith.constant 0 : i32
    %54 = arith.addi %53, %c0_i32_45 : i32
    %c0_46 = arith.constant 0 : index
    %55 = arith.index_cast %54 : i32 to index
    %c1_47 = arith.constant 1 : index
    %c0_48 = arith.constant 0 : index
    %56 = vector.load %arg2[%c0_46, %55, %c1_47, %c0_48] : memref<1x19x17x24xbf16, #tpu.memory_space<vmem>>, vector<1x1x16x24xbf16>
    %57 = vector.shape_cast %56 : vector<1x1x16x24xbf16> to vector<16x24xbf16>
    %c1_49 = arith.constant 1 : index
    %c0_50 = arith.constant 0 : index
    %c0_51 = arith.constant 0 : index
    %58 = vector.load %arg3[%c1_49, %c0_50, %c0_51] : memref<4x24x8xbf16, #tpu.memory_space<vmem>>, vector<1x24x8xbf16>
    %59 = vector.shape_cast %58 : vector<1x24x8xbf16> to vector<24x8xbf16>
    %cst_52 = arith.constant dense<0.000000e+00> : vector<16x8xf32>
    %60 = tpu.matmul %57, %59, %cst_52 {dimension_numbers = #tpu.dot_dimension_numbers<[1], [0], [0], [1], [0, 0, 1, 1], [], []>} : vector<16x24xbf16>, vector<24x8xbf16>, vector<16x8xf32> -> vector<16x8xf32>
    %61 = arith.addf %52, %60 : vector<16x8xf32>
    %c1_i32_53 = arith.constant 1 : i32
    %62 = arith.addi %0, %c1_i32_53 : i32
    %c1_i32_54 = arith.constant 1 : i32
    %63 = arith.addi %62, %c1_i32_54 : i32
    %c0_55 = arith.constant 0 : index
    %64 = arith.index_cast %63 : i32 to index
    %c0_56 = arith.constant 0 : index
    %c0_57 = arith.constant 0 : index
    %65 = vector.load %arg2[%c0_55, %64, %c0_56, %c0_57] : memref<1x19x17x24xbf16, #tpu.memory_space<vmem>>, vector<1x1x16x24xbf16>
    %66 = vector.shape_cast %65 : vector<1x1x16x24xbf16> to vector<16x24xbf16>
    %c2_58 = arith.constant 2 : index
    %c0_59 = arith.constant 0 : index
    %c0_60 = arith.constant 0 : index
    %67 = vector.load %arg3[%c2_58, %c0_59, %c0_60] : memref<4x24x8xbf16, #tpu.memory_space<vmem>>, vector<1x24x8xbf16>
    %68 = vector.shape_cast %67 : vector<1x24x8xbf16> to vector<24x8xbf16>
    %cst_61 = arith.constant dense<0.000000e+00> : vector<16x8xf32>
    %69 = tpu.matmul %66, %68, %cst_61 {dimension_numbers = #tpu.dot_dimension_numbers<[1], [0], [0], [1], [0, 0, 1, 1], [], []>} : vector<16x24xbf16>, vector<24x8xbf16>, vector<16x8xf32> -> vector<16x8xf32>
    %70 = arith.addf %61, %69 : vector<16x8xf32>
    %c1_i32_62 = arith.constant 1 : i32
    %71 = arith.addi %0, %c1_i32_62 : i32
    %c1_i32_63 = arith.constant 1 : i32
    %72 = arith.addi %71, %c1_i32_63 : i32
    %c0_64 = arith.constant 0 : index
    %73 = arith.index_cast %72 : i32 to index
    %c1_65 = arith.constant 1 : index
    %c0_66 = arith.constant 0 : index
    %74 = vector.load %arg2[%c0_64, %73, %c1_65, %c0_66] : memref<1x19x17x24xbf16, #tpu.memory_space<vmem>>, vector<1x1x16x24xbf16>
    %75 = vector.shape_cast %74 : vector<1x1x16x24xbf16> to vector<16x24xbf16>
    %c3_67 = arith.constant 3 : index
    %c0_68 = arith.constant 0 : index
    %c0_69 = arith.constant 0 : index
    %76 = vector.load %arg3[%c3_67, %c0_68, %c0_69] : memref<4x24x8xbf16, #tpu.memory_space<vmem>>, vector<1x24x8xbf16>
    %77 = vector.shape_cast %76 : vector<1x24x8xbf16> to vector<24x8xbf16>
    %cst_70 = arith.constant dense<0.000000e+00> : vector<16x8xf32>
    %78 = tpu.matmul %75, %77, %cst_70 {dimension_numbers = #tpu.dot_dimension_numbers<[1], [0], [0], [1], [0, 0, 1, 1], [], []>} : vector<16x24xbf16>, vector<24x8xbf16>, vector<16x8xf32> -> vector<16x8xf32>
    %79 = arith.addf %70, %78 : vector<16x8xf32>
    %cst_71 = arith.constant 0.000000e+00 : f32
    %80 = vector.broadcast %cst_71 : f32 to vector<16x8xf32>
    %81 = arith.cmpf oge, %79, %80 : vector<16x8xf32>
    %cst_72 = arith.constant 2.000000e-01 : f32
    %82 = vector.broadcast %cst_72 : f32 to vector<16x8xf32>
    %83 = arith.mulf %82, %79 : vector<16x8xf32>
    %84 = arith.select %81, %79, %83 : vector<16x8xi1>, vector<16x8xf32>
    %85 = arith.truncf %84 : vector<16x8xf32> to vector<16x8xbf16>
    %c0_73 = arith.constant 0 : index
    %c1_74 = arith.constant 1 : index
    %c0_75 = arith.constant 0 : index
    %c0_76 = arith.constant 0 : index
    %86 = vector.load %arg4[%c0_73, %c1_74, %c0_75, %c0_76] : memref<1x3x16x8xbf16, #tpu.memory_space<vmem>>, vector<1x1x16x8xbf16>
    %87 = vector.shape_cast %86 : vector<1x1x16x8xbf16> to vector<16x8xbf16>
    %88 = vector.shape_cast %85 : vector<16x8xbf16> to vector<1x1x16x8xbf16>
    tpu.vector_store %arg4[%c0_73, %c1_74, %c0_75, %c0_76], %88 {strides = array<i32>} : memref<1x3x16x8xbf16, #tpu.memory_space<vmem>>, vector<1x1x16x8xbf16>,
    %c2_i32 = arith.constant 2 : i32
    %89 = arith.addi %0, %c2_i32 : i32
    %c0_i32_77 = arith.constant 0 : i32
    %90 = arith.addi %89, %c0_i32_77 : i32
    %c0_78 = arith.constant 0 : index
    %91 = arith.index_cast %90 : i32 to index
    %c0_79 = arith.constant 0 : index
    %c0_80 = arith.constant 0 : index
    %92 = vector.load %arg2[%c0_78, %91, %c0_79, %c0_80] : memref<1x19x17x24xbf16, #tpu.memory_space<vmem>>, vector<1x1x16x24xbf16>
    %93 = vector.shape_cast %92 : vector<1x1x16x24xbf16> to vector<16x24xbf16>
    %c0_81 = arith.constant 0 : index
    %c0_82 = arith.constant 0 : index
    %c0_83 = arith.constant 0 : index
    %94 = vector.load %arg3[%c0_81, %c0_82, %c0_83] : memref<4x24x8xbf16, #tpu.memory_space<vmem>>, vector<1x24x8xbf16>
    %95 = vector.shape_cast %94 : vector<1x24x8xbf16> to vector<24x8xbf16>
    %cst_84 = arith.constant dense<0.000000e+00> : vector<16x8xf32>
    %96 = tpu.matmul %93, %95, %cst_84 {dimension_numbers = #tpu.dot_dimension_numbers<[1], [0], [0], [1], [0, 0, 1, 1], [], []>} : vector<16x24xbf16>, vector<24x8xbf16>, vector<16x8xf32> -> vector<16x8xf32>
    %c2_i32_85 = arith.constant 2 : i32
    %97 = arith.addi %0, %c2_i32_85 : i32
    %c0_i32_86 = arith.constant 0 : i32
    %98 = arith.addi %97, %c0_i32_86 : i32
    %c0_87 = arith.constant 0 : index
    %99 = arith.index_cast %98 : i32 to index
    %c1_88 = arith.constant 1 : index
    %c0_89 = arith.constant 0 : index
    %100 = vector.load %arg2[%c0_87, %99, %c1_88, %c0_89] : memref<1x19x17x24xbf16, #tpu.memory_space<vmem>>, vector<1x1x16x24xbf16>
    %101 = vector.shape_cast %100 : vector<1x1x16x24xbf16> to vector<16x24xbf16>
    %c1_90 = arith.constant 1 : index
    %c0_91 = arith.constant 0 : index
    %c0_92 = arith.constant 0 : index
    %102 = vector.load %arg3[%c1_90, %c0_91, %c0_92] : memref<4x24x8xbf16, #tpu.memory_space<vmem>>, vector<1x24x8xbf16>
    %103 = vector.shape_cast %102 : vector<1x24x8xbf16> to vector<24x8xbf16>
    %cst_93 = arith.constant dense<0.000000e+00> : vector<16x8xf32>
    %104 = tpu.matmul %101, %103, %cst_93 {dimension_numbers = #tpu.dot_dimension_numbers<[1], [0], [0], [1], [0, 0, 1, 1], [], []>} : vector<16x24xbf16>, vector<24x8xbf16>, vector<16x8xf32> -> vector<16x8xf32>
    %105 = arith.addf %96, %104 : vector<16x8xf32>
    %c2_i32_94 = arith.constant 2 : i32
    %106 = arith.addi %0, %c2_i32_94 : i32
    %c1_i32_95 = arith.constant 1 : i32
    %107 = arith.addi %106, %c1_i32_95 : i32
    %c0_96 = arith.constant 0 : index
    %108 = arith.index_cast %107 : i32 to index
    %c0_97 = arith.constant 0 : index
    %c0_98 = arith.constant 0 : index
    %109 = vector.load %arg2[%c0_96, %108, %c0_97, %c0_98] : memref<1x19x17x24xbf16, #tpu.memory_space<vmem>>, vector<1x1x16x24xbf16>
    %110 = vector.shape_cast %109 : vector<1x1x16x24xbf16> to vector<16x24xbf16>
    %c2_99 = arith.constant 2 : index
    %c0_100 = arith.constant 0 : index
    %c0_101 = arith.constant 0 : index
    %111 = vector.load %arg3[%c2_99, %c0_100, %c0_101] : memref<4x24x8xbf16, #tpu.memory_space<vmem>>, vector<1x24x8xbf16>
    %112 = vector.shape_cast %111 : vector<1x24x8xbf16> to vector<24x8xbf16>
    %cst_102 = arith.constant dense<0.000000e+00> : vector<16x8xf32>
    %113 = tpu.matmul %110, %112, %cst_102 {dimension_numbers = #tpu.dot_dimension_numbers<[1], [0], [0], [1], [0, 0, 1, 1], [], []>} : vector<16x24xbf16>, vector<24x8xbf16>, vector<16x8xf32> -> vector<16x8xf32>
    %114 = arith.addf %105, %113 : vector<16x8xf32>
    %c2_i32_103 = arith.constant 2 : i32
    %115 = arith.addi %0, %c2_i32_103 : i32
    %c1_i32_104 = arith.constant 1 : i32
    %116 = arith.addi %115, %c1_i32_104 : i32
    %c0_105 = arith.constant 0 : index
    %117 = arith.index_cast %116 : i32 to index
    %c1_106 = arith.constant 1 : index
    %c0_107 = arith.constant 0 : index
    %118 = vector.load %arg2[%c0_105, %117, %c1_106, %c0_107] : memref<1x19x17x24xbf16, #tpu.memory_space<vmem>>, vector<1x1x16x24xbf16>
    %119 = vector.shape_cast %118 : vector<1x1x16x24xbf16> to vector<16x24xbf16>
    %c3_108 = arith.constant 3 : index
    %c0_109 = arith.constant 0 : index
    %c0_110 = arith.constant 0 : index
    %120 = vector.load %arg3[%c3_108, %c0_109, %c0_110] : memref<4x24x8xbf16, #tpu.memory_space<vmem>>, vector<1x24x8xbf16>
    %121 = vector.shape_cast %120 : vector<1x24x8xbf16> to vector<24x8xbf16>
    %cst_111 = arith.constant dense<0.000000e+00> : vector<16x8xf32>
    %122 = tpu.matmul %119, %121, %cst_111 {dimension_numbers = #tpu.dot_dimension_numbers<[1], [0], [0], [1], [0, 0, 1, 1], [], []>} : vector<16x24xbf16>, vector<24x8xbf16>, vector<16x8xf32> -> vector<16x8xf32>
    %123 = arith.addf %114, %122 : vector<16x8xf32>
    %cst_112 = arith.constant 0.000000e+00 : f32
    %124 = vector.broadcast %cst_112 : f32 to vector<16x8xf32>
    %125 = arith.cmpf oge, %123, %124 : vector<16x8xf32>
    %cst_113 = arith.constant 2.000000e-01 : f32
    %126 = vector.broadcast %cst_113 : f32 to vector<16x8xf32>
    %127 = arith.mulf %126, %123 : vector<16x8xf32>
    %128 = arith.select %125, %123, %127 : vector<16x8xi1>, vector<16x8xf32>
    %129 = arith.truncf %128 : vector<16x8xf32> to vector<16x8xbf16>
    %c0_114 = arith.constant 0 : index
    %c2_115 = arith.constant 2 : index
    %c0_116 = arith.constant 0 : index
    %c0_117 = arith.constant 0 : index
    %130 = vector.load %arg4[%c0_114, %c2_115, %c0_116, %c0_117] : memref<1x3x16x8xbf16, #tpu.memory_space<vmem>>, vector<1x1x16x8xbf16>
    %131 = vector.shape_cast %130 : vector<1x1x16x8xbf16> to vector<16x8xbf16>
    %132 = vector.shape_cast %129 : vector<16x8xbf16> to vector<1x1x16x8xbf16>
    tpu.vector_store %arg4[%c0_114, %c2_115, %c0_116, %c0_117], %132 {strides = array<i32>} : memref<1x3x16x8xbf16, #tpu.memory_space<vmem>>, vector<1x1x16x8xbf16>,
    return
  }
  func.func @transform_0(%arg0: i32, %arg1: i32) -> (i32, i32, i32, i32) {
    %c0_i32 = arith.constant 0 : i32
    %c0_i32_0 = arith.constant 0 : i32
    %c0_i32_1 = arith.constant 0 : i32
    %c0_i32_2 = arith.constant 0 : i32
    return %arg0, %c0_i32, %c0_i32_0, %c0_i32_1 : i32, i32, i32, i32
  }
  func.func @transform_1(%arg0: i32, %arg1: i32) -> (i32, i32, i32) {
    %c0_i32 = arith.constant 0 : i32
    %c0_i32_0 = arith.constant 0 : i32
    %c0_i32_1 = arith.constant 0 : i32
    %c0_i32_2 = arith.constant 0 : i32
    return %c0_i32, %c0_i32_0, %c0_i32_1 : i32, i32, i32
  }
  func.func @transform_2(%arg0: i32, %arg1: i32) -> (i32, i32, i32, i32) {
    %c0_i32 = arith.constant 0 : i32
    %c0_i32_0 = arith.constant 0 : i32
    %c0_i32_1 = arith.constant 0 : i32
    return %arg0, %arg1, %c0_i32, %c0_i32_0 : i32, i32, i32, i32
  }
}

module attributes {stable_mosaic.version = 11 : i64} {
  func.func @_conv_tap_kernel(%arg0: i32, %arg1: i32, %arg2: memref<1x10x9x32xbf16, #tpu.memory_space<vmem>>, %arg3: memref<4x32x16xbf16, #tpu.memory_space<vmem>>, %arg4: memref<1x3x8x16xbf16, #tpu.memory_space<vmem>>, %arg5: memref<1x1x2x16xf32, #tpu.memory_space<vmem>>) attributes {dimension_semantics = [#tpu.dimension_semantics<parallel>, #tpu.dimension_semantics<parallel>], iteration_bounds = array<i64: 2, 3>, scalar_prefetch = 0 : i64, scratch_operands = 0 : i64, tpu.core_type = #tpu.core_type<tc>, window_params = [{transform_indices = @transform_0, window_bounds = array<i64: 1, 10, 9, 32>}, {pipeline_mode = #tpu.pipeline_mode<synchronous>, transform_indices = @transform_1, window_bounds = array<i64: 4, 32, 16>}, {transform_indices = @transform_2, window_bounds = array<i64: 1, 3, 8, 16>}, {transform_indices = @transform_3, window_bounds = array<i64: 1, 1, 2, 16>}]} {
    %c3_i32 = arith.constant 3 : i32
    %0 = arith.muli %arg1, %c3_i32 : i32
    %cst = arith.constant 0.000000e+00 : f32
    %1 = vector.broadcast %cst : f32 to vector<1x16xf32>
    %cst_0 = arith.constant 0.000000e+00 : f32
    %2 = vector.broadcast %cst_0 : f32 to vector<1x16xf32>
    %c0_i32 = arith.constant 0 : i32
    %3 = arith.addi %0, %c0_i32 : i32
    %c0_i32_1 = arith.constant 0 : i32
    %4 = arith.addi %3, %c0_i32_1 : i32
    %c0 = arith.constant 0 : index
    %5 = arith.index_cast %4 : i32 to index
    %c0_2 = arith.constant 0 : index
    %c0_3 = arith.constant 0 : index
    %6 = vector.load %arg2[%c0, %5, %c0_2, %c0_3] : memref<1x10x9x32xbf16, #tpu.memory_space<vmem>>, vector<1x1x8x32xbf16>
    %7 = vector.shape_cast %6 : vector<1x1x8x32xbf16> to vector<8x32xbf16>
    %c0_4 = arith.constant 0 : index
    %c0_5 = arith.constant 0 : index
    %c0_6 = arith.constant 0 : index
    %8 = vector.load %arg3[%c0_4, %c0_5, %c0_6] : memref<4x32x16xbf16, #tpu.memory_space<vmem>>, vector<1x32x16xbf16>
    %9 = vector.shape_cast %8 : vector<1x32x16xbf16> to vector<32x16xbf16>
    %cst_7 = arith.constant dense<0.000000e+00> : vector<8x16xf32>
    %10 = tpu.matmul %7, %9, %cst_7 {dimension_numbers = #tpu.dot_dimension_numbers<[1], [0], [0], [1], [0, 0, 1, 1], [], []>} : vector<8x32xbf16>, vector<32x16xbf16>, vector<8x16xf32> -> vector<8x16xf32>
    %c0_i32_8 = arith.constant 0 : i32
    %11 = arith.addi %0, %c0_i32_8 : i32
    %c0_i32_9 = arith.constant 0 : i32
    %12 = arith.addi %11, %c0_i32_9 : i32
    %c0_10 = arith.constant 0 : index
    %13 = arith.index_cast %12 : i32 to index
    %c1 = arith.constant 1 : index
    %c0_11 = arith.constant 0 : index
    %14 = vector.load %arg2[%c0_10, %13, %c1, %c0_11] : memref<1x10x9x32xbf16, #tpu.memory_space<vmem>>, vector<1x1x8x32xbf16>
    %15 = vector.shape_cast %14 : vector<1x1x8x32xbf16> to vector<8x32xbf16>
    %c1_12 = arith.constant 1 : index
    %c0_13 = arith.constant 0 : index
    %c0_14 = arith.constant 0 : index
    %16 = vector.load %arg3[%c1_12, %c0_13, %c0_14] : memref<4x32x16xbf16, #tpu.memory_space<vmem>>, vector<1x32x16xbf16>
    %17 = vector.shape_cast %16 : vector<1x32x16xbf16> to vector<32x16xbf16>
    %cst_15 = arith.constant dense<0.000000e+00> : vector<8x16xf32>
    %18 = tpu.matmul %15, %17, %cst_15 {dimension_numbers = #tpu.dot_dimension_numbers<[1], [0], [0], [1], [0, 0, 1, 1], [], []>} : vector<8x32xbf16>, vector<32x16xbf16>, vector<8x16xf32> -> vector<8x16xf32>
    %19 = arith.addf %10, %18 : vector<8x16xf32>
    %c0_i32_16 = arith.constant 0 : i32
    %20 = arith.addi %0, %c0_i32_16 : i32
    %c1_i32 = arith.constant 1 : i32
    %21 = arith.addi %20, %c1_i32 : i32
    %c0_17 = arith.constant 0 : index
    %22 = arith.index_cast %21 : i32 to index
    %c0_18 = arith.constant 0 : index
    %c0_19 = arith.constant 0 : index
    %23 = vector.load %arg2[%c0_17, %22, %c0_18, %c0_19] : memref<1x10x9x32xbf16, #tpu.memory_space<vmem>>, vector<1x1x8x32xbf16>
    %24 = vector.shape_cast %23 : vector<1x1x8x32xbf16> to vector<8x32xbf16>
    %c2 = arith.constant 2 : index
    %c0_20 = arith.constant 0 : index
    %c0_21 = arith.constant 0 : index
    %25 = vector.load %arg3[%c2, %c0_20, %c0_21] : memref<4x32x16xbf16, #tpu.memory_space<vmem>>, vector<1x32x16xbf16>
    %26 = vector.shape_cast %25 : vector<1x32x16xbf16> to vector<32x16xbf16>
    %cst_22 = arith.constant dense<0.000000e+00> : vector<8x16xf32>
    %27 = tpu.matmul %24, %26, %cst_22 {dimension_numbers = #tpu.dot_dimension_numbers<[1], [0], [0], [1], [0, 0, 1, 1], [], []>} : vector<8x32xbf16>, vector<32x16xbf16>, vector<8x16xf32> -> vector<8x16xf32>
    %28 = arith.addf %19, %27 : vector<8x16xf32>
    %c0_i32_23 = arith.constant 0 : i32
    %29 = arith.addi %0, %c0_i32_23 : i32
    %c1_i32_24 = arith.constant 1 : i32
    %30 = arith.addi %29, %c1_i32_24 : i32
    %c0_25 = arith.constant 0 : index
    %31 = arith.index_cast %30 : i32 to index
    %c1_26 = arith.constant 1 : index
    %c0_27 = arith.constant 0 : index
    %32 = vector.load %arg2[%c0_25, %31, %c1_26, %c0_27] : memref<1x10x9x32xbf16, #tpu.memory_space<vmem>>, vector<1x1x8x32xbf16>
    %33 = vector.shape_cast %32 : vector<1x1x8x32xbf16> to vector<8x32xbf16>
    %c3 = arith.constant 3 : index
    %c0_28 = arith.constant 0 : index
    %c0_29 = arith.constant 0 : index
    %34 = vector.load %arg3[%c3, %c0_28, %c0_29] : memref<4x32x16xbf16, #tpu.memory_space<vmem>>, vector<1x32x16xbf16>
    %35 = vector.shape_cast %34 : vector<1x32x16xbf16> to vector<32x16xbf16>
    %cst_30 = arith.constant dense<0.000000e+00> : vector<8x16xf32>
    %36 = tpu.matmul %33, %35, %cst_30 {dimension_numbers = #tpu.dot_dimension_numbers<[1], [0], [0], [1], [0, 0, 1, 1], [], []>} : vector<8x32xbf16>, vector<32x16xbf16>, vector<8x16xf32> -> vector<8x16xf32>
    %37 = arith.addf %28, %36 : vector<8x16xf32>
    %c0_i32_31 = arith.constant 0 : i32
    %38 = arith.addi %0, %c0_i32_31 : i32
    %c8_i32 = arith.constant 8 : i32
    %39 = arith.cmpi slt, %38, %c8_i32 : i32
    %40 = arith.extui %39 : i1 to i32
    %41 = arith.sitofp %40 : i32 to f32
    %cst_32 = arith.constant dense<0.000000e+00> : vector<16xf32>
    %42 = vector.multi_reduction <add>, %37, %cst_32 [0] : vector<8x16xf32> to vector<16xf32>
    %43 = vector.shape_cast %42 : vector<16xf32> to vector<1x16xf32>
    %44 = vector.broadcast %41 : f32 to vector<1x16xf32>
    %45 = arith.mulf %44, %43 : vector<1x16xf32>
    %46 = arith.addf %1, %45 : vector<1x16xf32>
    %47 = arith.mulf %37, %37 : vector<8x16xf32>
    %cst_33 = arith.constant dense<0.000000e+00> : vector<16xf32>
    %48 = vector.multi_reduction <add>, %47, %cst_33 [0] : vector<8x16xf32> to vector<16xf32>
    %49 = vector.shape_cast %48 : vector<16xf32> to vector<1x16xf32>
    %50 = vector.broadcast %41 : f32 to vector<1x16xf32>
    %51 = arith.mulf %50, %49 : vector<1x16xf32>
    %52 = arith.addf %2, %51 : vector<1x16xf32>
    %53 = arith.truncf %37 : vector<8x16xf32> to vector<8x16xbf16>
    %c0_34 = arith.constant 0 : index
    %c0_35 = arith.constant 0 : index
    %c0_36 = arith.constant 0 : index
    %c0_37 = arith.constant 0 : index
    %54 = vector.load %arg4[%c0_34, %c0_35, %c0_36, %c0_37] : memref<1x3x8x16xbf16, #tpu.memory_space<vmem>>, vector<1x1x8x16xbf16>
    %55 = vector.shape_cast %54 : vector<1x1x8x16xbf16> to vector<8x16xbf16>
    %56 = vector.shape_cast %53 : vector<8x16xbf16> to vector<1x1x8x16xbf16>
    tpu.vector_store %arg4[%c0_34, %c0_35, %c0_36, %c0_37], %56 {strides = array<i32>} : memref<1x3x8x16xbf16, #tpu.memory_space<vmem>>, vector<1x1x8x16xbf16>,
    %c1_i32_38 = arith.constant 1 : i32
    %57 = arith.addi %0, %c1_i32_38 : i32
    %c0_i32_39 = arith.constant 0 : i32
    %58 = arith.addi %57, %c0_i32_39 : i32
    %c0_40 = arith.constant 0 : index
    %59 = arith.index_cast %58 : i32 to index
    %c0_41 = arith.constant 0 : index
    %c0_42 = arith.constant 0 : index
    %60 = vector.load %arg2[%c0_40, %59, %c0_41, %c0_42] : memref<1x10x9x32xbf16, #tpu.memory_space<vmem>>, vector<1x1x8x32xbf16>
    %61 = vector.shape_cast %60 : vector<1x1x8x32xbf16> to vector<8x32xbf16>
    %c0_43 = arith.constant 0 : index
    %c0_44 = arith.constant 0 : index
    %c0_45 = arith.constant 0 : index
    %62 = vector.load %arg3[%c0_43, %c0_44, %c0_45] : memref<4x32x16xbf16, #tpu.memory_space<vmem>>, vector<1x32x16xbf16>
    %63 = vector.shape_cast %62 : vector<1x32x16xbf16> to vector<32x16xbf16>
    %cst_46 = arith.constant dense<0.000000e+00> : vector<8x16xf32>
    %64 = tpu.matmul %61, %63, %cst_46 {dimension_numbers = #tpu.dot_dimension_numbers<[1], [0], [0], [1], [0, 0, 1, 1], [], []>} : vector<8x32xbf16>, vector<32x16xbf16>, vector<8x16xf32> -> vector<8x16xf32>
    %c1_i32_47 = arith.constant 1 : i32
    %65 = arith.addi %0, %c1_i32_47 : i32
    %c0_i32_48 = arith.constant 0 : i32
    %66 = arith.addi %65, %c0_i32_48 : i32
    %c0_49 = arith.constant 0 : index
    %67 = arith.index_cast %66 : i32 to index
    %c1_50 = arith.constant 1 : index
    %c0_51 = arith.constant 0 : index
    %68 = vector.load %arg2[%c0_49, %67, %c1_50, %c0_51] : memref<1x10x9x32xbf16, #tpu.memory_space<vmem>>, vector<1x1x8x32xbf16>
    %69 = vector.shape_cast %68 : vector<1x1x8x32xbf16> to vector<8x32xbf16>
    %c1_52 = arith.constant 1 : index
    %c0_53 = arith.constant 0 : index
    %c0_54 = arith.constant 0 : index
    %70 = vector.load %arg3[%c1_52, %c0_53, %c0_54] : memref<4x32x16xbf16, #tpu.memory_space<vmem>>, vector<1x32x16xbf16>
    %71 = vector.shape_cast %70 : vector<1x32x16xbf16> to vector<32x16xbf16>
    %cst_55 = arith.constant dense<0.000000e+00> : vector<8x16xf32>
    %72 = tpu.matmul %69, %71, %cst_55 {dimension_numbers = #tpu.dot_dimension_numbers<[1], [0], [0], [1], [0, 0, 1, 1], [], []>} : vector<8x32xbf16>, vector<32x16xbf16>, vector<8x16xf32> -> vector<8x16xf32>
    %73 = arith.addf %64, %72 : vector<8x16xf32>
    %c1_i32_56 = arith.constant 1 : i32
    %74 = arith.addi %0, %c1_i32_56 : i32
    %c1_i32_57 = arith.constant 1 : i32
    %75 = arith.addi %74, %c1_i32_57 : i32
    %c0_58 = arith.constant 0 : index
    %76 = arith.index_cast %75 : i32 to index
    %c0_59 = arith.constant 0 : index
    %c0_60 = arith.constant 0 : index
    %77 = vector.load %arg2[%c0_58, %76, %c0_59, %c0_60] : memref<1x10x9x32xbf16, #tpu.memory_space<vmem>>, vector<1x1x8x32xbf16>
    %78 = vector.shape_cast %77 : vector<1x1x8x32xbf16> to vector<8x32xbf16>
    %c2_61 = arith.constant 2 : index
    %c0_62 = arith.constant 0 : index
    %c0_63 = arith.constant 0 : index
    %79 = vector.load %arg3[%c2_61, %c0_62, %c0_63] : memref<4x32x16xbf16, #tpu.memory_space<vmem>>, vector<1x32x16xbf16>
    %80 = vector.shape_cast %79 : vector<1x32x16xbf16> to vector<32x16xbf16>
    %cst_64 = arith.constant dense<0.000000e+00> : vector<8x16xf32>
    %81 = tpu.matmul %78, %80, %cst_64 {dimension_numbers = #tpu.dot_dimension_numbers<[1], [0], [0], [1], [0, 0, 1, 1], [], []>} : vector<8x32xbf16>, vector<32x16xbf16>, vector<8x16xf32> -> vector<8x16xf32>
    %82 = arith.addf %73, %81 : vector<8x16xf32>
    %c1_i32_65 = arith.constant 1 : i32
    %83 = arith.addi %0, %c1_i32_65 : i32
    %c1_i32_66 = arith.constant 1 : i32
    %84 = arith.addi %83, %c1_i32_66 : i32
    %c0_67 = arith.constant 0 : index
    %85 = arith.index_cast %84 : i32 to index
    %c1_68 = arith.constant 1 : index
    %c0_69 = arith.constant 0 : index
    %86 = vector.load %arg2[%c0_67, %85, %c1_68, %c0_69] : memref<1x10x9x32xbf16, #tpu.memory_space<vmem>>, vector<1x1x8x32xbf16>
    %87 = vector.shape_cast %86 : vector<1x1x8x32xbf16> to vector<8x32xbf16>
    %c3_70 = arith.constant 3 : index
    %c0_71 = arith.constant 0 : index
    %c0_72 = arith.constant 0 : index
    %88 = vector.load %arg3[%c3_70, %c0_71, %c0_72] : memref<4x32x16xbf16, #tpu.memory_space<vmem>>, vector<1x32x16xbf16>
    %89 = vector.shape_cast %88 : vector<1x32x16xbf16> to vector<32x16xbf16>
    %cst_73 = arith.constant dense<0.000000e+00> : vector<8x16xf32>
    %90 = tpu.matmul %87, %89, %cst_73 {dimension_numbers = #tpu.dot_dimension_numbers<[1], [0], [0], [1], [0, 0, 1, 1], [], []>} : vector<8x32xbf16>, vector<32x16xbf16>, vector<8x16xf32> -> vector<8x16xf32>
    %91 = arith.addf %82, %90 : vector<8x16xf32>
    %c1_i32_74 = arith.constant 1 : i32
    %92 = arith.addi %0, %c1_i32_74 : i32
    %c8_i32_75 = arith.constant 8 : i32
    %93 = arith.cmpi slt, %92, %c8_i32_75 : i32
    %94 = arith.extui %93 : i1 to i32
    %95 = arith.sitofp %94 : i32 to f32
    %cst_76 = arith.constant dense<0.000000e+00> : vector<16xf32>
    %96 = vector.multi_reduction <add>, %91, %cst_76 [0] : vector<8x16xf32> to vector<16xf32>
    %97 = vector.shape_cast %96 : vector<16xf32> to vector<1x16xf32>
    %98 = vector.broadcast %95 : f32 to vector<1x16xf32>
    %99 = arith.mulf %98, %97 : vector<1x16xf32>
    %100 = arith.addf %46, %99 : vector<1x16xf32>
    %101 = arith.mulf %91, %91 : vector<8x16xf32>
    %cst_77 = arith.constant dense<0.000000e+00> : vector<16xf32>
    %102 = vector.multi_reduction <add>, %101, %cst_77 [0] : vector<8x16xf32> to vector<16xf32>
    %103 = vector.shape_cast %102 : vector<16xf32> to vector<1x16xf32>
    %104 = vector.broadcast %95 : f32 to vector<1x16xf32>
    %105 = arith.mulf %104, %103 : vector<1x16xf32>
    %106 = arith.addf %52, %105 : vector<1x16xf32>
    %107 = arith.truncf %91 : vector<8x16xf32> to vector<8x16xbf16>
    %c0_78 = arith.constant 0 : index
    %c1_79 = arith.constant 1 : index
    %c0_80 = arith.constant 0 : index
    %c0_81 = arith.constant 0 : index
    %108 = vector.load %arg4[%c0_78, %c1_79, %c0_80, %c0_81] : memref<1x3x8x16xbf16, #tpu.memory_space<vmem>>, vector<1x1x8x16xbf16>
    %109 = vector.shape_cast %108 : vector<1x1x8x16xbf16> to vector<8x16xbf16>
    %110 = vector.shape_cast %107 : vector<8x16xbf16> to vector<1x1x8x16xbf16>
    tpu.vector_store %arg4[%c0_78, %c1_79, %c0_80, %c0_81], %110 {strides = array<i32>} : memref<1x3x8x16xbf16, #tpu.memory_space<vmem>>, vector<1x1x8x16xbf16>,
    %c2_i32 = arith.constant 2 : i32
    %111 = arith.addi %0, %c2_i32 : i32
    %c0_i32_82 = arith.constant 0 : i32
    %112 = arith.addi %111, %c0_i32_82 : i32
    %c0_83 = arith.constant 0 : index
    %113 = arith.index_cast %112 : i32 to index
    %c0_84 = arith.constant 0 : index
    %c0_85 = arith.constant 0 : index
    %114 = vector.load %arg2[%c0_83, %113, %c0_84, %c0_85] : memref<1x10x9x32xbf16, #tpu.memory_space<vmem>>, vector<1x1x8x32xbf16>
    %115 = vector.shape_cast %114 : vector<1x1x8x32xbf16> to vector<8x32xbf16>
    %c0_86 = arith.constant 0 : index
    %c0_87 = arith.constant 0 : index
    %c0_88 = arith.constant 0 : index
    %116 = vector.load %arg3[%c0_86, %c0_87, %c0_88] : memref<4x32x16xbf16, #tpu.memory_space<vmem>>, vector<1x32x16xbf16>
    %117 = vector.shape_cast %116 : vector<1x32x16xbf16> to vector<32x16xbf16>
    %cst_89 = arith.constant dense<0.000000e+00> : vector<8x16xf32>
    %118 = tpu.matmul %115, %117, %cst_89 {dimension_numbers = #tpu.dot_dimension_numbers<[1], [0], [0], [1], [0, 0, 1, 1], [], []>} : vector<8x32xbf16>, vector<32x16xbf16>, vector<8x16xf32> -> vector<8x16xf32>
    %c2_i32_90 = arith.constant 2 : i32
    %119 = arith.addi %0, %c2_i32_90 : i32
    %c0_i32_91 = arith.constant 0 : i32
    %120 = arith.addi %119, %c0_i32_91 : i32
    %c0_92 = arith.constant 0 : index
    %121 = arith.index_cast %120 : i32 to index
    %c1_93 = arith.constant 1 : index
    %c0_94 = arith.constant 0 : index
    %122 = vector.load %arg2[%c0_92, %121, %c1_93, %c0_94] : memref<1x10x9x32xbf16, #tpu.memory_space<vmem>>, vector<1x1x8x32xbf16>
    %123 = vector.shape_cast %122 : vector<1x1x8x32xbf16> to vector<8x32xbf16>
    %c1_95 = arith.constant 1 : index
    %c0_96 = arith.constant 0 : index
    %c0_97 = arith.constant 0 : index
    %124 = vector.load %arg3[%c1_95, %c0_96, %c0_97] : memref<4x32x16xbf16, #tpu.memory_space<vmem>>, vector<1x32x16xbf16>
    %125 = vector.shape_cast %124 : vector<1x32x16xbf16> to vector<32x16xbf16>
    %cst_98 = arith.constant dense<0.000000e+00> : vector<8x16xf32>
    %126 = tpu.matmul %123, %125, %cst_98 {dimension_numbers = #tpu.dot_dimension_numbers<[1], [0], [0], [1], [0, 0, 1, 1], [], []>} : vector<8x32xbf16>, vector<32x16xbf16>, vector<8x16xf32> -> vector<8x16xf32>
    %127 = arith.addf %118, %126 : vector<8x16xf32>
    %c2_i32_99 = arith.constant 2 : i32
    %128 = arith.addi %0, %c2_i32_99 : i32
    %c1_i32_100 = arith.constant 1 : i32
    %129 = arith.addi %128, %c1_i32_100 : i32
    %c0_101 = arith.constant 0 : index
    %130 = arith.index_cast %129 : i32 to index
    %c0_102 = arith.constant 0 : index
    %c0_103 = arith.constant 0 : index
    %131 = vector.load %arg2[%c0_101, %130, %c0_102, %c0_103] : memref<1x10x9x32xbf16, #tpu.memory_space<vmem>>, vector<1x1x8x32xbf16>
    %132 = vector.shape_cast %131 : vector<1x1x8x32xbf16> to vector<8x32xbf16>
    %c2_104 = arith.constant 2 : index
    %c0_105 = arith.constant 0 : index
    %c0_106 = arith.constant 0 : index
    %133 = vector.load %arg3[%c2_104, %c0_105, %c0_106] : memref<4x32x16xbf16, #tpu.memory_space<vmem>>, vector<1x32x16xbf16>
    %134 = vector.shape_cast %133 : vector<1x32x16xbf16> to vector<32x16xbf16>
    %cst_107 = arith.constant dense<0.000000e+00> : vector<8x16xf32>
    %135 = tpu.matmul %132, %134, %cst_107 {dimension_numbers = #tpu.dot_dimension_numbers<[1], [0], [0], [1], [0, 0, 1, 1], [], []>} : vector<8x32xbf16>, vector<32x16xbf16>, vector<8x16xf32> -> vector<8x16xf32>
    %136 = arith.addf %127, %135 : vector<8x16xf32>
    %c2_i32_108 = arith.constant 2 : i32
    %137 = arith.addi %0, %c2_i32_108 : i32
    %c1_i32_109 = arith.constant 1 : i32
    %138 = arith.addi %137, %c1_i32_109 : i32
    %c0_110 = arith.constant 0 : index
    %139 = arith.index_cast %138 : i32 to index
    %c1_111 = arith.constant 1 : index
    %c0_112 = arith.constant 0 : index
    %140 = vector.load %arg2[%c0_110, %139, %c1_111, %c0_112] : memref<1x10x9x32xbf16, #tpu.memory_space<vmem>>, vector<1x1x8x32xbf16>
    %141 = vector.shape_cast %140 : vector<1x1x8x32xbf16> to vector<8x32xbf16>
    %c3_113 = arith.constant 3 : index
    %c0_114 = arith.constant 0 : index
    %c0_115 = arith.constant 0 : index
    %142 = vector.load %arg3[%c3_113, %c0_114, %c0_115] : memref<4x32x16xbf16, #tpu.memory_space<vmem>>, vector<1x32x16xbf16>
    %143 = vector.shape_cast %142 : vector<1x32x16xbf16> to vector<32x16xbf16>
    %cst_116 = arith.constant dense<0.000000e+00> : vector<8x16xf32>
    %144 = tpu.matmul %141, %143, %cst_116 {dimension_numbers = #tpu.dot_dimension_numbers<[1], [0], [0], [1], [0, 0, 1, 1], [], []>} : vector<8x32xbf16>, vector<32x16xbf16>, vector<8x16xf32> -> vector<8x16xf32>
    %145 = arith.addf %136, %144 : vector<8x16xf32>
    %c2_i32_117 = arith.constant 2 : i32
    %146 = arith.addi %0, %c2_i32_117 : i32
    %c8_i32_118 = arith.constant 8 : i32
    %147 = arith.cmpi slt, %146, %c8_i32_118 : i32
    %148 = arith.extui %147 : i1 to i32
    %149 = arith.sitofp %148 : i32 to f32
    %cst_119 = arith.constant dense<0.000000e+00> : vector<16xf32>
    %150 = vector.multi_reduction <add>, %145, %cst_119 [0] : vector<8x16xf32> to vector<16xf32>
    %151 = vector.shape_cast %150 : vector<16xf32> to vector<1x16xf32>
    %152 = vector.broadcast %149 : f32 to vector<1x16xf32>
    %153 = arith.mulf %152, %151 : vector<1x16xf32>
    %154 = arith.addf %100, %153 : vector<1x16xf32>
    %155 = arith.mulf %145, %145 : vector<8x16xf32>
    %cst_120 = arith.constant dense<0.000000e+00> : vector<16xf32>
    %156 = vector.multi_reduction <add>, %155, %cst_120 [0] : vector<8x16xf32> to vector<16xf32>
    %157 = vector.shape_cast %156 : vector<16xf32> to vector<1x16xf32>
    %158 = vector.broadcast %149 : f32 to vector<1x16xf32>
    %159 = arith.mulf %158, %157 : vector<1x16xf32>
    %160 = arith.addf %106, %159 : vector<1x16xf32>
    %161 = arith.truncf %145 : vector<8x16xf32> to vector<8x16xbf16>
    %c0_121 = arith.constant 0 : index
    %c2_122 = arith.constant 2 : index
    %c0_123 = arith.constant 0 : index
    %c0_124 = arith.constant 0 : index
    %162 = vector.load %arg4[%c0_121, %c2_122, %c0_123, %c0_124] : memref<1x3x8x16xbf16, #tpu.memory_space<vmem>>, vector<1x1x8x16xbf16>
    %163 = vector.shape_cast %162 : vector<1x1x8x16xbf16> to vector<8x16xbf16>
    %164 = vector.shape_cast %161 : vector<8x16xbf16> to vector<1x1x8x16xbf16>
    tpu.vector_store %arg4[%c0_121, %c2_122, %c0_123, %c0_124], %164 {strides = array<i32>} : memref<1x3x8x16xbf16, #tpu.memory_space<vmem>>, vector<1x1x8x16xbf16>,
    %c0_125 = arith.constant 0 : index
    %c0_126 = arith.constant 0 : index
    %c0_127 = arith.constant 0 : index
    %c0_128 = arith.constant 0 : index
    %165 = vector.load %arg5[%c0_125, %c0_126, %c0_127, %c0_128] : memref<1x1x2x16xf32, #tpu.memory_space<vmem>>, vector<1x1x1x16xf32>
    %166 = vector.shape_cast %165 : vector<1x1x1x16xf32> to vector<1x16xf32>
    %167 = vector.shape_cast %154 : vector<1x16xf32> to vector<1x1x1x16xf32>
    tpu.vector_store %arg5[%c0_125, %c0_126, %c0_127, %c0_128], %167 {strides = array<i32>} : memref<1x1x2x16xf32, #tpu.memory_space<vmem>>, vector<1x1x1x16xf32>,
    %c0_129 = arith.constant 0 : index
    %c0_130 = arith.constant 0 : index
    %c1_131 = arith.constant 1 : index
    %c0_132 = arith.constant 0 : index
    %168 = vector.load %arg5[%c0_129, %c0_130, %c1_131, %c0_132] : memref<1x1x2x16xf32, #tpu.memory_space<vmem>>, vector<1x1x1x16xf32>
    %169 = vector.shape_cast %168 : vector<1x1x1x16xf32> to vector<1x16xf32>
    %170 = vector.shape_cast %160 : vector<1x16xf32> to vector<1x1x1x16xf32>
    tpu.vector_store %arg5[%c0_129, %c0_130, %c1_131, %c0_132], %170 {strides = array<i32>} : memref<1x1x2x16xf32, #tpu.memory_space<vmem>>, vector<1x1x1x16xf32>,
    return
  }
  func.func @transform_0(%arg0: i32, %arg1: i32) -> (i32, i32, i32, i32) {
    %c0_i32 = arith.constant 0 : i32
    %c0_i32_0 = arith.constant 0 : i32
    %c0_i32_1 = arith.constant 0 : i32
    %c0_i32_2 = arith.constant 0 : i32
    return %arg0, %c0_i32, %c0_i32_0, %c0_i32_1 : i32, i32, i32, i32
  }
  func.func @transform_1(%arg0: i32, %arg1: i32) -> (i32, i32, i32) {
    %c0_i32 = arith.constant 0 : i32
    %c0_i32_0 = arith.constant 0 : i32
    %c0_i32_1 = arith.constant 0 : i32
    %c0_i32_2 = arith.constant 0 : i32
    return %c0_i32, %c0_i32_0, %c0_i32_1 : i32, i32, i32
  }
  func.func @transform_2(%arg0: i32, %arg1: i32) -> (i32, i32, i32, i32) {
    %c0_i32 = arith.constant 0 : i32
    %c0_i32_0 = arith.constant 0 : i32
    %c0_i32_1 = arith.constant 0 : i32
    return %arg0, %arg1, %c0_i32, %c0_i32_0 : i32, i32, i32, i32
  }
  func.func @transform_3(%arg0: i32, %arg1: i32) -> (i32, i32, i32, i32) {
    %c0_i32 = arith.constant 0 : i32
    %c0_i32_0 = arith.constant 0 : i32
    %c0_i32_1 = arith.constant 0 : i32
    return %arg0, %arg1, %c0_i32, %c0_i32_0 : i32, i32, i32, i32
  }
}

module attributes {stable_mosaic.version = 11 : i64} {
  func.func @_bn_lrelu_kernel(%arg0: i32, %arg1: memref<16x16xbf16, #tpu.memory_space<vmem>>, %arg2: memref<1x16xf32, #tpu.memory_space<vmem>>, %arg3: memref<1x16xf32, #tpu.memory_space<vmem>>, %arg4: memref<16x16xbf16, #tpu.memory_space<vmem>>) attributes {dimension_semantics = [#tpu.dimension_semantics<parallel>], iteration_bounds = array<i64: 9>, scalar_prefetch = 0 : i64, scratch_operands = 0 : i64, tpu.core_type = #tpu.core_type<tc>, window_params = [{transform_indices = @transform_0, window_bounds = array<i64: 16, 16>}, {pipeline_mode = #tpu.pipeline_mode<synchronous>, transform_indices = @transform_1, window_bounds = array<i64: 1, 16>}, {pipeline_mode = #tpu.pipeline_mode<synchronous>, transform_indices = @transform_2, window_bounds = array<i64: 1, 16>}, {transform_indices = @transform_3, window_bounds = array<i64: 16, 16>}]} {
    %c0 = arith.constant 0 : index
    %c0_0 = arith.constant 0 : index
    %0 = vector.load %arg1[%c0, %c0_0] : memref<16x16xbf16, #tpu.memory_space<vmem>>, vector<16x16xbf16>
    %1 = arith.extf %0 : vector<16x16xbf16> to vector<16x16xf32>
    %c0_1 = arith.constant 0 : index
    %c0_2 = arith.constant 0 : index
    %2 = vector.load %arg2[%c0_1, %c0_2] : memref<1x16xf32, #tpu.memory_space<vmem>>, vector<1x16xf32>
    %3 = vector.broadcast %2 : vector<1x16xf32> to vector<16x16xf32>
    %4 = arith.mulf %1, %3 : vector<16x16xf32>
    %c0_3 = arith.constant 0 : index
    %c0_4 = arith.constant 0 : index
    %5 = vector.load %arg3[%c0_3, %c0_4] : memref<1x16xf32, #tpu.memory_space<vmem>>, vector<1x16xf32>
    %6 = vector.broadcast %5 : vector<1x16xf32> to vector<16x16xf32>
    %7 = arith.addf %4, %6 : vector<16x16xf32>
    %cst = arith.constant 0.000000e+00 : f32
    %8 = vector.broadcast %cst : f32 to vector<16x16xf32>
    %9 = arith.cmpf oge, %7, %8 : vector<16x16xf32>
    %cst_5 = arith.constant 2.000000e-01 : f32
    %10 = vector.broadcast %cst_5 : f32 to vector<16x16xf32>
    %11 = arith.mulf %10, %7 : vector<16x16xf32>
    %12 = arith.select %9, %7, %11 : vector<16x16xi1>, vector<16x16xf32>
    %13 = arith.truncf %12 : vector<16x16xf32> to vector<16x16xbf16>
    %c0_6 = arith.constant 0 : index
    %c0_7 = arith.constant 0 : index
    %14 = vector.load %arg4[%c0_6, %c0_7] : memref<16x16xbf16, #tpu.memory_space<vmem>>, vector<16x16xbf16>
    tpu.vector_store %arg4[%c0_6, %c0_7], %13 {strides = array<i32>} : memref<16x16xbf16, #tpu.memory_space<vmem>>, vector<16x16xbf16>,
    return
  }
  func.func @transform_0(%arg0: i32) -> (i32, i32) {
    %c0_i32 = arith.constant 0 : i32
    %c0_i32_0 = arith.constant 0 : i32
    return %arg0, %c0_i32 : i32, i32
  }
  func.func @transform_1(%arg0: i32) -> (i32, i32) {
    %c0_i32 = arith.constant 0 : i32
    %c0_i32_0 = arith.constant 0 : i32
    %c0_i32_1 = arith.constant 0 : i32
    return %c0_i32, %c0_i32_0 : i32, i32
  }
  func.func @transform_2(%arg0: i32) -> (i32, i32) {
    %c0_i32 = arith.constant 0 : i32
    %c0_i32_0 = arith.constant 0 : i32
    %c0_i32_1 = arith.constant 0 : i32
    return %c0_i32, %c0_i32_0 : i32, i32
  }
  func.func @transform_3(%arg0: i32) -> (i32, i32) {
    %c0_i32 = arith.constant 0 : i32
    %c0_i32_0 = arith.constant 0 : i32
    return %arg0, %c0_i32 : i32, i32
  }
}

module attributes {stable_mosaic.version = 11 : i64} {
  func.func @_conv_tap_kernel(%arg0: i32, %arg1: i32, %arg2: memref<1x7x5x64xbf16, #tpu.memory_space<vmem>>, %arg3: memref<4x64x32xbf16, #tpu.memory_space<vmem>>, %arg4: memref<1x3x4x32xbf16, #tpu.memory_space<vmem>>, %arg5: memref<1x1x2x32xf32, #tpu.memory_space<vmem>>) attributes {dimension_semantics = [#tpu.dimension_semantics<parallel>, #tpu.dimension_semantics<parallel>], iteration_bounds = array<i64: 2, 2>, scalar_prefetch = 0 : i64, scratch_operands = 0 : i64, tpu.core_type = #tpu.core_type<tc>, window_params = [{transform_indices = @transform_0, window_bounds = array<i64: 1, 7, 5, 64>}, {pipeline_mode = #tpu.pipeline_mode<synchronous>, transform_indices = @transform_1, window_bounds = array<i64: 4, 64, 32>}, {transform_indices = @transform_2, window_bounds = array<i64: 1, 3, 4, 32>}, {transform_indices = @transform_3, window_bounds = array<i64: 1, 1, 2, 32>}]} {
    %c3_i32 = arith.constant 3 : i32
    %0 = arith.muli %arg1, %c3_i32 : i32
    %cst = arith.constant 0.000000e+00 : f32
    %1 = vector.broadcast %cst : f32 to vector<1x32xf32>
    %cst_0 = arith.constant 0.000000e+00 : f32
    %2 = vector.broadcast %cst_0 : f32 to vector<1x32xf32>
    %c0_i32 = arith.constant 0 : i32
    %3 = arith.addi %0, %c0_i32 : i32
    %c0_i32_1 = arith.constant 0 : i32
    %4 = arith.addi %3, %c0_i32_1 : i32
    %c0 = arith.constant 0 : index
    %5 = arith.index_cast %4 : i32 to index
    %c0_2 = arith.constant 0 : index
    %c0_3 = arith.constant 0 : index
    %6 = vector.load %arg2[%c0, %5, %c0_2, %c0_3] : memref<1x7x5x64xbf16, #tpu.memory_space<vmem>>, vector<1x1x4x64xbf16>
    %7 = vector.shape_cast %6 : vector<1x1x4x64xbf16> to vector<4x64xbf16>
    %c0_4 = arith.constant 0 : index
    %c0_5 = arith.constant 0 : index
    %c0_6 = arith.constant 0 : index
    %8 = vector.load %arg3[%c0_4, %c0_5, %c0_6] : memref<4x64x32xbf16, #tpu.memory_space<vmem>>, vector<1x64x32xbf16>
    %9 = vector.shape_cast %8 : vector<1x64x32xbf16> to vector<64x32xbf16>
    %cst_7 = arith.constant dense<0.000000e+00> : vector<4x32xf32>
    %10 = tpu.matmul %7, %9, %cst_7 {dimension_numbers = #tpu.dot_dimension_numbers<[1], [0], [0], [1], [0, 0, 1, 1], [], []>} : vector<4x64xbf16>, vector<64x32xbf16>, vector<4x32xf32> -> vector<4x32xf32>
    %c0_i32_8 = arith.constant 0 : i32
    %11 = arith.addi %0, %c0_i32_8 : i32
    %c0_i32_9 = arith.constant 0 : i32
    %12 = arith.addi %11, %c0_i32_9 : i32
    %c0_10 = arith.constant 0 : index
    %13 = arith.index_cast %12 : i32 to index
    %c1 = arith.constant 1 : index
    %c0_11 = arith.constant 0 : index
    %14 = vector.load %arg2[%c0_10, %13, %c1, %c0_11] : memref<1x7x5x64xbf16, #tpu.memory_space<vmem>>, vector<1x1x4x64xbf16>
    %15 = vector.shape_cast %14 : vector<1x1x4x64xbf16> to vector<4x64xbf16>
    %c1_12 = arith.constant 1 : index
    %c0_13 = arith.constant 0 : index
    %c0_14 = arith.constant 0 : index
    %16 = vector.load %arg3[%c1_12, %c0_13, %c0_14] : memref<4x64x32xbf16, #tpu.memory_space<vmem>>, vector<1x64x32xbf16>
    %17 = vector.shape_cast %16 : vector<1x64x32xbf16> to vector<64x32xbf16>
    %cst_15 = arith.constant dense<0.000000e+00> : vector<4x32xf32>
    %18 = tpu.matmul %15, %17, %cst_15 {dimension_numbers = #tpu.dot_dimension_numbers<[1], [0], [0], [1], [0, 0, 1, 1], [], []>} : vector<4x64xbf16>, vector<64x32xbf16>, vector<4x32xf32> -> vector<4x32xf32>
    %19 = arith.addf %10, %18 : vector<4x32xf32>
    %c0_i32_16 = arith.constant 0 : i32
    %20 = arith.addi %0, %c0_i32_16 : i32
    %c1_i32 = arith.constant 1 : i32
    %21 = arith.addi %20, %c1_i32 : i32
    %c0_17 = arith.constant 0 : index
    %22 = arith.index_cast %21 : i32 to index
    %c0_18 = arith.constant 0 : index
    %c0_19 = arith.constant 0 : index
    %23 = vector.load %arg2[%c0_17, %22, %c0_18, %c0_19] : memref<1x7x5x64xbf16, #tpu.memory_space<vmem>>, vector<1x1x4x64xbf16>
    %24 = vector.shape_cast %23 : vector<1x1x4x64xbf16> to vector<4x64xbf16>
    %c2 = arith.constant 2 : index
    %c0_20 = arith.constant 0 : index
    %c0_21 = arith.constant 0 : index
    %25 = vector.load %arg3[%c2, %c0_20, %c0_21] : memref<4x64x32xbf16, #tpu.memory_space<vmem>>, vector<1x64x32xbf16>
    %26 = vector.shape_cast %25 : vector<1x64x32xbf16> to vector<64x32xbf16>
    %cst_22 = arith.constant dense<0.000000e+00> : vector<4x32xf32>
    %27 = tpu.matmul %24, %26, %cst_22 {dimension_numbers = #tpu.dot_dimension_numbers<[1], [0], [0], [1], [0, 0, 1, 1], [], []>} : vector<4x64xbf16>, vector<64x32xbf16>, vector<4x32xf32> -> vector<4x32xf32>
    %28 = arith.addf %19, %27 : vector<4x32xf32>
    %c0_i32_23 = arith.constant 0 : i32
    %29 = arith.addi %0, %c0_i32_23 : i32
    %c1_i32_24 = arith.constant 1 : i32
    %30 = arith.addi %29, %c1_i32_24 : i32
    %c0_25 = arith.constant 0 : index
    %31 = arith.index_cast %30 : i32 to index
    %c1_26 = arith.constant 1 : index
    %c0_27 = arith.constant 0 : index
    %32 = vector.load %arg2[%c0_25, %31, %c1_26, %c0_27] : memref<1x7x5x64xbf16, #tpu.memory_space<vmem>>, vector<1x1x4x64xbf16>
    %33 = vector.shape_cast %32 : vector<1x1x4x64xbf16> to vector<4x64xbf16>
    %c3 = arith.constant 3 : index
    %c0_28 = arith.constant 0 : index
    %c0_29 = arith.constant 0 : index
    %34 = vector.load %arg3[%c3, %c0_28, %c0_29] : memref<4x64x32xbf16, #tpu.memory_space<vmem>>, vector<1x64x32xbf16>
    %35 = vector.shape_cast %34 : vector<1x64x32xbf16> to vector<64x32xbf16>
    %cst_30 = arith.constant dense<0.000000e+00> : vector<4x32xf32>
    %36 = tpu.matmul %33, %35, %cst_30 {dimension_numbers = #tpu.dot_dimension_numbers<[1], [0], [0], [1], [0, 0, 1, 1], [], []>} : vector<4x64xbf16>, vector<64x32xbf16>, vector<4x32xf32> -> vector<4x32xf32>
    %37 = arith.addf %28, %36 : vector<4x32xf32>
    %c0_i32_31 = arith.constant 0 : i32
    %38 = arith.addi %0, %c0_i32_31 : i32
    %c4_i32 = arith.constant 4 : i32
    %39 = arith.cmpi slt, %38, %c4_i32 : i32
    %40 = arith.extui %39 : i1 to i32
    %41 = arith.sitofp %40 : i32 to f32
    %cst_32 = arith.constant dense<0.000000e+00> : vector<32xf32>
    %42 = vector.multi_reduction <add>, %37, %cst_32 [0] : vector<4x32xf32> to vector<32xf32>
    %43 = vector.shape_cast %42 : vector<32xf32> to vector<1x32xf32>
    %44 = vector.broadcast %41 : f32 to vector<1x32xf32>
    %45 = arith.mulf %44, %43 : vector<1x32xf32>
    %46 = arith.addf %1, %45 : vector<1x32xf32>
    %47 = arith.mulf %37, %37 : vector<4x32xf32>
    %cst_33 = arith.constant dense<0.000000e+00> : vector<32xf32>
    %48 = vector.multi_reduction <add>, %47, %cst_33 [0] : vector<4x32xf32> to vector<32xf32>
    %49 = vector.shape_cast %48 : vector<32xf32> to vector<1x32xf32>
    %50 = vector.broadcast %41 : f32 to vector<1x32xf32>
    %51 = arith.mulf %50, %49 : vector<1x32xf32>
    %52 = arith.addf %2, %51 : vector<1x32xf32>
    %53 = arith.truncf %37 : vector<4x32xf32> to vector<4x32xbf16>
    %c0_34 = arith.constant 0 : index
    %c0_35 = arith.constant 0 : index
    %c0_36 = arith.constant 0 : index
    %c0_37 = arith.constant 0 : index
    %54 = vector.load %arg4[%c0_34, %c0_35, %c0_36, %c0_37] : memref<1x3x4x32xbf16, #tpu.memory_space<vmem>>, vector<1x1x4x32xbf16>
    %55 = vector.shape_cast %54 : vector<1x1x4x32xbf16> to vector<4x32xbf16>
    %56 = vector.shape_cast %53 : vector<4x32xbf16> to vector<1x1x4x32xbf16>
    tpu.vector_store %arg4[%c0_34, %c0_35, %c0_36, %c0_37], %56 {strides = array<i32>} : memref<1x3x4x32xbf16, #tpu.memory_space<vmem>>, vector<1x1x4x32xbf16>,
    %c1_i32_38 = arith.constant 1 : i32
    %57 = arith.addi %0, %c1_i32_38 : i32
    %c0_i32_39 = arith.constant 0 : i32
    %58 = arith.addi %57, %c0_i32_39 : i32
    %c0_40 = arith.constant 0 : index
    %59 = arith.index_cast %58 : i32 to index
    %c0_41 = arith.constant 0 : index
    %c0_42 = arith.constant 0 : index
    %60 = vector.load %arg2[%c0_40, %59, %c0_41, %c0_42] : memref<1x7x5x64xbf16, #tpu.memory_space<vmem>>, vector<1x1x4x64xbf16>
    %61 = vector.shape_cast %60 : vector<1x1x4x64xbf16> to vector<4x64xbf16>
    %c0_43 = arith.constant 0 : index
    %c0_44 = arith.constant 0 : index
    %c0_45 = arith.constant 0 : index
    %62 = vector.load %arg3[%c0_43, %c0_44, %c0_45] : memref<4x64x32xbf16, #tpu.memory_space<vmem>>, vector<1x64x32xbf16>
    %63 = vector.shape_cast %62 : vector<1x64x32xbf16> to vector<64x32xbf16>
    %cst_46 = arith.constant dense<0.000000e+00> : vector<4x32xf32>
    %64 = tpu.matmul %61, %63, %cst_46 {dimension_numbers = #tpu.dot_dimension_numbers<[1], [0], [0], [1], [0, 0, 1, 1], [], []>} : vector<4x64xbf16>, vector<64x32xbf16>, vector<4x32xf32> -> vector<4x32xf32>
    %c1_i32_47 = arith.constant 1 : i32
    %65 = arith.addi %0, %c1_i32_47 : i32
    %c0_i32_48 = arith.constant 0 : i32
    %66 = arith.addi %65, %c0_i32_48 : i32
    %c0_49 = arith.constant 0 : index
    %67 = arith.index_cast %66 : i32 to index
    %c1_50 = arith.constant 1 : index
    %c0_51 = arith.constant 0 : index
    %68 = vector.load %arg2[%c0_49, %67, %c1_50, %c0_51] : memref<1x7x5x64xbf16, #tpu.memory_space<vmem>>, vector<1x1x4x64xbf16>
    %69 = vector.shape_cast %68 : vector<1x1x4x64xbf16> to vector<4x64xbf16>
    %c1_52 = arith.constant 1 : index
    %c0_53 = arith.constant 0 : index
    %c0_54 = arith.constant 0 : index
    %70 = vector.load %arg3[%c1_52, %c0_53, %c0_54] : memref<4x64x32xbf16, #tpu.memory_space<vmem>>, vector<1x64x32xbf16>
    %71 = vector.shape_cast %70 : vector<1x64x32xbf16> to vector<64x32xbf16>
    %cst_55 = arith.constant dense<0.000000e+00> : vector<4x32xf32>
    %72 = tpu.matmul %69, %71, %cst_55 {dimension_numbers = #tpu.dot_dimension_numbers<[1], [0], [0], [1], [0, 0, 1, 1], [], []>} : vector<4x64xbf16>, vector<64x32xbf16>, vector<4x32xf32> -> vector<4x32xf32>
    %73 = arith.addf %64, %72 : vector<4x32xf32>
    %c1_i32_56 = arith.constant 1 : i32
    %74 = arith.addi %0, %c1_i32_56 : i32
    %c1_i32_57 = arith.constant 1 : i32
    %75 = arith.addi %74, %c1_i32_57 : i32
    %c0_58 = arith.constant 0 : index
    %76 = arith.index_cast %75 : i32 to index
    %c0_59 = arith.constant 0 : index
    %c0_60 = arith.constant 0 : index
    %77 = vector.load %arg2[%c0_58, %76, %c0_59, %c0_60] : memref<1x7x5x64xbf16, #tpu.memory_space<vmem>>, vector<1x1x4x64xbf16>
    %78 = vector.shape_cast %77 : vector<1x1x4x64xbf16> to vector<4x64xbf16>
    %c2_61 = arith.constant 2 : index
    %c0_62 = arith.constant 0 : index
    %c0_63 = arith.constant 0 : index
    %79 = vector.load %arg3[%c2_61, %c0_62, %c0_63] : memref<4x64x32xbf16, #tpu.memory_space<vmem>>, vector<1x64x32xbf16>
    %80 = vector.shape_cast %79 : vector<1x64x32xbf16> to vector<64x32xbf16>
    %cst_64 = arith.constant dense<0.000000e+00> : vector<4x32xf32>
    %81 = tpu.matmul %78, %80, %cst_64 {dimension_numbers = #tpu.dot_dimension_numbers<[1], [0], [0], [1], [0, 0, 1, 1], [], []>} : vector<4x64xbf16>, vector<64x32xbf16>, vector<4x32xf32> -> vector<4x32xf32>
    %82 = arith.addf %73, %81 : vector<4x32xf32>
    %c1_i32_65 = arith.constant 1 : i32
    %83 = arith.addi %0, %c1_i32_65 : i32
    %c1_i32_66 = arith.constant 1 : i32
    %84 = arith.addi %83, %c1_i32_66 : i32
    %c0_67 = arith.constant 0 : index
    %85 = arith.index_cast %84 : i32 to index
    %c1_68 = arith.constant 1 : index
    %c0_69 = arith.constant 0 : index
    %86 = vector.load %arg2[%c0_67, %85, %c1_68, %c0_69] : memref<1x7x5x64xbf16, #tpu.memory_space<vmem>>, vector<1x1x4x64xbf16>
    %87 = vector.shape_cast %86 : vector<1x1x4x64xbf16> to vector<4x64xbf16>
    %c3_70 = arith.constant 3 : index
    %c0_71 = arith.constant 0 : index
    %c0_72 = arith.constant 0 : index
    %88 = vector.load %arg3[%c3_70, %c0_71, %c0_72] : memref<4x64x32xbf16, #tpu.memory_space<vmem>>, vector<1x64x32xbf16>
    %89 = vector.shape_cast %88 : vector<1x64x32xbf16> to vector<64x32xbf16>
    %cst_73 = arith.constant dense<0.000000e+00> : vector<4x32xf32>
    %90 = tpu.matmul %87, %89, %cst_73 {dimension_numbers = #tpu.dot_dimension_numbers<[1], [0], [0], [1], [0, 0, 1, 1], [], []>} : vector<4x64xbf16>, vector<64x32xbf16>, vector<4x32xf32> -> vector<4x32xf32>
    %91 = arith.addf %82, %90 : vector<4x32xf32>
    %c1_i32_74 = arith.constant 1 : i32
    %92 = arith.addi %0, %c1_i32_74 : i32
    %c4_i32_75 = arith.constant 4 : i32
    %93 = arith.cmpi slt, %92, %c4_i32_75 : i32
    %94 = arith.extui %93 : i1 to i32
    %95 = arith.sitofp %94 : i32 to f32
    %cst_76 = arith.constant dense<0.000000e+00> : vector<32xf32>
    %96 = vector.multi_reduction <add>, %91, %cst_76 [0] : vector<4x32xf32> to vector<32xf32>
    %97 = vector.shape_cast %96 : vector<32xf32> to vector<1x32xf32>
    %98 = vector.broadcast %95 : f32 to vector<1x32xf32>
    %99 = arith.mulf %98, %97 : vector<1x32xf32>
    %100 = arith.addf %46, %99 : vector<1x32xf32>
    %101 = arith.mulf %91, %91 : vector<4x32xf32>
    %cst_77 = arith.constant dense<0.000000e+00> : vector<32xf32>
    %102 = vector.multi_reduction <add>, %101, %cst_77 [0] : vector<4x32xf32> to vector<32xf32>
    %103 = vector.shape_cast %102 : vector<32xf32> to vector<1x32xf32>
    %104 = vector.broadcast %95 : f32 to vector<1x32xf32>
    %105 = arith.mulf %104, %103 : vector<1x32xf32>
    %106 = arith.addf %52, %105 : vector<1x32xf32>
    %107 = arith.truncf %91 : vector<4x32xf32> to vector<4x32xbf16>
    %c0_78 = arith.constant 0 : index
    %c1_79 = arith.constant 1 : index
    %c0_80 = arith.constant 0 : index
    %c0_81 = arith.constant 0 : index
    %108 = vector.load %arg4[%c0_78, %c1_79, %c0_80, %c0_81] : memref<1x3x4x32xbf16, #tpu.memory_space<vmem>>, vector<1x1x4x32xbf16>
    %109 = vector.shape_cast %108 : vector<1x1x4x32xbf16> to vector<4x32xbf16>
    %110 = vector.shape_cast %107 : vector<4x32xbf16> to vector<1x1x4x32xbf16>
    tpu.vector_store %arg4[%c0_78, %c1_79, %c0_80, %c0_81], %110 {strides = array<i32>} : memref<1x3x4x32xbf16, #tpu.memory_space<vmem>>, vector<1x1x4x32xbf16>,
    %c2_i32 = arith.constant 2 : i32
    %111 = arith.addi %0, %c2_i32 : i32
    %c0_i32_82 = arith.constant 0 : i32
    %112 = arith.addi %111, %c0_i32_82 : i32
    %c0_83 = arith.constant 0 : index
    %113 = arith.index_cast %112 : i32 to index
    %c0_84 = arith.constant 0 : index
    %c0_85 = arith.constant 0 : index
    %114 = vector.load %arg2[%c0_83, %113, %c0_84, %c0_85] : memref<1x7x5x64xbf16, #tpu.memory_space<vmem>>, vector<1x1x4x64xbf16>
    %115 = vector.shape_cast %114 : vector<1x1x4x64xbf16> to vector<4x64xbf16>
    %c0_86 = arith.constant 0 : index
    %c0_87 = arith.constant 0 : index
    %c0_88 = arith.constant 0 : index
    %116 = vector.load %arg3[%c0_86, %c0_87, %c0_88] : memref<4x64x32xbf16, #tpu.memory_space<vmem>>, vector<1x64x32xbf16>
    %117 = vector.shape_cast %116 : vector<1x64x32xbf16> to vector<64x32xbf16>
    %cst_89 = arith.constant dense<0.000000e+00> : vector<4x32xf32>
    %118 = tpu.matmul %115, %117, %cst_89 {dimension_numbers = #tpu.dot_dimension_numbers<[1], [0], [0], [1], [0, 0, 1, 1], [], []>} : vector<4x64xbf16>, vector<64x32xbf16>, vector<4x32xf32> -> vector<4x32xf32>
    %c2_i32_90 = arith.constant 2 : i32
    %119 = arith.addi %0, %c2_i32_90 : i32
    %c0_i32_91 = arith.constant 0 : i32
    %120 = arith.addi %119, %c0_i32_91 : i32
    %c0_92 = arith.constant 0 : index
    %121 = arith.index_cast %120 : i32 to index
    %c1_93 = arith.constant 1 : index
    %c0_94 = arith.constant 0 : index
    %122 = vector.load %arg2[%c0_92, %121, %c1_93, %c0_94] : memref<1x7x5x64xbf16, #tpu.memory_space<vmem>>, vector<1x1x4x64xbf16>
    %123 = vector.shape_cast %122 : vector<1x1x4x64xbf16> to vector<4x64xbf16>
    %c1_95 = arith.constant 1 : index
    %c0_96 = arith.constant 0 : index
    %c0_97 = arith.constant 0 : index
    %124 = vector.load %arg3[%c1_95, %c0_96, %c0_97] : memref<4x64x32xbf16, #tpu.memory_space<vmem>>, vector<1x64x32xbf16>
    %125 = vector.shape_cast %124 : vector<1x64x32xbf16> to vector<64x32xbf16>
    %cst_98 = arith.constant dense<0.000000e+00> : vector<4x32xf32>
    %126 = tpu.matmul %123, %125, %cst_98 {dimension_numbers = #tpu.dot_dimension_numbers<[1], [0], [0], [1], [0, 0, 1, 1], [], []>} : vector<4x64xbf16>, vector<64x32xbf16>, vector<4x32xf32> -> vector<4x32xf32>
    %127 = arith.addf %118, %126 : vector<4x32xf32>
    %c2_i32_99 = arith.constant 2 : i32
    %128 = arith.addi %0, %c2_i32_99 : i32
    %c1_i32_100 = arith.constant 1 : i32
    %129 = arith.addi %128, %c1_i32_100 : i32
    %c0_101 = arith.constant 0 : index
    %130 = arith.index_cast %129 : i32 to index
    %c0_102 = arith.constant 0 : index
    %c0_103 = arith.constant 0 : index
    %131 = vector.load %arg2[%c0_101, %130, %c0_102, %c0_103] : memref<1x7x5x64xbf16, #tpu.memory_space<vmem>>, vector<1x1x4x64xbf16>
    %132 = vector.shape_cast %131 : vector<1x1x4x64xbf16> to vector<4x64xbf16>
    %c2_104 = arith.constant 2 : index
    %c0_105 = arith.constant 0 : index
    %c0_106 = arith.constant 0 : index
    %133 = vector.load %arg3[%c2_104, %c0_105, %c0_106] : memref<4x64x32xbf16, #tpu.memory_space<vmem>>, vector<1x64x32xbf16>
    %134 = vector.shape_cast %133 : vector<1x64x32xbf16> to vector<64x32xbf16>
    %cst_107 = arith.constant dense<0.000000e+00> : vector<4x32xf32>
    %135 = tpu.matmul %132, %134, %cst_107 {dimension_numbers = #tpu.dot_dimension_numbers<[1], [0], [0], [1], [0, 0, 1, 1], [], []>} : vector<4x64xbf16>, vector<64x32xbf16>, vector<4x32xf32> -> vector<4x32xf32>
    %136 = arith.addf %127, %135 : vector<4x32xf32>
    %c2_i32_108 = arith.constant 2 : i32
    %137 = arith.addi %0, %c2_i32_108 : i32
    %c1_i32_109 = arith.constant 1 : i32
    %138 = arith.addi %137, %c1_i32_109 : i32
    %c0_110 = arith.constant 0 : index
    %139 = arith.index_cast %138 : i32 to index
    %c1_111 = arith.constant 1 : index
    %c0_112 = arith.constant 0 : index
    %140 = vector.load %arg2[%c0_110, %139, %c1_111, %c0_112] : memref<1x7x5x64xbf16, #tpu.memory_space<vmem>>, vector<1x1x4x64xbf16>
    %141 = vector.shape_cast %140 : vector<1x1x4x64xbf16> to vector<4x64xbf16>
    %c3_113 = arith.constant 3 : index
    %c0_114 = arith.constant 0 : index
    %c0_115 = arith.constant 0 : index
    %142 = vector.load %arg3[%c3_113, %c0_114, %c0_115] : memref<4x64x32xbf16, #tpu.memory_space<vmem>>, vector<1x64x32xbf16>
    %143 = vector.shape_cast %142 : vector<1x64x32xbf16> to vector<64x32xbf16>
    %cst_116 = arith.constant dense<0.000000e+00> : vector<4x32xf32>
    %144 = tpu.matmul %141, %143, %cst_116 {dimension_numbers = #tpu.dot_dimension_numbers<[1], [0], [0], [1], [0, 0, 1, 1], [], []>} : vector<4x64xbf16>, vector<64x32xbf16>, vector<4x32xf32> -> vector<4x32xf32>
    %145 = arith.addf %136, %144 : vector<4x32xf32>
    %c2_i32_117 = arith.constant 2 : i32
    %146 = arith.addi %0, %c2_i32_117 : i32
    %c4_i32_118 = arith.constant 4 : i32
    %147 = arith.cmpi slt, %146, %c4_i32_118 : i32
    %148 = arith.extui %147 : i1 to i32
    %149 = arith.sitofp %148 : i32 to f32
    %cst_119 = arith.constant dense<0.000000e+00> : vector<32xf32>
    %150 = vector.multi_reduction <add>, %145, %cst_119 [0] : vector<4x32xf32> to vector<32xf32>
    %151 = vector.shape_cast %150 : vector<32xf32> to vector<1x32xf32>
    %152 = vector.broadcast %149 : f32 to vector<1x32xf32>
    %153 = arith.mulf %152, %151 : vector<1x32xf32>
    %154 = arith.addf %100, %153 : vector<1x32xf32>
    %155 = arith.mulf %145, %145 : vector<4x32xf32>
    %cst_120 = arith.constant dense<0.000000e+00> : vector<32xf32>
    %156 = vector.multi_reduction <add>, %155, %cst_120 [0] : vector<4x32xf32> to vector<32xf32>
    %157 = vector.shape_cast %156 : vector<32xf32> to vector<1x32xf32>
    %158 = vector.broadcast %149 : f32 to vector<1x32xf32>
    %159 = arith.mulf %158, %157 : vector<1x32xf32>
    %160 = arith.addf %106, %159 : vector<1x32xf32>
    %161 = arith.truncf %145 : vector<4x32xf32> to vector<4x32xbf16>
    %c0_121 = arith.constant 0 : index
    %c2_122 = arith.constant 2 : index
    %c0_123 = arith.constant 0 : index
    %c0_124 = arith.constant 0 : index
    %162 = vector.load %arg4[%c0_121, %c2_122, %c0_123, %c0_124] : memref<1x3x4x32xbf16, #tpu.memory_space<vmem>>, vector<1x1x4x32xbf16>
    %163 = vector.shape_cast %162 : vector<1x1x4x32xbf16> to vector<4x32xbf16>
    %164 = vector.shape_cast %161 : vector<4x32xbf16> to vector<1x1x4x32xbf16>
    tpu.vector_store %arg4[%c0_121, %c2_122, %c0_123, %c0_124], %164 {strides = array<i32>} : memref<1x3x4x32xbf16, #tpu.memory_space<vmem>>, vector<1x1x4x32xbf16>,
    %c0_125 = arith.constant 0 : index
    %c0_126 = arith.constant 0 : index
    %c0_127 = arith.constant 0 : index
    %c0_128 = arith.constant 0 : index
    %165 = vector.load %arg5[%c0_125, %c0_126, %c0_127, %c0_128] : memref<1x1x2x32xf32, #tpu.memory_space<vmem>>, vector<1x1x1x32xf32>
    %166 = vector.shape_cast %165 : vector<1x1x1x32xf32> to vector<1x32xf32>
    %167 = vector.shape_cast %154 : vector<1x32xf32> to vector<1x1x1x32xf32>
    tpu.vector_store %arg5[%c0_125, %c0_126, %c0_127, %c0_128], %167 {strides = array<i32>} : memref<1x1x2x32xf32, #tpu.memory_space<vmem>>, vector<1x1x1x32xf32>,
    %c0_129 = arith.constant 0 : index
    %c0_130 = arith.constant 0 : index
    %c1_131 = arith.constant 1 : index
    %c0_132 = arith.constant 0 : index
    %168 = vector.load %arg5[%c0_129, %c0_130, %c1_131, %c0_132] : memref<1x1x2x32xf32, #tpu.memory_space<vmem>>, vector<1x1x1x32xf32>
    %169 = vector.shape_cast %168 : vector<1x1x1x32xf32> to vector<1x32xf32>
    %170 = vector.shape_cast %160 : vector<1x32xf32> to vector<1x1x1x32xf32>
    tpu.vector_store %arg5[%c0_129, %c0_130, %c1_131, %c0_132], %170 {strides = array<i32>} : memref<1x1x2x32xf32, #tpu.memory_space<vmem>>, vector<1x1x1x32xf32>,
    return
  }
  func.func @transform_0(%arg0: i32, %arg1: i32) -> (i32, i32, i32, i32) {
    %c0_i32 = arith.constant 0 : i32
    %c0_i32_0 = arith.constant 0 : i32
    %c0_i32_1 = arith.constant 0 : i32
    %c0_i32_2 = arith.constant 0 : i32
    return %arg0, %c0_i32, %c0_i32_0, %c0_i32_1 : i32, i32, i32, i32
  }
  func.func @transform_1(%arg0: i32, %arg1: i32) -> (i32, i32, i32) {
    %c0_i32 = arith.constant 0 : i32
    %c0_i32_0 = arith.constant 0 : i32
    %c0_i32_1 = arith.constant 0 : i32
    %c0_i32_2 = arith.constant 0 : i32
    return %c0_i32, %c0_i32_0, %c0_i32_1 : i32, i32, i32
  }
  func.func @transform_2(%arg0: i32, %arg1: i32) -> (i32, i32, i32, i32) {
    %c0_i32 = arith.constant 0 : i32
    %c0_i32_0 = arith.constant 0 : i32
    %c0_i32_1 = arith.constant 0 : i32
    return %arg0, %arg1, %c0_i32, %c0_i32_0 : i32, i32, i32, i32
  }
  func.func @transform_3(%arg0: i32, %arg1: i32) -> (i32, i32, i32, i32) {
    %c0_i32 = arith.constant 0 : i32
    %c0_i32_0 = arith.constant 0 : i32
    %c0_i32_1 = arith.constant 0 : i32
    return %arg0, %arg1, %c0_i32, %c0_i32_0 : i32, i32, i32, i32
  }
}

module attributes {stable_mosaic.version = 11 : i64} {
  func.func @_bn_lrelu_kernel(%arg0: i32, %arg1: memref<16x32xbf16, #tpu.memory_space<vmem>>, %arg2: memref<1x32xf32, #tpu.memory_space<vmem>>, %arg3: memref<1x32xf32, #tpu.memory_space<vmem>>, %arg4: memref<16x32xbf16, #tpu.memory_space<vmem>>) attributes {dimension_semantics = [#tpu.dimension_semantics<parallel>], iteration_bounds = array<i64: 3>, scalar_prefetch = 0 : i64, scratch_operands = 0 : i64, tpu.core_type = #tpu.core_type<tc>, window_params = [{transform_indices = @transform_0, window_bounds = array<i64: 16, 32>}, {pipeline_mode = #tpu.pipeline_mode<synchronous>, transform_indices = @transform_1, window_bounds = array<i64: 1, 32>}, {pipeline_mode = #tpu.pipeline_mode<synchronous>, transform_indices = @transform_2, window_bounds = array<i64: 1, 32>}, {transform_indices = @transform_3, window_bounds = array<i64: 16, 32>}]} {
    %c0 = arith.constant 0 : index
    %c0_0 = arith.constant 0 : index
    %0 = vector.load %arg1[%c0, %c0_0] : memref<16x32xbf16, #tpu.memory_space<vmem>>, vector<16x32xbf16>
    %1 = arith.extf %0 : vector<16x32xbf16> to vector<16x32xf32>
    %c0_1 = arith.constant 0 : index
    %c0_2 = arith.constant 0 : index
    %2 = vector.load %arg2[%c0_1, %c0_2] : memref<1x32xf32, #tpu.memory_space<vmem>>, vector<1x32xf32>
    %3 = vector.broadcast %2 : vector<1x32xf32> to vector<16x32xf32>
    %4 = arith.mulf %1, %3 : vector<16x32xf32>
    %c0_3 = arith.constant 0 : index
    %c0_4 = arith.constant 0 : index
    %5 = vector.load %arg3[%c0_3, %c0_4] : memref<1x32xf32, #tpu.memory_space<vmem>>, vector<1x32xf32>
    %6 = vector.broadcast %5 : vector<1x32xf32> to vector<16x32xf32>
    %7 = arith.addf %4, %6 : vector<16x32xf32>
    %cst = arith.constant 0.000000e+00 : f32
    %8 = vector.broadcast %cst : f32 to vector<16x32xf32>
    %9 = arith.cmpf oge, %7, %8 : vector<16x32xf32>
    %cst_5 = arith.constant 2.000000e-01 : f32
    %10 = vector.broadcast %cst_5 : f32 to vector<16x32xf32>
    %11 = arith.mulf %10, %7 : vector<16x32xf32>
    %12 = arith.select %9, %7, %11 : vector<16x32xi1>, vector<16x32xf32>
    %13 = arith.truncf %12 : vector<16x32xf32> to vector<16x32xbf16>
    %c0_6 = arith.constant 0 : index
    %c0_7 = arith.constant 0 : index
    %14 = vector.load %arg4[%c0_6, %c0_7] : memref<16x32xbf16, #tpu.memory_space<vmem>>, vector<16x32xbf16>
    tpu.vector_store %arg4[%c0_6, %c0_7], %13 {strides = array<i32>} : memref<16x32xbf16, #tpu.memory_space<vmem>>, vector<16x32xbf16>,
    return
  }
  func.func @transform_0(%arg0: i32) -> (i32, i32) {
    %c0_i32 = arith.constant 0 : i32
    %c0_i32_0 = arith.constant 0 : i32
    return %arg0, %c0_i32 : i32, i32
  }
  func.func @transform_1(%arg0: i32) -> (i32, i32) {
    %c0_i32 = arith.constant 0 : i32
    %c0_i32_0 = arith.constant 0 : i32
    %c0_i32_1 = arith.constant 0 : i32
    return %c0_i32, %c0_i32_0 : i32, i32
  }
  func.func @transform_2(%arg0: i32) -> (i32, i32) {
    %c0_i32 = arith.constant 0 : i32
    %c0_i32_0 = arith.constant 0 : i32
    %c0_i32_1 = arith.constant 0 : i32
    return %c0_i32, %c0_i32_0 : i32, i32
  }
  func.func @transform_3(%arg0: i32) -> (i32, i32) {
    %c0_i32 = arith.constant 0 : i32
    %c0_i32_0 = arith.constant 0 : i32
    return %arg0, %c0_i32 : i32, i32
  }
}

module attributes {stable_mosaic.version = 11 : i64} {
  func.func @_conv_tap_kernel(%arg0: i32, %arg1: i32, %arg2: memref<1x6x6x32xbf16, #tpu.memory_space<vmem>>, %arg3: memref<16x1x32xbf16, #tpu.memory_space<vmem>>, %arg4: memref<1x1xf32, #tpu.memory_space<vmem>>, %arg5: memref<1x3x3x1xf32, #tpu.memory_space<vmem>>) attributes {dimension_semantics = [#tpu.dimension_semantics<parallel>, #tpu.dimension_semantics<parallel>], iteration_bounds = array<i64: 2, 1>, scalar_prefetch = 0 : i64, scratch_operands = 0 : i64, tpu.core_type = #tpu.core_type<tc>, window_params = [{transform_indices = @transform_0, window_bounds = array<i64: 1, 6, 6, 32>}, {pipeline_mode = #tpu.pipeline_mode<synchronous>, transform_indices = @transform_1, window_bounds = array<i64: 16, 1, 32>}, {pipeline_mode = #tpu.pipeline_mode<synchronous>, transform_indices = @transform_2, window_bounds = array<i64: 1, 1>}, {transform_indices = @transform_3, window_bounds = array<i64: 1, 3, 3, 1>}]} {
    %c3_i32 = arith.constant 3 : i32
    %0 = arith.muli %arg1, %c3_i32 : i32
    %c0_i32 = arith.constant 0 : i32
    %1 = arith.addi %0, %c0_i32 : i32
    %c0_i32_0 = arith.constant 0 : i32
    %2 = arith.addi %1, %c0_i32_0 : i32
    %c0 = arith.constant 0 : index
    %3 = arith.index_cast %2 : i32 to index
    %c0_1 = arith.constant 0 : index
    %c0_2 = arith.constant 0 : index
    %4 = vector.load %arg2[%c0, %3, %c0_1, %c0_2] : memref<1x6x6x32xbf16, #tpu.memory_space<vmem>>, vector<1x1x3x32xbf16>
    %5 = vector.shape_cast %4 : vector<1x1x3x32xbf16> to vector<3x32xbf16>
    %c0_3 = arith.constant 0 : index
    %c0_4 = arith.constant 0 : index
    %c0_5 = arith.constant 0 : index
    %6 = vector.load %arg3[%c0_3, %c0_4, %c0_5] : memref<16x1x32xbf16, #tpu.memory_space<vmem>>, vector<1x1x32xbf16>
    %7 = vector.shape_cast %6 : vector<1x1x32xbf16> to vector<1x32xbf16>
    %8 = arith.extf %7 : vector<1x32xbf16> to vector<1x32xf32>
    %9 = arith.extf %5 : vector<3x32xbf16> to vector<3x32xf32>
    %10 = vector.broadcast %8 : vector<1x32xf32> to vector<3x32xf32>
    %11 = arith.mulf %9, %10 : vector<3x32xf32>
    %cst = arith.constant dense<0.000000e+00> : vector<3xf32>
    %12 = vector.multi_reduction <add>, %11, %cst [1] : vector<3x32xf32> to vector<3xf32>
    %13 = vector.shape_cast %12 : vector<3xf32> to vector<3x1xf32>
    %c0_i32_6 = arith.constant 0 : i32
    %14 = arith.addi %0, %c0_i32_6 : i32
    %c0_i32_7 = arith.constant 0 : i32
    %15 = arith.addi %14, %c0_i32_7 : i32
    %c0_8 = arith.constant 0 : index
    %16 = arith.index_cast %15 : i32 to index
    %c1 = arith.constant 1 : index
    %c0_9 = arith.constant 0 : index
    %17 = vector.load %arg2[%c0_8, %16, %c1, %c0_9] : memref<1x6x6x32xbf16, #tpu.memory_space<vmem>>, vector<1x1x3x32xbf16>
    %18 = vector.shape_cast %17 : vector<1x1x3x32xbf16> to vector<3x32xbf16>
    %c1_10 = arith.constant 1 : index
    %c0_11 = arith.constant 0 : index
    %c0_12 = arith.constant 0 : index
    %19 = vector.load %arg3[%c1_10, %c0_11, %c0_12] : memref<16x1x32xbf16, #tpu.memory_space<vmem>>, vector<1x1x32xbf16>
    %20 = vector.shape_cast %19 : vector<1x1x32xbf16> to vector<1x32xbf16>
    %21 = arith.extf %20 : vector<1x32xbf16> to vector<1x32xf32>
    %22 = arith.extf %18 : vector<3x32xbf16> to vector<3x32xf32>
    %23 = vector.broadcast %21 : vector<1x32xf32> to vector<3x32xf32>
    %24 = arith.mulf %22, %23 : vector<3x32xf32>
    %cst_13 = arith.constant dense<0.000000e+00> : vector<3xf32>
    %25 = vector.multi_reduction <add>, %24, %cst_13 [1] : vector<3x32xf32> to vector<3xf32>
    %26 = vector.shape_cast %25 : vector<3xf32> to vector<3x1xf32>
    %27 = arith.addf %13, %26 : vector<3x1xf32>
    %c0_i32_14 = arith.constant 0 : i32
    %28 = arith.addi %0, %c0_i32_14 : i32
    %c0_i32_15 = arith.constant 0 : i32
    %29 = arith.addi %28, %c0_i32_15 : i32
    %c0_16 = arith.constant 0 : index
    %30 = arith.index_cast %29 : i32 to index
    %c2 = arith.constant 2 : index
    %c0_17 = arith.constant 0 : index
    %31 = vector.load %arg2[%c0_16, %30, %c2, %c0_17] : memref<1x6x6x32xbf16, #tpu.memory_space<vmem>>, vector<1x1x3x32xbf16>
    %32 = vector.shape_cast %31 : vector<1x1x3x32xbf16> to vector<3x32xbf16>
    %c2_18 = arith.constant 2 : index
    %c0_19 = arith.constant 0 : index
    %c0_20 = arith.constant 0 : index
    %33 = vector.load %arg3[%c2_18, %c0_19, %c0_20] : memref<16x1x32xbf16, #tpu.memory_space<vmem>>, vector<1x1x32xbf16>
    %34 = vector.shape_cast %33 : vector<1x1x32xbf16> to vector<1x32xbf16>
    %35 = arith.extf %34 : vector<1x32xbf16> to vector<1x32xf32>
    %36 = arith.extf %32 : vector<3x32xbf16> to vector<3x32xf32>
    %37 = vector.broadcast %35 : vector<1x32xf32> to vector<3x32xf32>
    %38 = arith.mulf %36, %37 : vector<3x32xf32>
    %cst_21 = arith.constant dense<0.000000e+00> : vector<3xf32>
    %39 = vector.multi_reduction <add>, %38, %cst_21 [1] : vector<3x32xf32> to vector<3xf32>
    %40 = vector.shape_cast %39 : vector<3xf32> to vector<3x1xf32>
    %41 = arith.addf %27, %40 : vector<3x1xf32>
    %c0_i32_22 = arith.constant 0 : i32
    %42 = arith.addi %0, %c0_i32_22 : i32
    %c0_i32_23 = arith.constant 0 : i32
    %43 = arith.addi %42, %c0_i32_23 : i32
    %c0_24 = arith.constant 0 : index
    %44 = arith.index_cast %43 : i32 to index
    %c3 = arith.constant 3 : index
    %c0_25 = arith.constant 0 : index
    %45 = vector.load %arg2[%c0_24, %44, %c3, %c0_25] : memref<1x6x6x32xbf16, #tpu.memory_space<vmem>>, vector<1x1x3x32xbf16>
    %46 = vector.shape_cast %45 : vector<1x1x3x32xbf16> to vector<3x32xbf16>
    %c3_26 = arith.constant 3 : index
    %c0_27 = arith.constant 0 : index
    %c0_28 = arith.constant 0 : index
    %47 = vector.load %arg3[%c3_26, %c0_27, %c0_28] : memref<16x1x32xbf16, #tpu.memory_space<vmem>>, vector<1x1x32xbf16>
    %48 = vector.shape_cast %47 : vector<1x1x32xbf16> to vector<1x32xbf16>
    %49 = arith.extf %48 : vector<1x32xbf16> to vector<1x32xf32>
    %50 = arith.extf %46 : vector<3x32xbf16> to vector<3x32xf32>
    %51 = vector.broadcast %49 : vector<1x32xf32> to vector<3x32xf32>
    %52 = arith.mulf %50, %51 : vector<3x32xf32>
    %cst_29 = arith.constant dense<0.000000e+00> : vector<3xf32>
    %53 = vector.multi_reduction <add>, %52, %cst_29 [1] : vector<3x32xf32> to vector<3xf32>
    %54 = vector.shape_cast %53 : vector<3xf32> to vector<3x1xf32>
    %55 = arith.addf %41, %54 : vector<3x1xf32>
    %c0_i32_30 = arith.constant 0 : i32
    %56 = arith.addi %0, %c0_i32_30 : i32
    %c1_i32 = arith.constant 1 : i32
    %57 = arith.addi %56, %c1_i32 : i32
    %c0_31 = arith.constant 0 : index
    %58 = arith.index_cast %57 : i32 to index
    %c0_32 = arith.constant 0 : index
    %c0_33 = arith.constant 0 : index
    %59 = vector.load %arg2[%c0_31, %58, %c0_32, %c0_33] : memref<1x6x6x32xbf16, #tpu.memory_space<vmem>>, vector<1x1x3x32xbf16>
    %60 = vector.shape_cast %59 : vector<1x1x3x32xbf16> to vector<3x32xbf16>
    %c4 = arith.constant 4 : index
    %c0_34 = arith.constant 0 : index
    %c0_35 = arith.constant 0 : index
    %61 = vector.load %arg3[%c4, %c0_34, %c0_35] : memref<16x1x32xbf16, #tpu.memory_space<vmem>>, vector<1x1x32xbf16>
    %62 = vector.shape_cast %61 : vector<1x1x32xbf16> to vector<1x32xbf16>
    %63 = arith.extf %62 : vector<1x32xbf16> to vector<1x32xf32>
    %64 = arith.extf %60 : vector<3x32xbf16> to vector<3x32xf32>
    %65 = vector.broadcast %63 : vector<1x32xf32> to vector<3x32xf32>
    %66 = arith.mulf %64, %65 : vector<3x32xf32>
    %cst_36 = arith.constant dense<0.000000e+00> : vector<3xf32>
    %67 = vector.multi_reduction <add>, %66, %cst_36 [1] : vector<3x32xf32> to vector<3xf32>
    %68 = vector.shape_cast %67 : vector<3xf32> to vector<3x1xf32>
    %69 = arith.addf %55, %68 : vector<3x1xf32>
    %c0_i32_37 = arith.constant 0 : i32
    %70 = arith.addi %0, %c0_i32_37 : i32
    %c1_i32_38 = arith.constant 1 : i32
    %71 = arith.addi %70, %c1_i32_38 : i32
    %c0_39 = arith.constant 0 : index
    %72 = arith.index_cast %71 : i32 to index
    %c1_40 = arith.constant 1 : index
    %c0_41 = arith.constant 0 : index
    %73 = vector.load %arg2[%c0_39, %72, %c1_40, %c0_41] : memref<1x6x6x32xbf16, #tpu.memory_space<vmem>>, vector<1x1x3x32xbf16>
    %74 = vector.shape_cast %73 : vector<1x1x3x32xbf16> to vector<3x32xbf16>
    %c5 = arith.constant 5 : index
    %c0_42 = arith.constant 0 : index
    %c0_43 = arith.constant 0 : index
    %75 = vector.load %arg3[%c5, %c0_42, %c0_43] : memref<16x1x32xbf16, #tpu.memory_space<vmem>>, vector<1x1x32xbf16>
    %76 = vector.shape_cast %75 : vector<1x1x32xbf16> to vector<1x32xbf16>
    %77 = arith.extf %76 : vector<1x32xbf16> to vector<1x32xf32>
    %78 = arith.extf %74 : vector<3x32xbf16> to vector<3x32xf32>
    %79 = vector.broadcast %77 : vector<1x32xf32> to vector<3x32xf32>
    %80 = arith.mulf %78, %79 : vector<3x32xf32>
    %cst_44 = arith.constant dense<0.000000e+00> : vector<3xf32>
    %81 = vector.multi_reduction <add>, %80, %cst_44 [1] : vector<3x32xf32> to vector<3xf32>
    %82 = vector.shape_cast %81 : vector<3xf32> to vector<3x1xf32>
    %83 = arith.addf %69, %82 : vector<3x1xf32>
    %c0_i32_45 = arith.constant 0 : i32
    %84 = arith.addi %0, %c0_i32_45 : i32
    %c1_i32_46 = arith.constant 1 : i32
    %85 = arith.addi %84, %c1_i32_46 : i32
    %c0_47 = arith.constant 0 : index
    %86 = arith.index_cast %85 : i32 to index
    %c2_48 = arith.constant 2 : index
    %c0_49 = arith.constant 0 : index
    %87 = vector.load %arg2[%c0_47, %86, %c2_48, %c0_49] : memref<1x6x6x32xbf16, #tpu.memory_space<vmem>>, vector<1x1x3x32xbf16>
    %88 = vector.shape_cast %87 : vector<1x1x3x32xbf16> to vector<3x32xbf16>
    %c6 = arith.constant 6 : index
    %c0_50 = arith.constant 0 : index
    %c0_51 = arith.constant 0 : index
    %89 = vector.load %arg3[%c6, %c0_50, %c0_51] : memref<16x1x32xbf16, #tpu.memory_space<vmem>>, vector<1x1x32xbf16>
    %90 = vector.shape_cast %89 : vector<1x1x32xbf16> to vector<1x32xbf16>
    %91 = arith.extf %90 : vector<1x32xbf16> to vector<1x32xf32>
    %92 = arith.extf %88 : vector<3x32xbf16> to vector<3x32xf32>
    %93 = vector.broadcast %91 : vector<1x32xf32> to vector<3x32xf32>
    %94 = arith.mulf %92, %93 : vector<3x32xf32>
    %cst_52 = arith.constant dense<0.000000e+00> : vector<3xf32>
    %95 = vector.multi_reduction <add>, %94, %cst_52 [1] : vector<3x32xf32> to vector<3xf32>
    %96 = vector.shape_cast %95 : vector<3xf32> to vector<3x1xf32>
    %97 = arith.addf %83, %96 : vector<3x1xf32>
    %c0_i32_53 = arith.constant 0 : i32
    %98 = arith.addi %0, %c0_i32_53 : i32
    %c1_i32_54 = arith.constant 1 : i32
    %99 = arith.addi %98, %c1_i32_54 : i32
    %c0_55 = arith.constant 0 : index
    %100 = arith.index_cast %99 : i32 to index
    %c3_56 = arith.constant 3 : index
    %c0_57 = arith.constant 0 : index
    %101 = vector.load %arg2[%c0_55, %100, %c3_56, %c0_57] : memref<1x6x6x32xbf16, #tpu.memory_space<vmem>>, vector<1x1x3x32xbf16>
    %102 = vector.shape_cast %101 : vector<1x1x3x32xbf16> to vector<3x32xbf16>
    %c7 = arith.constant 7 : index
    %c0_58 = arith.constant 0 : index
    %c0_59 = arith.constant 0 : index
    %103 = vector.load %arg3[%c7, %c0_58, %c0_59] : memref<16x1x32xbf16, #tpu.memory_space<vmem>>, vector<1x1x32xbf16>
    %104 = vector.shape_cast %103 : vector<1x1x32xbf16> to vector<1x32xbf16>
    %105 = arith.extf %104 : vector<1x32xbf16> to vector<1x32xf32>
    %106 = arith.extf %102 : vector<3x32xbf16> to vector<3x32xf32>
    %107 = vector.broadcast %105 : vector<1x32xf32> to vector<3x32xf32>
    %108 = arith.mulf %106, %107 : vector<3x32xf32>
    %cst_60 = arith.constant dense<0.000000e+00> : vector<3xf32>
    %109 = vector.multi_reduction <add>, %108, %cst_60 [1] : vector<3x32xf32> to vector<3xf32>
    %110 = vector.shape_cast %109 : vector<3xf32> to vector<3x1xf32>
    %111 = arith.addf %97, %110 : vector<3x1xf32>
    %c0_i32_61 = arith.constant 0 : i32
    %112 = arith.addi %0, %c0_i32_61 : i32
    %c2_i32 = arith.constant 2 : i32
    %113 = arith.addi %112, %c2_i32 : i32
    %c0_62 = arith.constant 0 : index
    %114 = arith.index_cast %113 : i32 to index
    %c0_63 = arith.constant 0 : index
    %c0_64 = arith.constant 0 : index
    %115 = vector.load %arg2[%c0_62, %114, %c0_63, %c0_64] : memref<1x6x6x32xbf16, #tpu.memory_space<vmem>>, vector<1x1x3x32xbf16>
    %116 = vector.shape_cast %115 : vector<1x1x3x32xbf16> to vector<3x32xbf16>
    %c8 = arith.constant 8 : index
    %c0_65 = arith.constant 0 : index
    %c0_66 = arith.constant 0 : index
    %117 = vector.load %arg3[%c8, %c0_65, %c0_66] : memref<16x1x32xbf16, #tpu.memory_space<vmem>>, vector<1x1x32xbf16>
    %118 = vector.shape_cast %117 : vector<1x1x32xbf16> to vector<1x32xbf16>
    %119 = arith.extf %118 : vector<1x32xbf16> to vector<1x32xf32>
    %120 = arith.extf %116 : vector<3x32xbf16> to vector<3x32xf32>
    %121 = vector.broadcast %119 : vector<1x32xf32> to vector<3x32xf32>
    %122 = arith.mulf %120, %121 : vector<3x32xf32>
    %cst_67 = arith.constant dense<0.000000e+00> : vector<3xf32>
    %123 = vector.multi_reduction <add>, %122, %cst_67 [1] : vector<3x32xf32> to vector<3xf32>
    %124 = vector.shape_cast %123 : vector<3xf32> to vector<3x1xf32>
    %125 = arith.addf %111, %124 : vector<3x1xf32>
    %c0_i32_68 = arith.constant 0 : i32
    %126 = arith.addi %0, %c0_i32_68 : i32
    %c2_i32_69 = arith.constant 2 : i32
    %127 = arith.addi %126, %c2_i32_69 : i32
    %c0_70 = arith.constant 0 : index
    %128 = arith.index_cast %127 : i32 to index
    %c1_71 = arith.constant 1 : index
    %c0_72 = arith.constant 0 : index
    %129 = vector.load %arg2[%c0_70, %128, %c1_71, %c0_72] : memref<1x6x6x32xbf16, #tpu.memory_space<vmem>>, vector<1x1x3x32xbf16>
    %130 = vector.shape_cast %129 : vector<1x1x3x32xbf16> to vector<3x32xbf16>
    %c9 = arith.constant 9 : index
    %c0_73 = arith.constant 0 : index
    %c0_74 = arith.constant 0 : index
    %131 = vector.load %arg3[%c9, %c0_73, %c0_74] : memref<16x1x32xbf16, #tpu.memory_space<vmem>>, vector<1x1x32xbf16>
    %132 = vector.shape_cast %131 : vector<1x1x32xbf16> to vector<1x32xbf16>
    %133 = arith.extf %132 : vector<1x32xbf16> to vector<1x32xf32>
    %134 = arith.extf %130 : vector<3x32xbf16> to vector<3x32xf32>
    %135 = vector.broadcast %133 : vector<1x32xf32> to vector<3x32xf32>
    %136 = arith.mulf %134, %135 : vector<3x32xf32>
    %cst_75 = arith.constant dense<0.000000e+00> : vector<3xf32>
    %137 = vector.multi_reduction <add>, %136, %cst_75 [1] : vector<3x32xf32> to vector<3xf32>
    %138 = vector.shape_cast %137 : vector<3xf32> to vector<3x1xf32>
    %139 = arith.addf %125, %138 : vector<3x1xf32>
    %c0_i32_76 = arith.constant 0 : i32
    %140 = arith.addi %0, %c0_i32_76 : i32
    %c2_i32_77 = arith.constant 2 : i32
    %141 = arith.addi %140, %c2_i32_77 : i32
    %c0_78 = arith.constant 0 : index
    %142 = arith.index_cast %141 : i32 to index
    %c2_79 = arith.constant 2 : index
    %c0_80 = arith.constant 0 : index
    %143 = vector.load %arg2[%c0_78, %142, %c2_79, %c0_80] : memref<1x6x6x32xbf16, #tpu.memory_space<vmem>>, vector<1x1x3x32xbf16>
    %144 = vector.shape_cast %143 : vector<1x1x3x32xbf16> to vector<3x32xbf16>
    %c10 = arith.constant 10 : index
    %c0_81 = arith.constant 0 : index
    %c0_82 = arith.constant 0 : index
    %145 = vector.load %arg3[%c10, %c0_81, %c0_82] : memref<16x1x32xbf16, #tpu.memory_space<vmem>>, vector<1x1x32xbf16>
    %146 = vector.shape_cast %145 : vector<1x1x32xbf16> to vector<1x32xbf16>
    %147 = arith.extf %146 : vector<1x32xbf16> to vector<1x32xf32>
    %148 = arith.extf %144 : vector<3x32xbf16> to vector<3x32xf32>
    %149 = vector.broadcast %147 : vector<1x32xf32> to vector<3x32xf32>
    %150 = arith.mulf %148, %149 : vector<3x32xf32>
    %cst_83 = arith.constant dense<0.000000e+00> : vector<3xf32>
    %151 = vector.multi_reduction <add>, %150, %cst_83 [1] : vector<3x32xf32> to vector<3xf32>
    %152 = vector.shape_cast %151 : vector<3xf32> to vector<3x1xf32>
    %153 = arith.addf %139, %152 : vector<3x1xf32>
    %c0_i32_84 = arith.constant 0 : i32
    %154 = arith.addi %0, %c0_i32_84 : i32
    %c2_i32_85 = arith.constant 2 : i32
    %155 = arith.addi %154, %c2_i32_85 : i32
    %c0_86 = arith.constant 0 : index
    %156 = arith.index_cast %155 : i32 to index
    %c3_87 = arith.constant 3 : index
    %c0_88 = arith.constant 0 : index
    %157 = vector.load %arg2[%c0_86, %156, %c3_87, %c0_88] : memref<1x6x6x32xbf16, #tpu.memory_space<vmem>>, vector<1x1x3x32xbf16>
    %158 = vector.shape_cast %157 : vector<1x1x3x32xbf16> to vector<3x32xbf16>
    %c11 = arith.constant 11 : index
    %c0_89 = arith.constant 0 : index
    %c0_90 = arith.constant 0 : index
    %159 = vector.load %arg3[%c11, %c0_89, %c0_90] : memref<16x1x32xbf16, #tpu.memory_space<vmem>>, vector<1x1x32xbf16>
    %160 = vector.shape_cast %159 : vector<1x1x32xbf16> to vector<1x32xbf16>
    %161 = arith.extf %160 : vector<1x32xbf16> to vector<1x32xf32>
    %162 = arith.extf %158 : vector<3x32xbf16> to vector<3x32xf32>
    %163 = vector.broadcast %161 : vector<1x32xf32> to vector<3x32xf32>
    %164 = arith.mulf %162, %163 : vector<3x32xf32>
    %cst_91 = arith.constant dense<0.000000e+00> : vector<3xf32>
    %165 = vector.multi_reduction <add>, %164, %cst_91 [1] : vector<3x32xf32> to vector<3xf32>
    %166 = vector.shape_cast %165 : vector<3xf32> to vector<3x1xf32>
    %167 = arith.addf %153, %166 : vector<3x1xf32>
    %c0_i32_92 = arith.constant 0 : i32
    %168 = arith.addi %0, %c0_i32_92 : i32
    %c3_i32_93 = arith.constant 3 : i32
    %169 = arith.addi %168, %c3_i32_93 : i32
    %c0_94 = arith.constant 0 : index
    %170 = arith.index_cast %169 : i32 to index
    %c0_95 = arith.constant 0 : index
    %c0_96 = arith.constant 0 : index
    %171 = vector.load %arg2[%c0_94, %170, %c0_95, %c0_96] : memref<1x6x6x32xbf16, #tpu.memory_space<vmem>>, vector<1x1x3x32xbf16>
    %172 = vector.shape_cast %171 : vector<1x1x3x32xbf16> to vector<3x32xbf16>
    %c12 = arith.constant 12 : index
    %c0_97 = arith.constant 0 : index
    %c0_98 = arith.constant 0 : index
    %173 = vector.load %arg3[%c12, %c0_97, %c0_98] : memref<16x1x32xbf16, #tpu.memory_space<vmem>>, vector<1x1x32xbf16>
    %174 = vector.shape_cast %173 : vector<1x1x32xbf16> to vector<1x32xbf16>
    %175 = arith.extf %174 : vector<1x32xbf16> to vector<1x32xf32>
    %176 = arith.extf %172 : vector<3x32xbf16> to vector<3x32xf32>
    %177 = vector.broadcast %175 : vector<1x32xf32> to vector<3x32xf32>
    %178 = arith.mulf %176, %177 : vector<3x32xf32>
    %cst_99 = arith.constant dense<0.000000e+00> : vector<3xf32>
    %179 = vector.multi_reduction <add>, %178, %cst_99 [1] : vector<3x32xf32> to vector<3xf32>
    %180 = vector.shape_cast %179 : vector<3xf32> to vector<3x1xf32>
    %181 = arith.addf %167, %180 : vector<3x1xf32>
    %c0_i32_100 = arith.constant 0 : i32
    %182 = arith.addi %0, %c0_i32_100 : i32
    %c3_i32_101 = arith.constant 3 : i32
    %183 = arith.addi %182, %c3_i32_101 : i32
    %c0_102 = arith.constant 0 : index
    %184 = arith.index_cast %183 : i32 to index
    %c1_103 = arith.constant 1 : index
    %c0_104 = arith.constant 0 : index
    %185 = vector.load %arg2[%c0_102, %184, %c1_103, %c0_104] : memref<1x6x6x32xbf16, #tpu.memory_space<vmem>>, vector<1x1x3x32xbf16>
    %186 = vector.shape_cast %185 : vector<1x1x3x32xbf16> to vector<3x32xbf16>
    %c13 = arith.constant 13 : index
    %c0_105 = arith.constant 0 : index
    %c0_106 = arith.constant 0 : index
    %187 = vector.load %arg3[%c13, %c0_105, %c0_106] : memref<16x1x32xbf16, #tpu.memory_space<vmem>>, vector<1x1x32xbf16>
    %188 = vector.shape_cast %187 : vector<1x1x32xbf16> to vector<1x32xbf16>
    %189 = arith.extf %188 : vector<1x32xbf16> to vector<1x32xf32>
    %190 = arith.extf %186 : vector<3x32xbf16> to vector<3x32xf32>
    %191 = vector.broadcast %189 : vector<1x32xf32> to vector<3x32xf32>
    %192 = arith.mulf %190, %191 : vector<3x32xf32>
    %cst_107 = arith.constant dense<0.000000e+00> : vector<3xf32>
    %193 = vector.multi_reduction <add>, %192, %cst_107 [1] : vector<3x32xf32> to vector<3xf32>
    %194 = vector.shape_cast %193 : vector<3xf32> to vector<3x1xf32>
    %195 = arith.addf %181, %194 : vector<3x1xf32>
    %c0_i32_108 = arith.constant 0 : i32
    %196 = arith.addi %0, %c0_i32_108 : i32
    %c3_i32_109 = arith.constant 3 : i32
    %197 = arith.addi %196, %c3_i32_109 : i32
    %c0_110 = arith.constant 0 : index
    %198 = arith.index_cast %197 : i32 to index
    %c2_111 = arith.constant 2 : index
    %c0_112 = arith.constant 0 : index
    %199 = vector.load %arg2[%c0_110, %198, %c2_111, %c0_112] : memref<1x6x6x32xbf16, #tpu.memory_space<vmem>>, vector<1x1x3x32xbf16>
    %200 = vector.shape_cast %199 : vector<1x1x3x32xbf16> to vector<3x32xbf16>
    %c14 = arith.constant 14 : index
    %c0_113 = arith.constant 0 : index
    %c0_114 = arith.constant 0 : index
    %201 = vector.load %arg3[%c14, %c0_113, %c0_114] : memref<16x1x32xbf16, #tpu.memory_space<vmem>>, vector<1x1x32xbf16>
    %202 = vector.shape_cast %201 : vector<1x1x32xbf16> to vector<1x32xbf16>
    %203 = arith.extf %202 : vector<1x32xbf16> to vector<1x32xf32>
    %204 = arith.extf %200 : vector<3x32xbf16> to vector<3x32xf32>
    %205 = vector.broadcast %203 : vector<1x32xf32> to vector<3x32xf32>
    %206 = arith.mulf %204, %205 : vector<3x32xf32>
    %cst_115 = arith.constant dense<0.000000e+00> : vector<3xf32>
    %207 = vector.multi_reduction <add>, %206, %cst_115 [1] : vector<3x32xf32> to vector<3xf32>
    %208 = vector.shape_cast %207 : vector<3xf32> to vector<3x1xf32>
    %209 = arith.addf %195, %208 : vector<3x1xf32>
    %c0_i32_116 = arith.constant 0 : i32
    %210 = arith.addi %0, %c0_i32_116 : i32
    %c3_i32_117 = arith.constant 3 : i32
    %211 = arith.addi %210, %c3_i32_117 : i32
    %c0_118 = arith.constant 0 : index
    %212 = arith.index_cast %211 : i32 to index
    %c3_119 = arith.constant 3 : index
    %c0_120 = arith.constant 0 : index
    %213 = vector.load %arg2[%c0_118, %212, %c3_119, %c0_120] : memref<1x6x6x32xbf16, #tpu.memory_space<vmem>>, vector<1x1x3x32xbf16>
    %214 = vector.shape_cast %213 : vector<1x1x3x32xbf16> to vector<3x32xbf16>
    %c15 = arith.constant 15 : index
    %c0_121 = arith.constant 0 : index
    %c0_122 = arith.constant 0 : index
    %215 = vector.load %arg3[%c15, %c0_121, %c0_122] : memref<16x1x32xbf16, #tpu.memory_space<vmem>>, vector<1x1x32xbf16>
    %216 = vector.shape_cast %215 : vector<1x1x32xbf16> to vector<1x32xbf16>
    %217 = arith.extf %216 : vector<1x32xbf16> to vector<1x32xf32>
    %218 = arith.extf %214 : vector<3x32xbf16> to vector<3x32xf32>
    %219 = vector.broadcast %217 : vector<1x32xf32> to vector<3x32xf32>
    %220 = arith.mulf %218, %219 : vector<3x32xf32>
    %cst_123 = arith.constant dense<0.000000e+00> : vector<3xf32>
    %221 = vector.multi_reduction <add>, %220, %cst_123 [1] : vector<3x32xf32> to vector<3xf32>
    %222 = vector.shape_cast %221 : vector<3xf32> to vector<3x1xf32>
    %223 = arith.addf %209, %222 : vector<3x1xf32>
    %c0_124 = arith.constant 0 : index
    %c0_125 = arith.constant 0 : index
    %224 = vector.load %arg4[%c0_124, %c0_125] : memref<1x1xf32, #tpu.memory_space<vmem>>, vector<1x1xf32>
    %225 = vector.broadcast %224 : vector<1x1xf32> to vector<3x1xf32>
    %226 = arith.addf %223, %225 : vector<3x1xf32>
    %c0_126 = arith.constant 0 : index
    %c0_127 = arith.constant 0 : index
    %c0_128 = arith.constant 0 : index
    %c0_129 = arith.constant 0 : index
    %227 = vector.load %arg5[%c0_126, %c0_127, %c0_128, %c0_129] : memref<1x3x3x1xf32, #tpu.memory_space<vmem>>, vector<1x1x3x1xf32>
    %228 = vector.shape_cast %227 : vector<1x1x3x1xf32> to vector<3x1xf32>
    %229 = vector.shape_cast %226 : vector<3x1xf32> to vector<1x1x3x1xf32>
    tpu.vector_store %arg5[%c0_126, %c0_127, %c0_128, %c0_129], %229 {strides = array<i32>} : memref<1x3x3x1xf32, #tpu.memory_space<vmem>>, vector<1x1x3x1xf32>,
    %c1_i32_130 = arith.constant 1 : i32
    %230 = arith.addi %0, %c1_i32_130 : i32
    %c0_i32_131 = arith.constant 0 : i32
    %231 = arith.addi %230, %c0_i32_131 : i32
    %c0_132 = arith.constant 0 : index
    %232 = arith.index_cast %231 : i32 to index
    %c0_133 = arith.constant 0 : index
    %c0_134 = arith.constant 0 : index
    %233 = vector.load %arg2[%c0_132, %232, %c0_133, %c0_134] : memref<1x6x6x32xbf16, #tpu.memory_space<vmem>>, vector<1x1x3x32xbf16>
    %234 = vector.shape_cast %233 : vector<1x1x3x32xbf16> to vector<3x32xbf16>
    %c0_135 = arith.constant 0 : index
    %c0_136 = arith.constant 0 : index
    %c0_137 = arith.constant 0 : index
    %235 = vector.load %arg3[%c0_135, %c0_136, %c0_137] : memref<16x1x32xbf16, #tpu.memory_space<vmem>>, vector<1x1x32xbf16>
    %236 = vector.shape_cast %235 : vector<1x1x32xbf16> to vector<1x32xbf16>
    %237 = arith.extf %236 : vector<1x32xbf16> to vector<1x32xf32>
    %238 = arith.extf %234 : vector<3x32xbf16> to vector<3x32xf32>
    %239 = vector.broadcast %237 : vector<1x32xf32> to vector<3x32xf32>
    %240 = arith.mulf %238, %239 : vector<3x32xf32>
    %cst_138 = arith.constant dense<0.000000e+00> : vector<3xf32>
    %241 = vector.multi_reduction <add>, %240, %cst_138 [1] : vector<3x32xf32> to vector<3xf32>
    %242 = vector.shape_cast %241 : vector<3xf32> to vector<3x1xf32>
    %c1_i32_139 = arith.constant 1 : i32
    %243 = arith.addi %0, %c1_i32_139 : i32
    %c0_i32_140 = arith.constant 0 : i32
    %244 = arith.addi %243, %c0_i32_140 : i32
    %c0_141 = arith.constant 0 : index
    %245 = arith.index_cast %244 : i32 to index
    %c1_142 = arith.constant 1 : index
    %c0_143 = arith.constant 0 : index
    %246 = vector.load %arg2[%c0_141, %245, %c1_142, %c0_143] : memref<1x6x6x32xbf16, #tpu.memory_space<vmem>>, vector<1x1x3x32xbf16>
    %247 = vector.shape_cast %246 : vector<1x1x3x32xbf16> to vector<3x32xbf16>
    %c1_144 = arith.constant 1 : index
    %c0_145 = arith.constant 0 : index
    %c0_146 = arith.constant 0 : index
    %248 = vector.load %arg3[%c1_144, %c0_145, %c0_146] : memref<16x1x32xbf16, #tpu.memory_space<vmem>>, vector<1x1x32xbf16>
    %249 = vector.shape_cast %248 : vector<1x1x32xbf16> to vector<1x32xbf16>
    %250 = arith.extf %249 : vector<1x32xbf16> to vector<1x32xf32>
    %251 = arith.extf %247 : vector<3x32xbf16> to vector<3x32xf32>
    %252 = vector.broadcast %250 : vector<1x32xf32> to vector<3x32xf32>
    %253 = arith.mulf %251, %252 : vector<3x32xf32>
    %cst_147 = arith.constant dense<0.000000e+00> : vector<3xf32>
    %254 = vector.multi_reduction <add>, %253, %cst_147 [1] : vector<3x32xf32> to vector<3xf32>
    %255 = vector.shape_cast %254 : vector<3xf32> to vector<3x1xf32>
    %256 = arith.addf %242, %255 : vector<3x1xf32>
    %c1_i32_148 = arith.constant 1 : i32
    %257 = arith.addi %0, %c1_i32_148 : i32
    %c0_i32_149 = arith.constant 0 : i32
    %258 = arith.addi %257, %c0_i32_149 : i32
    %c0_150 = arith.constant 0 : index
    %259 = arith.index_cast %258 : i32 to index
    %c2_151 = arith.constant 2 : index
    %c0_152 = arith.constant 0 : index
    %260 = vector.load %arg2[%c0_150, %259, %c2_151, %c0_152] : memref<1x6x6x32xbf16, #tpu.memory_space<vmem>>, vector<1x1x3x32xbf16>
    %261 = vector.shape_cast %260 : vector<1x1x3x32xbf16> to vector<3x32xbf16>
    %c2_153 = arith.constant 2 : index
    %c0_154 = arith.constant 0 : index
    %c0_155 = arith.constant 0 : index
    %262 = vector.load %arg3[%c2_153, %c0_154, %c0_155] : memref<16x1x32xbf16, #tpu.memory_space<vmem>>, vector<1x1x32xbf16>
    %263 = vector.shape_cast %262 : vector<1x1x32xbf16> to vector<1x32xbf16>
    %264 = arith.extf %263 : vector<1x32xbf16> to vector<1x32xf32>
    %265 = arith.extf %261 : vector<3x32xbf16> to vector<3x32xf32>
    %266 = vector.broadcast %264 : vector<1x32xf32> to vector<3x32xf32>
    %267 = arith.mulf %265, %266 : vector<3x32xf32>
    %cst_156 = arith.constant dense<0.000000e+00> : vector<3xf32>
    %268 = vector.multi_reduction <add>, %267, %cst_156 [1] : vector<3x32xf32> to vector<3xf32>
    %269 = vector.shape_cast %268 : vector<3xf32> to vector<3x1xf32>
    %270 = arith.addf %256, %269 : vector<3x1xf32>
    %c1_i32_157 = arith.constant 1 : i32
    %271 = arith.addi %0, %c1_i32_157 : i32
    %c0_i32_158 = arith.constant 0 : i32
    %272 = arith.addi %271, %c0_i32_158 : i32
    %c0_159 = arith.constant 0 : index
    %273 = arith.index_cast %272 : i32 to index
    %c3_160 = arith.constant 3 : index
    %c0_161 = arith.constant 0 : index
    %274 = vector.load %arg2[%c0_159, %273, %c3_160, %c0_161] : memref<1x6x6x32xbf16, #tpu.memory_space<vmem>>, vector<1x1x3x32xbf16>
    %275 = vector.shape_cast %274 : vector<1x1x3x32xbf16> to vector<3x32xbf16>
    %c3_162 = arith.constant 3 : index
    %c0_163 = arith.constant 0 : index
    %c0_164 = arith.constant 0 : index
    %276 = vector.load %arg3[%c3_162, %c0_163, %c0_164] : memref<16x1x32xbf16, #tpu.memory_space<vmem>>, vector<1x1x32xbf16>
    %277 = vector.shape_cast %276 : vector<1x1x32xbf16> to vector<1x32xbf16>
    %278 = arith.extf %277 : vector<1x32xbf16> to vector<1x32xf32>
    %279 = arith.extf %275 : vector<3x32xbf16> to vector<3x32xf32>
    %280 = vector.broadcast %278 : vector<1x32xf32> to vector<3x32xf32>
    %281 = arith.mulf %279, %280 : vector<3x32xf32>
    %cst_165 = arith.constant dense<0.000000e+00> : vector<3xf32>
    %282 = vector.multi_reduction <add>, %281, %cst_165 [1] : vector<3x32xf32> to vector<3xf32>
    %283 = vector.shape_cast %282 : vector<3xf32> to vector<3x1xf32>
    %284 = arith.addf %270, %283 : vector<3x1xf32>
    %c1_i32_166 = arith.constant 1 : i32
    %285 = arith.addi %0, %c1_i32_166 : i32
    %c1_i32_167 = arith.constant 1 : i32
    %286 = arith.addi %285, %c1_i32_167 : i32
    %c0_168 = arith.constant 0 : index
    %287 = arith.index_cast %286 : i32 to index
    %c0_169 = arith.constant 0 : index
    %c0_170 = arith.constant 0 : index
    %288 = vector.load %arg2[%c0_168, %287, %c0_169, %c0_170] : memref<1x6x6x32xbf16, #tpu.memory_space<vmem>>, vector<1x1x3x32xbf16>
    %289 = vector.shape_cast %288 : vector<1x1x3x32xbf16> to vector<3x32xbf16>
    %c4_171 = arith.constant 4 : index
    %c0_172 = arith.constant 0 : index
    %c0_173 = arith.constant 0 : index
    %290 = vector.load %arg3[%c4_171, %c0_172, %c0_173] : memref<16x1x32xbf16, #tpu.memory_space<vmem>>, vector<1x1x32xbf16>
    %291 = vector.shape_cast %290 : vector<1x1x32xbf16> to vector<1x32xbf16>
    %292 = arith.extf %291 : vector<1x32xbf16> to vector<1x32xf32>
    %293 = arith.extf %289 : vector<3x32xbf16> to vector<3x32xf32>
    %294 = vector.broadcast %292 : vector<1x32xf32> to vector<3x32xf32>
    %295 = arith.mulf %293, %294 : vector<3x32xf32>
    %cst_174 = arith.constant dense<0.000000e+00> : vector<3xf32>
    %296 = vector.multi_reduction <add>, %295, %cst_174 [1] : vector<3x32xf32> to vector<3xf32>
    %297 = vector.shape_cast %296 : vector<3xf32> to vector<3x1xf32>
    %298 = arith.addf %284, %297 : vector<3x1xf32>
    %c1_i32_175 = arith.constant 1 : i32
    %299 = arith.addi %0, %c1_i32_175 : i32
    %c1_i32_176 = arith.constant 1 : i32
    %300 = arith.addi %299, %c1_i32_176 : i32
    %c0_177 = arith.constant 0 : index
    %301 = arith.index_cast %300 : i32 to index
    %c1_178 = arith.constant 1 : index
    %c0_179 = arith.constant 0 : index
    %302 = vector.load %arg2[%c0_177, %301, %c1_178, %c0_179] : memref<1x6x6x32xbf16, #tpu.memory_space<vmem>>, vector<1x1x3x32xbf16>
    %303 = vector.shape_cast %302 : vector<1x1x3x32xbf16> to vector<3x32xbf16>
    %c5_180 = arith.constant 5 : index
    %c0_181 = arith.constant 0 : index
    %c0_182 = arith.constant 0 : index
    %304 = vector.load %arg3[%c5_180, %c0_181, %c0_182] : memref<16x1x32xbf16, #tpu.memory_space<vmem>>, vector<1x1x32xbf16>
    %305 = vector.shape_cast %304 : vector<1x1x32xbf16> to vector<1x32xbf16>
    %306 = arith.extf %305 : vector<1x32xbf16> to vector<1x32xf32>
    %307 = arith.extf %303 : vector<3x32xbf16> to vector<3x32xf32>
    %308 = vector.broadcast %306 : vector<1x32xf32> to vector<3x32xf32>
    %309 = arith.mulf %307, %308 : vector<3x32xf32>
    %cst_183 = arith.constant dense<0.000000e+00> : vector<3xf32>
    %310 = vector.multi_reduction <add>, %309, %cst_183 [1] : vector<3x32xf32> to vector<3xf32>
    %311 = vector.shape_cast %310 : vector<3xf32> to vector<3x1xf32>
    %312 = arith.addf %298, %311 : vector<3x1xf32>
    %c1_i32_184 = arith.constant 1 : i32
    %313 = arith.addi %0, %c1_i32_184 : i32
    %c1_i32_185 = arith.constant 1 : i32
    %314 = arith.addi %313, %c1_i32_185 : i32
    %c0_186 = arith.constant 0 : index
    %315 = arith.index_cast %314 : i32 to index
    %c2_187 = arith.constant 2 : index
    %c0_188 = arith.constant 0 : index
    %316 = vector.load %arg2[%c0_186, %315, %c2_187, %c0_188] : memref<1x6x6x32xbf16, #tpu.memory_space<vmem>>, vector<1x1x3x32xbf16>
    %317 = vector.shape_cast %316 : vector<1x1x3x32xbf16> to vector<3x32xbf16>
    %c6_189 = arith.constant 6 : index
    %c0_190 = arith.constant 0 : index
    %c0_191 = arith.constant 0 : index
    %318 = vector.load %arg3[%c6_189, %c0_190, %c0_191] : memref<16x1x32xbf16, #tpu.memory_space<vmem>>, vector<1x1x32xbf16>
    %319 = vector.shape_cast %318 : vector<1x1x32xbf16> to vector<1x32xbf16>
    %320 = arith.extf %319 : vector<1x32xbf16> to vector<1x32xf32>
    %321 = arith.extf %317 : vector<3x32xbf16> to vector<3x32xf32>
    %322 = vector.broadcast %320 : vector<1x32xf32> to vector<3x32xf32>
    %323 = arith.mulf %321, %322 : vector<3x32xf32>
    %cst_192 = arith.constant dense<0.000000e+00> : vector<3xf32>
    %324 = vector.multi_reduction <add>, %323, %cst_192 [1] : vector<3x32xf32> to vector<3xf32>
    %325 = vector.shape_cast %324 : vector<3xf32> to vector<3x1xf32>
    %326 = arith.addf %312, %325 : vector<3x1xf32>
    %c1_i32_193 = arith.constant 1 : i32
    %327 = arith.addi %0, %c1_i32_193 : i32
    %c1_i32_194 = arith.constant 1 : i32
    %328 = arith.addi %327, %c1_i32_194 : i32
    %c0_195 = arith.constant 0 : index
    %329 = arith.index_cast %328 : i32 to index
    %c3_196 = arith.constant 3 : index
    %c0_197 = arith.constant 0 : index
    %330 = vector.load %arg2[%c0_195, %329, %c3_196, %c0_197] : memref<1x6x6x32xbf16, #tpu.memory_space<vmem>>, vector<1x1x3x32xbf16>
    %331 = vector.shape_cast %330 : vector<1x1x3x32xbf16> to vector<3x32xbf16>
    %c7_198 = arith.constant 7 : index
    %c0_199 = arith.constant 0 : index
    %c0_200 = arith.constant 0 : index
    %332 = vector.load %arg3[%c7_198, %c0_199, %c0_200] : memref<16x1x32xbf16, #tpu.memory_space<vmem>>, vector<1x1x32xbf16>
    %333 = vector.shape_cast %332 : vector<1x1x32xbf16> to vector<1x32xbf16>
    %334 = arith.extf %333 : vector<1x32xbf16> to vector<1x32xf32>
    %335 = arith.extf %331 : vector<3x32xbf16> to vector<3x32xf32>
    %336 = vector.broadcast %334 : vector<1x32xf32> to vector<3x32xf32>
    %337 = arith.mulf %335, %336 : vector<3x32xf32>
    %cst_201 = arith.constant dense<0.000000e+00> : vector<3xf32>
    %338 = vector.multi_reduction <add>, %337, %cst_201 [1] : vector<3x32xf32> to vector<3xf32>
    %339 = vector.shape_cast %338 : vector<3xf32> to vector<3x1xf32>
    %340 = arith.addf %326, %339 : vector<3x1xf32>
    %c1_i32_202 = arith.constant 1 : i32
    %341 = arith.addi %0, %c1_i32_202 : i32
    %c2_i32_203 = arith.constant 2 : i32
    %342 = arith.addi %341, %c2_i32_203 : i32
    %c0_204 = arith.constant 0 : index
    %343 = arith.index_cast %342 : i32 to index
    %c0_205 = arith.constant 0 : index
    %c0_206 = arith.constant 0 : index
    %344 = vector.load %arg2[%c0_204, %343, %c0_205, %c0_206] : memref<1x6x6x32xbf16, #tpu.memory_space<vmem>>, vector<1x1x3x32xbf16>
    %345 = vector.shape_cast %344 : vector<1x1x3x32xbf16> to vector<3x32xbf16>
    %c8_207 = arith.constant 8 : index
    %c0_208 = arith.constant 0 : index
    %c0_209 = arith.constant 0 : index
    %346 = vector.load %arg3[%c8_207, %c0_208, %c0_209] : memref<16x1x32xbf16, #tpu.memory_space<vmem>>, vector<1x1x32xbf16>
    %347 = vector.shape_cast %346 : vector<1x1x32xbf16> to vector<1x32xbf16>
    %348 = arith.extf %347 : vector<1x32xbf16> to vector<1x32xf32>
    %349 = arith.extf %345 : vector<3x32xbf16> to vector<3x32xf32>
    %350 = vector.broadcast %348 : vector<1x32xf32> to vector<3x32xf32>
    %351 = arith.mulf %349, %350 : vector<3x32xf32>
    %cst_210 = arith.constant dense<0.000000e+00> : vector<3xf32>
    %352 = vector.multi_reduction <add>, %351, %cst_210 [1] : vector<3x32xf32> to vector<3xf32>
    %353 = vector.shape_cast %352 : vector<3xf32> to vector<3x1xf32>
    %354 = arith.addf %340, %353 : vector<3x1xf32>
    %c1_i32_211 = arith.constant 1 : i32
    %355 = arith.addi %0, %c1_i32_211 : i32
    %c2_i32_212 = arith.constant 2 : i32
    %356 = arith.addi %355, %c2_i32_212 : i32
    %c0_213 = arith.constant 0 : index
    %357 = arith.index_cast %356 : i32 to index
    %c1_214 = arith.constant 1 : index
    %c0_215 = arith.constant 0 : index
    %358 = vector.load %arg2[%c0_213, %357, %c1_214, %c0_215] : memref<1x6x6x32xbf16, #tpu.memory_space<vmem>>, vector<1x1x3x32xbf16>
    %359 = vector.shape_cast %358 : vector<1x1x3x32xbf16> to vector<3x32xbf16>
    %c9_216 = arith.constant 9 : index
    %c0_217 = arith.constant 0 : index
    %c0_218 = arith.constant 0 : index
    %360 = vector.load %arg3[%c9_216, %c0_217, %c0_218] : memref<16x1x32xbf16, #tpu.memory_space<vmem>>, vector<1x1x32xbf16>
    %361 = vector.shape_cast %360 : vector<1x1x32xbf16> to vector<1x32xbf16>
    %362 = arith.extf %361 : vector<1x32xbf16> to vector<1x32xf32>
    %363 = arith.extf %359 : vector<3x32xbf16> to vector<3x32xf32>
    %364 = vector.broadcast %362 : vector<1x32xf32> to vector<3x32xf32>
    %365 = arith.mulf %363, %364 : vector<3x32xf32>
    %cst_219 = arith.constant dense<0.000000e+00> : vector<3xf32>
    %366 = vector.multi_reduction <add>, %365, %cst_219 [1] : vector<3x32xf32> to vector<3xf32>
    %367 = vector.shape_cast %366 : vector<3xf32> to vector<3x1xf32>
    %368 = arith.addf %354, %367 : vector<3x1xf32>
    %c1_i32_220 = arith.constant 1 : i32
    %369 = arith.addi %0, %c1_i32_220 : i32
    %c2_i32_221 = arith.constant 2 : i32
    %370 = arith.addi %369, %c2_i32_221 : i32
    %c0_222 = arith.constant 0 : index
    %371 = arith.index_cast %370 : i32 to index
    %c2_223 = arith.constant 2 : index
    %c0_224 = arith.constant 0 : index
    %372 = vector.load %arg2[%c0_222, %371, %c2_223, %c0_224] : memref<1x6x6x32xbf16, #tpu.memory_space<vmem>>, vector<1x1x3x32xbf16>
    %373 = vector.shape_cast %372 : vector<1x1x3x32xbf16> to vector<3x32xbf16>
    %c10_225 = arith.constant 10 : index
    %c0_226 = arith.constant 0 : index
    %c0_227 = arith.constant 0 : index
    %374 = vector.load %arg3[%c10_225, %c0_226, %c0_227] : memref<16x1x32xbf16, #tpu.memory_space<vmem>>, vector<1x1x32xbf16>
    %375 = vector.shape_cast %374 : vector<1x1x32xbf16> to vector<1x32xbf16>
    %376 = arith.extf %375 : vector<1x32xbf16> to vector<1x32xf32>
    %377 = arith.extf %373 : vector<3x32xbf16> to vector<3x32xf32>
    %378 = vector.broadcast %376 : vector<1x32xf32> to vector<3x32xf32>
    %379 = arith.mulf %377, %378 : vector<3x32xf32>
    %cst_228 = arith.constant dense<0.000000e+00> : vector<3xf32>
    %380 = vector.multi_reduction <add>, %379, %cst_228 [1] : vector<3x32xf32> to vector<3xf32>
    %381 = vector.shape_cast %380 : vector<3xf32> to vector<3x1xf32>
    %382 = arith.addf %368, %381 : vector<3x1xf32>
    %c1_i32_229 = arith.constant 1 : i32
    %383 = arith.addi %0, %c1_i32_229 : i32
    %c2_i32_230 = arith.constant 2 : i32
    %384 = arith.addi %383, %c2_i32_230 : i32
    %c0_231 = arith.constant 0 : index
    %385 = arith.index_cast %384 : i32 to index
    %c3_232 = arith.constant 3 : index
    %c0_233 = arith.constant 0 : index
    %386 = vector.load %arg2[%c0_231, %385, %c3_232, %c0_233] : memref<1x6x6x32xbf16, #tpu.memory_space<vmem>>, vector<1x1x3x32xbf16>
    %387 = vector.shape_cast %386 : vector<1x1x3x32xbf16> to vector<3x32xbf16>
    %c11_234 = arith.constant 11 : index
    %c0_235 = arith.constant 0 : index
    %c0_236 = arith.constant 0 : index
    %388 = vector.load %arg3[%c11_234, %c0_235, %c0_236] : memref<16x1x32xbf16, #tpu.memory_space<vmem>>, vector<1x1x32xbf16>
    %389 = vector.shape_cast %388 : vector<1x1x32xbf16> to vector<1x32xbf16>
    %390 = arith.extf %389 : vector<1x32xbf16> to vector<1x32xf32>
    %391 = arith.extf %387 : vector<3x32xbf16> to vector<3x32xf32>
    %392 = vector.broadcast %390 : vector<1x32xf32> to vector<3x32xf32>
    %393 = arith.mulf %391, %392 : vector<3x32xf32>
    %cst_237 = arith.constant dense<0.000000e+00> : vector<3xf32>
    %394 = vector.multi_reduction <add>, %393, %cst_237 [1] : vector<3x32xf32> to vector<3xf32>
    %395 = vector.shape_cast %394 : vector<3xf32> to vector<3x1xf32>
    %396 = arith.addf %382, %395 : vector<3x1xf32>
    %c1_i32_238 = arith.constant 1 : i32
    %397 = arith.addi %0, %c1_i32_238 : i32
    %c3_i32_239 = arith.constant 3 : i32
    %398 = arith.addi %397, %c3_i32_239 : i32
    %c0_240 = arith.constant 0 : index
    %399 = arith.index_cast %398 : i32 to index
    %c0_241 = arith.constant 0 : index
    %c0_242 = arith.constant 0 : index
    %400 = vector.load %arg2[%c0_240, %399, %c0_241, %c0_242] : memref<1x6x6x32xbf16, #tpu.memory_space<vmem>>, vector<1x1x3x32xbf16>
    %401 = vector.shape_cast %400 : vector<1x1x3x32xbf16> to vector<3x32xbf16>
    %c12_243 = arith.constant 12 : index
    %c0_244 = arith.constant 0 : index
    %c0_245 = arith.constant 0 : index
    %402 = vector.load %arg3[%c12_243, %c0_244, %c0_245] : memref<16x1x32xbf16, #tpu.memory_space<vmem>>, vector<1x1x32xbf16>
    %403 = vector.shape_cast %402 : vector<1x1x32xbf16> to vector<1x32xbf16>
    %404 = arith.extf %403 : vector<1x32xbf16> to vector<1x32xf32>
    %405 = arith.extf %401 : vector<3x32xbf16> to vector<3x32xf32>
    %406 = vector.broadcast %404 : vector<1x32xf32> to vector<3x32xf32>
    %407 = arith.mulf %405, %406 : vector<3x32xf32>
    %cst_246 = arith.constant dense<0.000000e+00> : vector<3xf32>
    %408 = vector.multi_reduction <add>, %407, %cst_246 [1] : vector<3x32xf32> to vector<3xf32>
    %409 = vector.shape_cast %408 : vector<3xf32> to vector<3x1xf32>
    %410 = arith.addf %396, %409 : vector<3x1xf32>
    %c1_i32_247 = arith.constant 1 : i32
    %411 = arith.addi %0, %c1_i32_247 : i32
    %c3_i32_248 = arith.constant 3 : i32
    %412 = arith.addi %411, %c3_i32_248 : i32
    %c0_249 = arith.constant 0 : index
    %413 = arith.index_cast %412 : i32 to index
    %c1_250 = arith.constant 1 : index
    %c0_251 = arith.constant 0 : index
    %414 = vector.load %arg2[%c0_249, %413, %c1_250, %c0_251] : memref<1x6x6x32xbf16, #tpu.memory_space<vmem>>, vector<1x1x3x32xbf16>
    %415 = vector.shape_cast %414 : vector<1x1x3x32xbf16> to vector<3x32xbf16>
    %c13_252 = arith.constant 13 : index
    %c0_253 = arith.constant 0 : index
    %c0_254 = arith.constant 0 : index
    %416 = vector.load %arg3[%c13_252, %c0_253, %c0_254] : memref<16x1x32xbf16, #tpu.memory_space<vmem>>, vector<1x1x32xbf16>
    %417 = vector.shape_cast %416 : vector<1x1x32xbf16> to vector<1x32xbf16>
    %418 = arith.extf %417 : vector<1x32xbf16> to vector<1x32xf32>
    %419 = arith.extf %415 : vector<3x32xbf16> to vector<3x32xf32>
    %420 = vector.broadcast %418 : vector<1x32xf32> to vector<3x32xf32>
    %421 = arith.mulf %419, %420 : vector<3x32xf32>
    %cst_255 = arith.constant dense<0.000000e+00> : vector<3xf32>
    %422 = vector.multi_reduction <add>, %421, %cst_255 [1] : vector<3x32xf32> to vector<3xf32>
    %423 = vector.shape_cast %422 : vector<3xf32> to vector<3x1xf32>
    %424 = arith.addf %410, %423 : vector<3x1xf32>
    %c1_i32_256 = arith.constant 1 : i32
    %425 = arith.addi %0, %c1_i32_256 : i32
    %c3_i32_257 = arith.constant 3 : i32
    %426 = arith.addi %425, %c3_i32_257 : i32
    %c0_258 = arith.constant 0 : index
    %427 = arith.index_cast %426 : i32 to index
    %c2_259 = arith.constant 2 : index
    %c0_260 = arith.constant 0 : index
    %428 = vector.load %arg2[%c0_258, %427, %c2_259, %c0_260] : memref<1x6x6x32xbf16, #tpu.memory_space<vmem>>, vector<1x1x3x32xbf16>
    %429 = vector.shape_cast %428 : vector<1x1x3x32xbf16> to vector<3x32xbf16>
    %c14_261 = arith.constant 14 : index
    %c0_262 = arith.constant 0 : index
    %c0_263 = arith.constant 0 : index
    %430 = vector.load %arg3[%c14_261, %c0_262, %c0_263] : memref<16x1x32xbf16, #tpu.memory_space<vmem>>, vector<1x1x32xbf16>
    %431 = vector.shape_cast %430 : vector<1x1x32xbf16> to vector<1x32xbf16>
    %432 = arith.extf %431 : vector<1x32xbf16> to vector<1x32xf32>
    %433 = arith.extf %429 : vector<3x32xbf16> to vector<3x32xf32>
    %434 = vector.broadcast %432 : vector<1x32xf32> to vector<3x32xf32>
    %435 = arith.mulf %433, %434 : vector<3x32xf32>
    %cst_264 = arith.constant dense<0.000000e+00> : vector<3xf32>
    %436 = vector.multi_reduction <add>, %435, %cst_264 [1] : vector<3x32xf32> to vector<3xf32>
    %437 = vector.shape_cast %436 : vector<3xf32> to vector<3x1xf32>
    %438 = arith.addf %424, %437 : vector<3x1xf32>
    %c1_i32_265 = arith.constant 1 : i32
    %439 = arith.addi %0, %c1_i32_265 : i32
    %c3_i32_266 = arith.constant 3 : i32
    %440 = arith.addi %439, %c3_i32_266 : i32
    %c0_267 = arith.constant 0 : index
    %441 = arith.index_cast %440 : i32 to index
    %c3_268 = arith.constant 3 : index
    %c0_269 = arith.constant 0 : index
    %442 = vector.load %arg2[%c0_267, %441, %c3_268, %c0_269] : memref<1x6x6x32xbf16, #tpu.memory_space<vmem>>, vector<1x1x3x32xbf16>
    %443 = vector.shape_cast %442 : vector<1x1x3x32xbf16> to vector<3x32xbf16>
    %c15_270 = arith.constant 15 : index
    %c0_271 = arith.constant 0 : index
    %c0_272 = arith.constant 0 : index
    %444 = vector.load %arg3[%c15_270, %c0_271, %c0_272] : memref<16x1x32xbf16, #tpu.memory_space<vmem>>, vector<1x1x32xbf16>
    %445 = vector.shape_cast %444 : vector<1x1x32xbf16> to vector<1x32xbf16>
    %446 = arith.extf %445 : vector<1x32xbf16> to vector<1x32xf32>
    %447 = arith.extf %443 : vector<3x32xbf16> to vector<3x32xf32>
    %448 = vector.broadcast %446 : vector<1x32xf32> to vector<3x32xf32>
    %449 = arith.mulf %447, %448 : vector<3x32xf32>
    %cst_273 = arith.constant dense<0.000000e+00> : vector<3xf32>
    %450 = vector.multi_reduction <add>, %449, %cst_273 [1] : vector<3x32xf32> to vector<3xf32>
    %451 = vector.shape_cast %450 : vector<3xf32> to vector<3x1xf32>
    %452 = arith.addf %438, %451 : vector<3x1xf32>
    %c0_274 = arith.constant 0 : index
    %c0_275 = arith.constant 0 : index
    %453 = vector.load %arg4[%c0_274, %c0_275] : memref<1x1xf32, #tpu.memory_space<vmem>>, vector<1x1xf32>
    %454 = vector.broadcast %453 : vector<1x1xf32> to vector<3x1xf32>
    %455 = arith.addf %452, %454 : vector<3x1xf32>
    %c0_276 = arith.constant 0 : index
    %c1_277 = arith.constant 1 : index
    %c0_278 = arith.constant 0 : index
    %c0_279 = arith.constant 0 : index
    %456 = vector.load %arg5[%c0_276, %c1_277, %c0_278, %c0_279] : memref<1x3x3x1xf32, #tpu.memory_space<vmem>>, vector<1x1x3x1xf32>
    %457 = vector.shape_cast %456 : vector<1x1x3x1xf32> to vector<3x1xf32>
    %458 = vector.shape_cast %455 : vector<3x1xf32> to vector<1x1x3x1xf32>
    tpu.vector_store %arg5[%c0_276, %c1_277, %c0_278, %c0_279], %458 {strides = array<i32>} : memref<1x3x3x1xf32, #tpu.memory_space<vmem>>, vector<1x1x3x1xf32>,
    %c2_i32_280 = arith.constant 2 : i32
    %459 = arith.addi %0, %c2_i32_280 : i32
    %c0_i32_281 = arith.constant 0 : i32
    %460 = arith.addi %459, %c0_i32_281 : i32
    %c0_282 = arith.constant 0 : index
    %461 = arith.index_cast %460 : i32 to index
    %c0_283 = arith.constant 0 : index
    %c0_284 = arith.constant 0 : index
    %462 = vector.load %arg2[%c0_282, %461, %c0_283, %c0_284] : memref<1x6x6x32xbf16, #tpu.memory_space<vmem>>, vector<1x1x3x32xbf16>
    %463 = vector.shape_cast %462 : vector<1x1x3x32xbf16> to vector<3x32xbf16>
    %c0_285 = arith.constant 0 : index
    %c0_286 = arith.constant 0 : index
    %c0_287 = arith.constant 0 : index
    %464 = vector.load %arg3[%c0_285, %c0_286, %c0_287] : memref<16x1x32xbf16, #tpu.memory_space<vmem>>, vector<1x1x32xbf16>
    %465 = vector.shape_cast %464 : vector<1x1x32xbf16> to vector<1x32xbf16>
    %466 = arith.extf %465 : vector<1x32xbf16> to vector<1x32xf32>
    %467 = arith.extf %463 : vector<3x32xbf16> to vector<3x32xf32>
    %468 = vector.broadcast %466 : vector<1x32xf32> to vector<3x32xf32>
    %469 = arith.mulf %467, %468 : vector<3x32xf32>
    %cst_288 = arith.constant dense<0.000000e+00> : vector<3xf32>
    %470 = vector.multi_reduction <add>, %469, %cst_288 [1] : vector<3x32xf32> to vector<3xf32>
    %471 = vector.shape_cast %470 : vector<3xf32> to vector<3x1xf32>
    %c2_i32_289 = arith.constant 2 : i32
    %472 = arith.addi %0, %c2_i32_289 : i32
    %c0_i32_290 = arith.constant 0 : i32
    %473 = arith.addi %472, %c0_i32_290 : i32
    %c0_291 = arith.constant 0 : index
    %474 = arith.index_cast %473 : i32 to index
    %c1_292 = arith.constant 1 : index
    %c0_293 = arith.constant 0 : index
    %475 = vector.load %arg2[%c0_291, %474, %c1_292, %c0_293] : memref<1x6x6x32xbf16, #tpu.memory_space<vmem>>, vector<1x1x3x32xbf16>
    %476 = vector.shape_cast %475 : vector<1x1x3x32xbf16> to vector<3x32xbf16>
    %c1_294 = arith.constant 1 : index
    %c0_295 = arith.constant 0 : index
    %c0_296 = arith.constant 0 : index
    %477 = vector.load %arg3[%c1_294, %c0_295, %c0_296] : memref<16x1x32xbf16, #tpu.memory_space<vmem>>, vector<1x1x32xbf16>
    %478 = vector.shape_cast %477 : vector<1x1x32xbf16> to vector<1x32xbf16>
    %479 = arith.extf %478 : vector<1x32xbf16> to vector<1x32xf32>
    %480 = arith.extf %476 : vector<3x32xbf16> to vector<3x32xf32>
    %481 = vector.broadcast %479 : vector<1x32xf32> to vector<3x32xf32>
    %482 = arith.mulf %480, %481 : vector<3x32xf32>
    %cst_297 = arith.constant dense<0.000000e+00> : vector<3xf32>
    %483 = vector.multi_reduction <add>, %482, %cst_297 [1] : vector<3x32xf32> to vector<3xf32>
    %484 = vector.shape_cast %483 : vector<3xf32> to vector<3x1xf32>
    %485 = arith.addf %471, %484 : vector<3x1xf32>
    %c2_i32_298 = arith.constant 2 : i32
    %486 = arith.addi %0, %c2_i32_298 : i32
    %c0_i32_299 = arith.constant 0 : i32
    %487 = arith.addi %486, %c0_i32_299 : i32
    %c0_300 = arith.constant 0 : index
    %488 = arith.index_cast %487 : i32 to index
    %c2_301 = arith.constant 2 : index
    %c0_302 = arith.constant 0 : index
    %489 = vector.load %arg2[%c0_300, %488, %c2_301, %c0_302] : memref<1x6x6x32xbf16, #tpu.memory_space<vmem>>, vector<1x1x3x32xbf16>
    %490 = vector.shape_cast %489 : vector<1x1x3x32xbf16> to vector<3x32xbf16>
    %c2_303 = arith.constant 2 : index
    %c0_304 = arith.constant 0 : index
    %c0_305 = arith.constant 0 : index
    %491 = vector.load %arg3[%c2_303, %c0_304, %c0_305] : memref<16x1x32xbf16, #tpu.memory_space<vmem>>, vector<1x1x32xbf16>
    %492 = vector.shape_cast %491 : vector<1x1x32xbf16> to vector<1x32xbf16>
    %493 = arith.extf %492 : vector<1x32xbf16> to vector<1x32xf32>
    %494 = arith.extf %490 : vector<3x32xbf16> to vector<3x32xf32>
    %495 = vector.broadcast %493 : vector<1x32xf32> to vector<3x32xf32>
    %496 = arith.mulf %494, %495 : vector<3x32xf32>
    %cst_306 = arith.constant dense<0.000000e+00> : vector<3xf32>
    %497 = vector.multi_reduction <add>, %496, %cst_306 [1] : vector<3x32xf32> to vector<3xf32>
    %498 = vector.shape_cast %497 : vector<3xf32> to vector<3x1xf32>
    %499 = arith.addf %485, %498 : vector<3x1xf32>
    %c2_i32_307 = arith.constant 2 : i32
    %500 = arith.addi %0, %c2_i32_307 : i32
    %c0_i32_308 = arith.constant 0 : i32
    %501 = arith.addi %500, %c0_i32_308 : i32
    %c0_309 = arith.constant 0 : index
    %502 = arith.index_cast %501 : i32 to index
    %c3_310 = arith.constant 3 : index
    %c0_311 = arith.constant 0 : index
    %503 = vector.load %arg2[%c0_309, %502, %c3_310, %c0_311] : memref<1x6x6x32xbf16, #tpu.memory_space<vmem>>, vector<1x1x3x32xbf16>
    %504 = vector.shape_cast %503 : vector<1x1x3x32xbf16> to vector<3x32xbf16>
    %c3_312 = arith.constant 3 : index
    %c0_313 = arith.constant 0 : index
    %c0_314 = arith.constant 0 : index
    %505 = vector.load %arg3[%c3_312, %c0_313, %c0_314] : memref<16x1x32xbf16, #tpu.memory_space<vmem>>, vector<1x1x32xbf16>
    %506 = vector.shape_cast %505 : vector<1x1x32xbf16> to vector<1x32xbf16>
    %507 = arith.extf %506 : vector<1x32xbf16> to vector<1x32xf32>
    %508 = arith.extf %504 : vector<3x32xbf16> to vector<3x32xf32>
    %509 = vector.broadcast %507 : vector<1x32xf32> to vector<3x32xf32>
    %510 = arith.mulf %508, %509 : vector<3x32xf32>
    %cst_315 = arith.constant dense<0.000000e+00> : vector<3xf32>
    %511 = vector.multi_reduction <add>, %510, %cst_315 [1] : vector<3x32xf32> to vector<3xf32>
    %512 = vector.shape_cast %511 : vector<3xf32> to vector<3x1xf32>
    %513 = arith.addf %499, %512 : vector<3x1xf32>
    %c2_i32_316 = arith.constant 2 : i32
    %514 = arith.addi %0, %c2_i32_316 : i32
    %c1_i32_317 = arith.constant 1 : i32
    %515 = arith.addi %514, %c1_i32_317 : i32
    %c0_318 = arith.constant 0 : index
    %516 = arith.index_cast %515 : i32 to index
    %c0_319 = arith.constant 0 : index
    %c0_320 = arith.constant 0 : index
    %517 = vector.load %arg2[%c0_318, %516, %c0_319, %c0_320] : memref<1x6x6x32xbf16, #tpu.memory_space<vmem>>, vector<1x1x3x32xbf16>
    %518 = vector.shape_cast %517 : vector<1x1x3x32xbf16> to vector<3x32xbf16>
    %c4_321 = arith.constant 4 : index
    %c0_322 = arith.constant 0 : index
    %c0_323 = arith.constant 0 : index
    %519 = vector.load %arg3[%c4_321, %c0_322, %c0_323] : memref<16x1x32xbf16, #tpu.memory_space<vmem>>, vector<1x1x32xbf16>
    %520 = vector.shape_cast %519 : vector<1x1x32xbf16> to vector<1x32xbf16>
    %521 = arith.extf %520 : vector<1x32xbf16> to vector<1x32xf32>
    %522 = arith.extf %518 : vector<3x32xbf16> to vector<3x32xf32>
    %523 = vector.broadcast %521 : vector<1x32xf32> to vector<3x32xf32>
    %524 = arith.mulf %522, %523 : vector<3x32xf32>
    %cst_324 = arith.constant dense<0.000000e+00> : vector<3xf32>
    %525 = vector.multi_reduction <add>, %524, %cst_324 [1] : vector<3x32xf32> to vector<3xf32>
    %526 = vector.shape_cast %525 : vector<3xf32> to vector<3x1xf32>
    %527 = arith.addf %513, %526 : vector<3x1xf32>
    %c2_i32_325 = arith.constant 2 : i32
    %528 = arith.addi %0, %c2_i32_325 : i32
    %c1_i32_326 = arith.constant 1 : i32
    %529 = arith.addi %528, %c1_i32_326 : i32
    %c0_327 = arith.constant 0 : index
    %530 = arith.index_cast %529 : i32 to index
    %c1_328 = arith.constant 1 : index
    %c0_329 = arith.constant 0 : index
    %531 = vector.load %arg2[%c0_327, %530, %c1_328, %c0_329] : memref<1x6x6x32xbf16, #tpu.memory_space<vmem>>, vector<1x1x3x32xbf16>
    %532 = vector.shape_cast %531 : vector<1x1x3x32xbf16> to vector<3x32xbf16>
    %c5_330 = arith.constant 5 : index
    %c0_331 = arith.constant 0 : index
    %c0_332 = arith.constant 0 : index
    %533 = vector.load %arg3[%c5_330, %c0_331, %c0_332] : memref<16x1x32xbf16, #tpu.memory_space<vmem>>, vector<1x1x32xbf16>
    %534 = vector.shape_cast %533 : vector<1x1x32xbf16> to vector<1x32xbf16>
    %535 = arith.extf %534 : vector<1x32xbf16> to vector<1x32xf32>
    %536 = arith.extf %532 : vector<3x32xbf16> to vector<3x32xf32>
    %537 = vector.broadcast %535 : vector<1x32xf32> to vector<3x32xf32>
    %538 = arith.mulf %536, %537 : vector<3x32xf32>
    %cst_333 = arith.constant dense<0.000000e+00> : vector<3xf32>
    %539 = vector.multi_reduction <add>, %538, %cst_333 [1] : vector<3x32xf32> to vector<3xf32>
    %540 = vector.shape_cast %539 : vector<3xf32> to vector<3x1xf32>
    %541 = arith.addf %527, %540 : vector<3x1xf32>
    %c2_i32_334 = arith.constant 2 : i32
    %542 = arith.addi %0, %c2_i32_334 : i32
    %c1_i32_335 = arith.constant 1 : i32
    %543 = arith.addi %542, %c1_i32_335 : i32
    %c0_336 = arith.constant 0 : index
    %544 = arith.index_cast %543 : i32 to index
    %c2_337 = arith.constant 2 : index
    %c0_338 = arith.constant 0 : index
    %545 = vector.load %arg2[%c0_336, %544, %c2_337, %c0_338] : memref<1x6x6x32xbf16, #tpu.memory_space<vmem>>, vector<1x1x3x32xbf16>
    %546 = vector.shape_cast %545 : vector<1x1x3x32xbf16> to vector<3x32xbf16>
    %c6_339 = arith.constant 6 : index
    %c0_340 = arith.constant 0 : index
    %c0_341 = arith.constant 0 : index
    %547 = vector.load %arg3[%c6_339, %c0_340, %c0_341] : memref<16x1x32xbf16, #tpu.memory_space<vmem>>, vector<1x1x32xbf16>
    %548 = vector.shape_cast %547 : vector<1x1x32xbf16> to vector<1x32xbf16>
    %549 = arith.extf %548 : vector<1x32xbf16> to vector<1x32xf32>
    %550 = arith.extf %546 : vector<3x32xbf16> to vector<3x32xf32>
    %551 = vector.broadcast %549 : vector<1x32xf32> to vector<3x32xf32>
    %552 = arith.mulf %550, %551 : vector<3x32xf32>
    %cst_342 = arith.constant dense<0.000000e+00> : vector<3xf32>
    %553 = vector.multi_reduction <add>, %552, %cst_342 [1] : vector<3x32xf32> to vector<3xf32>
    %554 = vector.shape_cast %553 : vector<3xf32> to vector<3x1xf32>
    %555 = arith.addf %541, %554 : vector<3x1xf32>
    %c2_i32_343 = arith.constant 2 : i32
    %556 = arith.addi %0, %c2_i32_343 : i32
    %c1_i32_344 = arith.constant 1 : i32
    %557 = arith.addi %556, %c1_i32_344 : i32
    %c0_345 = arith.constant 0 : index
    %558 = arith.index_cast %557 : i32 to index
    %c3_346 = arith.constant 3 : index
    %c0_347 = arith.constant 0 : index
    %559 = vector.load %arg2[%c0_345, %558, %c3_346, %c0_347] : memref<1x6x6x32xbf16, #tpu.memory_space<vmem>>, vector<1x1x3x32xbf16>
    %560 = vector.shape_cast %559 : vector<1x1x3x32xbf16> to vector<3x32xbf16>
    %c7_348 = arith.constant 7 : index
    %c0_349 = arith.constant 0 : index
    %c0_350 = arith.constant 0 : index
    %561 = vector.load %arg3[%c7_348, %c0_349, %c0_350] : memref<16x1x32xbf16, #tpu.memory_space<vmem>>, vector<1x1x32xbf16>
    %562 = vector.shape_cast %561 : vector<1x1x32xbf16> to vector<1x32xbf16>
    %563 = arith.extf %562 : vector<1x32xbf16> to vector<1x32xf32>
    %564 = arith.extf %560 : vector<3x32xbf16> to vector<3x32xf32>
    %565 = vector.broadcast %563 : vector<1x32xf32> to vector<3x32xf32>
    %566 = arith.mulf %564, %565 : vector<3x32xf32>
    %cst_351 = arith.constant dense<0.000000e+00> : vector<3xf32>
    %567 = vector.multi_reduction <add>, %566, %cst_351 [1] : vector<3x32xf32> to vector<3xf32>
    %568 = vector.shape_cast %567 : vector<3xf32> to vector<3x1xf32>
    %569 = arith.addf %555, %568 : vector<3x1xf32>
    %c2_i32_352 = arith.constant 2 : i32
    %570 = arith.addi %0, %c2_i32_352 : i32
    %c2_i32_353 = arith.constant 2 : i32
    %571 = arith.addi %570, %c2_i32_353 : i32
    %c0_354 = arith.constant 0 : index
    %572 = arith.index_cast %571 : i32 to index
    %c0_355 = arith.constant 0 : index
    %c0_356 = arith.constant 0 : index
    %573 = vector.load %arg2[%c0_354, %572, %c0_355, %c0_356] : memref<1x6x6x32xbf16, #tpu.memory_space<vmem>>, vector<1x1x3x32xbf16>
    %574 = vector.shape_cast %573 : vector<1x1x3x32xbf16> to vector<3x32xbf16>
    %c8_357 = arith.constant 8 : index
    %c0_358 = arith.constant 0 : index
    %c0_359 = arith.constant 0 : index
    %575 = vector.load %arg3[%c8_357, %c0_358, %c0_359] : memref<16x1x32xbf16, #tpu.memory_space<vmem>>, vector<1x1x32xbf16>
    %576 = vector.shape_cast %575 : vector<1x1x32xbf16> to vector<1x32xbf16>
    %577 = arith.extf %576 : vector<1x32xbf16> to vector<1x32xf32>
    %578 = arith.extf %574 : vector<3x32xbf16> to vector<3x32xf32>
    %579 = vector.broadcast %577 : vector<1x32xf32> to vector<3x32xf32>
    %580 = arith.mulf %578, %579 : vector<3x32xf32>
    %cst_360 = arith.constant dense<0.000000e+00> : vector<3xf32>
    %581 = vector.multi_reduction <add>, %580, %cst_360 [1] : vector<3x32xf32> to vector<3xf32>
    %582 = vector.shape_cast %581 : vector<3xf32> to vector<3x1xf32>
    %583 = arith.addf %569, %582 : vector<3x1xf32>
    %c2_i32_361 = arith.constant 2 : i32
    %584 = arith.addi %0, %c2_i32_361 : i32
    %c2_i32_362 = arith.constant 2 : i32
    %585 = arith.addi %584, %c2_i32_362 : i32
    %c0_363 = arith.constant 0 : index
    %586 = arith.index_cast %585 : i32 to index
    %c1_364 = arith.constant 1 : index
    %c0_365 = arith.constant 0 : index
    %587 = vector.load %arg2[%c0_363, %586, %c1_364, %c0_365] : memref<1x6x6x32xbf16, #tpu.memory_space<vmem>>, vector<1x1x3x32xbf16>
    %588 = vector.shape_cast %587 : vector<1x1x3x32xbf16> to vector<3x32xbf16>
    %c9_366 = arith.constant 9 : index
    %c0_367 = arith.constant 0 : index
    %c0_368 = arith.constant 0 : index
    %589 = vector.load %arg3[%c9_366, %c0_367, %c0_368] : memref<16x1x32xbf16, #tpu.memory_space<vmem>>, vector<1x1x32xbf16>
    %590 = vector.shape_cast %589 : vector<1x1x32xbf16> to vector<1x32xbf16>
    %591 = arith.extf %590 : vector<1x32xbf16> to vector<1x32xf32>
    %592 = arith.extf %588 : vector<3x32xbf16> to vector<3x32xf32>
    %593 = vector.broadcast %591 : vector<1x32xf32> to vector<3x32xf32>
    %594 = arith.mulf %592, %593 : vector<3x32xf32>
    %cst_369 = arith.constant dense<0.000000e+00> : vector<3xf32>
    %595 = vector.multi_reduction <add>, %594, %cst_369 [1] : vector<3x32xf32> to vector<3xf32>
    %596 = vector.shape_cast %595 : vector<3xf32> to vector<3x1xf32>
    %597 = arith.addf %583, %596 : vector<3x1xf32>
    %c2_i32_370 = arith.constant 2 : i32
    %598 = arith.addi %0, %c2_i32_370 : i32
    %c2_i32_371 = arith.constant 2 : i32
    %599 = arith.addi %598, %c2_i32_371 : i32
    %c0_372 = arith.constant 0 : index
    %600 = arith.index_cast %599 : i32 to index
    %c2_373 = arith.constant 2 : index
    %c0_374 = arith.constant 0 : index
    %601 = vector.load %arg2[%c0_372, %600, %c2_373, %c0_374] : memref<1x6x6x32xbf16, #tpu.memory_space<vmem>>, vector<1x1x3x32xbf16>
    %602 = vector.shape_cast %601 : vector<1x1x3x32xbf16> to vector<3x32xbf16>
    %c10_375 = arith.constant 10 : index
    %c0_376 = arith.constant 0 : index
    %c0_377 = arith.constant 0 : index
    %603 = vector.load %arg3[%c10_375, %c0_376, %c0_377] : memref<16x1x32xbf16, #tpu.memory_space<vmem>>, vector<1x1x32xbf16>
    %604 = vector.shape_cast %603 : vector<1x1x32xbf16> to vector<1x32xbf16>
    %605 = arith.extf %604 : vector<1x32xbf16> to vector<1x32xf32>
    %606 = arith.extf %602 : vector<3x32xbf16> to vector<3x32xf32>
    %607 = vector.broadcast %605 : vector<1x32xf32> to vector<3x32xf32>
    %608 = arith.mulf %606, %607 : vector<3x32xf32>
    %cst_378 = arith.constant dense<0.000000e+00> : vector<3xf32>
    %609 = vector.multi_reduction <add>, %608, %cst_378 [1] : vector<3x32xf32> to vector<3xf32>
    %610 = vector.shape_cast %609 : vector<3xf32> to vector<3x1xf32>
    %611 = arith.addf %597, %610 : vector<3x1xf32>
    %c2_i32_379 = arith.constant 2 : i32
    %612 = arith.addi %0, %c2_i32_379 : i32
    %c2_i32_380 = arith.constant 2 : i32
    %613 = arith.addi %612, %c2_i32_380 : i32
    %c0_381 = arith.constant 0 : index
    %614 = arith.index_cast %613 : i32 to index
    %c3_382 = arith.constant 3 : index
    %c0_383 = arith.constant 0 : index
    %615 = vector.load %arg2[%c0_381, %614, %c3_382, %c0_383] : memref<1x6x6x32xbf16, #tpu.memory_space<vmem>>, vector<1x1x3x32xbf16>
    %616 = vector.shape_cast %615 : vector<1x1x3x32xbf16> to vector<3x32xbf16>
    %c11_384 = arith.constant 11 : index
    %c0_385 = arith.constant 0 : index
    %c0_386 = arith.constant 0 : index
    %617 = vector.load %arg3[%c11_384, %c0_385, %c0_386] : memref<16x1x32xbf16, #tpu.memory_space<vmem>>, vector<1x1x32xbf16>
    %618 = vector.shape_cast %617 : vector<1x1x32xbf16> to vector<1x32xbf16>
    %619 = arith.extf %618 : vector<1x32xbf16> to vector<1x32xf32>
    %620 = arith.extf %616 : vector<3x32xbf16> to vector<3x32xf32>
    %621 = vector.broadcast %619 : vector<1x32xf32> to vector<3x32xf32>
    %622 = arith.mulf %620, %621 : vector<3x32xf32>
    %cst_387 = arith.constant dense<0.000000e+00> : vector<3xf32>
    %623 = vector.multi_reduction <add>, %622, %cst_387 [1] : vector<3x32xf32> to vector<3xf32>
    %624 = vector.shape_cast %623 : vector<3xf32> to vector<3x1xf32>
    %625 = arith.addf %611, %624 : vector<3x1xf32>
    %c2_i32_388 = arith.constant 2 : i32
    %626 = arith.addi %0, %c2_i32_388 : i32
    %c3_i32_389 = arith.constant 3 : i32
    %627 = arith.addi %626, %c3_i32_389 : i32
    %c0_390 = arith.constant 0 : index
    %628 = arith.index_cast %627 : i32 to index
    %c0_391 = arith.constant 0 : index
    %c0_392 = arith.constant 0 : index
    %629 = vector.load %arg2[%c0_390, %628, %c0_391, %c0_392] : memref<1x6x6x32xbf16, #tpu.memory_space<vmem>>, vector<1x1x3x32xbf16>
    %630 = vector.shape_cast %629 : vector<1x1x3x32xbf16> to vector<3x32xbf16>
    %c12_393 = arith.constant 12 : index
    %c0_394 = arith.constant 0 : index
    %c0_395 = arith.constant 0 : index
    %631 = vector.load %arg3[%c12_393, %c0_394, %c0_395] : memref<16x1x32xbf16, #tpu.memory_space<vmem>>, vector<1x1x32xbf16>
    %632 = vector.shape_cast %631 : vector<1x1x32xbf16> to vector<1x32xbf16>
    %633 = arith.extf %632 : vector<1x32xbf16> to vector<1x32xf32>
    %634 = arith.extf %630 : vector<3x32xbf16> to vector<3x32xf32>
    %635 = vector.broadcast %633 : vector<1x32xf32> to vector<3x32xf32>
    %636 = arith.mulf %634, %635 : vector<3x32xf32>
    %cst_396 = arith.constant dense<0.000000e+00> : vector<3xf32>
    %637 = vector.multi_reduction <add>, %636, %cst_396 [1] : vector<3x32xf32> to vector<3xf32>
    %638 = vector.shape_cast %637 : vector<3xf32> to vector<3x1xf32>
    %639 = arith.addf %625, %638 : vector<3x1xf32>
    %c2_i32_397 = arith.constant 2 : i32
    %640 = arith.addi %0, %c2_i32_397 : i32
    %c3_i32_398 = arith.constant 3 : i32
    %641 = arith.addi %640, %c3_i32_398 : i32
    %c0_399 = arith.constant 0 : index
    %642 = arith.index_cast %641 : i32 to index
    %c1_400 = arith.constant 1 : index
    %c0_401 = arith.constant 0 : index
    %643 = vector.load %arg2[%c0_399, %642, %c1_400, %c0_401] : memref<1x6x6x32xbf16, #tpu.memory_space<vmem>>, vector<1x1x3x32xbf16>
    %644 = vector.shape_cast %643 : vector<1x1x3x32xbf16> to vector<3x32xbf16>
    %c13_402 = arith.constant 13 : index
    %c0_403 = arith.constant 0 : index
    %c0_404 = arith.constant 0 : index
    %645 = vector.load %arg3[%c13_402, %c0_403, %c0_404] : memref<16x1x32xbf16, #tpu.memory_space<vmem>>, vector<1x1x32xbf16>
    %646 = vector.shape_cast %645 : vector<1x1x32xbf16> to vector<1x32xbf16>
    %647 = arith.extf %646 : vector<1x32xbf16> to vector<1x32xf32>
    %648 = arith.extf %644 : vector<3x32xbf16> to vector<3x32xf32>
    %649 = vector.broadcast %647 : vector<1x32xf32> to vector<3x32xf32>
    %650 = arith.mulf %648, %649 : vector<3x32xf32>
    %cst_405 = arith.constant dense<0.000000e+00> : vector<3xf32>
    %651 = vector.multi_reduction <add>, %650, %cst_405 [1] : vector<3x32xf32> to vector<3xf32>
    %652 = vector.shape_cast %651 : vector<3xf32> to vector<3x1xf32>
    %653 = arith.addf %639, %652 : vector<3x1xf32>
    %c2_i32_406 = arith.constant 2 : i32
    %654 = arith.addi %0, %c2_i32_406 : i32
    %c3_i32_407 = arith.constant 3 : i32
    %655 = arith.addi %654, %c3_i32_407 : i32
    %c0_408 = arith.constant 0 : index
    %656 = arith.index_cast %655 : i32 to index
    %c2_409 = arith.constant 2 : index
    %c0_410 = arith.constant 0 : index
    %657 = vector.load %arg2[%c0_408, %656, %c2_409, %c0_410] : memref<1x6x6x32xbf16, #tpu.memory_space<vmem>>, vector<1x1x3x32xbf16>
    %658 = vector.shape_cast %657 : vector<1x1x3x32xbf16> to vector<3x32xbf16>
    %c14_411 = arith.constant 14 : index
    %c0_412 = arith.constant 0 : index
    %c0_413 = arith.constant 0 : index
    %659 = vector.load %arg3[%c14_411, %c0_412, %c0_413] : memref<16x1x32xbf16, #tpu.memory_space<vmem>>, vector<1x1x32xbf16>
    %660 = vector.shape_cast %659 : vector<1x1x32xbf16> to vector<1x32xbf16>
    %661 = arith.extf %660 : vector<1x32xbf16> to vector<1x32xf32>
    %662 = arith.extf %658 : vector<3x32xbf16> to vector<3x32xf32>
    %663 = vector.broadcast %661 : vector<1x32xf32> to vector<3x32xf32>
    %664 = arith.mulf %662, %663 : vector<3x32xf32>
    %cst_414 = arith.constant dense<0.000000e+00> : vector<3xf32>
    %665 = vector.multi_reduction <add>, %664, %cst_414 [1] : vector<3x32xf32> to vector<3xf32>
    %666 = vector.shape_cast %665 : vector<3xf32> to vector<3x1xf32>
    %667 = arith.addf %653, %666 : vector<3x1xf32>
    %c2_i32_415 = arith.constant 2 : i32
    %668 = arith.addi %0, %c2_i32_415 : i32
    %c3_i32_416 = arith.constant 3 : i32
    %669 = arith.addi %668, %c3_i32_416 : i32
    %c0_417 = arith.constant 0 : index
    %670 = arith.index_cast %669 : i32 to index
    %c3_418 = arith.constant 3 : index
    %c0_419 = arith.constant 0 : index
    %671 = vector.load %arg2[%c0_417, %670, %c3_418, %c0_419] : memref<1x6x6x32xbf16, #tpu.memory_space<vmem>>, vector<1x1x3x32xbf16>
    %672 = vector.shape_cast %671 : vector<1x1x3x32xbf16> to vector<3x32xbf16>
    %c15_420 = arith.constant 15 : index
    %c0_421 = arith.constant 0 : index
    %c0_422 = arith.constant 0 : index
    %673 = vector.load %arg3[%c15_420, %c0_421, %c0_422] : memref<16x1x32xbf16, #tpu.memory_space<vmem>>, vector<1x1x32xbf16>
    %674 = vector.shape_cast %673 : vector<1x1x32xbf16> to vector<1x32xbf16>
    %675 = arith.extf %674 : vector<1x32xbf16> to vector<1x32xf32>
    %676 = arith.extf %672 : vector<3x32xbf16> to vector<3x32xf32>
    %677 = vector.broadcast %675 : vector<1x32xf32> to vector<3x32xf32>
    %678 = arith.mulf %676, %677 : vector<3x32xf32>
    %cst_423 = arith.constant dense<0.000000e+00> : vector<3xf32>
    %679 = vector.multi_reduction <add>, %678, %cst_423 [1] : vector<3x32xf32> to vector<3xf32>
    %680 = vector.shape_cast %679 : vector<3xf32> to vector<3x1xf32>
    %681 = arith.addf %667, %680 : vector<3x1xf32>
    %c0_424 = arith.constant 0 : index
    %c0_425 = arith.constant 0 : index
    %682 = vector.load %arg4[%c0_424, %c0_425] : memref<1x1xf32, #tpu.memory_space<vmem>>, vector<1x1xf32>
    %683 = vector.broadcast %682 : vector<1x1xf32> to vector<3x1xf32>
    %684 = arith.addf %681, %683 : vector<3x1xf32>
    %c0_426 = arith.constant 0 : index
    %c2_427 = arith.constant 2 : index
    %c0_428 = arith.constant 0 : index
    %c0_429 = arith.constant 0 : index
    %685 = vector.load %arg5[%c0_426, %c2_427, %c0_428, %c0_429] : memref<1x3x3x1xf32, #tpu.memory_space<vmem>>, vector<1x1x3x1xf32>
    %686 = vector.shape_cast %685 : vector<1x1x3x1xf32> to vector<3x1xf32>
    %687 = vector.shape_cast %684 : vector<3x1xf32> to vector<1x1x3x1xf32>
    tpu.vector_store %arg5[%c0_426, %c2_427, %c0_428, %c0_429], %687 {strides = array<i32>} : memref<1x3x3x1xf32, #tpu.memory_space<vmem>>, vector<1x1x3x1xf32>,
    return
  }
  func.func @transform_0(%arg0: i32, %arg1: i32) -> (i32, i32, i32, i32) {
    %c0_i32 = arith.constant 0 : i32
    %c0_i32_0 = arith.constant 0 : i32
    %c0_i32_1 = arith.constant 0 : i32
    %c0_i32_2 = arith.constant 0 : i32
    return %arg0, %c0_i32, %c0_i32_0, %c0_i32_1 : i32, i32, i32, i32
  }
  func.func @transform_1(%arg0: i32, %arg1: i32) -> (i32, i32, i32) {
    %c0_i32 = arith.constant 0 : i32
    %c0_i32_0 = arith.constant 0 : i32
    %c0_i32_1 = arith.constant 0 : i32
    %c0_i32_2 = arith.constant 0 : i32
    return %c0_i32, %c0_i32_0, %c0_i32_1 : i32, i32, i32
  }
  func.func @transform_2(%arg0: i32, %arg1: i32) -> (i32, i32) {
    %c0_i32 = arith.constant 0 : i32
    %c0_i32_0 = arith.constant 0 : i32
    %c0_i32_1 = arith.constant 0 : i32
    return %c0_i32, %c0_i32_0 : i32, i32
  }
  func.func @transform_3(%arg0: i32, %arg1: i32) -> (i32, i32, i32, i32) {
    %c0_i32 = arith.constant 0 : i32
    %c0_i32_0 = arith.constant 0 : i32
    %c0_i32_1 = arith.constant 0 : i32
    return %arg0, %arg1, %c0_i32, %c0_i32_0 : i32, i32, i32, i32
  }
}

</mosaic_0001>

<llo_original>
// kernel: _lambda_.6
$region0: #{_lambda_.6}
  #allocation0 [shape = 'u32[]', space=smem, size = 0x4, offset = 0x4, fixed_abs, tag = 'smem constant byte address 0x4 - core index']
  #allocation1 [shape = 'u32[144,128]{1,0:T(1,128)}', space=vmem, size = 0x12000, scoped, tag = 'internal scratch']
  %s0 = inlined_call_operand.vmem [shape: bf16[2,19,17,24], index: 0, kind: input, shape index: {}]
  %s1 = inlined_call_operand.vmem [shape: bf16[4,24,8], index: 1, kind: input, shape index: {}]
  %s2 = inlined_call_operand.vmem [shape: bf16[2,18,16,8], index: 2, kind: output, shape index: {}]
  %s3 = sld [smem:[#allocation0]]
  $region41: #{_lambda_.6} parent=0
    _
  %s5 = ssub.s32 1, %s3
  %s6 = scalar_select 0, %s5, %s3
  loop: start=0, step=1, limit=14
  $region2: #{_lambda_.6} parent=0 // loop_pre_header
    _
  $region3: #{_lambda_.6} parent=0 // loop_header
    %s8 = sphi 0, %s12
    %p9 = scmp.ge.s32.totalorder %s8, 14
    %s15 = sphi 0, %s27
    %s16 = sphi 0, %s23
    %s17 = sphi 0, %s15
    %s18 = sphi 0, %s16
    %s19 = sphi 0, %s17
    %s20 = sphi 0, %s18
    %s30 = sphi 0, %s32
    %s33 = sphi 0, %s30
    %s34 = sphi 0, %s33
    %s50 = sphi 0, %s34
    %s54 = sphi 0, %s54
    %s56 = sphi 0, %s54
    %s57 = sphi 0, %s56
    %s71 = sphi 0, %s57
    %s79 = sphi 0, %s81
    %s82 = sphi 0, %s79
    %s83 = sphi 0, %s82
    %s99 = sphi 0, %s83
  $region4: #{_lambda_.6} parent=0 // loop_header_branch
    %11 = sbr.rel (%p9) target = $region8
  $region5: #{_lambda_.6} parent=0 // loop_body
    %s13 = ssub.s32 %s8, 1
    %s14 = ssub.s32 %s8, 2
    %s21 = sadd.s32 1, %s16
    %p22 = scmp.ge.s32.totalorder %s21, 6
    %s23 = scalar_select %p22, 0, %s21
    %s24 = sadd.s32 1, %s15
    %s25 = scalar_select %p22, %s24, %s15
    %p26 = scmp.ge.s32.totalorder %s25, 2
    %s27 = scalar_select %p26, 0, %s25
    %s28 = ssub.s32 %s15, %s27
    %p29 = scmp.eq.s32.totalorder %s28, 0
    %s31 = sadd.s32 %s30, 1
    %s32 = scalar_select %p29, %s30, %s31
    %p35 = pneg %p29
    %p36 = scmp.eq.s32.totalorder %s8, 11
    %p37 = por %p35, %p36
    %p38 = scmp.ne.s32.totalorder %s30, %s33
    %p39 = scmp.eq.s32.totalorder %s8, 0
    %p40 = por %p38, %p39
    %p41 = scmp.ne.s32.totalorder %s30, %s33
    %p42 = scmp.eq.s32.totalorder %s13, 11
    %p43 = por %p41, %p42
    %p44 = scmp.ne.s32.totalorder %s33, %s34
    %p45 = scmp.eq.s32.totalorder %s13, 0
    %p46 = por %p44, %p45
    %p47 = scmp.ne.s32.totalorder %s33, %s34
    %p48 = scmp.eq.s32.totalorder %s14, 11
    %p49 = por %p47, %p48
    %p51 = scmp.ne.s32.totalorder %s34, %s50
    %p52 = scmp.eq.s32.totalorder %s14, 0
    %p53 = por %p51, %p52
    %s55 = sadd.s32 %s54, 1
    %p58 = scmp.eq.s32.totalorder %s8, 11
    %p59 = scmp.ne.s32.totalorder %s54, %s56
    %p60 = scmp.eq.s32.totalorder %s8, 0
    %p61 = por %p59, %p60
    %p62 = scmp.ne.s32.totalorder %s54, %s56
    %p63 = scmp.eq.s32.totalorder %s13, 11
    %p64 = por %p62, %p63
    %p65 = scmp.ne.s32.totalorder %s56, %s57
    %p66 = scmp.eq.s32.totalorder %s13, 0
    %p67 = por %p65, %p66
    %p68 = scmp.ne.s32.totalorder %s56, %s57
    %p69 = scmp.eq.s32.totalorder %s14, 11
    %p70 = por %p68, %p69
    %p72 = scmp.ne.s32.totalorder %s57, %s71
    %p73 = scmp.eq.s32.totalorder %s14, 0
    %p74 = por %p72, %p73
    %s75 = ssub.s32 %s15, %s27
    %s76 = ssub.s32 %s16, %s23
    %s77 = sor.u32 %s75, %s76
    %p78 = scmp.eq.s32.totalorder %s77, 0
    %s80 = sadd.s32 %s79, 1
    %s81 = scalar_select %p78, %s79, %s80
    %p84 = pneg %p78
    %p85 = scmp.eq.s32.totalorder %s8, 11
    %p86 = por %p84, %p85
    %p87 = scmp.ne.s32.totalorder %s79, %s82
    %p88 = scmp.eq.s32.totalorder %s8, 0
    %p89 = por %p87, %p88
    %p90 = scmp.ne.s32.totalorder %s79, %s82
    %p91 = scmp.eq.s32.totalorder %s13, 11
    %p92 = por %p90, %p91
    %p93 = scmp.ne.s32.totalorder %s82, %s83
    %p94 = scmp.eq.s32.totalorder %s13, 0
    %p95 = por %p93, %p94
    %p96 = scmp.ne.s32.totalorder %s82, %s83
    %p97 = scmp.eq.s32.totalorder %s14, 11
    %p98 = por %p96, %p97
    %p100 = scmp.ne.s32.totalorder %s83, %s99
    %p101 = scmp.eq.s32.totalorder %s14, 0
    %p102 = por %p100, %p101
    %p103 = scmp.le.s32.totalorder 1, %s8
    %p104 = scmp.lt.s32.totalorder %s8, 13
    %p105 = pnand %p103, %p104
    %p106 = pneg %p105
    // Predicated region
    $region9: #{_lambda_.6} parent=5 // pred_check
      _
    $region10: #{_lambda_.6} parent=5 // pred_check_branch
      %108 = sbr.rel (%p105) target = $region12
    $region11: #{_lambda_.6} parent=5 // pred_region
      %s109 = ssub.s32 %s8, 1
      // Predicated region
      $region13: #{_lambda_.6} parent=11 // pred_check
        %p110 = pneg %p67
      $region14: #{_lambda_.6} parent=11 // pred_check_branch
        %112 = sbr.rel (%p110) target = $region16
      $region15: #{_lambda_.6} parent=11 // pred_region
        _
      $region16: #{_lambda_.6} parent=11 // pred_fallthru
        _
    $region12: #{_lambda_.6} parent=5 // pred_fallthru
      _
    %p113 = scmp.lt.s32.totalorder %s8, 12
    // Predicated region
    $region17: #{_lambda_.6} parent=5 // pred_check
      %p114 = pneg %p113
    $region18: #{_lambda_.6} parent=5 // pred_check_branch
      %116 = sbr.rel (%p114) target = $region20
    $region19: #{_lambda_.6} parent=5 // pred_region
      // Predicated region
      $region21: #{_lambda_.6} parent=19 // pred_check
        %p117 = pneg %p40
      $region22: #{_lambda_.6} parent=19 // pred_check_branch
        %119 = sbr.rel (%p117) target = $region24
      $region23: #{_lambda_.6} parent=19 // pred_region
        %p120 = scmp.lt.s32.totalorder %s15, 1
        %s121 = scalar_select %p120, %s15, 1
        %s122 = smul.addr %s121, 57
        %s123 = smul.addr %s122, 4
        %s124 = scalar_lea.vmem %s0, %s123
      $region24: #{_lambda_.6} parent=19 // pred_fallthru
        _
    $region20: #{_lambda_.6} parent=5 // pred_fallthru
      _
    %p125 = scmp.le.s32.totalorder 1, %s8
    %p126 = scmp.lt.s32.totalorder %s8, 13
    %p127 = pnand %p125, %p126
    %p128 = pneg %p127
    // Predicated region
    $region25: #{_lambda_.6} parent=5 // pred_check
      _
    $region26: #{_lambda_.6} parent=5 // pred_check_branch
      %130 = sbr.rel (%p127) target = $region28
    $region27: #{_lambda_.6} parent=5 // pred_region
      %s131 = ssub.s32 %s8, 1
      %p132 = scmp.lt.s32.totalorder %s17, 1
      %s133 = scalar_select %p132, %s17, 1
      %s134 = smul.addr %s133, 57
      %s135 = smul.addr %s134, 4
      %s136 = scalar_lea.vmem %s0, %s135
      %p137 = pneg %p46
      %p138 = pneg %p43
      %p139 = pneg %p67
      %p140 = pneg %p64
      %p141 = pneg %p95
      %p142 = pneg %p92
      %s143 = smul.u32 3, %s18
      %p144 = scmp.lt.s32.totalorder %s17, 1
      %s145 = scalar_select %p144, %s17, 1
      %p146 = scmp.lt.s32.totalorder %s143, 17
      %s147 = scalar_select %p146, %s143, 17
      %s148 = smul.addr %s147, 2
      %s149 = smul.addr %s145, 36
      %s150 = sadd.s32 %s148, %s149
      %s151 = smul.addr %s150, 4
      %s152 = scalar_lea.vmem %s2, %s151
      %p153 = scmp.lt.s32.totalorder %s17, 1
      %s154 = scalar_select %p153, %s17, 1
      %s155 = smul.addr %s154, 57
      %s156 = smul.addr %s155, 4
      %s157 = scalar_lea.vmem %s0, %s156
      %s158 = smul.u32 3, %s18
      %p159 = scmp.lt.s32.totalorder %s17, 1
      %s160 = scalar_select %p159, %s17, 1
      %p161 = scmp.lt.s32.totalorder %s158, 17
      %s162 = scalar_select %p161, %s158, 17
      %s163 = smul.addr %s162, 2
      %s164 = smul.addr %s160, 36
      %s165 = sadd.s32 %s163, %s164
      %s166 = smul.addr %s165, 4
      %s167 = scalar_lea.vmem %s2, %s166
      %s168 = smul.u32 3, %s18
      %s170 = smul.u32 %s18, 3
      %s171 = smul.u32 %s170, 3
      %s172 = smul.addr %s171, 4
      %s173 = scalar_lea.vmem %s157, %s172
      %v174 = vld [vmem:[%s173] sm:$0xf]
      %v175 = vld [vmem:[%s173 + $0x4] sm:$0xf]
      %v176 = vld [vmem:[%s1] sm:$0xf]
      %v177 = vld [vmem:[%s1 + $0x4] sm:$0xf]
      %v178 = vld [vmem:[%s1 + $0x8] sm:$0xf]
      %v179 = vld [vmem:[%s173 + $0x8] sm:$0x1]
      %s180 = scalar_lea.vmem %s1, 12
      %v181 = vld [vmem:[%s180] sm:$0xf]
      %v182 = vld [vmem:[%s180 + $0x4] sm:$0xf]
      %v183 = vld [vmem:[%s180 + $0x8] sm:$0xf]
      %v187 = vunpack.c.l.b16 %v174
      %v188 = vunpack.c.l.b16 %v175
      %v189 = vunpack.c.l.b16 %v179
      %v190 = vpack.c.b16 %v188, %v187
      %v191 = vpack.c.b16 %v189, %v189
      %vm192 = vsmask.f32 7424
      %v194 = vshrl.u32 %v190, 16
      %v196 = vshll.u32 %v190, 16
      %v198 = vrot.slane %v196, 1
      %v199 = vor.u32 %v194, %v198
      %v201 = vshll.u32 %v191, 16
      %v203 = vrot.slane %v201, 1
      %v204 = vsel %vm192, %v199, %v203
      %v208 = vunpack.c.l.b16 %v181
      %v209 = vunpack.c.l.b16 %v182
      %v210 = vunpack.c.l.b16 %v183
      %v211 = vpack.c.b16 %v209, %v208
      %v212 = vpack.c.b16 %v210, %v210
      %vm214 = vcmask 195584
      %v216 = vsel %vm214, %v204, 0
      %vm218 = vcmask 1043456
      %v220 = vsel %vm218, %v212, 0
      %222 = vmatprep.subr.bf16.mxu0 0
      %223 = vmatpush1.bf16.msra.mxu0 0
      %224 = vmatprep.subr.bf16.mxu0 0
      %225 = vmatpush1.bf16.msra.mxu0 0
      %226 = vmatprep.subr.bf16.mxu0 0
      %227 = vmatpush1.bf16.msra.mxu0 0
      %228 = vmatprep.subr.bf16.mxu0 0
      %229 = vmatpush1.bf16.msra.mxu0 0
      %230 = vmatprep.subr.bf16.mxu0 0
      %231 = vmatpush1.bf16.msra.mxu0 0
      %232 = vmatprep.subr.bf16.mxu0 0
      %233 = vmatpush1.bf16.msra.mxu0 0
      %234 = vmatprep.subr.bf16.mxu0 0
      %235 = vmatpush1.bf16.msra.mxu0 %v220
      %236 = vmatprep.subr.bf16.mxu0 0
      %237 = vmatpush1.bf16.msra.mxu0 %v211
      %238 = vmatprep.subr.bf16.mxu0 0
      %239 = vmatpush2.bf16.msra.mxu0 0
      %240 = vmatprep.subr.bf16.mxu0 0
      %241 = vmatpush2.bf16.msra.mxu0 0
      %242 = vmatprep.subr.bf16.mxu0 0
      %243 = vmatpush2.bf16.msra.mxu0 0
      %244 = vmatprep.subr.bf16.mxu0 0
      %245 = vmatpush2.bf16.msra.mxu0 0
      %246 = vmatprep.subr.bf16.mxu0 0
      %247 = vmatpush2.bf16.msra.mxu0 0
      %248 = vmatprep.subr.bf16.mxu0 0
      %249 = vmatpush2.bf16.msra.mxu0 0
      %250 = vmatprep.subr.bf16.mxu0 0
      %251 = vmatpush2.bf16.msra.mxu0 0
      %252 = vmatprep.subr.bf16.mxu0 0
      %253 = vmatpush2.bf16.msra.mxu0 0
      %254 = vmatprep.mubr.bf16.mxu0 0
      %255 = vmatmul.mubr.bf16.gmra.mxu0 %v216
      %v256 = vpop.f32.mrf.mxu0
      %v257 = vadd.f32 0.0, %v256
      %v258 = vpop.f32.mrf.mxu0
      %v259 = vpop.f32.mrf.mxu0
      %v260 = vadd.f32 0.0, %v259
      %v261 = vpop.f32.mrf.mxu0
      %262 = vdwg.mxu0
      %v266 = vunpack.c.l.b16 %v176
      %v267 = vunpack.c.l.b16 %v177
      %v268 = vunpack.c.l.b16 %v178
      %v269 = vpack.c.b16 %v267, %v266
      %v270 = vpack.c.b16 %v268, %v268
      %v272 = vsel %vm214, %v190, 0
      %v275 = vsel %vm218, %v270, 0
      %277 = vmatprep.subr.bf16.mxu0 0
      %278 = vmatpush1.bf16.msra.mxu0 0
      %279 = vmatprep.subr.bf16.mxu0 0
      %280 = vmatpush1.bf16.msra.mxu0 0
      %281 = vmatprep.subr.bf16.mxu0 0
      %282 = vmatpush1.bf16.msra.mxu0 0
      %283 = vmatprep.subr.bf16.mxu0 0
      %284 = vmatpush1.bf16.msra.mxu0 0
      %285 = vmatprep.subr.bf16.mxu0 0
      %286 = vmatpush1.bf16.msra.mxu0 0
      %287 = vmatprep.subr.bf16.mxu0 0
      %288 = vmatpush1.bf16.msra.mxu0 0
      %289 = vmatprep.subr.bf16.mxu0 0
      %290 = vmatpush1.bf16.msra.mxu0 %v275
      %291 = vmatprep.subr.bf16.mxu0 0
      %292 = vmatpush1.bf16.msra.mxu0 %v269
      %293 = vmatprep.subr.bf16.mxu0 0
      %294 = vmatpush2.bf16.msra.mxu0 0
      %295 = vmatprep.subr.bf16.mxu0 0
      %296 = vmatpush2.bf16.msra.mxu0 0
      %297 = vmatprep.subr.bf16.mxu0 0
      %298 = vmatpush2.bf16.msra.mxu0 0
      %299 = vmatprep.subr.bf16.mxu0 0
      %300 = vmatpush2.bf16.msra.mxu0 0
      %301 = vmatprep.subr.bf16.mxu0 0
      %302 = vmatpush2.bf16.msra.mxu0 0
      %303 = vmatprep.subr.bf16.mxu0 0
      %304 = vmatpush2.bf16.msra.mxu0 0
      %305 = vmatprep.subr.bf16.mxu0 0
      %306 = vmatpush2.bf16.msra.mxu0 0
      %307 = vmatprep.subr.bf16.mxu0 0
      %308 = vmatpush2.bf16.msra.mxu0 0
      %309 = vmatprep.mubr.bf16.mxu0 0
      %310 = vmatmul.mubr.bf16.gmra.mxu0 %v272
      %v311 = vpop.f32.mrf.mxu0
      %v312 = vadd.f32 %v257, %v311
      %v313 = vpop.f32.mrf.mxu0
      %v314 = vpop.f32.mrf.mxu0
      %v315 = vadd.f32 %v260, %v314
      %v316 = vpop.f32.mrf.mxu0
      %317 = vdwg.mxu0
      %s318 = sadd.s32 %s170, 1
      %s319 = smul.u32 %s318, 3
      %s320 = smul.addr %s319, 4
      %s321 = scalar_lea.vmem %s157, %s320
      %v322 = vld [vmem:[%s321] sm:$0xf]
      %v323 = vld [vmem:[%s321 + $0x4] sm:$0xf]
      %s324 = scalar_lea.vmem %s1, 24
      %v325 = vld [vmem:[%s324] sm:$0xf]
      %v326 = vld [vmem:[%s324 + $0x4] sm:$0xf]
      %v327 = vld [vmem:[%s324 + $0x8] sm:$0xf]
      %v330 = vunpack.c.l.b16 %v322
      %v331 = vunpack.c.l.b16 %v323
      %v332 = vpack.c.b16 %v331, %v330
      %v336 = vunpack.c.l.b16 %v325
      %v337 = vunpack.c.l.b16 %v326
      %v338 = vunpack.c.l.b16 %v327
      %v339 = vpack.c.b16 %v337, %v336
      %v340 = vpack.c.b16 %v338, %v338
      %v343 = vsel %vm214, %v332, 0
      %v346 = vsel %vm218, %v340, 0
      %348 = vmatprep.subr.bf16.mxu0 0
      %349 = vmatpush1.bf16.msra.mxu0 0
      %350 = vmatprep.subr.bf16.mxu0 0
      %351 = vmatpush1.bf16.msra.mxu0 0
      %352 = vmatprep.subr.bf16.mxu0 0
      %353 = vmatpush1.bf16.msra.mxu0 0
      %354 = vmatprep.subr.bf16.mxu0 0
      %355 = vmatpush1.bf16.msra.mxu0 0
      %356 = vmatprep.subr.bf16.mxu0 0
      %357 = vmatpush1.bf16.msra.mxu0 0
      %358 = vmatprep.subr.bf16.mxu0 0
      %359 = vmatpush1.bf16.msra.mxu0 0
      %360 = vmatprep.subr.bf16.mxu0 0
      %361 = vmatpush1.bf16.msra.mxu0 %v346
      %362 = vmatprep.subr.bf16.mxu0 0
      %363 = vmatpush1.bf16.msra.mxu0 %v339
      %364 = vmatprep.subr.bf16.mxu0 0
      %365 = vmatpush2.bf16.msra.mxu0 0
      %366 = vmatprep.subr.bf16.mxu0 0
      %367 = vmatpush2.bf16.msra.mxu0 0
      %368 = vmatprep.subr.bf16.mxu0 0
      %369 = vmatpush2.bf16.msra.mxu0 0
      %370 = vmatprep.subr.bf16.mxu0 0
      %371 = vmatpush2.bf16.msra.mxu0 0
      %372 = vmatprep.subr.bf16.mxu0 0
      %373 = vmatpush2.bf16.msra.mxu0 0
      %374 = vmatprep.subr.bf16.mxu0 0
      %375 = vmatpush2.bf16.msra.mxu0 0
      %376 = vmatprep.subr.bf16.mxu0 0
      %377 = vmatpush2.bf16.msra.mxu0 0
      %378 = vmatprep.subr.bf16.mxu0 0
      %379 = vmatpush2.bf16.msra.mxu0 0
      %380 = vmatprep.mubr.bf16.mxu0 0
      %381 = vmatmul.mubr.bf16.gmra.mxu0 %v343
      %v382 = vpop.f32.mrf.mxu0
      %v383 = vadd.f32 0.0, %v382
      %v384 = vpop.f32.mrf.mxu0
      %v385 = vpop.f32.mrf.mxu0
      %v386 = vadd.f32 0.0, %v385
      %v387 = vpop.f32.mrf.mxu0
      %388 = vdwg.mxu0
      %v389 = vadd.f32 %v312, %v383
      %v390 = vadd.f32 %v315, %v386
      %v391 = vld [vmem:[%s321] sm:$0xf]
      %v392 = vld [vmem:[%s321 + $0x4] sm:$0xf]
      %v393 = vld [vmem:[%s321 + $0x8] sm:$0x1]
      %s394 = scalar_lea.vmem %s1, 36
      %v395 = vld [vmem:[%s394] sm:$0xf]
      %v396 = vld [vmem:[%s394 + $0x4] sm:$0xf]
      %v397 = vld [vmem:[%s394 + $0x8] sm:$0xf]
      %v401 = vunpack.c.l.b16 %v391
      %v402 = vunpack.c.l.b16 %v392
      %v403 = vunpack.c.l.b16 %v393
      %v404 = vpack.c.b16 %v402, %v401
      %v405 = vpack.c.b16 %v403, %v403
      %v407 = vshrl.u32 %v404, 16
      %v409 = vshll.u32 %v404, 16
      %v411 = vrot.slane %v409, 1
      %v412 = vor.u32 %v407, %v411
      %v414 = vshll.u32 %v405, 16
      %v416 = vrot.slane %v414, 1
      %v417 = vsel %vm192, %v412, %v416
      %v421 = vunpack.c.l.b16 %v395
      %v422 = vunpack.c.l.b16 %v396
      %v423 = vunpack.c.l.b16 %v397
      %v424 = vpack.c.b16 %v422, %v421
      %v425 = vpack.c.b16 %v423, %v423
      %v428 = vsel %vm214, %v417, 0
      %v431 = vsel %vm218, %v425, 0
      %433 = vmatprep.subr.bf16.mxu0 0
      %434 = vmatpush1.bf16.msra.mxu0 0
      %435 = vmatprep.subr.bf16.mxu0 0
      %436 = vmatpush1.bf16.msra.mxu0 0
      %437 = vmatprep.subr.bf16.mxu0 0
      %438 = vmatpush1.bf16.msra.mxu0 0
      %439 = vmatprep.subr.bf16.mxu0 0
      %440 = vmatpush1.bf16.msra.mxu0 0
      %441 = vmatprep.subr.bf16.mxu0 0
      %442 = vmatpush1.bf16.msra.mxu0 0
      %443 = vmatprep.subr.bf16.mxu0 0
      %444 = vmatpush1.bf16.msra.mxu0 0
      %445 = vmatprep.subr.bf16.mxu0 0
      %446 = vmatpush1.bf16.msra.mxu0 %v431
      %447 = vmatprep.subr.bf16.mxu0 0
      %448 = vmatpush1.bf16.msra.mxu0 %v424
      %449 = vmatprep.subr.bf16.mxu0 0
      %450 = vmatpush2.bf16.msra.mxu0 0
      %451 = vmatprep.subr.bf16.mxu0 0
      %452 = vmatpush2.bf16.msra.mxu0 0
      %453 = vmatprep.subr.bf16.mxu0 0
      %454 = vmatpush2.bf16.msra.mxu0 0
      %455 = vmatprep.subr.bf16.mxu0 0
      %456 = vmatpush2.bf16.msra.mxu0 0
      %457 = vmatprep.subr.bf16.mxu0 0
      %458 = vmatpush2.bf16.msra.mxu0 0
      %459 = vmatprep.subr.bf16.mxu0 0
      %460 = vmatpush2.bf16.msra.mxu0 0
      %461 = vmatprep.subr.bf16.mxu0 0
      %462 = vmatpush2.bf16.msra.mxu0 0
      %463 = vmatprep.subr.bf16.mxu0 0
      %464 = vmatpush2.bf16.msra.mxu0 0
      %465 = vmatprep.mubr.bf16.mxu0 0
      %466 = vmatmul.mubr.bf16.gmra.mxu0 %v428
      %v467 = vpop.f32.mrf.mxu0
      %v468 = vadd.f32 0.0, %v467
      %v469 = vpop.f32.mrf.mxu0
      %v470 = vpop.f32.mrf.mxu0
      %v471 = vadd.f32 0.0, %v470
      %v472 = vpop.f32.mrf.mxu0
      %473 = vdwg.mxu0
      %v474 = vadd.f32 %v389, %v468
      %v475 = vadd.f32 %v390, %v471
      %vm476 = vcmp.ge.f32.partialorder %v474, 0.0
      %vm477 = vcmp.ge.f32.partialorder %v475, 0.0
      %v478 = vmul.f32 %v474, 0.2
      %v479 = vmul.f32 %v475, 0.2
      %v480 = vsel %vm476, %v474, %v478
      %v481 = vsel %vm477, %v475, %v479
      %v482 = vpack.c.bf16 %v481, %v480
      %v484 = vunpack.c.l.b16 %v482
      %v485 = vunpack.c.h.b16 %v482
      %v486 = vpack.c.b16 %v484, %v484
      %v487 = vpack.c.b16 %v485, %v485
      %vm490 = vcmask 60416
      %491 = vst.msk [vmem:[%s167] sm:$0xf] %vm490, %v486
      %492 = vst.msk [vmem:[%s167 + $0x4] sm:$0xf] %vm490, %v487
      %v493 = vld [vmem:[%s321] sm:$0xf]
      %v494 = vld [vmem:[%s321 + $0x4] sm:$0xf]
      %v495 = vld [vmem:[%s1] sm:$0xf]
      %v496 = vld [vmem:[%s1 + $0x4] sm:$0xf]
      %v497 = vld [vmem:[%s1 + $0x8] sm:$0xf]
      %v498 = vld [vmem:[%s321 + $0x8] sm:$0x1]
      %v499 = vld [vmem:[%s180] sm:$0xf]
      %v500 = vld [vmem:[%s180 + $0x4] sm:$0xf]
      %v501 = vld [vmem:[%s180 + $0x8] sm:$0xf]
      %v505 = vunpack.c.l.b16 %v493
      %v506 = vunpack.c.l.b16 %v494
      %v507 = vunpack.c.l.b16 %v498
      %v508 = vpack.c.b16 %v506, %v505
      %v509 = vpack.c.b16 %v507, %v507
      %v511 = vshrl.u32 %v508, 16
      %v513 = vshll.u32 %v508, 16
      %v515 = vrot.slane %v513, 1
      %v516 = vor.u32 %v511, %v515
      %v518 = vshll.u32 %v509, 16
      %v520 = vrot.slane %v518, 1
      %v521 = vsel %vm192, %v516, %v520
      %v525 = vunpack.c.l.b16 %v499
      %v526 = vunpack.c.l.b16 %v500
      %v527 = vunpack.c.l.b16 %v501
      %v528 = vpack.c.b16 %v526, %v525
      %v529 = vpack.c.b16 %v527, %v527
      %v532 = vsel %vm214, %v521, 0
      %v535 = vsel %vm218, %v529, 0
      %537 = vmatprep.subr.bf16.mxu0 0
      %538 = vmatpush1.bf16.msra.mxu0 0
      %539 = vmatprep.subr.bf16.mxu0 0
      %540 = vmatpush1.bf16.msra.mxu0 0
      %541 = vmatprep.subr.bf16.mxu0 0
      %542 = vmatpush1.bf16.msra.mxu0 0
      %543 = vmatprep.subr.bf16.mxu0 0
      %544 = vmatpush1.bf16.msra.mxu0 0
      %545 = vmatprep.subr.bf16.mxu0 0
      %546 = vmatpush1.bf16.msra.mxu0 0
      %547 = vmatprep.subr.bf16.mxu0 0
      %548 = vmatpush1.bf16.msra.mxu0 0
      %549 = vmatprep.subr.bf16.mxu0 0
      %550 = vmatpush1.bf16.msra.mxu0 %v535
      %551 = vmatprep.subr.bf16.mxu0 0
      %552 = vmatpush1.bf16.msra.mxu0 %v528
      %553 = vmatprep.subr.bf16.mxu0 0
      %554 = vmatpush2.bf16.msra.mxu0 0
      %555 = vmatprep.subr.bf16.mxu0 0
      %556 = vmatpush2.bf16.msra.mxu0 0
      %557 = vmatprep.subr.bf16.mxu0 0
      %558 = vmatpush2.bf16.msra.mxu0 0
      %559 = vmatprep.subr.bf16.mxu0 0
      %560 = vmatpush2.bf16.msra.mxu0 0
      %561 = vmatprep.subr.bf16.mxu0 0
      %562 = vmatpush2.bf16.msra.mxu0 0
      %563 = vmatprep.subr.bf16.mxu0 0
      %564 = vmatpush2.bf16.msra.mxu0 0
      %565 = vmatprep.subr.bf16.mxu0 0
      %566 = vmatpush2.bf16.msra.mxu0 0
      %567 = vmatprep.subr.bf16.mxu0 0
      %568 = vmatpush2.bf16.msra.mxu0 0
      %569 = vmatprep.mubr.bf16.mxu0 0
      %570 = vmatmul.mubr.bf16.gmra.mxu0 %v532
      %v571 = vpop.f32.mrf.mxu0
      %v572 = vadd.f32 0.0, %v571
      %v573 = vpop.f32.mrf.mxu0
      %v574 = vpop.f32.mrf.mxu0
      %v575 = vadd.f32 0.0, %v574
      %v576 = vpop.f32.mrf.mxu0
      %577 = vdwg.mxu0
      %v581 = vunpack.c.l.b16 %v495
      %v582 = vunpack.c.l.b16 %v496
      %v583 = vunpack.c.l.b16 %v497
      %v584 = vpack.c.b16 %v582, %v581
      %v585 = vpack.c.b16 %v583, %v583
      %v587 = vsel %vm214, %v508, 0
      %v590 = vsel %vm218, %v585, 0
      %592 = vmatprep.subr.bf16.mxu0 0
      %593 = vmatpush1.bf16.msra.mxu0 0
      %594 = vmatprep.subr.bf16.mxu0 0
      %595 = vmatpush1.bf16.msra.mxu0 0
      %596 = vmatprep.subr.bf16.mxu0 0
      %597 = vmatpush1.bf16.msra.mxu0 0
      %598 = vmatprep.subr.bf16.mxu0 0
      %599 = vmatpush1.bf16.msra.mxu0 0
      %600 = vmatprep.subr.bf16.mxu0 0
      %601 = vmatpush1.bf16.msra.mxu0 0
      %602 = vmatprep.subr.bf16.mxu0 0
      %603 = vmatpush1.bf16.msra.mxu0 0
      %604 = vmatprep.subr.bf16.mxu0 0
      %605 = vmatpush1.bf16.msra.mxu0 %v590
      %606 = vmatprep.subr.bf16.mxu0 0
      %607 = vmatpush1.bf16.msra.mxu0 %v584
      %608 = vmatprep.subr.bf16.mxu0 0
      %609 = vmatpush2.bf16.msra.mxu0 0
      %610 = vmatprep.subr.bf16.mxu0 0
      %611 = vmatpush2.bf16.msra.mxu0 0
      %612 = vmatprep.subr.bf16.mxu0 0
      %613 = vmatpush2.bf16.msra.mxu0 0
      %614 = vmatprep.subr.bf16.mxu0 0
      %615 = vmatpush2.bf16.msra.mxu0 0
      %616 = vmatprep.subr.bf16.mxu0 0
      %617 = vmatpush2.bf16.msra.mxu0 0
      %618 = vmatprep.subr.bf16.mxu0 0
      %619 = vmatpush2.bf16.msra.mxu0 0
      %620 = vmatprep.subr.bf16.mxu0 0
      %621 = vmatpush2.bf16.msra.mxu0 0
      %622 = vmatprep.subr.bf16.mxu0 0
      %623 = vmatpush2.bf16.msra.mxu0 0
      %624 = vmatprep.mubr.bf16.mxu0 0
      %625 = vmatmul.mubr.bf16.gmra.mxu0 %v587
      %v626 = vpop.f32.mrf.mxu0
      %v627 = vadd.f32 %v572, %v626
      %v628 = vpop.f32.mrf.mxu0
      %v629 = vpop.f32.mrf.mxu0
      %v630 = vadd.f32 %v575, %v629
      %v631 = vpop.f32.mrf.mxu0
      %632 = vdwg.mxu0
      %s633 = sadd.s32 %s170, 2
      %s634 = smul.u32 %s633, 3
      %s635 = smul.addr %s634, 4
      %s636 = scalar_lea.vmem %s157, %s635
      %v637 = vld [vmem:[%s636] sm:$0xf]
      %v638 = vld [vmem:[%s636 + $0x4] sm:$0xf]
      %v639 = vld [vmem:[%s324] sm:$0xf]
      %v640 = vld [vmem:[%s324 + $0x4] sm:$0xf]
      %v641 = vld [vmem:[%s324 + $0x8] sm:$0xf]
      %v644 = vunpack.c.l.b16 %v637
      %v645 = vunpack.c.l.b16 %v638
      %v646 = vpack.c.b16 %v645, %v644
      %v650 = vunpack.c.l.b16 %v639
      %v651 = vunpack.c.l.b16 %v640
      %v652 = vunpack.c.l.b16 %v641
      %v653 = vpack.c.b16 %v651, %v650
      %v654 = vpack.c.b16 %v652, %v652
      %v657 = vsel %vm214, %v646, 0
      %v660 = vsel %vm218, %v654, 0
      %662 = vmatprep.subr.bf16.mxu0 0
      %663 = vmatpush1.bf16.msra.mxu0 0
      %664 = vmatprep.subr.bf16.mxu0 0
      %665 = vmatpush1.bf16.msra.mxu0 0
      %666 = vmatprep.subr.bf16.mxu0 0
      %667 = vmatpush1.bf16.msra.mxu0 0
      %668 = vmatprep.subr.bf16.mxu0 0
      %669 = vmatpush1.bf16.msra.mxu0 0
      %670 = vmatprep.subr.bf16.mxu0 0
      %671 = vmatpush1.bf16.msra.mxu0 0
      %672 = vmatprep.subr.bf16.mxu0 0
      %673 = vmatpush1.bf16.msra.mxu0 0
      %674 = vmatprep.subr.bf16.mxu0 0
      %675 = vmatpush1.bf16.msra.mxu0 %v660
      %676 = vmatprep.subr.bf16.mxu0 0
      %677 = vmatpush1.bf16.msra.mxu0 %v653
      %678 = vmatprep.subr.bf16.mxu0 0
      %679 = vmatpush2.bf16.msra.mxu0 0
      %680 = vmatprep.subr.bf16.mxu0 0
      %681 = vmatpush2.bf16.msra.mxu0 0
      %682 = vmatprep.subr.bf16.mxu0 0
      %683 = vmatpush2.bf16.msra.mxu0 0
      %684 = vmatprep.subr.bf16.mxu0 0
      %685 = vmatpush2.bf16.msra.mxu0 0
      %686 = vmatprep.subr.bf16.mxu0 0
      %687 = vmatpush2.bf16.msra.mxu0 0
      %688 = vmatprep.subr.bf16.mxu0 0
      %689 = vmatpush2.bf16.msra.mxu0 0
      %690 = vmatprep.subr.bf16.mxu0 0
      %691 = vmatpush2.bf16.msra.mxu0 0
      %692 = vmatprep.subr.bf16.mxu0 0
      %693 = vmatpush2.bf16.msra.mxu0 0
      %694 = vmatprep.mubr.bf16.mxu0 0
      %695 = vmatmul.mubr.bf16.gmra.mxu0 %v657
      %v696 = vpop.f32.mrf.mxu0
      %v697 = vadd.f32 0.0, %v696
      %v698 = vpop.f32.mrf.mxu0
      %v699 = vpop.f32.mrf.mxu0
      %v700 = vadd.f32 0.0, %v699
      %v701 = vpop.f32.mrf.mxu0
      %702 = vdwg.mxu0
      %v703 = vadd.f32 %v627, %v697
      %v704 = vadd.f32 %v630, %v700
      %v705 = vld [vmem:[%s636] sm:$0xf]
      %v706 = vld [vmem:[%s636 + $0x4] sm:$0xf]
      %v707 = vld [vmem:[%s636 + $0x8] sm:$0x1]
      %v708 = vld [vmem:[%s394] sm:$0xf]
      %v709 = vld [vmem:[%s394 + $0x4] sm:$0xf]
      %v710 = vld [vmem:[%s394 + $0x8] sm:$0xf]
      %v714 = vunpack.c.l.b16 %v705
      %v715 = vunpack.c.l.b16 %v706
      %v716 = vunpack.c.l.b16 %v707
      %v717 = vpack.c.b16 %v715, %v714
      %v718 = vpack.c.b16 %v716, %v716
      %v720 = vshrl.u32 %v717, 16
      %v722 = vshll.u32 %v717, 16
      %v724 = vrot.slane %v722, 1
      %v725 = vor.u32 %v720, %v724
      %v727 = vshll.u32 %v718, 16
      %v729 = vrot.slane %v727, 1
      %v730 = vsel %vm192, %v725, %v729
      %v734 = vunpack.c.l.b16 %v708
      %v735 = vunpack.c.l.b16 %v709
      %v736 = vunpack.c.l.b16 %v710
      %v737 = vpack.c.b16 %v735, %v734
      %v738 = vpack.c.b16 %v736, %v736
      %v741 = vsel %vm214, %v730, 0
      %v744 = vsel %vm218, %v738, 0
      %746 = vmatprep.subr.bf16.mxu0 0
      %747 = vmatpush1.bf16.msra.mxu0 0
      %748 = vmatprep.subr.bf16.mxu0 0
      %749 = vmatpush1.bf16.msra.mxu0 0
      %750 = vmatprep.subr.bf16.mxu0 0
      %751 = vmatpush1.bf16.msra.mxu0 0
      %752 = vmatprep.subr.bf16.mxu0 0
      %753 = vmatpush1.bf16.msra.mxu0 0
      %754 = vmatprep.subr.bf16.mxu0 0
      %755 = vmatpush1.bf16.msra.mxu0 0
      %756 = vmatprep.subr.bf16.mxu0 0
      %757 = vmatpush1.bf16.msra.mxu0 0
      %758 = vmatprep.subr.bf16.mxu0 0
      %759 = vmatpush1.bf16.msra.mxu0 %v744
      %760 = vmatprep.subr.bf16.mxu0 0
      %761 = vmatpush1.bf16.msra.mxu0 %v737
      %762 = vmatprep.subr.bf16.mxu0 0
      %763 = vmatpush2.bf16.msra.mxu0 0
      %764 = vmatprep.subr.bf16.mxu0 0
      %765 = vmatpush2.bf16.msra.mxu0 0
      %766 = vmatprep.subr.bf16.mxu0 0
      %767 = vmatpush2.bf16.msra.mxu0 0
      %768 = vmatprep.subr.bf16.mxu0 0
      %769 = vmatpush2.bf16.msra.mxu0 0
      %770 = vmatprep.subr.bf16.mxu0 0
      %771 = vmatpush2.bf16.msra.mxu0 0
      %772 = vmatprep.subr.bf16.mxu0 0
      %773 = vmatpush2.bf16.msra.mxu0 0
      %774 = vmatprep.subr.bf16.mxu0 0
      %775 = vmatpush2.bf16.msra.mxu0 0
      %776 = vmatprep.subr.bf16.mxu0 0
      %777 = vmatpush2.bf16.msra.mxu0 0
      %778 = vmatprep.mubr.bf16.mxu0 0
      %779 = vmatmul.mubr.bf16.gmra.mxu0 %v741
      %v780 = vpop.f32.mrf.mxu0
      %v781 = vadd.f32 0.0, %v780
      %v782 = vpop.f32.mrf.mxu0
      %v783 = vpop.f32.mrf.mxu0
      %v784 = vadd.f32 0.0, %v783
      %v785 = vpop.f32.mrf.mxu0
      %786 = vdwg.mxu0
      %v787 = vadd.f32 %v703, %v781
      %v788 = vadd.f32 %v704, %v784
      %vm789 = vcmp.ge.f32.partialorder %v787, 0.0
      %vm790 = vcmp.ge.f32.partialorder %v788, 0.0
      %v791 = vmul.f32 %v787, 0.2
      %v792 = vmul.f32 %v788, 0.2
      %v793 = vsel %vm789, %v787, %v791
      %v794 = vsel %vm790, %v788, %v792
      %v795 = vpack.c.bf16 %v794, %v793
      %v797 = vunpack.c.l.b16 %v795
      %v798 = vunpack.c.h.b16 %v795
      %v799 = vpack.c.b16 %v797, %v797
      %v800 = vpack.c.b16 %v798, %v798
      %s803 = scalar_lea.vmem %s167, 8
      %804 = vst.msk [vmem:[%s803] sm:$0xf] %vm490, %v799
      %805 = vst.msk [vmem:[%s803 + $0x4] sm:$0xf] %vm490, %v800
      %v806 = vld [vmem:[%s636] sm:$0xf]
      %v807 = vld [vmem:[%s636 + $0x4] sm:$0xf]
      %v808 = vld [vmem:[%s1] sm:$0xf]
      %v809 = vld [vmem:[%s1 + $0x4] sm:$0xf]
      %v810 = vld [vmem:[%s1 + $0x8] sm:$0xf]
      %v811 = vld [vmem:[%s636 + $0x8] sm:$0x1]
      %v812 = vld [vmem:[%s180] sm:$0xf]
      %v813 = vld [vmem:[%s180 + $0x4] sm:$0xf]
      %v814 = vld [vmem:[%s180 + $0x8] sm:$0xf]
      %v818 = vunpack.c.l.b16 %v806
      %v819 = vunpack.c.l.b16 %v807
      %v820 = vunpack.c.l.b16 %v811
      %v821 = vpack.c.b16 %v819, %v818
      %v822 = vpack.c.b16 %v820, %v820
      %v824 = vshrl.u32 %v821, 16
      %v826 = vshll.u32 %v821, 16
      %v828 = vrot.slane %v826, 1
      %v829 = vor.u32 %v824, %v828
      %v831 = vshll.u32 %v822, 16
      %v833 = vrot.slane %v831, 1
      %v834 = vsel %vm192, %v829, %v833
      %v838 = vunpack.c.l.b16 %v812
      %v839 = vunpack.c.l.b16 %v813
      %v840 = vunpack.c.l.b16 %v814
      %v841 = vpack.c.b16 %v839, %v838
      %v842 = vpack.c.b16 %v840, %v840
      %v845 = vsel %vm214, %v834, 0
      %v848 = vsel %vm218, %v842, 0
      %850 = vmatprep.subr.bf16.mxu0 0
      %851 = vmatpush1.bf16.msra.mxu0 0
      %852 = vmatprep.subr.bf16.mxu0 0
      %853 = vmatpush1.bf16.msra.mxu0 0
      %854 = vmatprep.subr.bf16.mxu0 0
      %855 = vmatpush1.bf16.msra.mxu0 0
      %856 = vmatprep.subr.bf16.mxu0 0
      %857 = vmatpush1.bf16.msra.mxu0 0
      %858 = vmatprep.subr.bf16.mxu0 0
      %859 = vmatpush1.bf16.msra.mxu0 0
      %860 = vmatprep.subr.bf16.mxu0 0
      %861 = vmatpush1.bf16.msra.mxu0 0
      %862 = vmatprep.subr.bf16.mxu0 0
      %863 = vmatpush1.bf16.msra.mxu0 %v848
      %864 = vmatprep.subr.bf16.mxu0 0
      %865 = vmatpush1.bf16.msra.mxu0 %v841
      %866 = vmatprep.subr.bf16.mxu0 0
      %867 = vmatpush2.bf16.msra.mxu0 0
      %868 = vmatprep.subr.bf16.mxu0 0
      %869 = vmatpush2.bf16.msra.mxu0 0
      %870 = vmatprep.subr.bf16.mxu0 0
      %871 = vmatpush2.bf16.msra.mxu0 0
      %872 = vmatprep.subr.bf16.mxu0 0
      %873 = vmatpush2.bf16.msra.mxu0 0
      %874 = vmatprep.subr.bf16.mxu0 0
      %875 = vmatpush2.bf16.msra.mxu0 0
      %876 = vmatprep.subr.bf16.mxu0 0
      %877 = vmatpush2.bf16.msra.mxu0 0
      %878 = vmatprep.subr.bf16.mxu0 0
      %879 = vmatpush2.bf16.msra.mxu0 0
      %880 = vmatprep.subr.bf16.mxu0 0
      %881 = vmatpush2.bf16.msra.mxu0 0
      %882 = vmatprep.mubr.bf16.mxu0 0
      %883 = vmatmul.mubr.bf16.gmra.mxu0 %v845
      %v884 = vpop.f32.mrf.mxu0
      %v885 = vadd.f32 0.0, %v884
      %v886 = vpop.f32.mrf.mxu0
      %v887 = vpop.f32.mrf.mxu0
      %v888 = vadd.f32 0.0, %v887
      %v889 = vpop.f32.mrf.mxu0
      %890 = vdwg.mxu0
      %v894 = vunpack.c.l.b16 %v808
      %v895 = vunpack.c.l.b16 %v809
      %v896 = vunpack.c.l.b16 %v810
      %v897 = vpack.c.b16 %v895, %v894
      %v898 = vpack.c.b16 %v896, %v896
      %v900 = vsel %vm214, %v821, 0
      %v903 = vsel %vm218, %v898, 0
      %905 = vmatprep.subr.bf16.mxu0 0
      %906 = vmatpush1.bf16.msra.mxu0 0
      %907 = vmatprep.subr.bf16.mxu0 0
      %908 = vmatpush1.bf16.msra.mxu0 0
      %909 = vmatprep.subr.bf16.mxu0 0
      %910 = vmatpush1.bf16.msra.mxu0 0
      %911 = vmatprep.subr.bf16.mxu0 0
      %912 = vmatpush1.bf16.msra.mxu0 0
      %913 = vmatprep.subr.bf16.mxu0 0
      %914 = vmatpush1.bf16.msra.mxu0 0
      %915 = vmatprep.subr.bf16.mxu0 0
      %916 = vmatpush1.bf16.msra.mxu0 0
      %917 = vmatprep.subr.bf16.mxu0 0
      %918 = vmatpush1.bf16.msra.mxu0 %v903
      %919 = vmatprep.subr.bf16.mxu0 0
      %920 = vmatpush1.bf16.msra.mxu0 %v897
      %921 = vmatprep.subr.bf16.mxu0 0
      %922 = vmatpush2.bf16.msra.mxu0 0
      %923 = vmatprep.subr.bf16.mxu0 0
      %924 = vmatpush2.bf16.msra.mxu0 0
      %925 = vmatprep.subr.bf16.mxu0 0
      %926 = vmatpush2.bf16.msra.mxu0 0
      %927 = vmatprep.subr.bf16.mxu0 0
      %928 = vmatpush2.bf16.msra.mxu0 0
      %929 = vmatprep.subr.bf16.mxu0 0
      %930 = vmatpush2.bf16.msra.mxu0 0
      %931 = vmatprep.subr.bf16.mxu0 0
      %932 = vmatpush2.bf16.msra.mxu0 0
      %933 = vmatprep.subr.bf16.mxu0 0
      %934 = vmatpush2.bf16.msra.mxu0 0
      %935 = vmatprep.subr.bf16.mxu0 0
      %936 = vmatpush2.bf16.msra.mxu0 0
      %937 = vmatprep.mubr.bf16.mxu0 0
      %938 = vmatmul.mubr.bf16.gmra.mxu0 %v900
      %v939 = vpop.f32.mrf.mxu0
      %v940 = vadd.f32 %v885, %v939
      %v941 = vpop.f32.mrf.mxu0
      %v942 = vpop.f32.mrf.mxu0
      %v943 = vadd.f32 %v888, %v942
      %v944 = vpop.f32.mrf.mxu0
      %945 = vdwg.mxu0
      %s946 = sadd.s32 %s170, 3
      %s947 = smul.u32 %s946, 3
      %s948 = smul.addr %s947, 4
      %s949 = scalar_lea.vmem %s157, %s948
      %v950 = vld [vmem:[%s949] sm:$0xf]
      %v951 = vld [vmem:[%s949 + $0x4] sm:$0xf]
      %v952 = vld [vmem:[%s324] sm:$0xf]
      %v953 = vld [vmem:[%s324 + $0x4] sm:$0xf]
      %v954 = vld [vmem:[%s324 + $0x8] sm:$0xf]
      %v957 = vunpack.c.l.b16 %v950
      %v958 = vunpack.c.l.b16 %v951
      %v959 = vpack.c.b16 %v958, %v957
      %v963 = vunpack.c.l.b16 %v952
      %v964 = vunpack.c.l.b16 %v953
      %v965 = vunpack.c.l.b16 %v954
      %v966 = vpack.c.b16 %v964, %v963
      %v967 = vpack.c.b16 %v965, %v965
      %v970 = vsel %vm214, %v959, 0
      %v973 = vsel %vm218, %v967, 0
      %975 = vmatprep.subr.bf16.mxu0 0
      %976 = vmatpush1.bf16.msra.mxu0 0
      %977 = vmatprep.subr.bf16.mxu0 0
      %978 = vmatpush1.bf16.msra.mxu0 0
      %979 = vmatprep.subr.bf16.mxu0 0
      %980 = vmatpush1.bf16.msra.mxu0 0
      %981 = vmatprep.subr.bf16.mxu0 0
      %982 = vmatpush1.bf16.msra.mxu0 0
      %983 = vmatprep.subr.bf16.mxu0 0
      %984 = vmatpush1.bf16.msra.mxu0 0
      %985 = vmatprep.subr.bf16.mxu0 0
      %986 = vmatpush1.bf16.msra.mxu0 0
      %987 = vmatprep.subr.bf16.mxu0 0
      %988 = vmatpush1.bf16.msra.mxu0 %v973
      %989 = vmatprep.subr.bf16.mxu0 0
      %990 = vmatpush1.bf16.msra.mxu0 %v966
      %991 = vmatprep.subr.bf16.mxu0 0
      %992 = vmatpush2.bf16.msra.mxu0 0
      %993 = vmatprep.subr.bf16.mxu0 0
      %994 = vmatpush2.bf16.msra.mxu0 0
      %995 = vmatprep.subr.bf16.mxu0 0
      %996 = vmatpush2.bf16.msra.mxu0 0
      %997 = vmatprep.subr.bf16.mxu0 0
      %998 = vmatpush2.bf16.msra.mxu0 0
      %999 = vmatprep.subr.bf16.mxu0 0
      %1000 = vmatpush2.bf16.msra.mxu0 0
      %1001 = vmatprep.subr.bf16.mxu0 0
      %1002 = vmatpush2.bf16.msra.mxu0 0
      %1003 = vmatprep.subr.bf16.mxu0 0
      %1004 = vmatpush2.bf16.msra.mxu0 0
      %1005 = vmatprep.subr.bf16.mxu0 0
      %1006 = vmatpush2.bf16.msra.mxu0 0
      %1007 = vmatprep.mubr.bf16.mxu0 0
      %1008 = vmatmul.mubr.bf16.gmra.mxu0 %v970
      %v1009 = vpop.f32.mrf.mxu0
      %v1010 = vadd.f32 0.0, %v1009
      %v1011 = vpop.f32.mrf.mxu0
      %v1012 = vpop.f32.mrf.mxu0
      %v1013 = vadd.f32 0.0, %v1012
      %v1014 = vpop.f32.mrf.mxu0
      %1015 = vdwg.mxu0
      %v1016 = vadd.f32 %v940, %v1010
      %v1017 = vadd.f32 %v943, %v1013
      %v1018 = vld [vmem:[%s949] sm:$0xf]
      %v1019 = vld [vmem:[%s949 + $0x4] sm:$0xf]
      %v1020 = vld [vmem:[%s949 + $0x8] sm:$0x1]
      %v1021 = vld [vmem:[%s394] sm:$0xf]
      %v1022 = vld [vmem:[%s394 + $0x4] sm:$0xf]
      %v1023 = vld [vmem:[%s394 + $0x8] sm:$0xf]
      %v1027 = vunpack.c.l.b16 %v1018
      %v1028 = vunpack.c.l.b16 %v1019
      %v1029 = vunpack.c.l.b16 %v1020
      %v1030 = vpack.c.b16 %v1028, %v1027
      %v1031 = vpack.c.b16 %v1029, %v1029
      %v1033 = vshrl.u32 %v1030, 16
      %v1035 = vshll.u32 %v1030, 16
      %v1037 = vrot.slane %v1035, 1
      %v1038 = vor.u32 %v1033, %v1037
      %v1040 = vshll.u32 %v1031, 16
      %v1042 = vrot.slane %v1040, 1
      %v1043 = vsel %vm192, %v1038, %v1042
      %v1047 = vunpack.c.l.b16 %v1021
      %v1048 = vunpack.c.l.b16 %v1022
      %v1049 = vunpack.c.l.b16 %v1023
      %v1050 = vpack.c.b16 %v1048, %v1047
      %v1051 = vpack.c.b16 %v1049, %v1049
      %v1054 = vsel %vm214, %v1043, 0
      %v1057 = vsel %vm218, %v1051, 0
      %1059 = vmatprep.subr.bf16.mxu0 0
      %1060 = vmatpush1.bf16.msra.mxu0 0
      %1061 = vmatprep.subr.bf16.mxu0 0
      %1062 = vmatpush1.bf16.msra.mxu0 0
      %1063 = vmatprep.subr.bf16.mxu0 0
      %1064 = vmatpush1.bf16.msra.mxu0 0
      %1065 = vmatprep.subr.bf16.mxu0 0
      %1066 = vmatpush1.bf16.msra.mxu0 0
      %1067 = vmatprep.subr.bf16.mxu0 0
      %1068 = vmatpush1.bf16.msra.mxu0 0
      %1069 = vmatprep.subr.bf16.mxu0 0
      %1070 = vmatpush1.bf16.msra.mxu0 0
      %1071 = vmatprep.subr.bf16.mxu0 0
      %1072 = vmatpush1.bf16.msra.mxu0 %v1057
      %1073 = vmatprep.subr.bf16.mxu0 0
      %1074 = vmatpush1.bf16.msra.mxu0 %v1050
      %1075 = vmatprep.subr.bf16.mxu0 0
      %1076 = vmatpush2.bf16.msra.mxu0 0
      %1077 = vmatprep.subr.bf16.mxu0 0
      %1078 = vmatpush2.bf16.msra.mxu0 0
      %1079 = vmatprep.subr.bf16.mxu0 0
      %1080 = vmatpush2.bf16.msra.mxu0 0
      %1081 = vmatprep.subr.bf16.mxu0 0
      %1082 = vmatpush2.bf16.msra.mxu0 0
      %1083 = vmatprep.subr.bf16.mxu0 0
      %1084 = vmatpush2.bf16.msra.mxu0 0
      %1085 = vmatprep.subr.bf16.mxu0 0
      %1086 = vmatpush2.bf16.msra.mxu0 0
      %1087 = vmatprep.subr.bf16.mxu0 0
      %1088 = vmatpush2.bf16.msra.mxu0 0
      %1089 = vmatprep.subr.bf16.mxu0 0
      %1090 = vmatpush2.bf16.msra.mxu0 0
      %1091 = vmatprep.mubr.bf16.mxu0 0
      %1092 = vmatmul.mubr.bf16.gmra.mxu0 %v1054
      %v1093 = vpop.f32.mrf.mxu0
      %v1094 = vadd.f32 0.0, %v1093
      %v1095 = vpop.f32.mrf.mxu0
      %v1096 = vpop.f32.mrf.mxu0
      %v1097 = vadd.f32 0.0, %v1096
      %v1098 = vpop.f32.mrf.mxu0
      %1099 = vdwg.mxu0
      %v1100 = vadd.f32 %v1016, %v1094
      %v1101 = vadd.f32 %v1017, %v1097
      %vm1102 = vcmp.ge.f32.partialorder %v1100, 0.0
      %vm1103 = vcmp.ge.f32.partialorder %v1101, 0.0
      %v1104 = vmul.f32 %v1100, 0.2
      %v1105 = vmul.f32 %v1101, 0.2
      %v1106 = vsel %vm1102, %v1100, %v1104
      %v1107 = vsel %vm1103, %v1101, %v1105
      %v1108 = vpack.c.bf16 %v1107, %v1106
      %v1110 = vunpack.c.l.b16 %v1108
      %v1111 = vunpack.c.h.b16 %v1108
      %v1112 = vpack.c.b16 %v1110, %v1110
      %v1113 = vpack.c.b16 %v1111, %v1111
      %s1116 = scalar_lea.vmem %s167, 16
      %1117 = vst.msk [vmem:[%s1116] sm:$0xf] %vm490, %v1112
      %1118 = vst.msk [vmem:[%s1116 + $0x4] sm:$0xf] %vm490, %v1113
      %s1119 = smul.u32 3, %s18
      %p1120 = scmp.lt.s32.totalorder %s17, 1
      %s1121 = scalar_select %p1120, %s17, 1
      %p1122 = scmp.lt.s32.totalorder %s1119, 17
      %s1123 = scalar_select %p1122, %s1119, 17
      %s1124 = smul.addr %s1123, 2
      %s1125 = smul.addr %s1121, 36
      %s1126 = sadd.s32 %s1124, %s1125
      %s1127 = smul.addr %s1126, 4
      %s1128 = scalar_lea.vmem %s2, %s1127
      // Predicated region
      $region29: #{_lambda_.6} parent=27 // pred_check
        %p1129 = pneg %p92
      $region30: #{_lambda_.6} parent=27 // pred_check_branch
        %1131 = sbr.rel (%p1129) target = $region32
      $region31: #{_lambda_.6} parent=27 // pred_region
        %s1132 = smul.u32 3, %s18
      $region32: #{_lambda_.6} parent=27 // pred_fallthru
        _
    $region28: #{_lambda_.6} parent=5 // pred_fallthru
      _
    %p1133 = scmp.le.s32.totalorder 2, %s8
    // Predicated region
    $region33: #{_lambda_.6} parent=5 // pred_check
      %p1134 = pneg %p1133
    $region34: #{_lambda_.6} parent=5 // pred_check_branch
      %1136 = sbr.rel (%p1134) target = $region36
    $region35: #{_lambda_.6} parent=5 // pred_region
      %s1137 = ssub.s32 %s8, 2
      // Predicated region
      $region37: #{_lambda_.6} parent=35 // pred_check
        %p1138 = pneg %p98
      $region38: #{_lambda_.6} parent=35 // pred_check_branch
        %1140 = sbr.rel (%p1138) target = $region40
      $region39: #{_lambda_.6} parent=35 // pred_region
        %s1141 = smul.u32 3, %s20
        %p1142 = scmp.lt.s32.totalorder %s19, 1
        %s1143 = scalar_select %p1142, %s19, 1
        %p1144 = scmp.lt.s32.totalorder %s1141, 17
        %s1145 = scalar_select %p1144, %s1141, 17
        %s1146 = smul.addr %s1145, 2
        %s1147 = smul.addr %s1143, 36
        %s1148 = sadd.s32 %s1146, %s1147
        %s1149 = smul.addr %s1148, 4
        %s1150 = scalar_lea.vmem %s2, %s1149
      $region40: #{_lambda_.6} parent=35 // pred_fallthru
        _
    $region36: #{_lambda_.6} parent=5 // pred_fallthru
      _
  $region6: #{_lambda_.6} parent=0 // loop_footer
    %s12 = sadd.s32 1, %s8
  $region7: #{_lambda_.6} parent=0 // loop_footer_branch
    %7 = sbr.rel target = $region3
  $region8: #{_lambda_.6} parent=0 // loop_exit
    _

// kernel: _lambda_.8
$region0: #{_lambda_.8}
  #allocation0 [shape = 'u32[]', space=smem, size = 0x4, offset = 0x4, fixed_abs, tag = 'smem constant byte address 0x4 - core index']
  #allocation1 [shape = 'u32[144,128]{1,0:T(1,128)}', space=vmem, size = 0x12000, scoped, tag = 'internal scratch']
  %s0 = inlined_call_operand.vmem [shape: bf16[144,16], index: 0, kind: input, shape index: {}]
  %s1 = inlined_call_operand.vmem [shape: f32[1,16], index: 1, kind: input, shape index: {}]
  %s2 = inlined_call_operand.vmem [shape: f32[1,16], index: 2, kind: input, shape index: {}]
  %s3 = inlined_call_operand.vmem [shape: bf16[144,16], index: 3, kind: output, shape index: {}]
  %s4 = sld [smem:[#allocation0]]
  $region45: #{_lambda_.8} parent=0
    _
  %s6 = ssub.s32 1, %s4
  %s7 = scalar_select 0, %s6, %s4
  loop: start=0, step=1, limit=11
  $region2: #{_lambda_.8} parent=0 // loop_pre_header
    _
  $region3: #{_lambda_.8} parent=0 // loop_header
    %s9 = sphi 0, %s13
    %p10 = scmp.ge.s32.totalorder %s9, 11
    %s19 = sphi 0, %s21
    %s22 = sphi 0, %s19
    %s23 = sphi 0, %s22
    %s39 = sphi 0, %s23
    %s43 = sphi 0, %s43
    %s45 = sphi 0, %s43
    %s46 = sphi 0, %s45
    %s60 = sphi 0, %s46
    %s64 = sphi 0, %s64
    %s66 = sphi 0, %s64
    %s67 = sphi 0, %s66
    %s81 = sphi 0, %s67
    %s87 = sphi 0, %s89
    %s90 = sphi 0, %s87
    %s91 = sphi 0, %s90
    %s107 = sphi 0, %s91
  $region4: #{_lambda_.8} parent=0 // loop_header_branch
    %12 = sbr.rel (%p10) target = $region8
  $region5: #{_lambda_.8} parent=0 // loop_body
    %s14 = ssub.s32 %s9, 1
    %s15 = ssub.s32 %s9, 2
    %s16 = sadd.s32 %s9, 1
    %s17 = ssub.s32 %s9, %s16
    %p18 = scmp.eq.s32.totalorder %s17, 0
    %s20 = sadd.s32 %s19, 1
    %s21 = scalar_select %p18, %s19, %s20
    %p24 = pneg %p18
    %p25 = scmp.eq.s32.totalorder %s9, 8
    %p26 = por %p24, %p25
    %p27 = scmp.ne.s32.totalorder %s19, %s22
    %p28 = scmp.eq.s32.totalorder %s9, 0
    %p29 = por %p27, %p28
    %p30 = scmp.ne.s32.totalorder %s19, %s22
    %p31 = scmp.eq.s32.totalorder %s14, 8
    %p32 = por %p30, %p31
    %p33 = scmp.ne.s32.totalorder %s22, %s23
    %p34 = scmp.eq.s32.totalorder %s14, 0
    %p35 = por %p33, %p34
    %p36 = scmp.ne.s32.totalorder %s22, %s23
    %p37 = scmp.eq.s32.totalorder %s15, 8
    %p38 = por %p36, %p37
    %p40 = scmp.ne.s32.totalorder %s23, %s39
    %p41 = scmp.eq.s32.totalorder %s15, 0
    %p42 = por %p40, %p41
    %s44 = sadd.s32 %s43, 1
    %p47 = scmp.eq.s32.totalorder %s9, 8
    %p48 = scmp.ne.s32.totalorder %s43, %s45
    %p49 = scmp.eq.s32.totalorder %s9, 0
    %p50 = por %p48, %p49
    %p51 = scmp.ne.s32.totalorder %s43, %s45
    %p52 = scmp.eq.s32.totalorder %s14, 8
    %p53 = por %p51, %p52
    %p54 = scmp.ne.s32.totalorder %s45, %s46
    %p55 = scmp.eq.s32.totalorder %s14, 0
    %p56 = por %p54, %p55
    %p57 = scmp.ne.s32.totalorder %s45, %s46
    %p58 = scmp.eq.s32.totalorder %s15, 8
    %p59 = por %p57, %p58
    %p61 = scmp.ne.s32.totalorder %s46, %s60
    %p62 = scmp.eq.s32.totalorder %s15, 0
    %p63 = por %p61, %p62
    %s65 = sadd.s32 %s64, 1
    %p68 = scmp.eq.s32.totalorder %s9, 8
    %p69 = scmp.ne.s32.totalorder %s64, %s66
    %p70 = scmp.eq.s32.totalorder %s9, 0
    %p71 = por %p69, %p70
    %p72 = scmp.ne.s32.totalorder %s64, %s66
    %p73 = scmp.eq.s32.totalorder %s14, 8
    %p74 = por %p72, %p73
    %p75 = scmp.ne.s32.totalorder %s66, %s67
    %p76 = scmp.eq.s32.totalorder %s14, 0
    %p77 = por %p75, %p76
    %p78 = scmp.ne.s32.totalorder %s66, %s67
    %p79 = scmp.eq.s32.totalorder %s15, 8
    %p80 = por %p78, %p79
    %p82 = scmp.ne.s32.totalorder %s67, %s81
    %p83 = scmp.eq.s32.totalorder %s15, 0
    %p84 = por %p82, %p83
    %s85 = ssub.s32 %s9, %s16
    %p86 = scmp.eq.s32.totalorder %s85, 0
    %s88 = sadd.s32 %s87, 1
    %s89 = scalar_select %p86, %s87, %s88
    %p92 = pneg %p86
    %p93 = scmp.eq.s32.totalorder %s9, 8
    %p94 = por %p92, %p93
    %p95 = scmp.ne.s32.totalorder %s87, %s90
    %p96 = scmp.eq.s32.totalorder %s9, 0
    %p97 = por %p95, %p96
    %p98 = scmp.ne.s32.totalorder %s87, %s90
    %p99 = scmp.eq.s32.totalorder %s14, 8
    %p100 = por %p98, %p99
    %p101 = scmp.ne.s32.totalorder %s90, %s91
    %p102 = scmp.eq.s32.totalorder %s14, 0
    %p103 = por %p101, %p102
    %p104 = scmp.ne.s32.totalorder %s90, %s91
    %p105 = scmp.eq.s32.totalorder %s15, 8
    %p106 = por %p104, %p105
    %p108 = scmp.ne.s32.totalorder %s91, %s107
    %p109 = scmp.eq.s32.totalorder %s15, 0
    %p110 = por %p108, %p109
    %p111 = scmp.le.s32.totalorder 1, %s9
    %p112 = scmp.lt.s32.totalorder %s9, 10
    %p113 = pnand %p111, %p112
    %p114 = pneg %p113
    // Predicated region
    $region9: #{_lambda_.8} parent=5 // pred_check
      _
    $region10: #{_lambda_.8} parent=5 // pred_check_branch
      %116 = sbr.rel (%p113) target = $region12
    $region11: #{_lambda_.8} parent=5 // pred_region
      %s117 = ssub.s32 %s9, 1
      // Predicated region
      $region13: #{_lambda_.8} parent=11 // pred_check
        %p118 = pneg %p56
      $region14: #{_lambda_.8} parent=11 // pred_check_branch
        %120 = sbr.rel (%p118) target = $region16
      $region15: #{_lambda_.8} parent=11 // pred_region
        _
      $region16: #{_lambda_.8} parent=11 // pred_fallthru
        _
      // Predicated region
      $region17: #{_lambda_.8} parent=11 // pred_check
        %p121 = pneg %p77
      $region18: #{_lambda_.8} parent=11 // pred_check_branch
        %123 = sbr.rel (%p121) target = $region20
      $region19: #{_lambda_.8} parent=11 // pred_region
        _
      $region20: #{_lambda_.8} parent=11 // pred_fallthru
        _
    $region12: #{_lambda_.8} parent=5 // pred_fallthru
      _
    %p124 = scmp.lt.s32.totalorder %s9, 9
    // Predicated region
    $region21: #{_lambda_.8} parent=5 // pred_check
      %p125 = pneg %p124
    $region22: #{_lambda_.8} parent=5 // pred_check_branch
      %127 = sbr.rel (%p125) target = $region24
    $region23: #{_lambda_.8} parent=5 // pred_region
      // Predicated region
      $region25: #{_lambda_.8} parent=23 // pred_check
        %p128 = pneg %p29
      $region26: #{_lambda_.8} parent=23 // pred_check_branch
        %130 = sbr.rel (%p128) target = $region28
      $region27: #{_lambda_.8} parent=23 // pred_region
        %s131 = smul.u32 2, %s9
        %p132 = scmp.lt.s32.totalorder %s131, 17
        %s133 = scalar_select %p132, %s131, 17
        %s134 = smul.addr %s133, 4
        %s135 = scalar_lea.vmem %s0, %s134
        %s136 = smul.u32 2, %s9
      $region28: #{_lambda_.8} parent=23 // pred_fallthru
        _
    $region24: #{_lambda_.8} parent=5 // pred_fallthru
      _
    %p137 = scmp.le.s32.totalorder 1, %s9
    %p138 = scmp.lt.s32.totalorder %s9, 10
    %p139 = pnand %p137, %p138
    %p140 = pneg %p139
    // Predicated region
    $region29: #{_lambda_.8} parent=5 // pred_check
      _
    $region30: #{_lambda_.8} parent=5 // pred_check_branch
      %142 = sbr.rel (%p139) target = $region32
    $region31: #{_lambda_.8} parent=5 // pred_region
      %s143 = ssub.s32 %s9, 1
      %s144 = smul.u32 2, %s14
      %p145 = scmp.lt.s32.totalorder %s144, 17
      %s146 = scalar_select %p145, %s144, 17
      %s147 = smul.addr %s146, 4
      %s148 = scalar_lea.vmem %s0, %s147
      %p149 = pneg %p35
      %p150 = pneg %p32
      %p151 = pneg %p56
      %p152 = pneg %p53
      %p153 = pneg %p77
      %p154 = pneg %p74
      %p155 = pneg %p103
      %p156 = pneg %p100
      %s157 = smul.u32 2, %s14
      %p158 = scmp.lt.s32.totalorder %s157, 17
      %s159 = scalar_select %p158, %s157, 17
      %s160 = smul.addr %s159, 4
      %s161 = scalar_lea.vmem %s3, %s160
      %s162 = smul.u32 2, %s14
      %p163 = scmp.lt.s32.totalorder %s162, 17
      %s164 = scalar_select %p163, %s162, 17
      %s165 = smul.addr %s164, 4
      %s166 = scalar_lea.vmem %s0, %s165
      %s167 = smul.u32 2, %s14
      %s168 = smul.u32 2, %s14
      %p169 = scmp.lt.s32.totalorder %s168, 17
      %s170 = scalar_select %p169, %s168, 17
      %s171 = smul.addr %s170, 4
      %s172 = scalar_lea.vmem %s3, %s171
      %s173 = smul.u32 2, %s14
      %v174 = vld [vmem:[%s166] sm:$0xf]
      %v175 = vld [vmem:[%s166 + $0x4] sm:$0xf]
      %v176 = vunpack.c.l.bf16 %v174
      %v177 = vunpack.c.l.bf16 %v175
      %v178 = vld [vmem:[%s1] sm:$0x1]
      %v180 = vlaneseq
      %v181 = vshrl.u32 %v180, 7
      %v182 = vsub.s32 0, %v181
      %v183 = vrot.slane %v178, %v182
      %v185 = vmul.f32 %v176, %v183
      %v186 = vmul.f32 %v177, %v183
      %v187 = vld [vmem:[%s2] sm:$0x1]
      %v189 = vlaneseq
      %v190 = vshrl.u32 %v189, 7
      %v191 = vsub.s32 0, %v190
      %v192 = vrot.slane %v187, %v191
      %v194 = vadd.f32 %v185, %v192
      %v195 = vadd.f32 %v186, %v192
      %vm196 = vcmp.ge.f32.partialorder %v194, 0.0
      %vm197 = vcmp.ge.f32.partialorder %v195, 0.0
      %v198 = vmul.f32 %v194, 0.2
      %v199 = vmul.f32 %v195, 0.2
      %v200 = vsel %vm196, %v194, %v198
      %v201 = vsel %vm197, %v195, %v199
      %v202 = vpack.c.bf16 %v201, %v200
      %v204 = vunpack.c.l.b16 %v202
      %v205 = vunpack.c.h.b16 %v202
      %v206 = vpack.c.b16 %v204, %v204
      %v207 = vpack.c.b16 %v205, %v205
      %vm210 = vcmask 125952
      %211 = vst.msk [vmem:[%s172] sm:$0xf] %vm210, %v206
      %212 = vst.msk [vmem:[%s172 + $0x4] sm:$0xf] %vm210, %v207
      %s213 = smul.u32 2, %s14
      %p214 = scmp.lt.s32.totalorder %s213, 17
      %s215 = scalar_select %p214, %s213, 17
      %s216 = smul.addr %s215, 4
      %s217 = scalar_lea.vmem %s3, %s216
      // Predicated region
      $region33: #{_lambda_.8} parent=31 // pred_check
        %p218 = pneg %p100
      $region34: #{_lambda_.8} parent=31 // pred_check_branch
        %220 = sbr.rel (%p218) target = $region36
      $region35: #{_lambda_.8} parent=31 // pred_region
        %s221 = smul.u32 2, %s14
      $region36: #{_lambda_.8} parent=31 // pred_fallthru
        _
    $region32: #{_lambda_.8} parent=5 // pred_fallthru
      _
    %p222 = scmp.le.s32.totalorder 2, %s9
    // Predicated region
    $region37: #{_lambda_.8} parent=5 // pred_check
      %p223 = pneg %p222
    $region38: #{_lambda_.8} parent=5 // pred_check_branch
      %225 = sbr.rel (%p223) target = $region40
    $region39: #{_lambda_.8} parent=5 // pred_region
      %s226 = ssub.s32 %s9, 2
      // Predicated region
      $region41: #{_lambda_.8} parent=39 // pred_check
        %p227 = pneg %p106
      $region42: #{_lambda_.8} parent=39 // pred_check_branch
        %229 = sbr.rel (%p227) target = $region44
      $region43: #{_lambda_.8} parent=39 // pred_region
        %s230 = smul.u32 2, %s15
        %p231 = scmp.lt.s32.totalorder %s230, 17
        %s232 = scalar_select %p231, %s230, 17
        %s233 = smul.addr %s232, 4
        %s234 = scalar_lea.vmem %s3, %s233
      $region44: #{_lambda_.8} parent=39 // pred_fallthru
        _
    $region40: #{_lambda_.8} parent=5 // pred_fallthru
      _
  $region6: #{_lambda_.8} parent=0 // loop_footer
    %s13 = sadd.s32 1, %s9
  $region7: #{_lambda_.8} parent=0 // loop_footer_branch
    %8 = sbr.rel target = $region3
  $region8: #{_lambda_.8} parent=0 // loop_exit
    _

// kernel: _lambda_.7
$region0: #{_lambda_.7}
  #allocation0 [shape = 'u32[]', space=smem, size = 0x4, offset = 0x4, fixed_abs, tag = 'smem constant byte address 0x4 - core index']
  #allocation1 [shape = 'u32[144,128]{1,0:T(1,128)}', space=vmem, size = 0x12000, scoped, tag = 'internal scratch']
  %s0 = inlined_call_operand.vmem [shape: bf16[2,10,9,32], index: 0, kind: input, shape index: {}]
  %s1 = inlined_call_operand.vmem [shape: bf16[4,32,16], index: 1, kind: input, shape index: {}]
  %s2 = inlined_call_operand.vmem [shape: bf16[2,9,8,16], index: 2, kind: output, shape index: {0}]
  %s3 = inlined_call_operand.vmem [shape: f32[2,3,2,16], index: 3, kind: output, shape index: {1}]
  %4 = xla_tuple %s2, %s3
  %s5 = sld [smem:[#allocation0]]
  $region49: #{_lambda_.7} parent=0
    _
  %s7 = ssub.s32 1, %s5
  %s8 = scalar_select 0, %s7, %s5
  loop: start=0, step=1, limit=8
  $region2: #{_lambda_.7} parent=0 // loop_pre_header
    _
  $region3: #{_lambda_.7} parent=0 // loop_header
    %s10 = sphi 0, %s14
    %p11 = scmp.ge.s32.totalorder %s10, 8
    %s17 = sphi 0, %s29
    %s18 = sphi 0, %s25
    %s19 = sphi 0, %s17
    %s20 = sphi 0, %s18
    %s21 = sphi 0, %s19
    %s22 = sphi 0, %s20
    %s32 = sphi 0, %s34
    %s35 = sphi 0, %s32
    %s36 = sphi 0, %s35
    %s52 = sphi 0, %s36
    %s56 = sphi 0, %s56
    %s58 = sphi 0, %s56
    %s59 = sphi 0, %s58
    %s73 = sphi 0, %s59
    %s81 = sphi 0, %s83
    %s84 = sphi 0, %s81
    %s85 = sphi 0, %s84
    %s101 = sphi 0, %s85
    %s109 = sphi 0, %s111
    %s112 = sphi 0, %s109
    %s113 = sphi 0, %s112
    %s129 = sphi 0, %s113
  $region4: #{_lambda_.7} parent=0 // loop_header_branch
    %13 = sbr.rel (%p11) target = $region8
  $region5: #{_lambda_.7} parent=0 // loop_body
    %s15 = ssub.s32 %s10, 1
    %s16 = ssub.s32 %s10, 2
    %s23 = sadd.s32 1, %s18
    %p24 = scmp.ge.s32.totalorder %s23, 3
    %s25 = scalar_select %p24, 0, %s23
    %s26 = sadd.s32 1, %s17
    %s27 = scalar_select %p24, %s26, %s17
    %p28 = scmp.ge.s32.totalorder %s27, 2
    %s29 = scalar_select %p28, 0, %s27
    %s30 = ssub.s32 %s17, %s29
    %p31 = scmp.eq.s32.totalorder %s30, 0
    %s33 = sadd.s32 %s32, 1
    %s34 = scalar_select %p31, %s32, %s33
    %p37 = pneg %p31
    %p38 = scmp.eq.s32.totalorder %s10, 5
    %p39 = por %p37, %p38
    %p40 = scmp.ne.s32.totalorder %s32, %s35
    %p41 = scmp.eq.s32.totalorder %s10, 0
    %p42 = por %p40, %p41
    %p43 = scmp.ne.s32.totalorder %s32, %s35
    %p44 = scmp.eq.s32.totalorder %s15, 5
    %p45 = por %p43, %p44
    %p46 = scmp.ne.s32.totalorder %s35, %s36
    %p47 = scmp.eq.s32.totalorder %s15, 0
    %p48 = por %p46, %p47
    %p49 = scmp.ne.s32.totalorder %s35, %s36
    %p50 = scmp.eq.s32.totalorder %s16, 5
    %p51 = por %p49, %p50
    %p53 = scmp.ne.s32.totalorder %s36, %s52
    %p54 = scmp.eq.s32.totalorder %s16, 0
    %p55 = por %p53, %p54
    %s57 = sadd.s32 %s56, 1
    %p60 = scmp.eq.s32.totalorder %s10, 5
    %p61 = scmp.ne.s32.totalorder %s56, %s58
    %p62 = scmp.eq.s32.totalorder %s10, 0
    %p63 = por %p61, %p62
    %p64 = scmp.ne.s32.totalorder %s56, %s58
    %p65 = scmp.eq.s32.totalorder %s15, 5
    %p66 = por %p64, %p65
    %p67 = scmp.ne.s32.totalorder %s58, %s59
    %p68 = scmp.eq.s32.totalorder %s15, 0
    %p69 = por %p67, %p68
    %p70 = scmp.ne.s32.totalorder %s58, %s59
    %p71 = scmp.eq.s32.totalorder %s16, 5
    %p72 = por %p70, %p71
    %p74 = scmp.ne.s32.totalorder %s59, %s73
    %p75 = scmp.eq.s32.totalorder %s16, 0
    %p76 = por %p74, %p75
    %s77 = ssub.s32 %s17, %s29
    %s78 = ssub.s32 %s18, %s25
    %s79 = sor.u32 %s77, %s78
    %p80 = scmp.eq.s32.totalorder %s79, 0
    %s82 = sadd.s32 %s81, 1
    %s83 = scalar_select %p80, %s81, %s82
    %p86 = pneg %p80
    %p87 = scmp.eq.s32.totalorder %s10, 5
    %p88 = por %p86, %p87
    %p89 = scmp.ne.s32.totalorder %s81, %s84
    %p90 = scmp.eq.s32.totalorder %s10, 0
    %p91 = por %p89, %p90
    %p92 = scmp.ne.s32.totalorder %s81, %s84
    %p93 = scmp.eq.s32.totalorder %s15, 5
    %p94 = por %p92, %p93
    %p95 = scmp.ne.s32.totalorder %s84, %s85
    %p96 = scmp.eq.s32.totalorder %s15, 0
    %p97 = por %p95, %p96
    %p98 = scmp.ne.s32.totalorder %s84, %s85
    %p99 = scmp.eq.s32.totalorder %s16, 5
    %p100 = por %p98, %p99
    %p102 = scmp.ne.s32.totalorder %s85, %s101
    %p103 = scmp.eq.s32.totalorder %s16, 0
    %p104 = por %p102, %p103
    %s105 = ssub.s32 %s17, %s29
    %s106 = ssub.s32 %s18, %s25
    %s107 = sor.u32 %s105, %s106
    %p108 = scmp.eq.s32.totalorder %s107, 0
    %s110 = sadd.s32 %s109, 1
    %s111 = scalar_select %p108, %s109, %s110
    %p114 = pneg %p108
    %p115 = scmp.eq.s32.totalorder %s10, 5
    %p116 = por %p114, %p115
    %p117 = scmp.ne.s32.totalorder %s109, %s112
    %p118 = scmp.eq.s32.totalorder %s10, 0
    %p119 = por %p117, %p118
    %p120 = scmp.ne.s32.totalorder %s109, %s112
    %p121 = scmp.eq.s32.totalorder %s15, 5
    %p122 = por %p120, %p121
    %p123 = scmp.ne.s32.totalorder %s112, %s113
    %p124 = scmp.eq.s32.totalorder %s15, 0
    %p125 = por %p123, %p124
    %p126 = scmp.ne.s32.totalorder %s112, %s113
    %p127 = scmp.eq.s32.totalorder %s16, 5
    %p128 = por %p126, %p127
    %p130 = scmp.ne.s32.totalorder %s113, %s129
    %p131 = scmp.eq.s32.totalorder %s16, 0
    %p132 = por %p130, %p131
    %p133 = scmp.le.s32.totalorder 1, %s10
    %p134 = scmp.lt.s32.totalorder %s10, 7
    %p135 = pnand %p133, %p134
    %p136 = pneg %p135
    // Predicated region
    $region9: #{_lambda_.7} parent=5 // pred_check
      _
    $region10: #{_lambda_.7} parent=5 // pred_check_branch
      %138 = sbr.rel (%p135) target = $region12
    $region11: #{_lambda_.7} parent=5 // pred_region
      %s139 = ssub.s32 %s10, 1
      // Predicated region
      $region13: #{_lambda_.7} parent=11 // pred_check
        %p140 = pneg %p69
      $region14: #{_lambda_.7} parent=11 // pred_check_branch
        %142 = sbr.rel (%p140) target = $region16
      $region15: #{_lambda_.7} parent=11 // pred_region
        _
      $region16: #{_lambda_.7} parent=11 // pred_fallthru
        _
    $region12: #{_lambda_.7} parent=5 // pred_fallthru
      _
    %p143 = scmp.lt.s32.totalorder %s10, 6
    // Predicated region
    $region17: #{_lambda_.7} parent=5 // pred_check
      %p144 = pneg %p143
    $region18: #{_lambda_.7} parent=5 // pred_check_branch
      %146 = sbr.rel (%p144) target = $region20
    $region19: #{_lambda_.7} parent=5 // pred_region
      // Predicated region
      $region21: #{_lambda_.7} parent=19 // pred_check
        %p147 = pneg %p42
      $region22: #{_lambda_.7} parent=19 // pred_check_branch
        %149 = sbr.rel (%p147) target = $region24
      $region23: #{_lambda_.7} parent=19 // pred_region
        %p150 = scmp.lt.s32.totalorder %s17, 1
        %s151 = scalar_select %p150, %s17, 1
        %s152 = smul.addr %s151, 20
        %s153 = smul.addr %s152, 4
        %s154 = scalar_lea.vmem %s0, %s153
      $region24: #{_lambda_.7} parent=19 // pred_fallthru
        _
    $region20: #{_lambda_.7} parent=5 // pred_fallthru
      _
    %p155 = scmp.le.s32.totalorder 1, %s10
    %p156 = scmp.lt.s32.totalorder %s10, 7
    %p157 = pnand %p155, %p156
    %p158 = pneg %p157
    // Predicated region
    $region25: #{_lambda_.7} parent=5 // pred_check
      _
    $region26: #{_lambda_.7} parent=5 // pred_check_branch
      %160 = sbr.rel (%p157) target = $region28
    $region27: #{_lambda_.7} parent=5 // pred_region
      %s161 = ssub.s32 %s10, 1
      %p162 = scmp.lt.s32.totalorder %s19, 1
      %s163 = scalar_select %p162, %s19, 1
      %s164 = smul.addr %s163, 20
      %s165 = smul.addr %s164, 4
      %s166 = scalar_lea.vmem %s0, %s165
      %p167 = pneg %p48
      %p168 = pneg %p45
      %p169 = pneg %p69
      %p170 = pneg %p66
      %p171 = pneg %p97
      %p172 = pneg %p94
      %s173 = smul.u32 3, %s20
      %p174 = scmp.lt.s32.totalorder %s19, 1
      %s175 = scalar_select %p174, %s19, 1
      %p176 = scmp.lt.s32.totalorder %s173, 8
      %s177 = scalar_select %p176, %s173, 8
      %s178 = smul.addr %s175, 9
      %s179 = sadd.s32 %s177, %s178
      %s180 = smul.addr %s179, 4
      %s181 = scalar_lea.vmem %s2, %s180
      %p182 = pneg %p125
      %p183 = pneg %p122
      %p184 = scmp.lt.s32.totalorder %s19, 1
      %s185 = scalar_select %p184, %s19, 1
      %p186 = scmp.lt.s32.totalorder %s20, 2
      %s187 = scalar_select %p186, %s20, 2
      %s188 = smul.addr %s185, 3
      %s189 = sadd.s32 %s187, %s188
      %s190 = smul.addr %s189, 2
      %s191 = scalar_lea.vmem %s3, %s190
      %p192 = scmp.lt.s32.totalorder %s19, 1
      %s193 = scalar_select %p192, %s19, 1
      %s194 = smul.addr %s193, 20
      %s195 = smul.addr %s194, 4
      %s196 = scalar_lea.vmem %s0, %s195
      %s197 = smul.u32 3, %s20
      %p198 = scmp.lt.s32.totalorder %s19, 1
      %s199 = scalar_select %p198, %s19, 1
      %p200 = scmp.lt.s32.totalorder %s197, 8
      %s201 = scalar_select %p200, %s197, 8
      %s202 = smul.addr %s199, 9
      %s203 = sadd.s32 %s201, %s202
      %s204 = smul.addr %s203, 4
      %s205 = scalar_lea.vmem %s2, %s204
      %s206 = smul.u32 3, %s20
      %p207 = scmp.lt.s32.totalorder %s19, 1
      %s208 = scalar_select %p207, %s19, 1
      %p209 = scmp.lt.s32.totalorder %s20, 2
      %s210 = scalar_select %p209, %s20, 2
      %s211 = smul.addr %s208, 3
      %s212 = sadd.s32 %s210, %s211
      %s213 = smul.addr %s212, 2
      %s214 = scalar_lea.vmem %s3, %s213
      %s216 = smul.u32 %s20, 3
      %s217 = smul.u32 %s216, 2
      %s218 = smul.addr %s217, 4
      %s219 = scalar_lea.vmem %s196, %s218
      %v220 = vld [vmem:[%s219] sm:$0xf]
      %v221 = vld [vmem:[%s1] sm:$0xf]
      %v222 = vld [vmem:[%s1 + $0x4] sm:$0xf]
      %v223 = vld [vmem:[%s1 + $0x8] sm:$0xf]
      %v224 = vld [vmem:[%s1 + $0xc] sm:$0xf]
      %v225 = vld [vmem:[%s219 + $0x4] sm:$0x1]
      %s226 = scalar_lea.vmem %s1, 16
      %v227 = vld [vmem:[%s226] sm:$0xf]
      %v228 = vld [vmem:[%s226 + $0x4] sm:$0xf]
      %v229 = vld [vmem:[%s226 + $0x8] sm:$0xf]
      %v230 = vld [vmem:[%s226 + $0xc] sm:$0xf]
      %v233 = vunpack.c.l.b16 %v220
      %v234 = vunpack.c.l.b16 %v225
      %v235 = vpack.c.b16 %v234, %v233
      %v237 = vshrl.u32 %v235, 16
      %v239 = vshll.u32 %v235, 16
      %v241 = vrot.slane %v239, 1
      %v242 = vor.u32 %v237, %v241
      %v247 = vunpack.c.l.b16 %v227
      %v248 = vunpack.c.l.b16 %v228
      %v249 = vunpack.c.l.b16 %v229
      %v250 = vunpack.c.l.b16 %v230
      %v251 = vpack.c.b16 %v248, %v247
      %v252 = vpack.c.b16 %v250, %v249
      %vm255 = vcmask 261120
      %v257 = vsel %vm255, %v242, 0
      %259 = vmatprep.subr.bf16.mxu0 0
      %260 = vmatpush1.bf16.msra.mxu0 0
      %261 = vmatprep.subr.bf16.mxu0 0
      %262 = vmatpush1.bf16.msra.mxu0 0
      %263 = vmatprep.subr.bf16.mxu0 0
      %264 = vmatpush1.bf16.msra.mxu0 0
      %265 = vmatprep.subr.bf16.mxu0 0
      %266 = vmatpush1.bf16.msra.mxu0 0
      %267 = vmatprep.subr.bf16.mxu0 0
      %268 = vmatpush1.bf16.msra.mxu0 0
      %269 = vmatprep.subr.bf16.mxu0 0
      %270 = vmatpush1.bf16.msra.mxu0 0
      %271 = vmatprep.subr.bf16.mxu0 0
      %272 = vmatpush1.bf16.msra.mxu0 %v252
      %273 = vmatprep.subr.bf16.mxu0 0
      %274 = vmatpush1.bf16.msra.mxu0 %v251
      %275 = vmatprep.subr.bf16.mxu0 0
      %276 = vmatpush2.bf16.msra.mxu0 0
      %277 = vmatprep.subr.bf16.mxu0 0
      %278 = vmatpush2.bf16.msra.mxu0 0
      %279 = vmatprep.subr.bf16.mxu0 0
      %280 = vmatpush2.bf16.msra.mxu0 0
      %281 = vmatprep.subr.bf16.mxu0 0
      %282 = vmatpush2.bf16.msra.mxu0 0
      %283 = vmatprep.subr.bf16.mxu0 0
      %284 = vmatpush2.bf16.msra.mxu0 0
      %285 = vmatprep.subr.bf16.mxu0 0
      %286 = vmatpush2.bf16.msra.mxu0 0
      %287 = vmatprep.subr.bf16.mxu0 0
      %288 = vmatpush2.bf16.msra.mxu0 0
      %289 = vmatprep.subr.bf16.mxu0 0
      %290 = vmatpush2.bf16.msra.mxu0 0
      %291 = vmatprep.mubr.bf16.mxu0 0
      %292 = vmatmul.mubr.bf16.gmra.mxu0 %v257
      %v293 = vpop.f32.mrf.mxu0
      %v294 = vadd.f32 0.0, %v293
      %v295 = vpop.f32.mrf.mxu0
      %v296 = vpop.f32.mrf.mxu0
      %v297 = vpop.f32.mrf.mxu0
      %298 = vdwg.mxu0
      %v303 = vunpack.c.l.b16 %v221
      %v304 = vunpack.c.l.b16 %v222
      %v305 = vunpack.c.l.b16 %v223
      %v306 = vunpack.c.l.b16 %v224
      %v307 = vpack.c.b16 %v304, %v303
      %v308 = vpack.c.b16 %v306, %v305
      %v312 = vsel %vm255, %v220, 0
      %314 = vmatprep.subr.bf16.mxu0 0
      %315 = vmatpush1.bf16.msra.mxu0 0
      %316 = vmatprep.subr.bf16.mxu0 0
      %317 = vmatpush1.bf16.msra.mxu0 0
      %318 = vmatprep.subr.bf16.mxu0 0
      %319 = vmatpush1.bf16.msra.mxu0 0
      %320 = vmatprep.subr.bf16.mxu0 0
      %321 = vmatpush1.bf16.msra.mxu0 0
      %322 = vmatprep.subr.bf16.mxu0 0
      %323 = vmatpush1.bf16.msra.mxu0 0
      %324 = vmatprep.subr.bf16.mxu0 0
      %325 = vmatpush1.bf16.msra.mxu0 0
      %326 = vmatprep.subr.bf16.mxu0 0
      %327 = vmatpush1.bf16.msra.mxu0 %v308
      %328 = vmatprep.subr.bf16.mxu0 0
      %329 = vmatpush1.bf16.msra.mxu0 %v307
      %330 = vmatprep.subr.bf16.mxu0 0
      %331 = vmatpush2.bf16.msra.mxu0 0
      %332 = vmatprep.subr.bf16.mxu0 0
      %333 = vmatpush2.bf16.msra.mxu0 0
      %334 = vmatprep.subr.bf16.mxu0 0
      %335 = vmatpush2.bf16.msra.mxu0 0
      %336 = vmatprep.subr.bf16.mxu0 0
      %337 = vmatpush2.bf16.msra.mxu0 0
      %338 = vmatprep.subr.bf16.mxu0 0
      %339 = vmatpush2.bf16.msra.mxu0 0
      %340 = vmatprep.subr.bf16.mxu0 0
      %341 = vmatpush2.bf16.msra.mxu0 0
      %342 = vmatprep.subr.bf16.mxu0 0
      %343 = vmatpush2.bf16.msra.mxu0 0
      %344 = vmatprep.subr.bf16.mxu0 0
      %345 = vmatpush2.bf16.msra.mxu0 0
      %346 = vmatprep.mubr.bf16.mxu0 0
      %347 = vmatmul.mubr.bf16.gmra.mxu0 %v312
      %v348 = vpop.f32.mrf.mxu0
      %v349 = vadd.f32 %v294, %v348
      %v350 = vpop.f32.mrf.mxu0
      %v351 = vpop.f32.mrf.mxu0
      %v352 = vpop.f32.mrf.mxu0
      %353 = vdwg.mxu0
      %s354 = sadd.s32 %s216, 1
      %s355 = smul.u32 %s354, 2
      %s356 = smul.addr %s355, 4
      %s357 = scalar_lea.vmem %s196, %s356
      %v358 = vld [vmem:[%s357] sm:$0xf]
      %s359 = scalar_lea.vmem %s1, 32
      %v360 = vld [vmem:[%s359] sm:$0xf]
      %v361 = vld [vmem:[%s359 + $0x4] sm:$0xf]
      %v362 = vld [vmem:[%s359 + $0x8] sm:$0xf]
      %v363 = vld [vmem:[%s359 + $0xc] sm:$0xf]
      %v368 = vunpack.c.l.b16 %v360
      %v369 = vunpack.c.l.b16 %v361
      %v370 = vunpack.c.l.b16 %v362
      %v371 = vunpack.c.l.b16 %v363
      %v372 = vpack.c.b16 %v369, %v368
      %v373 = vpack.c.b16 %v371, %v370
      %v377 = vsel %vm255, %v358, 0
      %379 = vmatprep.subr.bf16.mxu0 0
      %380 = vmatpush1.bf16.msra.mxu0 0
      %381 = vmatprep.subr.bf16.mxu0 0
      %382 = vmatpush1.bf16.msra.mxu0 0
      %383 = vmatprep.subr.bf16.mxu0 0
      %384 = vmatpush1.bf16.msra.mxu0 0
      %385 = vmatprep.subr.bf16.mxu0 0
      %386 = vmatpush1.bf16.msra.mxu0 0
      %387 = vmatprep.subr.bf16.mxu0 0
      %388 = vmatpush1.bf16.msra.mxu0 0
      %389 = vmatprep.subr.bf16.mxu0 0
      %390 = vmatpush1.bf16.msra.mxu0 0
      %391 = vmatprep.subr.bf16.mxu0 0
      %392 = vmatpush1.bf16.msra.mxu0 %v373
      %393 = vmatprep.subr.bf16.mxu0 0
      %394 = vmatpush1.bf16.msra.mxu0 %v372
      %395 = vmatprep.subr.bf16.mxu0 0
      %396 = vmatpush2.bf16.msra.mxu0 0
      %397 = vmatprep.subr.bf16.mxu0 0
      %398 = vmatpush2.bf16.msra.mxu0 0
      %399 = vmatprep.subr.bf16.mxu0 0
      %400 = vmatpush2.bf16.msra.mxu0 0
      %401 = vmatprep.subr.bf16.mxu0 0
      %402 = vmatpush2.bf16.msra.mxu0 0
      %403 = vmatprep.subr.bf16.mxu0 0
      %404 = vmatpush2.bf16.msra.mxu0 0
      %405 = vmatprep.subr.bf16.mxu0 0
      %406 = vmatpush2.bf16.msra.mxu0 0
      %407 = vmatprep.subr.bf16.mxu0 0
      %408 = vmatpush2.bf16.msra.mxu0 0
      %409 = vmatprep.subr.bf16.mxu0 0
      %410 = vmatpush2.bf16.msra.mxu0 0
      %411 = vmatprep.mubr.bf16.mxu0 0
      %412 = vmatmul.mubr.bf16.gmra.mxu0 %v377
      %v413 = vpop.f32.mrf.mxu0
      %v414 = vadd.f32 0.0, %v413
      %v415 = vpop.f32.mrf.mxu0
      %v416 = vpop.f32.mrf.mxu0
      %v417 = vpop.f32.mrf.mxu0
      %418 = vdwg.mxu0
      %v419 = vadd.f32 %v349, %v414
      %v420 = vld [vmem:[%s357] sm:$0xf]
      %v421 = vld [vmem:[%s357 + $0x4] sm:$0x1]
      %s422 = scalar_lea.vmem %s1, 48
      %v423 = vld [vmem:[%s422] sm:$0xf]
      %v424 = vld [vmem:[%s422 + $0x4] sm:$0xf]
      %v425 = vld [vmem:[%s422 + $0x8] sm:$0xf]
      %v426 = vld [vmem:[%s422 + $0xc] sm:$0xf]
      %v429 = vunpack.c.l.b16 %v420
      %v430 = vunpack.c.l.b16 %v421
      %v431 = vpack.c.b16 %v430, %v429
      %v433 = vshrl.u32 %v431, 16
      %v435 = vshll.u32 %v431, 16
      %v437 = vrot.slane %v435, 1
      %v438 = vor.u32 %v433, %v437
      %v443 = vunpack.c.l.b16 %v423
      %v444 = vunpack.c.l.b16 %v424
      %v445 = vunpack.c.l.b16 %v425
      %v446 = vunpack.c.l.b16 %v426
      %v447 = vpack.c.b16 %v444, %v443
      %v448 = vpack.c.b16 %v446, %v445
      %v452 = vsel %vm255, %v438, 0
      %454 = vmatprep.subr.bf16.mxu0 0
      %455 = vmatpush1.bf16.msra.mxu0 0
      %456 = vmatprep.subr.bf16.mxu0 0
      %457 = vmatpush1.bf16.msra.mxu0 0
      %458 = vmatprep.subr.bf16.mxu0 0
      %459 = vmatpush1.bf16.msra.mxu0 0
      %460 = vmatprep.subr.bf16.mxu0 0
      %461 = vmatpush1.bf16.msra.mxu0 0
      %462 = vmatprep.subr.bf16.mxu0 0
      %463 = vmatpush1.bf16.msra.mxu0 0
      %464 = vmatprep.subr.bf16.mxu0 0
      %465 = vmatpush1.bf16.msra.mxu0 0
      %466 = vmatprep.subr.bf16.mxu0 0
      %467 = vmatpush1.bf16.msra.mxu0 %v448
      %468 = vmatprep.subr.bf16.mxu0 0
      %469 = vmatpush1.bf16.msra.mxu0 %v447
      %470 = vmatprep.subr.bf16.mxu0 0
      %471 = vmatpush2.bf16.msra.mxu0 0
      %472 = vmatprep.subr.bf16.mxu0 0
      %473 = vmatpush2.bf16.msra.mxu0 0
      %474 = vmatprep.subr.bf16.mxu0 0
      %475 = vmatpush2.bf16.msra.mxu0 0
      %476 = vmatprep.subr.bf16.mxu0 0
      %477 = vmatpush2.bf16.msra.mxu0 0
      %478 = vmatprep.subr.bf16.mxu0 0
      %479 = vmatpush2.bf16.msra.mxu0 0
      %480 = vmatprep.subr.bf16.mxu0 0
      %481 = vmatpush2.bf16.msra.mxu0 0
      %482 = vmatprep.subr.bf16.mxu0 0
      %483 = vmatpush2.bf16.msra.mxu0 0
      %484 = vmatprep.subr.bf16.mxu0 0
      %485 = vmatpush2.bf16.msra.mxu0 0
      %486 = vmatprep.mubr.bf16.mxu0 0
      %487 = vmatmul.mubr.bf16.gmra.mxu0 %v452
      %v488 = vpop.f32.mrf.mxu0
      %v489 = vadd.f32 0.0, %v488
      %v490 = vpop.f32.mrf.mxu0
      %v491 = vpop.f32.mrf.mxu0
      %v492 = vpop.f32.mrf.mxu0
      %493 = vdwg.mxu0
      %v494 = vadd.f32 %v419, %v489
      %p495 = scmp.lt.s32.totalorder %s216, 8
      %s496 = scalar_select %p495, 1, 0
      %s497 = scvt.s32.f32 %s496
      %vm498 = vcmask 130048
      %v499 = vsel %vm498, %v494, 0.0
      %v500 = vrot.slane %v499, 4
      %v501 = vadd.f32 %v499, %v500
      %v502 = vrot.slane %v501, 2
      %v503 = vadd.f32 %v501, %v502
      %v504 = vrot.slane %v503, 1
      %v505 = vadd.f32 %v503, %v504
      %v506 = vstv %s497
      %v507 = vmul.f32 %v506, %v505
      %v508 = vadd.f32 %v507, 0.0
      %v509 = vmul.f32 %v494, %v494
      %v510 = vsel %vm498, %v509, 0.0
      %v511 = vrot.slane %v510, 4
      %v512 = vadd.f32 %v510, %v511
      %v513 = vrot.slane %v512, 2
      %v514 = vadd.f32 %v512, %v513
      %v515 = vrot.slane %v514, 1
      %v516 = vadd.f32 %v514, %v515
      %v517 = vmul.f32 %v506, %v516
      %v518 = vadd.f32 %v517, 0.0
      %v519 = vpack.c.bf16 %v494, %v494
      %vm520 = vcmask 125952
      %521 = vst.msk [vmem:[%s205] sm:$0xf] %vm520, %v519
      %v522 = vld [vmem:[%s357] sm:$0xf]
      %v523 = vld [vmem:[%s1] sm:$0xf]
      %v524 = vld [vmem:[%s1 + $0x4] sm:$0xf]
      %v525 = vld [vmem:[%s1 + $0x8] sm:$0xf]
      %v526 = vld [vmem:[%s1 + $0xc] sm:$0xf]
      %v527 = vld [vmem:[%s357 + $0x4] sm:$0x1]
      %v528 = vld [vmem:[%s226] sm:$0xf]
      %v529 = vld [vmem:[%s226 + $0x4] sm:$0xf]
      %v530 = vld [vmem:[%s226 + $0x8] sm:$0xf]
      %v531 = vld [vmem:[%s226 + $0xc] sm:$0xf]
      %v534 = vunpack.c.l.b16 %v522
      %v535 = vunpack.c.l.b16 %v527
      %v536 = vpack.c.b16 %v535, %v534
      %v538 = vshrl.u32 %v536, 16
      %v540 = vshll.u32 %v536, 16
      %v542 = vrot.slane %v540, 1
      %v543 = vor.u32 %v538, %v542
      %v548 = vunpack.c.l.b16 %v528
      %v549 = vunpack.c.l.b16 %v529
      %v550 = vunpack.c.l.b16 %v530
      %v551 = vunpack.c.l.b16 %v531
      %v552 = vpack.c.b16 %v549, %v548
      %v553 = vpack.c.b16 %v551, %v550
      %v557 = vsel %vm255, %v543, 0
      %559 = vmatprep.subr.bf16.mxu0 0
      %560 = vmatpush1.bf16.msra.mxu0 0
      %561 = vmatprep.subr.bf16.mxu0 0
      %562 = vmatpush1.bf16.msra.mxu0 0
      %563 = vmatprep.subr.bf16.mxu0 0
      %564 = vmatpush1.bf16.msra.mxu0 0
      %565 = vmatprep.subr.bf16.mxu0 0
      %566 = vmatpush1.bf16.msra.mxu0 0
      %567 = vmatprep.subr.bf16.mxu0 0
      %568 = vmatpush1.bf16.msra.mxu0 0
      %569 = vmatprep.subr.bf16.mxu0 0
      %570 = vmatpush1.bf16.msra.mxu0 0
      %571 = vmatprep.subr.bf16.mxu0 0
      %572 = vmatpush1.bf16.msra.mxu0 %v553
      %573 = vmatprep.subr.bf16.mxu0 0
      %574 = vmatpush1.bf16.msra.mxu0 %v552
      %575 = vmatprep.subr.bf16.mxu0 0
      %576 = vmatpush2.bf16.msra.mxu0 0
      %577 = vmatprep.subr.bf16.mxu0 0
      %578 = vmatpush2.bf16.msra.mxu0 0
      %579 = vmatprep.subr.bf16.mxu0 0
      %580 = vmatpush2.bf16.msra.mxu0 0
      %581 = vmatprep.subr.bf16.mxu0 0
      %582 = vmatpush2.bf16.msra.mxu0 0
      %583 = vmatprep.subr.bf16.mxu0 0
      %584 = vmatpush2.bf16.msra.mxu0 0
      %585 = vmatprep.subr.bf16.mxu0 0
      %586 = vmatpush2.bf16.msra.mxu0 0
      %587 = vmatprep.subr.bf16.mxu0 0
      %588 = vmatpush2.bf16.msra.mxu0 0
      %589 = vmatprep.subr.bf16.mxu0 0
      %590 = vmatpush2.bf16.msra.mxu0 0
      %591 = vmatprep.mubr.bf16.mxu0 0
      %592 = vmatmul.mubr.bf16.gmra.mxu0 %v557
      %v593 = vpop.f32.mrf.mxu0
      %v594 = vadd.f32 0.0, %v593
      %v595 = vpop.f32.mrf.mxu0
      %v596 = vpop.f32.mrf.mxu0
      %v597 = vpop.f32.mrf.mxu0
      %598 = vdwg.mxu0
      %v603 = vunpack.c.l.b16 %v523
      %v604 = vunpack.c.l.b16 %v524
      %v605 = vunpack.c.l.b16 %v525
      %v606 = vunpack.c.l.b16 %v526
      %v607 = vpack.c.b16 %v604, %v603
      %v608 = vpack.c.b16 %v606, %v605
      %v612 = vsel %vm255, %v522, 0
      %614 = vmatprep.subr.bf16.mxu0 0
      %615 = vmatpush1.bf16.msra.mxu0 0
      %616 = vmatprep.subr.bf16.mxu0 0
      %617 = vmatpush1.bf16.msra.mxu0 0
      %618 = vmatprep.subr.bf16.mxu0 0
      %619 = vmatpush1.bf16.msra.mxu0 0
      %620 = vmatprep.subr.bf16.mxu0 0
      %621 = vmatpush1.bf16.msra.mxu0 0
      %622 = vmatprep.subr.bf16.mxu0 0
      %623 = vmatpush1.bf16.msra.mxu0 0
      %624 = vmatprep.subr.bf16.mxu0 0
      %625 = vmatpush1.bf16.msra.mxu0 0
      %626 = vmatprep.subr.bf16.mxu0 0
      %627 = vmatpush1.bf16.msra.mxu0 %v608
      %628 = vmatprep.subr.bf16.mxu0 0
      %629 = vmatpush1.bf16.msra.mxu0 %v607
      %630 = vmatprep.subr.bf16.mxu0 0
      %631 = vmatpush2.bf16.msra.mxu0 0
      %632 = vmatprep.subr.bf16.mxu0 0
      %633 = vmatpush2.bf16.msra.mxu0 0
      %634 = vmatprep.subr.bf16.mxu0 0
      %635 = vmatpush2.bf16.msra.mxu0 0
      %636 = vmatprep.subr.bf16.mxu0 0
      %637 = vmatpush2.bf16.msra.mxu0 0
      %638 = vmatprep.subr.bf16.mxu0 0
      %639 = vmatpush2.bf16.msra.mxu0 0
      %640 = vmatprep.subr.bf16.mxu0 0
      %641 = vmatpush2.bf16.msra.mxu0 0
      %642 = vmatprep.subr.bf16.mxu0 0
      %643 = vmatpush2.bf16.msra.mxu0 0
      %644 = vmatprep.subr.bf16.mxu0 0
      %645 = vmatpush2.bf16.msra.mxu0 0
      %646 = vmatprep.mubr.bf16.mxu0 0
      %647 = vmatmul.mubr.bf16.gmra.mxu0 %v612
      %v648 = vpop.f32.mrf.mxu0
      %v649 = vadd.f32 %v594, %v648
      %v650 = vpop.f32.mrf.mxu0
      %v651 = vpop.f32.mrf.mxu0
      %v652 = vpop.f32.mrf.mxu0
      %653 = vdwg.mxu0
      %s654 = sadd.s32 %s216, 2
      %s655 = smul.u32 %s654, 2
      %s656 = smul.addr %s655, 4
      %s657 = scalar_lea.vmem %s196, %s656
      %v658 = vld [vmem:[%s657] sm:$0xf]
      %v659 = vld [vmem:[%s359] sm:$0xf]
      %v660 = vld [vmem:[%s359 + $0x4] sm:$0xf]
      %v661 = vld [vmem:[%s359 + $0x8] sm:$0xf]
      %v662 = vld [vmem:[%s359 + $0xc] sm:$0xf]
      %v667 = vunpack.c.l.b16 %v659
      %v668 = vunpack.c.l.b16 %v660
      %v669 = vunpack.c.l.b16 %v661
      %v670 = vunpack.c.l.b16 %v662
      %v671 = vpack.c.b16 %v668, %v667
      %v672 = vpack.c.b16 %v670, %v669
      %v676 = vsel %vm255, %v658, 0
      %678 = vmatprep.subr.bf16.mxu0 0
      %679 = vmatpush1.bf16.msra.mxu0 0
      %680 = vmatprep.subr.bf16.mxu0 0
      %681 = vmatpush1.bf16.msra.mxu0 0
      %682 = vmatprep.subr.bf16.mxu0 0
      %683 = vmatpush1.bf16.msra.mxu0 0
      %684 = vmatprep.subr.bf16.mxu0 0
      %685 = vmatpush1.bf16.msra.mxu0 0
      %686 = vmatprep.subr.bf16.mxu0 0
      %687 = vmatpush1.bf16.msra.mxu0 0
      %688 = vmatprep.subr.bf16.mxu0 0
      %689 = vmatpush1.bf16.msra.mxu0 0
      %690 = vmatprep.subr.bf16.mxu0 0
      %691 = vmatpush1.bf16.msra.mxu0 %v672
      %692 = vmatprep.subr.bf16.mxu0 0
      %693 = vmatpush1.bf16.msra.mxu0 %v671
      %694 = vmatprep.subr.bf16.mxu0 0
      %695 = vmatpush2.bf16.msra.mxu0 0
      %696 = vmatprep.subr.bf16.mxu0 0
      %697 = vmatpush2.bf16.msra.mxu0 0
      %698 = vmatprep.subr.bf16.mxu0 0
      %699 = vmatpush2.bf16.msra.mxu0 0
      %700 = vmatprep.subr.bf16.mxu0 0
      %701 = vmatpush2.bf16.msra.mxu0 0
      %702 = vmatprep.subr.bf16.mxu0 0
      %703 = vmatpush2.bf16.msra.mxu0 0
      %704 = vmatprep.subr.bf16.mxu0 0
      %705 = vmatpush2.bf16.msra.mxu0 0
      %706 = vmatprep.subr.bf16.mxu0 0
      %707 = vmatpush2.bf16.msra.mxu0 0
      %708 = vmatprep.subr.bf16.mxu0 0
      %709 = vmatpush2.bf16.msra.mxu0 0
      %710 = vmatprep.mubr.bf16.mxu0 0
      %711 = vmatmul.mubr.bf16.gmra.mxu0 %v676
      %v712 = vpop.f32.mrf.mxu0
      %v713 = vadd.f32 0.0, %v712
      %v714 = vpop.f32.mrf.mxu0
      %v715 = vpop.f32.mrf.mxu0
      %v716 = vpop.f32.mrf.mxu0
      %717 = vdwg.mxu0
      %v718 = vadd.f32 %v649, %v713
      %v719 = vld [vmem:[%s657] sm:$0xf]
      %v720 = vld [vmem:[%s657 + $0x4] sm:$0x1]
      %v721 = vld [vmem:[%s422] sm:$0xf]
      %v722 = vld [vmem:[%s422 + $0x4] sm:$0xf]
      %v723 = vld [vmem:[%s422 + $0x8] sm:$0xf]
      %v724 = vld [vmem:[%s422 + $0xc] sm:$0xf]
      %v727 = vunpack.c.l.b16 %v719
      %v728 = vunpack.c.l.b16 %v720
      %v729 = vpack.c.b16 %v728, %v727
      %v731 = vshrl.u32 %v729, 16
      %v733 = vshll.u32 %v729, 16
      %v735 = vrot.slane %v733, 1
      %v736 = vor.u32 %v731, %v735
      %v741 = vunpack.c.l.b16 %v721
      %v742 = vunpack.c.l.b16 %v722
      %v743 = vunpack.c.l.b16 %v723
      %v744 = vunpack.c.l.b16 %v724
      %v745 = vpack.c.b16 %v742, %v741
      %v746 = vpack.c.b16 %v744, %v743
      %v750 = vsel %vm255, %v736, 0
      %752 = vmatprep.subr.bf16.mxu0 0
      %753 = vmatpush1.bf16.msra.mxu0 0
      %754 = vmatprep.subr.bf16.mxu0 0
      %755 = vmatpush1.bf16.msra.mxu0 0
      %756 = vmatprep.subr.bf16.mxu0 0
      %757 = vmatpush1.bf16.msra.mxu0 0
      %758 = vmatprep.subr.bf16.mxu0 0
      %759 = vmatpush1.bf16.msra.mxu0 0
      %760 = vmatprep.subr.bf16.mxu0 0
      %761 = vmatpush1.bf16.msra.mxu0 0
      %762 = vmatprep.subr.bf16.mxu0 0
      %763 = vmatpush1.bf16.msra.mxu0 0
      %764 = vmatprep.subr.bf16.mxu0 0
      %765 = vmatpush1.bf16.msra.mxu0 %v746
      %766 = vmatprep.subr.bf16.mxu0 0
      %767 = vmatpush1.bf16.msra.mxu0 %v745
      %768 = vmatprep.subr.bf16.mxu0 0
      %769 = vmatpush2.bf16.msra.mxu0 0
      %770 = vmatprep.subr.bf16.mxu0 0
      %771 = vmatpush2.bf16.msra.mxu0 0
      %772 = vmatprep.subr.bf16.mxu0 0
      %773 = vmatpush2.bf16.msra.mxu0 0
      %774 = vmatprep.subr.bf16.mxu0 0
      %775 = vmatpush2.bf16.msra.mxu0 0
      %776 = vmatprep.subr.bf16.mxu0 0
      %777 = vmatpush2.bf16.msra.mxu0 0
      %778 = vmatprep.subr.bf16.mxu0 0
      %779 = vmatpush2.bf16.msra.mxu0 0
      %780 = vmatprep.subr.bf16.mxu0 0
      %781 = vmatpush2.bf16.msra.mxu0 0
      %782 = vmatprep.subr.bf16.mxu0 0
      %783 = vmatpush2.bf16.msra.mxu0 0
      %784 = vmatprep.mubr.bf16.mxu0 0
      %785 = vmatmul.mubr.bf16.gmra.mxu0 %v750
      %v786 = vpop.f32.mrf.mxu0
      %v787 = vadd.f32 0.0, %v786
      %v788 = vpop.f32.mrf.mxu0
      %v789 = vpop.f32.mrf.mxu0
      %v790 = vpop.f32.mrf.mxu0
      %791 = vdwg.mxu0
      %v792 = vadd.f32 %v718, %v787
      %p793 = scmp.lt.s32.totalorder %s354, 8
      %s794 = scalar_select %p793, 1, 0
      %s795 = scvt.s32.f32 %s794
      %v796 = vsel %vm498, %v792, 0.0
      %v797 = vrot.slane %v796, 4
      %v798 = vadd.f32 %v796, %v797
      %v799 = vrot.slane %v798, 2
      %v800 = vadd.f32 %v798, %v799
      %v801 = vrot.slane %v800, 1
      %v802 = vadd.f32 %v800, %v801
      %v803 = vstv %s795
      %v804 = vmul.f32 %v803, %v802
      %v805 = vadd.f32 %v508, %v804
      %v806 = vmul.f32 %v792, %v792
      %v807 = vsel %vm498, %v806, 0.0
      %v808 = vrot.slane %v807, 4
      %v809 = vadd.f32 %v807, %v808
      %v810 = vrot.slane %v809, 2
      %v811 = vadd.f32 %v809, %v810
      %v812 = vrot.slane %v811, 1
      %v813 = vadd.f32 %v811, %v812
      %v814 = vmul.f32 %v803, %v813
      %v815 = vadd.f32 %v518, %v814
      %v816 = vpack.c.bf16 %v792, %v792
      %s817 = scalar_lea.vmem %s205, 4
      %818 = vst.msk [vmem:[%s817] sm:$0xf] %vm520, %v816
      %v819 = vld [vmem:[%s657] sm:$0xf]
      %v820 = vld [vmem:[%s1] sm:$0xf]
      %v821 = vld [vmem:[%s1 + $0x4] sm:$0xf]
      %v822 = vld [vmem:[%s1 + $0x8] sm:$0xf]
      %v823 = vld [vmem:[%s1 + $0xc] sm:$0xf]
      %v824 = vld [vmem:[%s657 + $0x4] sm:$0x1]
      %v825 = vld [vmem:[%s226] sm:$0xf]
      %v826 = vld [vmem:[%s226 + $0x4] sm:$0xf]
      %v827 = vld [vmem:[%s226 + $0x8] sm:$0xf]
      %v828 = vld [vmem:[%s226 + $0xc] sm:$0xf]
      %v831 = vunpack.c.l.b16 %v819
      %v832 = vunpack.c.l.b16 %v824
      %v833 = vpack.c.b16 %v832, %v831
      %v835 = vshrl.u32 %v833, 16
      %v837 = vshll.u32 %v833, 16
      %v839 = vrot.slane %v837, 1
      %v840 = vor.u32 %v835, %v839
      %v845 = vunpack.c.l.b16 %v825
      %v846 = vunpack.c.l.b16 %v826
      %v847 = vunpack.c.l.b16 %v827
      %v848 = vunpack.c.l.b16 %v828
      %v849 = vpack.c.b16 %v846, %v845
      %v850 = vpack.c.b16 %v848, %v847
      %v854 = vsel %vm255, %v840, 0
      %856 = vmatprep.subr.bf16.mxu0 0
      %857 = vmatpush1.bf16.msra.mxu0 0
      %858 = vmatprep.subr.bf16.mxu0 0
      %859 = vmatpush1.bf16.msra.mxu0 0
      %860 = vmatprep.subr.bf16.mxu0 0
      %861 = vmatpush1.bf16.msra.mxu0 0
      %862 = vmatprep.subr.bf16.mxu0 0
      %863 = vmatpush1.bf16.msra.mxu0 0
      %864 = vmatprep.subr.bf16.mxu0 0
      %865 = vmatpush1.bf16.msra.mxu0 0
      %866 = vmatprep.subr.bf16.mxu0 0
      %867 = vmatpush1.bf16.msra.mxu0 0
      %868 = vmatprep.subr.bf16.mxu0 0
      %869 = vmatpush1.bf16.msra.mxu0 %v850
      %870 = vmatprep.subr.bf16.mxu0 0
      %871 = vmatpush1.bf16.msra.mxu0 %v849
      %872 = vmatprep.subr.bf16.mxu0 0
      %873 = vmatpush2.bf16.msra.mxu0 0
      %874 = vmatprep.subr.bf16.mxu0 0
      %875 = vmatpush2.bf16.msra.mxu0 0
      %876 = vmatprep.subr.bf16.mxu0 0
      %877 = vmatpush2.bf16.msra.mxu0 0
      %878 = vmatprep.subr.bf16.mxu0 0
      %879 = vmatpush2.bf16.msra.mxu0 0
      %880 = vmatprep.subr.bf16.mxu0 0
      %881 = vmatpush2.bf16.msra.mxu0 0
      %882 = vmatprep.subr.bf16.mxu0 0
      %883 = vmatpush2.bf16.msra.mxu0 0
      %884 = vmatprep.subr.bf16.mxu0 0
      %885 = vmatpush2.bf16.msra.mxu0 0
      %886 = vmatprep.subr.bf16.mxu0 0
      %887 = vmatpush2.bf16.msra.mxu0 0
      %888 = vmatprep.mubr.bf16.mxu0 0
      %889 = vmatmul.mubr.bf16.gmra.mxu0 %v854
      %v890 = vpop.f32.mrf.mxu0
      %v891 = vadd.f32 0.0, %v890
      %v892 = vpop.f32.mrf.mxu0
      %v893 = vpop.f32.mrf.mxu0
      %v894 = vpop.f32.mrf.mxu0
      %895 = vdwg.mxu0
      %v900 = vunpack.c.l.b16 %v820
      %v901 = vunpack.c.l.b16 %v821
      %v902 = vunpack.c.l.b16 %v822
      %v903 = vunpack.c.l.b16 %v823
      %v904 = vpack.c.b16 %v901, %v900
      %v905 = vpack.c.b16 %v903, %v902
      %v909 = vsel %vm255, %v819, 0
      %911 = vmatprep.subr.bf16.mxu0 0
      %912 = vmatpush1.bf16.msra.mxu0 0
      %913 = vmatprep.subr.bf16.mxu0 0
      %914 = vmatpush1.bf16.msra.mxu0 0
      %915 = vmatprep.subr.bf16.mxu0 0
      %916 = vmatpush1.bf16.msra.mxu0 0
      %917 = vmatprep.subr.bf16.mxu0 0
      %918 = vmatpush1.bf16.msra.mxu0 0
      %919 = vmatprep.subr.bf16.mxu0 0
      %920 = vmatpush1.bf16.msra.mxu0 0
      %921 = vmatprep.subr.bf16.mxu0 0
      %922 = vmatpush1.bf16.msra.mxu0 0
      %923 = vmatprep.subr.bf16.mxu0 0
      %924 = vmatpush1.bf16.msra.mxu0 %v905
      %925 = vmatprep.subr.bf16.mxu0 0
      %926 = vmatpush1.bf16.msra.mxu0 %v904
      %927 = vmatprep.subr.bf16.mxu0 0
      %928 = vmatpush2.bf16.msra.mxu0 0
      %929 = vmatprep.subr.bf16.mxu0 0
      %930 = vmatpush2.bf16.msra.mxu0 0
      %931 = vmatprep.subr.bf16.mxu0 0
      %932 = vmatpush2.bf16.msra.mxu0 0
      %933 = vmatprep.subr.bf16.mxu0 0
      %934 = vmatpush2.bf16.msra.mxu0 0
      %935 = vmatprep.subr.bf16.mxu0 0
      %936 = vmatpush2.bf16.msra.mxu0 0
      %937 = vmatprep.subr.bf16.mxu0 0
      %938 = vmatpush2.bf16.msra.mxu0 0
      %939 = vmatprep.subr.bf16.mxu0 0
      %940 = vmatpush2.bf16.msra.mxu0 0
      %941 = vmatprep.subr.bf16.mxu0 0
      %942 = vmatpush2.bf16.msra.mxu0 0
      %943 = vmatprep.mubr.bf16.mxu0 0
      %944 = vmatmul.mubr.bf16.gmra.mxu0 %v909
      %v945 = vpop.f32.mrf.mxu0
      %v946 = vadd.f32 %v891, %v945
      %v947 = vpop.f32.mrf.mxu0
      %v948 = vpop.f32.mrf.mxu0
      %v949 = vpop.f32.mrf.mxu0
      %950 = vdwg.mxu0
      %s951 = sadd.s32 %s216, 3
      %s952 = smul.u32 %s951, 2
      %s953 = smul.addr %s952, 4
      %s954 = scalar_lea.vmem %s196, %s953
      %v955 = vld [vmem:[%s954] sm:$0xf]
      %v956 = vld [vmem:[%s359] sm:$0xf]
      %v957 = vld [vmem:[%s359 + $0x4] sm:$0xf]
      %v958 = vld [vmem:[%s359 + $0x8] sm:$0xf]
      %v959 = vld [vmem:[%s359 + $0xc] sm:$0xf]
      %v964 = vunpack.c.l.b16 %v956
      %v965 = vunpack.c.l.b16 %v957
      %v966 = vunpack.c.l.b16 %v958
      %v967 = vunpack.c.l.b16 %v959
      %v968 = vpack.c.b16 %v965, %v964
      %v969 = vpack.c.b16 %v967, %v966
      %v973 = vsel %vm255, %v955, 0
      %975 = vmatprep.subr.bf16.mxu0 0
      %976 = vmatpush1.bf16.msra.mxu0 0
      %977 = vmatprep.subr.bf16.mxu0 0
      %978 = vmatpush1.bf16.msra.mxu0 0
      %979 = vmatprep.subr.bf16.mxu0 0
      %980 = vmatpush1.bf16.msra.mxu0 0
      %981 = vmatprep.subr.bf16.mxu0 0
      %982 = vmatpush1.bf16.msra.mxu0 0
      %983 = vmatprep.subr.bf16.mxu0 0
      %984 = vmatpush1.bf16.msra.mxu0 0
      %985 = vmatprep.subr.bf16.mxu0 0
      %986 = vmatpush1.bf16.msra.mxu0 0
      %987 = vmatprep.subr.bf16.mxu0 0
      %988 = vmatpush1.bf16.msra.mxu0 %v969
      %989 = vmatprep.subr.bf16.mxu0 0
      %990 = vmatpush1.bf16.msra.mxu0 %v968
      %991 = vmatprep.subr.bf16.mxu0 0
      %992 = vmatpush2.bf16.msra.mxu0 0
      %993 = vmatprep.subr.bf16.mxu0 0
      %994 = vmatpush2.bf16.msra.mxu0 0
      %995 = vmatprep.subr.bf16.mxu0 0
      %996 = vmatpush2.bf16.msra.mxu0 0
      %997 = vmatprep.subr.bf16.mxu0 0
      %998 = vmatpush2.bf16.msra.mxu0 0
      %999 = vmatprep.subr.bf16.mxu0 0
      %1000 = vmatpush2.bf16.msra.mxu0 0
      %1001 = vmatprep.subr.bf16.mxu0 0
      %1002 = vmatpush2.bf16.msra.mxu0 0
      %1003 = vmatprep.subr.bf16.mxu0 0
      %1004 = vmatpush2.bf16.msra.mxu0 0
      %1005 = vmatprep.subr.bf16.mxu0 0
      %1006 = vmatpush2.bf16.msra.mxu0 0
      %1007 = vmatprep.mubr.bf16.mxu0 0
      %1008 = vmatmul.mubr.bf16.gmra.mxu0 %v973
      %v1009 = vpop.f32.mrf.mxu0
      %v1010 = vadd.f32 0.0, %v1009
      %v1011 = vpop.f32.mrf.mxu0
      %v1012 = vpop.f32.mrf.mxu0
      %v1013 = vpop.f32.mrf.mxu0
      %1014 = vdwg.mxu0
      %v1015 = vadd.f32 %v946, %v1010
      %v1016 = vld [vmem:[%s954] sm:$0xf]
      %v1017 = vld [vmem:[%s954 + $0x4] sm:$0x1]
      %v1018 = vld [vmem:[%s422] sm:$0xf]
      %v1019 = vld [vmem:[%s422 + $0x4] sm:$0xf]
      %v1020 = vld [vmem:[%s422 + $0x8] sm:$0xf]
      %v1021 = vld [vmem:[%s422 + $0xc] sm:$0xf]
      %v1024 = vunpack.c.l.b16 %v1016
      %v1025 = vunpack.c.l.b16 %v1017
      %v1026 = vpack.c.b16 %v1025, %v1024
      %v1028 = vshrl.u32 %v1026, 16
      %v1030 = vshll.u32 %v1026, 16
      %v1032 = vrot.slane %v1030, 1
      %v1033 = vor.u32 %v1028, %v1032
      %v1038 = vunpack.c.l.b16 %v1018
      %v1039 = vunpack.c.l.b16 %v1019
      %v1040 = vunpack.c.l.b16 %v1020
      %v1041 = vunpack.c.l.b16 %v1021
      %v1042 = vpack.c.b16 %v1039, %v1038
      %v1043 = vpack.c.b16 %v1041, %v1040
      %v1047 = vsel %vm255, %v1033, 0
      %1049 = vmatprep.subr.bf16.mxu0 0
      %1050 = vmatpush1.bf16.msra.mxu0 0
      %1051 = vmatprep.subr.bf16.mxu0 0
      %1052 = vmatpush1.bf16.msra.mxu0 0
      %1053 = vmatprep.subr.bf16.mxu0 0
      %1054 = vmatpush1.bf16.msra.mxu0 0
      %1055 = vmatprep.subr.bf16.mxu0 0
      %1056 = vmatpush1.bf16.msra.mxu0 0
      %1057 = vmatprep.subr.bf16.mxu0 0
      %1058 = vmatpush1.bf16.msra.mxu0 0
      %1059 = vmatprep.subr.bf16.mxu0 0
      %1060 = vmatpush1.bf16.msra.mxu0 0
      %1061 = vmatprep.subr.bf16.mxu0 0
      %1062 = vmatpush1.bf16.msra.mxu0 %v1043
      %1063 = vmatprep.subr.bf16.mxu0 0
      %1064 = vmatpush1.bf16.msra.mxu0 %v1042
      %1065 = vmatprep.subr.bf16.mxu0 0
      %1066 = vmatpush2.bf16.msra.mxu0 0
      %1067 = vmatprep.subr.bf16.mxu0 0
      %1068 = vmatpush2.bf16.msra.mxu0 0
      %1069 = vmatprep.subr.bf16.mxu0 0
      %1070 = vmatpush2.bf16.msra.mxu0 0
      %1071 = vmatprep.subr.bf16.mxu0 0
      %1072 = vmatpush2.bf16.msra.mxu0 0
      %1073 = vmatprep.subr.bf16.mxu0 0
      %1074 = vmatpush2.bf16.msra.mxu0 0
      %1075 = vmatprep.subr.bf16.mxu0 0
      %1076 = vmatpush2.bf16.msra.mxu0 0
      %1077 = vmatprep.subr.bf16.mxu0 0
      %1078 = vmatpush2.bf16.msra.mxu0 0
      %1079 = vmatprep.subr.bf16.mxu0 0
      %1080 = vmatpush2.bf16.msra.mxu0 0
      %1081 = vmatprep.mubr.bf16.mxu0 0
      %1082 = vmatmul.mubr.bf16.gmra.mxu0 %v1047
      %v1083 = vpop.f32.mrf.mxu0
      %v1084 = vadd.f32 0.0, %v1083
      %v1085 = vpop.f32.mrf.mxu0
      %v1086 = vpop.f32.mrf.mxu0
      %v1087 = vpop.f32.mrf.mxu0
      %1088 = vdwg.mxu0
      %v1089 = vadd.f32 %v1015, %v1084
      %p1090 = scmp.lt.s32.totalorder %s654, 8
      %s1091 = scalar_select %p1090, 1, 0
      %s1092 = scvt.s32.f32 %s1091
      %v1093 = vsel %vm498, %v1089, 0.0
      %v1094 = vrot.slane %v1093, 4
      %v1095 = vadd.f32 %v1093, %v1094
      %v1096 = vrot.slane %v1095, 2
      %v1097 = vadd.f32 %v1095, %v1096
      %v1098 = vrot.slane %v1097, 1
      %v1099 = vadd.f32 %v1097, %v1098
      %v1100 = vstv %s1092
      %v1101 = vmul.f32 %v1100, %v1099
      %v1102 = vadd.f32 %v805, %v1101
      %v1103 = vmul.f32 %v1089, %v1089
      %v1104 = vsel %vm498, %v1103, 0.0
      %v1105 = vrot.slane %v1104, 4
      %v1106 = vadd.f32 %v1104, %v1105
      %v1107 = vrot.slane %v1106, 2
      %v1108 = vadd.f32 %v1106, %v1107
      %v1109 = vrot.slane %v1108, 1
      %v1110 = vadd.f32 %v1108, %v1109
      %v1111 = vmul.f32 %v1100, %v1110
      %v1112 = vadd.f32 %v815, %v1111
      %v1113 = vpack.c.bf16 %v1089, %v1089
      %s1114 = scalar_lea.vmem %s205, 8
      %1115 = vst.msk [vmem:[%s1114] sm:$0xf] %vm520, %v1113
      %vm1116 = vcmask 122880
      %1117 = vst.msk [vmem:[%s214] sm:$0x1] %vm1116, %v1102
      %1118 = vst.msk [vmem:[%s214 + $0x1] sm:$0x1] %vm1116, %v1112
      %s1119 = smul.u32 3, %s20
      %p1120 = scmp.lt.s32.totalorder %s19, 1
      %s1121 = scalar_select %p1120, %s19, 1
      %p1122 = scmp.lt.s32.totalorder %s1119, 8
      %s1123 = scalar_select %p1122, %s1119, 8
      %s1124 = smul.addr %s1121, 9
      %s1125 = sadd.s32 %s1123, %s1124
      %s1126 = smul.addr %s1125, 4
      %s1127 = scalar_lea.vmem %s2, %s1126
      %p1128 = scmp.lt.s32.totalorder %s19, 1
      %s1129 = scalar_select %p1128, %s19, 1
      %p1130 = scmp.lt.s32.totalorder %s20, 2
      %s1131 = scalar_select %p1130, %s20, 2
      %s1132 = smul.addr %s1129, 3
      %s1133 = sadd.s32 %s1131, %s1132
      %s1134 = smul.addr %s1133, 2
      %s1135 = scalar_lea.vmem %s3, %s1134
      // Predicated region
      $region29: #{_lambda_.7} parent=27 // pred_check
        %p1136 = pneg %p94
      $region30: #{_lambda_.7} parent=27 // pred_check_branch
        %1138 = sbr.rel (%p1136) target = $region32
      $region31: #{_lambda_.7} parent=27 // pred_region
        %s1139 = smul.u32 3, %s20
      $region32: #{_lambda_.7} parent=27 // pred_fallthru
        _
      // Predicated region
      $region33: #{_lambda_.7} parent=27 // pred_check
        %p1140 = pneg %p122
      $region34: #{_lambda_.7} parent=27 // pred_check_branch
        %1142 = sbr.rel (%p1140) target = $region36
      $region35: #{_lambda_.7} parent=27 // pred_region
        _
      $region36: #{_lambda_.7} parent=27 // pred_fallthru
        _
    $region28: #{_lambda_.7} parent=5 // pred_fallthru
      _
    %p1143 = scmp.le.s32.totalorder 2, %s10
    // Predicated region
    $region37: #{_lambda_.7} parent=5 // pred_check
      %p1144 = pneg %p1143
    $region38: #{_lambda_.7} parent=5 // pred_check_branch
      %1146 = sbr.rel (%p1144) target = $region40
    $region39: #{_lambda_.7} parent=5 // pred_region
      %s1147 = ssub.s32 %s10, 2
      // Predicated region
      $region41: #{_lambda_.7} parent=39 // pred_check
        %p1148 = pneg %p100
      $region42: #{_lambda_.7} parent=39 // pred_check_branch
        %1150 = sbr.rel (%p1148) target = $region44
      $region43: #{_lambda_.7} parent=39 // pred_region
        %s1151 = smul.u32 3, %s22
        %p1152 = scmp.lt.s32.totalorder %s21, 1
        %s1153 = scalar_select %p1152, %s21, 1
        %p1154 = scmp.lt.s32.totalorder %s1151, 8
        %s1155 = scalar_select %p1154, %s1151, 8
        %s1156 = smul.addr %s1153, 9
        %s1157 = sadd.s32 %s1155, %s1156
        %s1158 = smul.addr %s1157, 4
        %s1159 = scalar_lea.vmem %s2, %s1158
      $region44: #{_lambda_.7} parent=39 // pred_fallthru
        _
      // Predicated region
      $region45: #{_lambda_.7} parent=39 // pred_check
        %p1160 = pneg %p128
      $region46: #{_lambda_.7} parent=39 // pred_check_branch
        %1162 = sbr.rel (%p1160) target = $region48
      $region47: #{_lambda_.7} parent=39 // pred_region
        %p1163 = scmp.lt.s32.totalorder %s21, 1
        %s1164 = scalar_select %p1163, %s21, 1
        %p1165 = scmp.lt.s32.totalorder %s22, 2
        %s1166 = scalar_select %p1165, %s22, 2
        %s1167 = smul.addr %s1164, 3
        %s1168 = sadd.s32 %s1166, %s1167
        %s1169 = smul.addr %s1168, 2
        %s1170 = scalar_lea.vmem %s3, %s1169
      $region48: #{_lambda_.7} parent=39 // pred_fallthru
        _
    $region40: #{_lambda_.7} parent=5 // pred_fallthru
      _
  $region6: #{_lambda_.7} parent=0 // loop_footer
    %s14 = sadd.s32 1, %s10
  $region7: #{_lambda_.7} parent=0 // loop_footer_branch
    %9 = sbr.rel target = $region3
  $region8: #{_lambda_.7} parent=0 // loop_exit
    _

// kernel: _lambda_.10
$region0: #{_lambda_.10}
  #allocation0 [shape = 'u32[]', space=smem, size = 0x4, offset = 0x4, fixed_abs, tag = 'smem constant byte address 0x4 - core index']
  #allocation1 [shape = 'u32[144,128]{1,0:T(1,128)}', space=vmem, size = 0x12000, scoped, tag = 'internal scratch']
  %s0 = inlined_call_operand.vmem [shape: bf16[48,32], index: 0, kind: input, shape index: {}]
  %s1 = inlined_call_operand.vmem [shape: f32[1,32], index: 1, kind: input, shape index: {}]
  %s2 = inlined_call_operand.vmem [shape: f32[1,32], index: 2, kind: input, shape index: {}]
  %s3 = inlined_call_operand.vmem [shape: bf16[48,32], index: 3, kind: output, shape index: {}]
  %s4 = sld [smem:[#allocation0]]
  $region45: #{_lambda_.10} parent=0
    _
  %s6 = ssub.s32 1, %s4
  %s7 = scalar_select 0, %s6, %s4
  loop: start=0, step=1, limit=5
  $region2: #{_lambda_.10} parent=0 // loop_pre_header
    _
  $region3: #{_lambda_.10} parent=0 // loop_header
    %s9 = sphi 0, %s13
    %p10 = scmp.ge.s32.totalorder %s9, 5
    %s19 = sphi 0, %s21
    %s22 = sphi 0, %s19
    %s23 = sphi 0, %s22
    %s39 = sphi 0, %s23
    %s43 = sphi 0, %s43
    %s45 = sphi 0, %s43
    %s46 = sphi 0, %s45
    %s60 = sphi 0, %s46
    %s64 = sphi 0, %s64
    %s66 = sphi 0, %s64
    %s67 = sphi 0, %s66
    %s81 = sphi 0, %s67
    %s87 = sphi 0, %s89
    %s90 = sphi 0, %s87
    %s91 = sphi 0, %s90
    %s107 = sphi 0, %s91
  $region4: #{_lambda_.10} parent=0 // loop_header_branch
    %12 = sbr.rel (%p10) target = $region8
  $region5: #{_lambda_.10} parent=0 // loop_body
    %s14 = ssub.s32 %s9, 1
    %s15 = ssub.s32 %s9, 2
    %s16 = sadd.s32 %s9, 1
    %s17 = ssub.s32 %s9, %s16
    %p18 = scmp.eq.s32.totalorder %s17, 0
    %s20 = sadd.s32 %s19, 1
    %s21 = scalar_select %p18, %s19, %s20
    %p24 = pneg %p18
    %p25 = scmp.eq.s32.totalorder %s9, 2
    %p26 = por %p24, %p25
    %p27 = scmp.ne.s32.totalorder %s19, %s22
    %p28 = scmp.eq.s32.totalorder %s9, 0
    %p29 = por %p27, %p28
    %p30 = scmp.ne.s32.totalorder %s19, %s22
    %p31 = scmp.eq.s32.totalorder %s14, 2
    %p32 = por %p30, %p31
    %p33 = scmp.ne.s32.totalorder %s22, %s23
    %p34 = scmp.eq.s32.totalorder %s14, 0
    %p35 = por %p33, %p34
    %p36 = scmp.ne.s32.totalorder %s22, %s23
    %p37 = scmp.eq.s32.totalorder %s15, 2
    %p38 = por %p36, %p37
    %p40 = scmp.ne.s32.totalorder %s23, %s39
    %p41 = scmp.eq.s32.totalorder %s15, 0
    %p42 = por %p40, %p41
    %s44 = sadd.s32 %s43, 1
    %p47 = scmp.eq.s32.totalorder %s9, 2
    %p48 = scmp.ne.s32.totalorder %s43, %s45
    %p49 = scmp.eq.s32.totalorder %s9, 0
    %p50 = por %p48, %p49
    %p51 = scmp.ne.s32.totalorder %s43, %s45
    %p52 = scmp.eq.s32.totalorder %s14, 2
    %p53 = por %p51, %p52
    %p54 = scmp.ne.s32.totalorder %s45, %s46
    %p55 = scmp.eq.s32.totalorder %s14, 0
    %p56 = por %p54, %p55
    %p57 = scmp.ne.s32.totalorder %s45, %s46
    %p58 = scmp.eq.s32.totalorder %s15, 2
    %p59 = por %p57, %p58
    %p61 = scmp.ne.s32.totalorder %s46, %s60
    %p62 = scmp.eq.s32.totalorder %s15, 0
    %p63 = por %p61, %p62
    %s65 = sadd.s32 %s64, 1
    %p68 = scmp.eq.s32.totalorder %s9, 2
    %p69 = scmp.ne.s32.totalorder %s64, %s66
    %p70 = scmp.eq.s32.totalorder %s9, 0
    %p71 = por %p69, %p70
    %p72 = scmp.ne.s32.totalorder %s64, %s66
    %p73 = scmp.eq.s32.totalorder %s14, 2
    %p74 = por %p72, %p73
    %p75 = scmp.ne.s32.totalorder %s66, %s67
    %p76 = scmp.eq.s32.totalorder %s14, 0
    %p77 = por %p75, %p76
    %p78 = scmp.ne.s32.totalorder %s66, %s67
    %p79 = scmp.eq.s32.totalorder %s15, 2
    %p80 = por %p78, %p79
    %p82 = scmp.ne.s32.totalorder %s67, %s81
    %p83 = scmp.eq.s32.totalorder %s15, 0
    %p84 = por %p82, %p83
    %s85 = ssub.s32 %s9, %s16
    %p86 = scmp.eq.s32.totalorder %s85, 0
    %s88 = sadd.s32 %s87, 1
    %s89 = scalar_select %p86, %s87, %s88
    %p92 = pneg %p86
    %p93 = scmp.eq.s32.totalorder %s9, 2
    %p94 = por %p92, %p93
    %p95 = scmp.ne.s32.totalorder %s87, %s90
    %p96 = scmp.eq.s32.totalorder %s9, 0
    %p97 = por %p95, %p96
    %p98 = scmp.ne.s32.totalorder %s87, %s90
    %p99 = scmp.eq.s32.totalorder %s14, 2
    %p100 = por %p98, %p99
    %p101 = scmp.ne.s32.totalorder %s90, %s91
    %p102 = scmp.eq.s32.totalorder %s14, 0
    %p103 = por %p101, %p102
    %p104 = scmp.ne.s32.totalorder %s90, %s91
    %p105 = scmp.eq.s32.totalorder %s15, 2
    %p106 = por %p104, %p105
    %p108 = scmp.ne.s32.totalorder %s91, %s107
    %p109 = scmp.eq.s32.totalorder %s15, 0
    %p110 = por %p108, %p109
    %p111 = scmp.le.s32.totalorder 1, %s9
    %p112 = scmp.lt.s32.totalorder %s9, 4
    %p113 = pnand %p111, %p112
    %p114 = pneg %p113
    // Predicated region
    $region9: #{_lambda_.10} parent=5 // pred_check
      _
    $region10: #{_lambda_.10} parent=5 // pred_check_branch
      %116 = sbr.rel (%p113) target = $region12
    $region11: #{_lambda_.10} parent=5 // pred_region
      %s117 = ssub.s32 %s9, 1
      // Predicated region
      $region13: #{_lambda_.10} parent=11 // pred_check
        %p118 = pneg %p56
      $region14: #{_lambda_.10} parent=11 // pred_check_branch
        %120 = sbr.rel (%p118) target = $region16
      $region15: #{_lambda_.10} parent=11 // pred_region
        _
      $region16: #{_lambda_.10} parent=11 // pred_fallthru
        _
      // Predicated region
      $region17: #{_lambda_.10} parent=11 // pred_check
        %p121 = pneg %p77
      $region18: #{_lambda_.10} parent=11 // pred_check_branch
        %123 = sbr.rel (%p121) target = $region20
      $region19: #{_lambda_.10} parent=11 // pred_region
        _
      $region20: #{_lambda_.10} parent=11 // pred_fallthru
        _
    $region12: #{_lambda_.10} parent=5 // pred_fallthru
      _
    %p124 = scmp.lt.s32.totalorder %s9, 3
    // Predicated region
    $region21: #{_lambda_.10} parent=5 // pred_check
      %p125 = pneg %p124
    $region22: #{_lambda_.10} parent=5 // pred_check_branch
      %127 = sbr.rel (%p125) target = $region24
    $region23: #{_lambda_.10} parent=5 // pred_region
      // Predicated region
      $region25: #{_lambda_.10} parent=23 // pred_check
        %p128 = pneg %p29
      $region26: #{_lambda_.10} parent=23 // pred_check_branch
        %130 = sbr.rel (%p128) target = $region28
      $region27: #{_lambda_.10} parent=23 // pred_region
        %s131 = smul.u32 2, %s9
        %p132 = scmp.lt.s32.totalorder %s131, 5
        %s133 = scalar_select %p132, %s131, 5
        %s134 = smul.addr %s133, 4
        %s135 = scalar_lea.vmem %s0, %s134
        %s136 = smul.u32 2, %s9
      $region28: #{_lambda_.10} parent=23 // pred_fallthru
        _
    $region24: #{_lambda_.10} parent=5 // pred_fallthru
      _
    %p137 = scmp.le.s32.totalorder 1, %s9
    %p138 = scmp.lt.s32.totalorder %s9, 4
    %p139 = pnand %p137, %p138
    %p140 = pneg %p139
    // Predicated region
    $region29: #{_lambda_.10} parent=5 // pred_check
      _
    $region30: #{_lambda_.10} parent=5 // pred_check_branch
      %142 = sbr.rel (%p139) target = $region32
    $region31: #{_lambda_.10} parent=5 // pred_region
      %s143 = ssub.s32 %s9, 1
      %s144 = smul.u32 2, %s14
      %p145 = scmp.lt.s32.totalorder %s144, 5
      %s146 = scalar_select %p145, %s144, 5
      %s147 = smul.addr %s146, 4
      %s148 = scalar_lea.vmem %s0, %s147
      %p149 = pneg %p35
      %p150 = pneg %p32
      %p151 = pneg %p56
      %p152 = pneg %p53
      %p153 = pneg %p77
      %p154 = pneg %p74
      %p155 = pneg %p103
      %p156 = pneg %p100
      %s157 = smul.u32 2, %s14
      %p158 = scmp.lt.s32.totalorder %s157, 5
      %s159 = scalar_select %p158, %s157, 5
      %s160 = smul.addr %s159, 4
      %s161 = scalar_lea.vmem %s3, %s160
      %s162 = smul.u32 2, %s14
      %p163 = scmp.lt.s32.totalorder %s162, 5
      %s164 = scalar_select %p163, %s162, 5
      %s165 = smul.addr %s164, 4
      %s166 = scalar_lea.vmem %s0, %s165
      %s167 = smul.u32 2, %s14
      %s168 = smul.u32 2, %s14
      %p169 = scmp.lt.s32.totalorder %s168, 5
      %s170 = scalar_select %p169, %s168, 5
      %s171 = smul.addr %s170, 4
      %s172 = scalar_lea.vmem %s3, %s171
      %s173 = smul.u32 2, %s14
      %v174 = vld [vmem:[%s166] sm:$0xf]
      %v175 = vld [vmem:[%s166 + $0x4] sm:$0xf]
      %v176 = vunpack.c.l.bf16 %v174
      %v177 = vunpack.c.l.bf16 %v175
      %v178 = vld [vmem:[%s1] sm:$0x1]
      %v180 = vlaneseq
      %v181 = vshrl.u32 %v180, 7
      %v182 = vsub.s32 0, %v181
      %v183 = vrot.slane %v178, %v182
      %v185 = vmul.f32 %v176, %v183
      %v186 = vmul.f32 %v177, %v183
      %v187 = vld [vmem:[%s2] sm:$0x1]
      %v189 = vlaneseq
      %v190 = vshrl.u32 %v189, 7
      %v191 = vsub.s32 0, %v190
      %v192 = vrot.slane %v187, %v191
      %v194 = vadd.f32 %v185, %v192
      %v195 = vadd.f32 %v186, %v192
      %vm196 = vcmp.ge.f32.partialorder %v194, 0.0
      %vm197 = vcmp.ge.f32.partialorder %v195, 0.0
      %v198 = vmul.f32 %v194, 0.2
      %v199 = vmul.f32 %v195, 0.2
      %v200 = vsel %vm196, %v194, %v198
      %v201 = vsel %vm197, %v195, %v199
      %v202 = vpack.c.bf16 %v201, %v200
      %v204 = vunpack.c.l.b16 %v202
      %v205 = vunpack.c.h.b16 %v202
      %v206 = vpack.c.b16 %v204, %v204
      %v207 = vpack.c.b16 %v205, %v205
      %vm210 = vcmask 257024
      %211 = vst.msk [vmem:[%s172] sm:$0xf] %vm210, %v206
      %212 = vst.msk [vmem:[%s172 + $0x4] sm:$0xf] %vm210, %v207
      %s213 = smul.u32 2, %s14
      %p214 = scmp.lt.s32.totalorder %s213, 5
      %s215 = scalar_select %p214, %s213, 5
      %s216 = smul.addr %s215, 4
      %s217 = scalar_lea.vmem %s3, %s216
      // Predicated region
      $region33: #{_lambda_.10} parent=31 // pred_check
        %p218 = pneg %p100
      $region34: #{_lambda_.10} parent=31 // pred_check_branch
        %220 = sbr.rel (%p218) target = $region36
      $region35: #{_lambda_.10} parent=31 // pred_region
        %s221 = smul.u32 2, %s14
      $region36: #{_lambda_.10} parent=31 // pred_fallthru
        _
    $region32: #{_lambda_.10} parent=5 // pred_fallthru
      _
    %p222 = scmp.le.s32.totalorder 2, %s9
    // Predicated region
    $region37: #{_lambda_.10} parent=5 // pred_check
      %p223 = pneg %p222
    $region38: #{_lambda_.10} parent=5 // pred_check_branch
      %225 = sbr.rel (%p223) target = $region40
    $region39: #{_lambda_.10} parent=5 // pred_region
      %s226 = ssub.s32 %s9, 2
      // Predicated region
      $region41: #{_lambda_.10} parent=39 // pred_check
        %p227 = pneg %p106
      $region42: #{_lambda_.10} parent=39 // pred_check_branch
        %229 = sbr.rel (%p227) target = $region44
      $region43: #{_lambda_.10} parent=39 // pred_region
        %s230 = smul.u32 2, %s15
        %p231 = scmp.lt.s32.totalorder %s230, 5
        %s232 = scalar_select %p231, %s230, 5
        %s233 = smul.addr %s232, 4
        %s234 = scalar_lea.vmem %s3, %s233
      $region44: #{_lambda_.10} parent=39 // pred_fallthru
        _
    $region40: #{_lambda_.10} parent=5 // pred_fallthru
      _
  $region6: #{_lambda_.10} parent=0 // loop_footer
    %s13 = sadd.s32 1, %s9
  $region7: #{_lambda_.10} parent=0 // loop_footer_branch
    %8 = sbr.rel target = $region3
  $region8: #{_lambda_.10} parent=0 // loop_exit
    _

// kernel: _lambda_.9
$region0: #{_lambda_.9}
  #allocation0 [shape = 'u32[]', space=smem, size = 0x4, offset = 0x4, fixed_abs, tag = 'smem constant byte address 0x4 - core index']
  #allocation1 [shape = 'u32[144,128]{1,0:T(1,128)}', space=vmem, size = 0x12000, scoped, tag = 'internal scratch']
  %s0 = inlined_call_operand.vmem [shape: bf16[2,7,5,64], index: 0, kind: input, shape index: {}]
  %s1 = inlined_call_operand.vmem [shape: bf16[4,64,32], index: 1, kind: input, shape index: {}]
  %s2 = inlined_call_operand.vmem [shape: bf16[2,6,4,32], index: 2, kind: output, shape index: {0}]
  %s3 = inlined_call_operand.vmem [shape: f32[2,2,2,32], index: 3, kind: output, shape index: {1}]
  %4 = xla_tuple %s2, %s3
  %s5 = sld [smem:[#allocation0]]
  $region49: #{_lambda_.9} parent=0
    _
  %s7 = ssub.s32 1, %s5
  %s8 = scalar_select 0, %s7, %s5
  loop: start=0, step=1, limit=6
  $region2: #{_lambda_.9} parent=0 // loop_pre_header
    _
  $region3: #{_lambda_.9} parent=0 // loop_header
    %s10 = sphi 0, %s14
    %p11 = scmp.ge.s32.totalorder %s10, 6
    %s17 = sphi 0, %s29
    %s18 = sphi 0, %s25
    %s19 = sphi 0, %s17
    %s20 = sphi 0, %s18
    %s21 = sphi 0, %s19
    %s22 = sphi 0, %s20
    %s32 = sphi 0, %s34
    %s35 = sphi 0, %s32
    %s36 = sphi 0, %s35
    %s52 = sphi 0, %s36
    %s56 = sphi 0, %s56
    %s58 = sphi 0, %s56
    %s59 = sphi 0, %s58
    %s73 = sphi 0, %s59
    %s81 = sphi 0, %s83
    %s84 = sphi 0, %s81
    %s85 = sphi 0, %s84
    %s101 = sphi 0, %s85
    %s109 = sphi 0, %s111
    %s112 = sphi 0, %s109
    %s113 = sphi 0, %s112
    %s129 = sphi 0, %s113
  $region4: #{_lambda_.9} parent=0 // loop_header_branch
    %13 = sbr.rel (%p11) target = $region8
  $region5: #{_lambda_.9} parent=0 // loop_body
    %s15 = ssub.s32 %s10, 1
    %s16 = ssub.s32 %s10, 2
    %s23 = sadd.s32 1, %s18
    %p24 = scmp.ge.s32.totalorder %s23, 2
    %s25 = scalar_select %p24, 0, %s23
    %s26 = sadd.s32 1, %s17
    %s27 = scalar_select %p24, %s26, %s17
    %p28 = scmp.ge.s32.totalorder %s27, 2
    %s29 = scalar_select %p28, 0, %s27
    %s30 = ssub.s32 %s17, %s29
    %p31 = scmp.eq.s32.totalorder %s30, 0
    %s33 = sadd.s32 %s32, 1
    %s34 = scalar_select %p31, %s32, %s33
    %p37 = pneg %p31
    %p38 = scmp.eq.s32.totalorder %s10, 3
    %p39 = por %p37, %p38
    %p40 = scmp.ne.s32.totalorder %s32, %s35
    %p41 = scmp.eq.s32.totalorder %s10, 0
    %p42 = por %p40, %p41
    %p43 = scmp.ne.s32.totalorder %s32, %s35
    %p44 = scmp.eq.s32.totalorder %s15, 3
    %p45 = por %p43, %p44
    %p46 = scmp.ne.s32.totalorder %s35, %s36
    %p47 = scmp.eq.s32.totalorder %s15, 0
    %p48 = por %p46, %p47
    %p49 = scmp.ne.s32.totalorder %s35, %s36
    %p50 = scmp.eq.s32.totalorder %s16, 3
    %p51 = por %p49, %p50
    %p53 = scmp.ne.s32.totalorder %s36, %s52
    %p54 = scmp.eq.s32.totalorder %s16, 0
    %p55 = por %p53, %p54
    %s57 = sadd.s32 %s56, 1
    %p60 = scmp.eq.s32.totalorder %s10, 3
    %p61 = scmp.ne.s32.totalorder %s56, %s58
    %p62 = scmp.eq.s32.totalorder %s10, 0
    %p63 = por %p61, %p62
    %p64 = scmp.ne.s32.totalorder %s56, %s58
    %p65 = scmp.eq.s32.totalorder %s15, 3
    %p66 = por %p64, %p65
    %p67 = scmp.ne.s32.totalorder %s58, %s59
    %p68 = scmp.eq.s32.totalorder %s15, 0
    %p69 = por %p67, %p68
    %p70 = scmp.ne.s32.totalorder %s58, %s59
    %p71 = scmp.eq.s32.totalorder %s16, 3
    %p72 = por %p70, %p71
    %p74 = scmp.ne.s32.totalorder %s59, %s73
    %p75 = scmp.eq.s32.totalorder %s16, 0
    %p76 = por %p74, %p75
    %s77 = ssub.s32 %s17, %s29
    %s78 = ssub.s32 %s18, %s25
    %s79 = sor.u32 %s77, %s78
    %p80 = scmp.eq.s32.totalorder %s79, 0
    %s82 = sadd.s32 %s81, 1
    %s83 = scalar_select %p80, %s81, %s82
    %p86 = pneg %p80
    %p87 = scmp.eq.s32.totalorder %s10, 3
    %p88 = por %p86, %p87
    %p89 = scmp.ne.s32.totalorder %s81, %s84
    %p90 = scmp.eq.s32.totalorder %s10, 0
    %p91 = por %p89, %p90
    %p92 = scmp.ne.s32.totalorder %s81, %s84
    %p93 = scmp.eq.s32.totalorder %s15, 3
    %p94 = por %p92, %p93
    %p95 = scmp.ne.s32.totalorder %s84, %s85
    %p96 = scmp.eq.s32.totalorder %s15, 0
    %p97 = por %p95, %p96
    %p98 = scmp.ne.s32.totalorder %s84, %s85
    %p99 = scmp.eq.s32.totalorder %s16, 3
    %p100 = por %p98, %p99
    %p102 = scmp.ne.s32.totalorder %s85, %s101
    %p103 = scmp.eq.s32.totalorder %s16, 0
    %p104 = por %p102, %p103
    %s105 = ssub.s32 %s17, %s29
    %s106 = ssub.s32 %s18, %s25
    %s107 = sor.u32 %s105, %s106
    %p108 = scmp.eq.s32.totalorder %s107, 0
    %s110 = sadd.s32 %s109, 1
    %s111 = scalar_select %p108, %s109, %s110
    %p114 = pneg %p108
    %p115 = scmp.eq.s32.totalorder %s10, 3
    %p116 = por %p114, %p115
    %p117 = scmp.ne.s32.totalorder %s109, %s112
    %p118 = scmp.eq.s32.totalorder %s10, 0
    %p119 = por %p117, %p118
    %p120 = scmp.ne.s32.totalorder %s109, %s112
    %p121 = scmp.eq.s32.totalorder %s15, 3
    %p122 = por %p120, %p121
    %p123 = scmp.ne.s32.totalorder %s112, %s113
    %p124 = scmp.eq.s32.totalorder %s15, 0
    %p125 = por %p123, %p124
    %p126 = scmp.ne.s32.totalorder %s112, %s113
    %p127 = scmp.eq.s32.totalorder %s16, 3
    %p128 = por %p126, %p127
    %p130 = scmp.ne.s32.totalorder %s113, %s129
    %p131 = scmp.eq.s32.totalorder %s16, 0
    %p132 = por %p130, %p131
    %p133 = scmp.le.s32.totalorder 1, %s10
    %p134 = scmp.lt.s32.totalorder %s10, 5
    %p135 = pnand %p133, %p134
    %p136 = pneg %p135
    // Predicated region
    $region9: #{_lambda_.9} parent=5 // pred_check
      _
    $region10: #{_lambda_.9} parent=5 // pred_check_branch
      %138 = sbr.rel (%p135) target = $region12
    $region11: #{_lambda_.9} parent=5 // pred_region
      %s139 = ssub.s32 %s10, 1
      // Predicated region
      $region13: #{_lambda_.9} parent=11 // pred_check
        %p140 = pneg %p69
      $region14: #{_lambda_.9} parent=11 // pred_check_branch
        %142 = sbr.rel (%p140) target = $region16
      $region15: #{_lambda_.9} parent=11 // pred_region
        _
      $region16: #{_lambda_.9} parent=11 // pred_fallthru
        _
    $region12: #{_lambda_.9} parent=5 // pred_fallthru
      _
    %p143 = scmp.lt.s32.totalorder %s10, 4
    // Predicated region
    $region17: #{_lambda_.9} parent=5 // pred_check
      %p144 = pneg %p143
    $region18: #{_lambda_.9} parent=5 // pred_check_branch
      %146 = sbr.rel (%p144) target = $region20
    $region19: #{_lambda_.9} parent=5 // pred_region
      // Predicated region
      $region21: #{_lambda_.9} parent=19 // pred_check
        %p147 = pneg %p42
      $region22: #{_lambda_.9} parent=19 // pred_check_branch
        %149 = sbr.rel (%p147) target = $region24
      $region23: #{_lambda_.9} parent=19 // pred_region
        %p150 = scmp.lt.s32.totalorder %s17, 1
        %s151 = scalar_select %p150, %s17, 1
        %s152 = smul.addr %s151, 7
        %s153 = smul.addr %s152, 4
        %s154 = scalar_lea.vmem %s0, %s153
      $region24: #{_lambda_.9} parent=19 // pred_fallthru
        _
    $region20: #{_lambda_.9} parent=5 // pred_fallthru
      _
    %p155 = scmp.le.s32.totalorder 1, %s10
    %p156 = scmp.lt.s32.totalorder %s10, 5
    %p157 = pnand %p155, %p156
    %p158 = pneg %p157
    // Predicated region
    $region25: #{_lambda_.9} parent=5 // pred_check
      _
    $region26: #{_lambda_.9} parent=5 // pred_check_branch
      %160 = sbr.rel (%p157) target = $region28
    $region27: #{_lambda_.9} parent=5 // pred_region
      %s161 = ssub.s32 %s10, 1
      %p162 = scmp.lt.s32.totalorder %s19, 1
      %s163 = scalar_select %p162, %s19, 1
      %s164 = smul.addr %s163, 7
      %s165 = smul.addr %s164, 4
      %s166 = scalar_lea.vmem %s0, %s165
      %p167 = pneg %p48
      %p168 = pneg %p45
      %p169 = pneg %p69
      %p170 = pneg %p66
      %p171 = pneg %p97
      %p172 = pneg %p94
      %s173 = smul.u32 3, %s20
      %p174 = scmp.lt.s32.totalorder %s19, 1
      %s175 = scalar_select %p174, %s19, 1
      %p176 = scmp.lt.s32.totalorder %s173, 5
      %s177 = scalar_select %p176, %s173, 5
      %s178 = smul.addr %s175, 6
      %s179 = sadd.s32 %s177, %s178
      %s180 = smul.addr %s179, 2
      %s181 = scalar_lea.vmem %s2, %s180
      %p182 = pneg %p125
      %p183 = pneg %p122
      %p184 = scmp.lt.s32.totalorder %s19, 1
      %s185 = scalar_select %p184, %s19, 1
      %p186 = scmp.lt.s32.totalorder %s20, 1
      %s187 = scalar_select %p186, %s20, 1
      %s188 = smul.addr %s185, 2
      %s189 = sadd.s32 %s187, %s188
      %s190 = smul.addr %s189, 2
      %s191 = scalar_lea.vmem %s3, %s190
      %p192 = scmp.lt.s32.totalorder %s19, 1
      %s193 = scalar_select %p192, %s19, 1
      %s194 = smul.addr %s193, 7
      %s195 = smul.addr %s194, 4
      %s196 = scalar_lea.vmem %s0, %s195
      %s197 = smul.u32 3, %s20
      %p198 = scmp.lt.s32.totalorder %s19, 1
      %s199 = scalar_select %p198, %s19, 1
      %p200 = scmp.lt.s32.totalorder %s197, 5
      %s201 = scalar_select %p200, %s197, 5
      %s202 = smul.addr %s199, 6
      %s203 = sadd.s32 %s201, %s202
      %s204 = smul.addr %s203, 2
      %s205 = scalar_lea.vmem %s2, %s204
      %s206 = smul.u32 3, %s20
      %p207 = scmp.lt.s32.totalorder %s19, 1
      %s208 = scalar_select %p207, %s19, 1
      %p209 = scmp.lt.s32.totalorder %s20, 1
      %s210 = scalar_select %p209, %s20, 1
      %s211 = smul.addr %s208, 2
      %s212 = sadd.s32 %s210, %s211
      %s213 = smul.addr %s212, 2
      %s214 = scalar_lea.vmem %s3, %s213
      %s216 = smul.u32 %s20, 3
      %s217 = smul.addr %s216, 4
      %s218 = scalar_lea.vmem %s196, %s217
      %v219 = vld [vmem:[%s218] sm:$0x3]
      %v220 = vld [vmem:[%s1] sm:$0xf]
      %v221 = vld [vmem:[%s1 + $0x4] sm:$0xf]
      %v222 = vld [vmem:[%s1 + $0x8] sm:$0xf]
      %v223 = vld [vmem:[%s1 + $0xc] sm:$0xf]
      %v224 = vld [vmem:[%s1 + $0x10] sm:$0xf]
      %v225 = vld [vmem:[%s1 + $0x14] sm:$0xf]
      %v226 = vld [vmem:[%s1 + $0x18] sm:$0xf]
      %v227 = vld [vmem:[%s1 + $0x1c] sm:$0xf]
      %v228 = vld [vmem:[%s218] sm:$0x7]
      %s229 = scalar_lea.vmem %s1, 32
      %v230 = vld [vmem:[%s229] sm:$0xf]
      %v231 = vld [vmem:[%s229 + $0x4] sm:$0xf]
      %v232 = vld [vmem:[%s229 + $0x8] sm:$0xf]
      %v233 = vld [vmem:[%s229 + $0xc] sm:$0xf]
      %v234 = vld [vmem:[%s229 + $0x10] sm:$0xf]
      %v235 = vld [vmem:[%s229 + $0x14] sm:$0xf]
      %v236 = vld [vmem:[%s229 + $0x18] sm:$0xf]
      %v237 = vld [vmem:[%s229 + $0x1c] sm:$0xf]
      %v239 = vunpack.c.l.b16 %v228
      %v240 = vpack.c.b16 %v239, %v239
      %v242 = vshrl.u32 %v240, 16
      %v244 = vshll.u32 %v240, 16
      %v246 = vrot.slane %v244, 1
      %v247 = vor.u32 %v242, %v246
      %v256 = vunpack.c.l.b16 %v230
      %v257 = vunpack.c.l.b16 %v231
      %v258 = vunpack.c.l.b16 %v232
      %v259 = vunpack.c.l.b16 %v233
      %v260 = vunpack.c.l.b16 %v234
      %v261 = vunpack.c.l.b16 %v235
      %v262 = vunpack.c.l.b16 %v236
      %v263 = vunpack.c.l.b16 %v237
      %v264 = vpack.c.b16 %v257, %v256
      %v265 = vpack.c.b16 %v259, %v258
      %v266 = vpack.c.b16 %v261, %v260
      %v267 = vpack.c.b16 %v263, %v262
      %vm272 = vcmask 523264
      %v274 = vsel %vm272, %v247, 0
      %276 = vmatprep.subr.bf16.mxu0 0
      %277 = vmatpush1.bf16.msra.mxu0 0
      %278 = vmatprep.subr.bf16.mxu0 0
      %279 = vmatpush1.bf16.msra.mxu0 0
      %280 = vmatprep.subr.bf16.mxu0 0
      %281 = vmatpush1.bf16.msra.mxu0 0
      %282 = vmatprep.subr.bf16.mxu0 0
      %283 = vmatpush1.bf16.msra.mxu0 0
      %284 = vmatprep.subr.bf16.mxu0 0
      %285 = vmatpush1.bf16.msra.mxu0 %v267
      %286 = vmatprep.subr.bf16.mxu0 0
      %287 = vmatpush1.bf16.msra.mxu0 %v266
      %288 = vmatprep.subr.bf16.mxu0 0
      %289 = vmatpush1.bf16.msra.mxu0 %v265
      %290 = vmatprep.subr.bf16.mxu0 0
      %291 = vmatpush1.bf16.msra.mxu0 %v264
      %292 = vmatprep.subr.bf16.mxu0 0
      %293 = vmatpush2.bf16.msra.mxu0 0
      %294 = vmatprep.subr.bf16.mxu0 0
      %295 = vmatpush2.bf16.msra.mxu0 0
      %296 = vmatprep.subr.bf16.mxu0 0
      %297 = vmatpush2.bf16.msra.mxu0 0
      %298 = vmatprep.subr.bf16.mxu0 0
      %299 = vmatpush2.bf16.msra.mxu0 0
      %300 = vmatprep.subr.bf16.mxu0 0
      %301 = vmatpush2.bf16.msra.mxu0 0
      %302 = vmatprep.subr.bf16.mxu0 0
      %303 = vmatpush2.bf16.msra.mxu0 0
      %304 = vmatprep.subr.bf16.mxu0 0
      %305 = vmatpush2.bf16.msra.mxu0 0
      %306 = vmatprep.subr.bf16.mxu0 0
      %307 = vmatpush2.bf16.msra.mxu0 0
      %308 = vmatprep.mubr.bf16.mxu0 0
      %309 = vmatmul.mubr.bf16.gmra.mxu0 %v274
      %v310 = vpop.f32.mrf.mxu0
      %v311 = vadd.f32 0.0, %v310
      %v312 = vpop.f32.mrf.mxu0
      %v313 = vpop.f32.mrf.mxu0
      %v314 = vpop.f32.mrf.mxu0
      %315 = vdwg.mxu0
      %v324 = vunpack.c.l.b16 %v220
      %v325 = vunpack.c.l.b16 %v221
      %v326 = vunpack.c.l.b16 %v222
      %v327 = vunpack.c.l.b16 %v223
      %v328 = vunpack.c.l.b16 %v224
      %v329 = vunpack.c.l.b16 %v225
      %v330 = vunpack.c.l.b16 %v226
      %v331 = vunpack.c.l.b16 %v227
      %v332 = vpack.c.b16 %v325, %v324
      %v333 = vpack.c.b16 %v327, %v326
      %v334 = vpack.c.b16 %v329, %v328
      %v335 = vpack.c.b16 %v331, %v330
      %v341 = vsel %vm272, %v219, 0
      %343 = vmatprep.subr.bf16.mxu0 0
      %344 = vmatpush1.bf16.msra.mxu0 0
      %345 = vmatprep.subr.bf16.mxu0 0
      %346 = vmatpush1.bf16.msra.mxu0 0
      %347 = vmatprep.subr.bf16.mxu0 0
      %348 = vmatpush1.bf16.msra.mxu0 0
      %349 = vmatprep.subr.bf16.mxu0 0
      %350 = vmatpush1.bf16.msra.mxu0 0
      %351 = vmatprep.subr.bf16.mxu0 0
      %352 = vmatpush1.bf16.msra.mxu0 %v335
      %353 = vmatprep.subr.bf16.mxu0 0
      %354 = vmatpush1.bf16.msra.mxu0 %v334
      %355 = vmatprep.subr.bf16.mxu0 0
      %356 = vmatpush1.bf16.msra.mxu0 %v333
      %357 = vmatprep.subr.bf16.mxu0 0
      %358 = vmatpush1.bf16.msra.mxu0 %v332
      %359 = vmatprep.subr.bf16.mxu0 0
      %360 = vmatpush2.bf16.msra.mxu0 0
      %361 = vmatprep.subr.bf16.mxu0 0
      %362 = vmatpush2.bf16.msra.mxu0 0
      %363 = vmatprep.subr.bf16.mxu0 0
      %364 = vmatpush2.bf16.msra.mxu0 0
      %365 = vmatprep.subr.bf16.mxu0 0
      %366 = vmatpush2.bf16.msra.mxu0 0
      %367 = vmatprep.subr.bf16.mxu0 0
      %368 = vmatpush2.bf16.msra.mxu0 0
      %369 = vmatprep.subr.bf16.mxu0 0
      %370 = vmatpush2.bf16.msra.mxu0 0
      %371 = vmatprep.subr.bf16.mxu0 0
      %372 = vmatpush2.bf16.msra.mxu0 0
      %373 = vmatprep.subr.bf16.mxu0 0
      %374 = vmatpush2.bf16.msra.mxu0 0
      %375 = vmatprep.mubr.bf16.mxu0 0
      %376 = vmatmul.mubr.bf16.gmra.mxu0 %v341
      %v377 = vpop.f32.mrf.mxu0
      %v378 = vadd.f32 %v311, %v377
      %v379 = vpop.f32.mrf.mxu0
      %v380 = vpop.f32.mrf.mxu0
      %v381 = vpop.f32.mrf.mxu0
      %382 = vdwg.mxu0
      %s383 = sadd.s32 %s216, 1
      %s384 = smul.addr %s383, 4
      %s385 = scalar_lea.vmem %s196, %s384
      %v386 = vld [vmem:[%s385] sm:$0x3]
      %s387 = scalar_lea.vmem %s1, 64
      %v388 = vld [vmem:[%s387] sm:$0xf]
      %v389 = vld [vmem:[%s387 + $0x4] sm:$0xf]
      %v390 = vld [vmem:[%s387 + $0x8] sm:$0xf]
      %v391 = vld [vmem:[%s387 + $0xc] sm:$0xf]
      %v392 = vld [vmem:[%s387 + $0x10] sm:$0xf]
      %v393 = vld [vmem:[%s387 + $0x14] sm:$0xf]
      %v394 = vld [vmem:[%s387 + $0x18] sm:$0xf]
      %v395 = vld [vmem:[%s387 + $0x1c] sm:$0xf]
      %v404 = vunpack.c.l.b16 %v388
      %v405 = vunpack.c.l.b16 %v389
      %v406 = vunpack.c.l.b16 %v390
      %v407 = vunpack.c.l.b16 %v391
      %v408 = vunpack.c.l.b16 %v392
      %v409 = vunpack.c.l.b16 %v393
      %v410 = vunpack.c.l.b16 %v394
      %v411 = vunpack.c.l.b16 %v395
      %v412 = vpack.c.b16 %v405, %v404
      %v413 = vpack.c.b16 %v407, %v406
      %v414 = vpack.c.b16 %v409, %v408
      %v415 = vpack.c.b16 %v411, %v410
      %v421 = vsel %vm272, %v386, 0
      %423 = vmatprep.subr.bf16.mxu0 0
      %424 = vmatpush1.bf16.msra.mxu0 0
      %425 = vmatprep.subr.bf16.mxu0 0
      %426 = vmatpush1.bf16.msra.mxu0 0
      %427 = vmatprep.subr.bf16.mxu0 0
      %428 = vmatpush1.bf16.msra.mxu0 0
      %429 = vmatprep.subr.bf16.mxu0 0
      %430 = vmatpush1.bf16.msra.mxu0 0
      %431 = vmatprep.subr.bf16.mxu0 0
      %432 = vmatpush1.bf16.msra.mxu0 %v415
      %433 = vmatprep.subr.bf16.mxu0 0
      %434 = vmatpush1.bf16.msra.mxu0 %v414
      %435 = vmatprep.subr.bf16.mxu0 0
      %436 = vmatpush1.bf16.msra.mxu0 %v413
      %437 = vmatprep.subr.bf16.mxu0 0
      %438 = vmatpush1.bf16.msra.mxu0 %v412
      %439 = vmatprep.subr.bf16.mxu0 0
      %440 = vmatpush2.bf16.msra.mxu0 0
      %441 = vmatprep.subr.bf16.mxu0 0
      %442 = vmatpush2.bf16.msra.mxu0 0
      %443 = vmatprep.subr.bf16.mxu0 0
      %444 = vmatpush2.bf16.msra.mxu0 0
      %445 = vmatprep.subr.bf16.mxu0 0
      %446 = vmatpush2.bf16.msra.mxu0 0
      %447 = vmatprep.subr.bf16.mxu0 0
      %448 = vmatpush2.bf16.msra.mxu0 0
      %449 = vmatprep.subr.bf16.mxu0 0
      %450 = vmatpush2.bf16.msra.mxu0 0
      %451 = vmatprep.subr.bf16.mxu0 0
      %452 = vmatpush2.bf16.msra.mxu0 0
      %453 = vmatprep.subr.bf16.mxu0 0
      %454 = vmatpush2.bf16.msra.mxu0 0
      %455 = vmatprep.mubr.bf16.mxu0 0
      %456 = vmatmul.mubr.bf16.gmra.mxu0 %v421
      %v457 = vpop.f32.mrf.mxu0
      %v458 = vadd.f32 0.0, %v457
      %v459 = vpop.f32.mrf.mxu0
      %v460 = vpop.f32.mrf.mxu0
      %v461 = vpop.f32.mrf.mxu0
      %462 = vdwg.mxu0
      %v463 = vadd.f32 %v378, %v458
      %v464 = vld [vmem:[%s385] sm:$0x7]
      %s465 = scalar_lea.vmem %s1, 96
      %v466 = vld [vmem:[%s465] sm:$0xf]
      %v467 = vld [vmem:[%s465 + $0x4] sm:$0xf]
      %v468 = vld [vmem:[%s465 + $0x8] sm:$0xf]
      %v469 = vld [vmem:[%s465 + $0xc] sm:$0xf]
      %v470 = vld [vmem:[%s465 + $0x10] sm:$0xf]
      %v471 = vld [vmem:[%s465 + $0x14] sm:$0xf]
      %v472 = vld [vmem:[%s465 + $0x18] sm:$0xf]
      %v473 = vld [vmem:[%s465 + $0x1c] sm:$0xf]
      %v475 = vunpack.c.l.b16 %v464
      %v476 = vpack.c.b16 %v475, %v475
      %v478 = vshrl.u32 %v476, 16
      %v480 = vshll.u32 %v476, 16
      %v482 = vrot.slane %v480, 1
      %v483 = vor.u32 %v478, %v482
      %v492 = vunpack.c.l.b16 %v466
      %v493 = vunpack.c.l.b16 %v467
      %v494 = vunpack.c.l.b16 %v468
      %v495 = vunpack.c.l.b16 %v469
      %v496 = vunpack.c.l.b16 %v470
      %v497 = vunpack.c.l.b16 %v471
      %v498 = vunpack.c.l.b16 %v472
      %v499 = vunpack.c.l.b16 %v473
      %v500 = vpack.c.b16 %v493, %v492
      %v501 = vpack.c.b16 %v495, %v494
      %v502 = vpack.c.b16 %v497, %v496
      %v503 = vpack.c.b16 %v499, %v498
      %v509 = vsel %vm272, %v483, 0
      %511 = vmatprep.subr.bf16.mxu0 0
      %512 = vmatpush1.bf16.msra.mxu0 0
      %513 = vmatprep.subr.bf16.mxu0 0
      %514 = vmatpush1.bf16.msra.mxu0 0
      %515 = vmatprep.subr.bf16.mxu0 0
      %516 = vmatpush1.bf16.msra.mxu0 0
      %517 = vmatprep.subr.bf16.mxu0 0
      %518 = vmatpush1.bf16.msra.mxu0 0
      %519 = vmatprep.subr.bf16.mxu0 0
      %520 = vmatpush1.bf16.msra.mxu0 %v503
      %521 = vmatprep.subr.bf16.mxu0 0
      %522 = vmatpush1.bf16.msra.mxu0 %v502
      %523 = vmatprep.subr.bf16.mxu0 0
      %524 = vmatpush1.bf16.msra.mxu0 %v501
      %525 = vmatprep.subr.bf16.mxu0 0
      %526 = vmatpush1.bf16.msra.mxu0 %v500
      %527 = vmatprep.subr.bf16.mxu0 0
      %528 = vmatpush2.bf16.msra.mxu0 0
      %529 = vmatprep.subr.bf16.mxu0 0
      %530 = vmatpush2.bf16.msra.mxu0 0
      %531 = vmatprep.subr.bf16.mxu0 0
      %532 = vmatpush2.bf16.msra.mxu0 0
      %533 = vmatprep.subr.bf16.mxu0 0
      %534 = vmatpush2.bf16.msra.mxu0 0
      %535 = vmatprep.subr.bf16.mxu0 0
      %536 = vmatpush2.bf16.msra.mxu0 0
      %537 = vmatprep.subr.bf16.mxu0 0
      %538 = vmatpush2.bf16.msra.mxu0 0
      %539 = vmatprep.subr.bf16.mxu0 0
      %540 = vmatpush2.bf16.msra.mxu0 0
      %541 = vmatprep.subr.bf16.mxu0 0
      %542 = vmatpush2.bf16.msra.mxu0 0
      %543 = vmatprep.mubr.bf16.mxu0 0
      %544 = vmatmul.mubr.bf16.gmra.mxu0 %v509
      %v545 = vpop.f32.mrf.mxu0
      %v546 = vadd.f32 0.0, %v545
      %v547 = vpop.f32.mrf.mxu0
      %v548 = vpop.f32.mrf.mxu0
      %v549 = vpop.f32.mrf.mxu0
      %550 = vdwg.mxu0
      %v551 = vadd.f32 %v463, %v546
      %p552 = scmp.lt.s32.totalorder %s216, 4
      %s553 = scalar_select %p552, 1, 0
      %s554 = scvt.s32.f32 %s553
      %vm555 = vcmask 257024
      %v556 = vsel %vm555, %v551, 0.0
      %v557 = vrot.slane %v556, 4
      %v558 = vadd.f32 %v556, %v557
      %v559 = vrot.slane %v558, 2
      %v560 = vadd.f32 %v558, %v559
      %v561 = vrot.slane %v560, 1
      %v562 = vadd.f32 %v560, %v561
      %v563 = vstv %s554
      %v564 = vmul.f32 %v563, %v562
      %v565 = vadd.f32 %v564, 0.0
      %v566 = vmul.f32 %v551, %v551
      %v567 = vsel %vm555, %v566, 0.0
      %v568 = vrot.slane %v567, 4
      %v569 = vadd.f32 %v567, %v568
      %v570 = vrot.slane %v569, 2
      %v571 = vadd.f32 %v569, %v570
      %v572 = vrot.slane %v571, 1
      %v573 = vadd.f32 %v571, %v572
      %v574 = vmul.f32 %v563, %v573
      %v575 = vadd.f32 %v574, 0.0
      %v576 = vpack.c.bf16 %v551, %v551
      %vm577 = vcmask 254976
      %578 = vst.msk [vmem:[%s205] sm:$0x3] %vm577, %v576
      %v579 = vld [vmem:[%s385] sm:$0x3]
      %v580 = vld [vmem:[%s1] sm:$0xf]
      %v581 = vld [vmem:[%s1 + $0x4] sm:$0xf]
      %v582 = vld [vmem:[%s1 + $0x8] sm:$0xf]
      %v583 = vld [vmem:[%s1 + $0xc] sm:$0xf]
      %v584 = vld [vmem:[%s1 + $0x10] sm:$0xf]
      %v585 = vld [vmem:[%s1 + $0x14] sm:$0xf]
      %v586 = vld [vmem:[%s1 + $0x18] sm:$0xf]
      %v587 = vld [vmem:[%s1 + $0x1c] sm:$0xf]
      %v588 = vld [vmem:[%s385] sm:$0x7]
      %v589 = vld [vmem:[%s229] sm:$0xf]
      %v590 = vld [vmem:[%s229 + $0x4] sm:$0xf]
      %v591 = vld [vmem:[%s229 + $0x8] sm:$0xf]
      %v592 = vld [vmem:[%s229 + $0xc] sm:$0xf]
      %v593 = vld [vmem:[%s229 + $0x10] sm:$0xf]
      %v594 = vld [vmem:[%s229 + $0x14] sm:$0xf]
      %v595 = vld [vmem:[%s229 + $0x18] sm:$0xf]
      %v596 = vld [vmem:[%s229 + $0x1c] sm:$0xf]
      %v598 = vunpack.c.l.b16 %v588
      %v599 = vpack.c.b16 %v598, %v598
      %v601 = vshrl.u32 %v599, 16
      %v603 = vshll.u32 %v599, 16
      %v605 = vrot.slane %v603, 1
      %v606 = vor.u32 %v601, %v605
      %v615 = vunpack.c.l.b16 %v589
      %v616 = vunpack.c.l.b16 %v590
      %v617 = vunpack.c.l.b16 %v591
      %v618 = vunpack.c.l.b16 %v592
      %v619 = vunpack.c.l.b16 %v593
      %v620 = vunpack.c.l.b16 %v594
      %v621 = vunpack.c.l.b16 %v595
      %v622 = vunpack.c.l.b16 %v596
      %v623 = vpack.c.b16 %v616, %v615
      %v624 = vpack.c.b16 %v618, %v617
      %v625 = vpack.c.b16 %v620, %v619
      %v626 = vpack.c.b16 %v622, %v621
      %v632 = vsel %vm272, %v606, 0
      %634 = vmatprep.subr.bf16.mxu0 0
      %635 = vmatpush1.bf16.msra.mxu0 0
      %636 = vmatprep.subr.bf16.mxu0 0
      %637 = vmatpush1.bf16.msra.mxu0 0
      %638 = vmatprep.subr.bf16.mxu0 0
      %639 = vmatpush1.bf16.msra.mxu0 0
      %640 = vmatprep.subr.bf16.mxu0 0
      %641 = vmatpush1.bf16.msra.mxu0 0
      %642 = vmatprep.subr.bf16.mxu0 0
      %643 = vmatpush1.bf16.msra.mxu0 %v626
      %644 = vmatprep.subr.bf16.mxu0 0
      %645 = vmatpush1.bf16.msra.mxu0 %v625
      %646 = vmatprep.subr.bf16.mxu0 0
      %647 = vmatpush1.bf16.msra.mxu0 %v624
      %648 = vmatprep.subr.bf16.mxu0 0
      %649 = vmatpush1.bf16.msra.mxu0 %v623
      %650 = vmatprep.subr.bf16.mxu0 0
      %651 = vmatpush2.bf16.msra.mxu0 0
      %652 = vmatprep.subr.bf16.mxu0 0
      %653 = vmatpush2.bf16.msra.mxu0 0
      %654 = vmatprep.subr.bf16.mxu0 0
      %655 = vmatpush2.bf16.msra.mxu0 0
      %656 = vmatprep.subr.bf16.mxu0 0
      %657 = vmatpush2.bf16.msra.mxu0 0
      %658 = vmatprep.subr.bf16.mxu0 0
      %659 = vmatpush2.bf16.msra.mxu0 0
      %660 = vmatprep.subr.bf16.mxu0 0
      %661 = vmatpush2.bf16.msra.mxu0 0
      %662 = vmatprep.subr.bf16.mxu0 0
      %663 = vmatpush2.bf16.msra.mxu0 0
      %664 = vmatprep.subr.bf16.mxu0 0
      %665 = vmatpush2.bf16.msra.mxu0 0
      %666 = vmatprep.mubr.bf16.mxu0 0
      %667 = vmatmul.mubr.bf16.gmra.mxu0 %v632
      %v668 = vpop.f32.mrf.mxu0
      %v669 = vadd.f32 0.0, %v668
      %v670 = vpop.f32.mrf.mxu0
      %v671 = vpop.f32.mrf.mxu0
      %v672 = vpop.f32.mrf.mxu0
      %673 = vdwg.mxu0
      %v682 = vunpack.c.l.b16 %v580
      %v683 = vunpack.c.l.b16 %v581
      %v684 = vunpack.c.l.b16 %v582
      %v685 = vunpack.c.l.b16 %v583
      %v686 = vunpack.c.l.b16 %v584
      %v687 = vunpack.c.l.b16 %v585
      %v688 = vunpack.c.l.b16 %v586
      %v689 = vunpack.c.l.b16 %v587
      %v690 = vpack.c.b16 %v683, %v682
      %v691 = vpack.c.b16 %v685, %v684
      %v692 = vpack.c.b16 %v687, %v686
      %v693 = vpack.c.b16 %v689, %v688
      %v699 = vsel %vm272, %v579, 0
      %701 = vmatprep.subr.bf16.mxu0 0
      %702 = vmatpush1.bf16.msra.mxu0 0
      %703 = vmatprep.subr.bf16.mxu0 0
      %704 = vmatpush1.bf16.msra.mxu0 0
      %705 = vmatprep.subr.bf16.mxu0 0
      %706 = vmatpush1.bf16.msra.mxu0 0
      %707 = vmatprep.subr.bf16.mxu0 0
      %708 = vmatpush1.bf16.msra.mxu0 0
      %709 = vmatprep.subr.bf16.mxu0 0
      %710 = vmatpush1.bf16.msra.mxu0 %v693
      %711 = vmatprep.subr.bf16.mxu0 0
      %712 = vmatpush1.bf16.msra.mxu0 %v692
      %713 = vmatprep.subr.bf16.mxu0 0
      %714 = vmatpush1.bf16.msra.mxu0 %v691
      %715 = vmatprep.subr.bf16.mxu0 0
      %716 = vmatpush1.bf16.msra.mxu0 %v690
      %717 = vmatprep.subr.bf16.mxu0 0
      %718 = vmatpush2.bf16.msra.mxu0 0
      %719 = vmatprep.subr.bf16.mxu0 0
      %720 = vmatpush2.bf16.msra.mxu0 0
      %721 = vmatprep.subr.bf16.mxu0 0
      %722 = vmatpush2.bf16.msra.mxu0 0
      %723 = vmatprep.subr.bf16.mxu0 0
      %724 = vmatpush2.bf16.msra.mxu0 0
      %725 = vmatprep.subr.bf16.mxu0 0
      %726 = vmatpush2.bf16.msra.mxu0 0
      %727 = vmatprep.subr.bf16.mxu0 0
      %728 = vmatpush2.bf16.msra.mxu0 0
      %729 = vmatprep.subr.bf16.mxu0 0
      %730 = vmatpush2.bf16.msra.mxu0 0
      %731 = vmatprep.subr.bf16.mxu0 0
      %732 = vmatpush2.bf16.msra.mxu0 0
      %733 = vmatprep.mubr.bf16.mxu0 0
      %734 = vmatmul.mubr.bf16.gmra.mxu0 %v699
      %v735 = vpop.f32.mrf.mxu0
      %v736 = vadd.f32 %v669, %v735
      %v737 = vpop.f32.mrf.mxu0
      %v738 = vpop.f32.mrf.mxu0
      %v739 = vpop.f32.mrf.mxu0
      %740 = vdwg.mxu0
      %s741 = sadd.s32 %s216, 2
      %s742 = smul.addr %s741, 4
      %s743 = scalar_lea.vmem %s196, %s742
      %v744 = vld [vmem:[%s743] sm:$0x3]
      %v745 = vld [vmem:[%s387] sm:$0xf]
      %v746 = vld [vmem:[%s387 + $0x4] sm:$0xf]
      %v747 = vld [vmem:[%s387 + $0x8] sm:$0xf]
      %v748 = vld [vmem:[%s387 + $0xc] sm:$0xf]
      %v749 = vld [vmem:[%s387 + $0x10] sm:$0xf]
      %v750 = vld [vmem:[%s387 + $0x14] sm:$0xf]
      %v751 = vld [vmem:[%s387 + $0x18] sm:$0xf]
      %v752 = vld [vmem:[%s387 + $0x1c] sm:$0xf]
      %v761 = vunpack.c.l.b16 %v745
      %v762 = vunpack.c.l.b16 %v746
      %v763 = vunpack.c.l.b16 %v747
      %v764 = vunpack.c.l.b16 %v748
      %v765 = vunpack.c.l.b16 %v749
      %v766 = vunpack.c.l.b16 %v750
      %v767 = vunpack.c.l.b16 %v751
      %v768 = vunpack.c.l.b16 %v752
      %v769 = vpack.c.b16 %v762, %v761
      %v770 = vpack.c.b16 %v764, %v763
      %v771 = vpack.c.b16 %v766, %v765
      %v772 = vpack.c.b16 %v768, %v767
      %v778 = vsel %vm272, %v744, 0
      %780 = vmatprep.subr.bf16.mxu0 0
      %781 = vmatpush1.bf16.msra.mxu0 0
      %782 = vmatprep.subr.bf16.mxu0 0
      %783 = vmatpush1.bf16.msra.mxu0 0
      %784 = vmatprep.subr.bf16.mxu0 0
      %785 = vmatpush1.bf16.msra.mxu0 0
      %786 = vmatprep.subr.bf16.mxu0 0
      %787 = vmatpush1.bf16.msra.mxu0 0
      %788 = vmatprep.subr.bf16.mxu0 0
      %789 = vmatpush1.bf16.msra.mxu0 %v772
      %790 = vmatprep.subr.bf16.mxu0 0
      %791 = vmatpush1.bf16.msra.mxu0 %v771
      %792 = vmatprep.subr.bf16.mxu0 0
      %793 = vmatpush1.bf16.msra.mxu0 %v770
      %794 = vmatprep.subr.bf16.mxu0 0
      %795 = vmatpush1.bf16.msra.mxu0 %v769
      %796 = vmatprep.subr.bf16.mxu0 0
      %797 = vmatpush2.bf16.msra.mxu0 0
      %798 = vmatprep.subr.bf16.mxu0 0
      %799 = vmatpush2.bf16.msra.mxu0 0
      %800 = vmatprep.subr.bf16.mxu0 0
      %801 = vmatpush2.bf16.msra.mxu0 0
      %802 = vmatprep.subr.bf16.mxu0 0
      %803 = vmatpush2.bf16.msra.mxu0 0
      %804 = vmatprep.subr.bf16.mxu0 0
      %805 = vmatpush2.bf16.msra.mxu0 0
      %806 = vmatprep.subr.bf16.mxu0 0
      %807 = vmatpush2.bf16.msra.mxu0 0
      %808 = vmatprep.subr.bf16.mxu0 0
      %809 = vmatpush2.bf16.msra.mxu0 0
      %810 = vmatprep.subr.bf16.mxu0 0
      %811 = vmatpush2.bf16.msra.mxu0 0
      %812 = vmatprep.mubr.bf16.mxu0 0
      %813 = vmatmul.mubr.bf16.gmra.mxu0 %v778
      %v814 = vpop.f32.mrf.mxu0
      %v815 = vadd.f32 0.0, %v814
      %v816 = vpop.f32.mrf.mxu0
      %v817 = vpop.f32.mrf.mxu0
      %v818 = vpop.f32.mrf.mxu0
      %819 = vdwg.mxu0
      %v820 = vadd.f32 %v736, %v815
      %v821 = vld [vmem:[%s743] sm:$0x7]
      %v822 = vld [vmem:[%s465] sm:$0xf]
      %v823 = vld [vmem:[%s465 + $0x4] sm:$0xf]
      %v824 = vld [vmem:[%s465 + $0x8] sm:$0xf]
      %v825 = vld [vmem:[%s465 + $0xc] sm:$0xf]
      %v826 = vld [vmem:[%s465 + $0x10] sm:$0xf]
      %v827 = vld [vmem:[%s465 + $0x14] sm:$0xf]
      %v828 = vld [vmem:[%s465 + $0x18] sm:$0xf]
      %v829 = vld [vmem:[%s465 + $0x1c] sm:$0xf]
      %v831 = vunpack.c.l.b16 %v821
      %v832 = vpack.c.b16 %v831, %v831
      %v834 = vshrl.u32 %v832, 16
      %v836 = vshll.u32 %v832, 16
      %v838 = vrot.slane %v836, 1
      %v839 = vor.u32 %v834, %v838
      %v848 = vunpack.c.l.b16 %v822
      %v849 = vunpack.c.l.b16 %v823
      %v850 = vunpack.c.l.b16 %v824
      %v851 = vunpack.c.l.b16 %v825
      %v852 = vunpack.c.l.b16 %v826
      %v853 = vunpack.c.l.b16 %v827
      %v854 = vunpack.c.l.b16 %v828
      %v855 = vunpack.c.l.b16 %v829
      %v856 = vpack.c.b16 %v849, %v848
      %v857 = vpack.c.b16 %v851, %v850
      %v858 = vpack.c.b16 %v853, %v852
      %v859 = vpack.c.b16 %v855, %v854
      %v865 = vsel %vm272, %v839, 0
      %867 = vmatprep.subr.bf16.mxu0 0
      %868 = vmatpush1.bf16.msra.mxu0 0
      %869 = vmatprep.subr.bf16.mxu0 0
      %870 = vmatpush1.bf16.msra.mxu0 0
      %871 = vmatprep.subr.bf16.mxu0 0
      %872 = vmatpush1.bf16.msra.mxu0 0
      %873 = vmatprep.subr.bf16.mxu0 0
      %874 = vmatpush1.bf16.msra.mxu0 0
      %875 = vmatprep.subr.bf16.mxu0 0
      %876 = vmatpush1.bf16.msra.mxu0 %v859
      %877 = vmatprep.subr.bf16.mxu0 0
      %878 = vmatpush1.bf16.msra.mxu0 %v858
      %879 = vmatprep.subr.bf16.mxu0 0
      %880 = vmatpush1.bf16.msra.mxu0 %v857
      %881 = vmatprep.subr.bf16.mxu0 0
      %882 = vmatpush1.bf16.msra.mxu0 %v856
      %883 = vmatprep.subr.bf16.mxu0 0
      %884 = vmatpush2.bf16.msra.mxu0 0
      %885 = vmatprep.subr.bf16.mxu0 0
      %886 = vmatpush2.bf16.msra.mxu0 0
      %887 = vmatprep.subr.bf16.mxu0 0
      %888 = vmatpush2.bf16.msra.mxu0 0
      %889 = vmatprep.subr.bf16.mxu0 0
      %890 = vmatpush2.bf16.msra.mxu0 0
      %891 = vmatprep.subr.bf16.mxu0 0
      %892 = vmatpush2.bf16.msra.mxu0 0
      %893 = vmatprep.subr.bf16.mxu0 0
      %894 = vmatpush2.bf16.msra.mxu0 0
      %895 = vmatprep.subr.bf16.mxu0 0
      %896 = vmatpush2.bf16.msra.mxu0 0
      %897 = vmatprep.subr.bf16.mxu0 0
      %898 = vmatpush2.bf16.msra.mxu0 0
      %899 = vmatprep.mubr.bf16.mxu0 0
      %900 = vmatmul.mubr.bf16.gmra.mxu0 %v865
      %v901 = vpop.f32.mrf.mxu0
      %v902 = vadd.f32 0.0, %v901
      %v903 = vpop.f32.mrf.mxu0
      %v904 = vpop.f32.mrf.mxu0
      %v905 = vpop.f32.mrf.mxu0
      %906 = vdwg.mxu0
      %v907 = vadd.f32 %v820, %v902
      %p908 = scmp.lt.s32.totalorder %s383, 4
      %s909 = scalar_select %p908, 1, 0
      %s910 = scvt.s32.f32 %s909
      %v911 = vsel %vm555, %v907, 0.0
      %v912 = vrot.slane %v911, 4
      %v913 = vadd.f32 %v911, %v912
      %v914 = vrot.slane %v913, 2
      %v915 = vadd.f32 %v913, %v914
      %v916 = vrot.slane %v915, 1
      %v917 = vadd.f32 %v915, %v916
      %v918 = vstv %s910
      %v919 = vmul.f32 %v918, %v917
      %v920 = vadd.f32 %v565, %v919
      %v921 = vmul.f32 %v907, %v907
      %v922 = vsel %vm555, %v921, 0.0
      %v923 = vrot.slane %v922, 4
      %v924 = vadd.f32 %v922, %v923
      %v925 = vrot.slane %v924, 2
      %v926 = vadd.f32 %v924, %v925
      %v927 = vrot.slane %v926, 1
      %v928 = vadd.f32 %v926, %v927
      %v929 = vmul.f32 %v918, %v928
      %v930 = vadd.f32 %v575, %v929
      %v931 = vpack.c.bf16 %v907, %v907
      %s932 = scalar_lea.vmem %s205, 2
      %933 = vst.msk [vmem:[%s932] sm:$0x3] %vm577, %v931
      %v934 = vld [vmem:[%s743] sm:$0x3]
      %v935 = vld [vmem:[%s1] sm:$0xf]
      %v936 = vld [vmem:[%s1 + $0x4] sm:$0xf]
      %v937 = vld [vmem:[%s1 + $0x8] sm:$0xf]
      %v938 = vld [vmem:[%s1 + $0xc] sm:$0xf]
      %v939 = vld [vmem:[%s1 + $0x10] sm:$0xf]
      %v940 = vld [vmem:[%s1 + $0x14] sm:$0xf]
      %v941 = vld [vmem:[%s1 + $0x18] sm:$0xf]
      %v942 = vld [vmem:[%s1 + $0x1c] sm:$0xf]
      %v943 = vld [vmem:[%s743] sm:$0x7]
      %v944 = vld [vmem:[%s229] sm:$0xf]
      %v945 = vld [vmem:[%s229 + $0x4] sm:$0xf]
      %v946 = vld [vmem:[%s229 + $0x8] sm:$0xf]
      %v947 = vld [vmem:[%s229 + $0xc] sm:$0xf]
      %v948 = vld [vmem:[%s229 + $0x10] sm:$0xf]
      %v949 = vld [vmem:[%s229 + $0x14] sm:$0xf]
      %v950 = vld [vmem:[%s229 + $0x18] sm:$0xf]
      %v951 = vld [vmem:[%s229 + $0x1c] sm:$0xf]
      %v953 = vunpack.c.l.b16 %v943
      %v954 = vpack.c.b16 %v953, %v953
      %v956 = vshrl.u32 %v954, 16
      %v958 = vshll.u32 %v954, 16
      %v960 = vrot.slane %v958, 1
      %v961 = vor.u32 %v956, %v960
      %v970 = vunpack.c.l.b16 %v944
      %v971 = vunpack.c.l.b16 %v945
      %v972 = vunpack.c.l.b16 %v946
      %v973 = vunpack.c.l.b16 %v947
      %v974 = vunpack.c.l.b16 %v948
      %v975 = vunpack.c.l.b16 %v949
      %v976 = vunpack.c.l.b16 %v950
      %v977 = vunpack.c.l.b16 %v951
      %v978 = vpack.c.b16 %v971, %v970
      %v979 = vpack.c.b16 %v973, %v972
      %v980 = vpack.c.b16 %v975, %v974
      %v981 = vpack.c.b16 %v977, %v976
      %v987 = vsel %vm272, %v961, 0
      %989 = vmatprep.subr.bf16.mxu0 0
      %990 = vmatpush1.bf16.msra.mxu0 0
      %991 = vmatprep.subr.bf16.mxu0 0
      %992 = vmatpush1.bf16.msra.mxu0 0
      %993 = vmatprep.subr.bf16.mxu0 0
      %994 = vmatpush1.bf16.msra.mxu0 0
      %995 = vmatprep.subr.bf16.mxu0 0
      %996 = vmatpush1.bf16.msra.mxu0 0
      %997 = vmatprep.subr.bf16.mxu0 0
      %998 = vmatpush1.bf16.msra.mxu0 %v981
      %999 = vmatprep.subr.bf16.mxu0 0
      %1000 = vmatpush1.bf16.msra.mxu0 %v980
      %1001 = vmatprep.subr.bf16.mxu0 0
      %1002 = vmatpush1.bf16.msra.mxu0 %v979
      %1003 = vmatprep.subr.bf16.mxu0 0
      %1004 = vmatpush1.bf16.msra.mxu0 %v978
      %1005 = vmatprep.subr.bf16.mxu0 0
      %1006 = vmatpush2.bf16.msra.mxu0 0
      %1007 = vmatprep.subr.bf16.mxu0 0
      %1008 = vmatpush2.bf16.msra.mxu0 0
      %1009 = vmatprep.subr.bf16.mxu0 0
      %1010 = vmatpush2.bf16.msra.mxu0 0
      %1011 = vmatprep.subr.bf16.mxu0 0
      %1012 = vmatpush2.bf16.msra.mxu0 0
      %1013 = vmatprep.subr.bf16.mxu0 0
      %1014 = vmatpush2.bf16.msra.mxu0 0
      %1015 = vmatprep.subr.bf16.mxu0 0
      %1016 = vmatpush2.bf16.msra.mxu0 0
      %1017 = vmatprep.subr.bf16.mxu0 0
      %1018 = vmatpush2.bf16.msra.mxu0 0
      %1019 = vmatprep.subr.bf16.mxu0 0
      %1020 = vmatpush2.bf16.msra.mxu0 0
      %1021 = vmatprep.mubr.bf16.mxu0 0
      %1022 = vmatmul.mubr.bf16.gmra.mxu0 %v987
      %v1023 = vpop.f32.mrf.mxu0
      %v1024 = vadd.f32 0.0, %v1023
      %v1025 = vpop.f32.mrf.mxu0
      %v1026 = vpop.f32.mrf.mxu0
      %v1027 = vpop.f32.mrf.mxu0
      %1028 = vdwg.mxu0
      %v1037 = vunpack.c.l.b16 %v935
      %v1038 = vunpack.c.l.b16 %v936
      %v1039 = vunpack.c.l.b16 %v937
      %v1040 = vunpack.c.l.b16 %v938
      %v1041 = vunpack.c.l.b16 %v939
      %v1042 = vunpack.c.l.b16 %v940
      %v1043 = vunpack.c.l.b16 %v941
      %v1044 = vunpack.c.l.b16 %v942
      %v1045 = vpack.c.b16 %v1038, %v1037
      %v1046 = vpack.c.b16 %v1040, %v1039
      %v1047 = vpack.c.b16 %v1042, %v1041
      %v1048 = vpack.c.b16 %v1044, %v1043
      %v1054 = vsel %vm272, %v934, 0
      %1056 = vmatprep.subr.bf16.mxu0 0
      %1057 = vmatpush1.bf16.msra.mxu0 0
      %1058 = vmatprep.subr.bf16.mxu0 0
      %1059 = vmatpush1.bf16.msra.mxu0 0
      %1060 = vmatprep.subr.bf16.mxu0 0
      %1061 = vmatpush1.bf16.msra.mxu0 0
      %1062 = vmatprep.subr.bf16.mxu0 0
      %1063 = vmatpush1.bf16.msra.mxu0 0
      %1064 = vmatprep.subr.bf16.mxu0 0
      %1065 = vmatpush1.bf16.msra.mxu0 %v1048
      %1066 = vmatprep.subr.bf16.mxu0 0
      %1067 = vmatpush1.bf16.msra.mxu0 %v1047
      %1068 = vmatprep.subr.bf16.mxu0 0
      %1069 = vmatpush1.bf16.msra.mxu0 %v1046
      %1070 = vmatprep.subr.bf16.mxu0 0
      %1071 = vmatpush1.bf16.msra.mxu0 %v1045
      %1072 = vmatprep.subr.bf16.mxu0 0
      %1073 = vmatpush2.bf16.msra.mxu0 0
      %1074 = vmatprep.subr.bf16.mxu0 0
      %1075 = vmatpush2.bf16.msra.mxu0 0
      %1076 = vmatprep.subr.bf16.mxu0 0
      %1077 = vmatpush2.bf16.msra.mxu0 0
      %1078 = vmatprep.subr.bf16.mxu0 0
      %1079 = vmatpush2.bf16.msra.mxu0 0
      %1080 = vmatprep.subr.bf16.mxu0 0
      %1081 = vmatpush2.bf16.msra.mxu0 0
      %1082 = vmatprep.subr.bf16.mxu0 0
      %1083 = vmatpush2.bf16.msra.mxu0 0
      %1084 = vmatprep.subr.bf16.mxu0 0
      %1085 = vmatpush2.bf16.msra.mxu0 0
      %1086 = vmatprep.subr.bf16.mxu0 0
      %1087 = vmatpush2.bf16.msra.mxu0 0
      %1088 = vmatprep.mubr.bf16.mxu0 0
      %1089 = vmatmul.mubr.bf16.gmra.mxu0 %v1054
      %v1090 = vpop.f32.mrf.mxu0
      %v1091 = vadd.f32 %v1024, %v1090
      %v1092 = vpop.f32.mrf.mxu0
      %v1093 = vpop.f32.mrf.mxu0
      %v1094 = vpop.f32.mrf.mxu0
      %1095 = vdwg.mxu0
      %s1096 = sadd.s32 %s216, 3
      %s1097 = smul.addr %s1096, 4
      %s1098 = scalar_lea.vmem %s196, %s1097
      %v1099 = vld [vmem:[%s1098] sm:$0x3]
      %v1100 = vld [vmem:[%s387] sm:$0xf]
      %v1101 = vld [vmem:[%s387 + $0x4] sm:$0xf]
      %v1102 = vld [vmem:[%s387 + $0x8] sm:$0xf]
      %v1103 = vld [vmem:[%s387 + $0xc] sm:$0xf]
      %v1104 = vld [vmem:[%s387 + $0x10] sm:$0xf]
      %v1105 = vld [vmem:[%s387 + $0x14] sm:$0xf]
      %v1106 = vld [vmem:[%s387 + $0x18] sm:$0xf]
      %v1107 = vld [vmem:[%s387 + $0x1c] sm:$0xf]
      %v1116 = vunpack.c.l.b16 %v1100
      %v1117 = vunpack.c.l.b16 %v1101
      %v1118 = vunpack.c.l.b16 %v1102
      %v1119 = vunpack.c.l.b16 %v1103
      %v1120 = vunpack.c.l.b16 %v1104
      %v1121 = vunpack.c.l.b16 %v1105
      %v1122 = vunpack.c.l.b16 %v1106
      %v1123 = vunpack.c.l.b16 %v1107
      %v1124 = vpack.c.b16 %v1117, %v1116
      %v1125 = vpack.c.b16 %v1119, %v1118
      %v1126 = vpack.c.b16 %v1121, %v1120
      %v1127 = vpack.c.b16 %v1123, %v1122
      %v1133 = vsel %vm272, %v1099, 0
      %1135 = vmatprep.subr.bf16.mxu0 0
      %1136 = vmatpush1.bf16.msra.mxu0 0
      %1137 = vmatprep.subr.bf16.mxu0 0
      %1138 = vmatpush1.bf16.msra.mxu0 0
      %1139 = vmatprep.subr.bf16.mxu0 0
      %1140 = vmatpush1.bf16.msra.mxu0 0
      %1141 = vmatprep.subr.bf16.mxu0 0
      %1142 = vmatpush1.bf16.msra.mxu0 0
      %1143 = vmatprep.subr.bf16.mxu0 0
      %1144 = vmatpush1.bf16.msra.mxu0 %v1127
      %1145 = vmatprep.subr.bf16.mxu0 0
      %1146 = vmatpush1.bf16.msra.mxu0 %v1126
      %1147 = vmatprep.subr.bf16.mxu0 0
      %1148 = vmatpush1.bf16.msra.mxu0 %v1125
      %1149 = vmatprep.subr.bf16.mxu0 0
      %1150 = vmatpush1.bf16.msra.mxu0 %v1124
      %1151 = vmatprep.subr.bf16.mxu0 0
      %1152 = vmatpush2.bf16.msra.mxu0 0
      %1153 = vmatprep.subr.bf16.mxu0 0
      %1154 = vmatpush2.bf16.msra.mxu0 0
      %1155 = vmatprep.subr.bf16.mxu0 0
      %1156 = vmatpush2.bf16.msra.mxu0 0
      %1157 = vmatprep.subr.bf16.mxu0 0
      %1158 = vmatpush2.bf16.msra.mxu0 0
      %1159 = vmatprep.subr.bf16.mxu0 0
      %1160 = vmatpush2.bf16.msra.mxu0 0
      %1161 = vmatprep.subr.bf16.mxu0 0
      %1162 = vmatpush2.bf16.msra.mxu0 0
      %1163 = vmatprep.subr.bf16.mxu0 0
      %1164 = vmatpush2.bf16.msra.mxu0 0
      %1165 = vmatprep.subr.bf16.mxu0 0
      %1166 = vmatpush2.bf16.msra.mxu0 0
      %1167 = vmatprep.mubr.bf16.mxu0 0
      %1168 = vmatmul.mubr.bf16.gmra.mxu0 %v1133
      %v1169 = vpop.f32.mrf.mxu0
      %v1170 = vadd.f32 0.0, %v1169
      %v1171 = vpop.f32.mrf.mxu0
      %v1172 = vpop.f32.mrf.mxu0
      %v1173 = vpop.f32.mrf.mxu0
      %1174 = vdwg.mxu0
      %v1175 = vadd.f32 %v1091, %v1170
      %v1176 = vld [vmem:[%s1098] sm:$0x7]
      %v1177 = vld [vmem:[%s465] sm:$0xf]
      %v1178 = vld [vmem:[%s465 + $0x4] sm:$0xf]
      %v1179 = vld [vmem:[%s465 + $0x8] sm:$0xf]
      %v1180 = vld [vmem:[%s465 + $0xc] sm:$0xf]
      %v1181 = vld [vmem:[%s465 + $0x10] sm:$0xf]
      %v1182 = vld [vmem:[%s465 + $0x14] sm:$0xf]
      %v1183 = vld [vmem:[%s465 + $0x18] sm:$0xf]
      %v1184 = vld [vmem:[%s465 + $0x1c] sm:$0xf]
      %v1186 = vunpack.c.l.b16 %v1176
      %v1187 = vpack.c.b16 %v1186, %v1186
      %v1189 = vshrl.u32 %v1187, 16
      %v1191 = vshll.u32 %v1187, 16
      %v1193 = vrot.slane %v1191, 1
      %v1194 = vor.u32 %v1189, %v1193
      %v1203 = vunpack.c.l.b16 %v1177
      %v1204 = vunpack.c.l.b16 %v1178
      %v1205 = vunpack.c.l.b16 %v1179
      %v1206 = vunpack.c.l.b16 %v1180
      %v1207 = vunpack.c.l.b16 %v1181
      %v1208 = vunpack.c.l.b16 %v1182
      %v1209 = vunpack.c.l.b16 %v1183
      %v1210 = vunpack.c.l.b16 %v1184
      %v1211 = vpack.c.b16 %v1204, %v1203
      %v1212 = vpack.c.b16 %v1206, %v1205
      %v1213 = vpack.c.b16 %v1208, %v1207
      %v1214 = vpack.c.b16 %v1210, %v1209
      %v1220 = vsel %vm272, %v1194, 0
      %1222 = vmatprep.subr.bf16.mxu0 0
      %1223 = vmatpush1.bf16.msra.mxu0 0
      %1224 = vmatprep.subr.bf16.mxu0 0
      %1225 = vmatpush1.bf16.msra.mxu0 0
      %1226 = vmatprep.subr.bf16.mxu0 0
      %1227 = vmatpush1.bf16.msra.mxu0 0
      %1228 = vmatprep.subr.bf16.mxu0 0
      %1229 = vmatpush1.bf16.msra.mxu0 0
      %1230 = vmatprep.subr.bf16.mxu0 0
      %1231 = vmatpush1.bf16.msra.mxu0 %v1214
      %1232 = vmatprep.subr.bf16.mxu0 0
      %1233 = vmatpush1.bf16.msra.mxu0 %v1213
      %1234 = vmatprep.subr.bf16.mxu0 0
      %1235 = vmatpush1.bf16.msra.mxu0 %v1212
      %1236 = vmatprep.subr.bf16.mxu0 0
      %1237 = vmatpush1.bf16.msra.mxu0 %v1211
      %1238 = vmatprep.subr.bf16.mxu0 0
      %1239 = vmatpush2.bf16.msra.mxu0 0
      %1240 = vmatprep.subr.bf16.mxu0 0
      %1241 = vmatpush2.bf16.msra.mxu0 0
      %1242 = vmatprep.subr.bf16.mxu0 0
      %1243 = vmatpush2.bf16.msra.mxu0 0
      %1244 = vmatprep.subr.bf16.mxu0 0
      %1245 = vmatpush2.bf16.msra.mxu0 0
      %1246 = vmatprep.subr.bf16.mxu0 0
      %1247 = vmatpush2.bf16.msra.mxu0 0
      %1248 = vmatprep.subr.bf16.mxu0 0
      %1249 = vmatpush2.bf16.msra.mxu0 0
      %1250 = vmatprep.subr.bf16.mxu0 0
      %1251 = vmatpush2.bf16.msra.mxu0 0
      %1252 = vmatprep.subr.bf16.mxu0 0
      %1253 = vmatpush2.bf16.msra.mxu0 0
      %1254 = vmatprep.mubr.bf16.mxu0 0
      %1255 = vmatmul.mubr.bf16.gmra.mxu0 %v1220
      %v1256 = vpop.f32.mrf.mxu0
      %v1257 = vadd.f32 0.0, %v1256
      %v1258 = vpop.f32.mrf.mxu0
      %v1259 = vpop.f32.mrf.mxu0
      %v1260 = vpop.f32.mrf.mxu0
      %1261 = vdwg.mxu0
      %v1262 = vadd.f32 %v1175, %v1257
      %p1263 = scmp.lt.s32.totalorder %s741, 4
      %s1264 = scalar_select %p1263, 1, 0
      %s1265 = scvt.s32.f32 %s1264
      %v1266 = vsel %vm555, %v1262, 0.0
      %v1267 = vrot.slane %v1266, 4
      %v1268 = vadd.f32 %v1266, %v1267
      %v1269 = vrot.slane %v1268, 2
      %v1270 = vadd.f32 %v1268, %v1269
      %v1271 = vrot.slane %v1270, 1
      %v1272 = vadd.f32 %v1270, %v1271
      %v1273 = vstv %s1265
      %v1274 = vmul.f32 %v1273, %v1272
      %v1275 = vadd.f32 %v920, %v1274
      %v1276 = vmul.f32 %v1262, %v1262
      %v1277 = vsel %vm555, %v1276, 0.0
      %v1278 = vrot.slane %v1277, 4
      %v1279 = vadd.f32 %v1277, %v1278
      %v1280 = vrot.slane %v1279, 2
      %v1281 = vadd.f32 %v1279, %v1280
      %v1282 = vrot.slane %v1281, 1
      %v1283 = vadd.f32 %v1281, %v1282
      %v1284 = vmul.f32 %v1273, %v1283
      %v1285 = vadd.f32 %v930, %v1284
      %v1286 = vpack.c.bf16 %v1262, %v1262
      %s1287 = scalar_lea.vmem %s205, 4
      %1288 = vst.msk [vmem:[%s1287] sm:$0x3] %vm577, %v1286
      %vm1289 = vcmask 253952
      %1290 = vst.msk [vmem:[%s214] sm:$0x1] %vm1289, %v1275
      %1291 = vst.msk [vmem:[%s214 + $0x1] sm:$0x1] %vm1289, %v1285
      %s1292 = smul.u32 3, %s20
      %p1293 = scmp.lt.s32.totalorder %s19, 1
      %s1294 = scalar_select %p1293, %s19, 1
      %p1295 = scmp.lt.s32.totalorder %s1292, 5
      %s1296 = scalar_select %p1295, %s1292, 5
      %s1297 = smul.addr %s1294, 6
      %s1298 = sadd.s32 %s1296, %s1297
      %s1299 = smul.addr %s1298, 2
      %s1300 = scalar_lea.vmem %s2, %s1299
      %p1301 = scmp.lt.s32.totalorder %s19, 1
      %s1302 = scalar_select %p1301, %s19, 1
      %p1303 = scmp.lt.s32.totalorder %s20, 1
      %s1304 = scalar_select %p1303, %s20, 1
      %s1305 = smul.addr %s1302, 2
      %s1306 = sadd.s32 %s1304, %s1305
      %s1307 = smul.addr %s1306, 2
      %s1308 = scalar_lea.vmem %s3, %s1307
      // Predicated region
      $region29: #{_lambda_.9} parent=27 // pred_check
        %p1309 = pneg %p94
      $region30: #{_lambda_.9} parent=27 // pred_check_branch
        %1311 = sbr.rel (%p1309) target = $region32
      $region31: #{_lambda_.9} parent=27 // pred_region
        %s1312 = smul.u32 3, %s20
      $region32: #{_lambda_.9} parent=27 // pred_fallthru
        _
      // Predicated region
      $region33: #{_lambda_.9} parent=27 // pred_check
        %p1313 = pneg %p122
      $region34: #{_lambda_.9} parent=27 // pred_check_branch
        %1315 = sbr.rel (%p1313) target = $region36
      $region35: #{_lambda_.9} parent=27 // pred_region
        _
      $region36: #{_lambda_.9} parent=27 // pred_fallthru
        _
    $region28: #{_lambda_.9} parent=5 // pred_fallthru
      _
    %p1316 = scmp.le.s32.totalorder 2, %s10
    // Predicated region
    $region37: #{_lambda_.9} parent=5 // pred_check
      %p1317 = pneg %p1316
    $region38: #{_lambda_.9} parent=5 // pred_check_branch
      %1319 = sbr.rel (%p1317) target = $region40
    $region39: #{_lambda_.9} parent=5 // pred_region
      %s1320 = ssub.s32 %s10, 2
      // Predicated region
      $region41: #{_lambda_.9} parent=39 // pred_check
        %p1321 = pneg %p100
      $region42: #{_lambda_.9} parent=39 // pred_check_branch
        %1323 = sbr.rel (%p1321) target = $region44
      $region43: #{_lambda_.9} parent=39 // pred_region
        %s1324 = smul.u32 3, %s22
        %p1325 = scmp.lt.s32.totalorder %s21, 1
        %s1326 = scalar_select %p1325, %s21, 1
        %p1327 = scmp.lt.s32.totalorder %s1324, 5
        %s1328 = scalar_select %p1327, %s1324, 5
        %s1329 = smul.addr %s1326, 6
        %s1330 = sadd.s32 %s1328, %s1329
        %s1331 = smul.addr %s1330, 2
        %s1332 = scalar_lea.vmem %s2, %s1331
      $region44: #{_lambda_.9} parent=39 // pred_fallthru
        _
      // Predicated region
      $region45: #{_lambda_.9} parent=39 // pred_check
        %p1333 = pneg %p128
      $region46: #{_lambda_.9} parent=39 // pred_check_branch
        %1335 = sbr.rel (%p1333) target = $region48
      $region47: #{_lambda_.9} parent=39 // pred_region
        %p1336 = scmp.lt.s32.totalorder %s21, 1
        %s1337 = scalar_select %p1336, %s21, 1
        %p1338 = scmp.lt.s32.totalorder %s22, 1
        %s1339 = scalar_select %p1338, %s22, 1
        %s1340 = smul.addr %s1337, 2
        %s1341 = sadd.s32 %s1339, %s1340
        %s1342 = smul.addr %s1341, 2
        %s1343 = scalar_lea.vmem %s3, %s1342
      $region48: #{_lambda_.9} parent=39 // pred_fallthru
        _
    $region40: #{_lambda_.9} parent=5 // pred_fallthru
      _
  $region6: #{_lambda_.9} parent=0 // loop_footer
    %s14 = sadd.s32 1, %s10
  $region7: #{_lambda_.9} parent=0 // loop_footer_branch
    %9 = sbr.rel target = $region3
  $region8: #{_lambda_.9} parent=0 // loop_exit
    _

// kernel: _lambda_.11
$region0: #{_lambda_.11}
  #allocation0 [shape = 'u32[]', space=smem, size = 0x4, offset = 0x4, fixed_abs, tag = 'smem constant byte address 0x4 - core index']
  #allocation1 [shape = 'u32[144,128]{1,0:T(1,128)}', space=vmem, size = 0x12000, scoped, tag = 'internal scratch']
  #allocation2 [shape = 'f32[1,1]{1,0:T(1,128)S(1)}', space=vmem, size = 0x200, scoped, tag = 'scoped memory for _lambda_.11']
  %s0 = inlined_call_operand.vmem [shape: bf16[2,6,6,32], index: 0, kind: input, shape index: {}]
  %s1 = inlined_call_operand.vmem [shape: bf16[16,1,32], index: 1, kind: input, shape index: {}]
  %s2 = inlined_call_operand.<no memory space> [shape: f32[1,1], index: 2, kind: input, shape index: {}]
  %s3 = inlined_call_operand.vmem [shape: f32[2,3,3,1], index: 3, kind: output, shape index: {}]
  %s4 = sld [smem:[#allocation0]]
  $region45: #{_lambda_.11} parent=0
    _
  %s6 = ssub.s32 1, %s4
  %s7 = scalar_select 0, %s6, %s4
  %v8 = vstv %s2
  %9 = vst [vmem:[#allocation2] sm:$0x1] %v8
  loop: start=0, step=1, limit=4
  $region2: #{_lambda_.11} parent=0 // loop_pre_header
    _
  $region3: #{_lambda_.11} parent=0 // loop_header
    %s11 = sphi 0, %s15
    %p12 = scmp.ge.s32.totalorder %s11, 4
    %s18 = sphi 0, %s30
    %s19 = sphi 0, %s26
    %s20 = sphi 0, %s18
    %s21 = sphi 0, %s19
    %s22 = sphi 0, %s20
    %s23 = sphi 0, %s21
    %s33 = sphi 0, %s35
    %s36 = sphi 0, %s33
    %s37 = sphi 0, %s36
    %s53 = sphi 0, %s37
    %s57 = sphi 0, %s57
    %s59 = sphi 0, %s57
    %s60 = sphi 0, %s59
    %s74 = sphi 0, %s60
    %s78 = sphi 0, %s78
    %s80 = sphi 0, %s78
    %s81 = sphi 0, %s80
    %s95 = sphi 0, %s81
    %s103 = sphi 0, %s105
    %s106 = sphi 0, %s103
    %s107 = sphi 0, %s106
    %s123 = sphi 0, %s107
  $region4: #{_lambda_.11} parent=0 // loop_header_branch
    %14 = sbr.rel (%p12) target = $region8
  $region5: #{_lambda_.11} parent=0 // loop_body
    %s16 = ssub.s32 %s11, 1
    %s17 = ssub.s32 %s11, 2
    %s24 = sadd.s32 1, %s19
    %p25 = scmp.ge.s32.totalorder %s24, 1
    %s26 = scalar_select %p25, 0, %s24
    %s27 = sadd.s32 1, %s18
    %s28 = scalar_select %p25, %s27, %s18
    %p29 = scmp.ge.s32.totalorder %s28, 2
    %s30 = scalar_select %p29, 0, %s28
    %s31 = ssub.s32 %s18, %s30
    %p32 = scmp.eq.s32.totalorder %s31, 0
    %s34 = sadd.s32 %s33, 1
    %s35 = scalar_select %p32, %s33, %s34
    %p38 = pneg %p32
    %p39 = scmp.eq.s32.totalorder %s11, 1
    %p40 = por %p38, %p39
    %p41 = scmp.ne.s32.totalorder %s33, %s36
    %p42 = scmp.eq.s32.totalorder %s11, 0
    %p43 = por %p41, %p42
    %p44 = scmp.ne.s32.totalorder %s33, %s36
    %p45 = scmp.eq.s32.totalorder %s16, 1
    %p46 = por %p44, %p45
    %p47 = scmp.ne.s32.totalorder %s36, %s37
    %p48 = scmp.eq.s32.totalorder %s16, 0
    %p49 = por %p47, %p48
    %p50 = scmp.ne.s32.totalorder %s36, %s37
    %p51 = scmp.eq.s32.totalorder %s17, 1
    %p52 = por %p50, %p51
    %p54 = scmp.ne.s32.totalorder %s37, %s53
    %p55 = scmp.eq.s32.totalorder %s17, 0
    %p56 = por %p54, %p55
    %s58 = sadd.s32 %s57, 1
    %p61 = scmp.eq.s32.totalorder %s11, 1
    %p62 = scmp.ne.s32.totalorder %s57, %s59
    %p63 = scmp.eq.s32.totalorder %s11, 0
    %p64 = por %p62, %p63
    %p65 = scmp.ne.s32.totalorder %s57, %s59
    %p66 = scmp.eq.s32.totalorder %s16, 1
    %p67 = por %p65, %p66
    %p68 = scmp.ne.s32.totalorder %s59, %s60
    %p69 = scmp.eq.s32.totalorder %s16, 0
    %p70 = por %p68, %p69
    %p71 = scmp.ne.s32.totalorder %s59, %s60
    %p72 = scmp.eq.s32.totalorder %s17, 1
    %p73 = por %p71, %p72
    %p75 = scmp.ne.s32.totalorder %s60, %s74
    %p76 = scmp.eq.s32.totalorder %s17, 0
    %p77 = por %p75, %p76
    %s79 = sadd.s32 %s78, 1
    %p82 = scmp.eq.s32.totalorder %s11, 1
    %p83 = scmp.ne.s32.totalorder %s78, %s80
    %p84 = scmp.eq.s32.totalorder %s11, 0
    %p85 = por %p83, %p84
    %p86 = scmp.ne.s32.totalorder %s78, %s80
    %p87 = scmp.eq.s32.totalorder %s16, 1
    %p88 = por %p86, %p87
    %p89 = scmp.ne.s32.totalorder %s80, %s81
    %p90 = scmp.eq.s32.totalorder %s16, 0
    %p91 = por %p89, %p90
    %p92 = scmp.ne.s32.totalorder %s80, %s81
    %p93 = scmp.eq.s32.totalorder %s17, 1
    %p94 = por %p92, %p93
    %p96 = scmp.ne.s32.totalorder %s81, %s95
    %p97 = scmp.eq.s32.totalorder %s17, 0
    %p98 = por %p96, %p97
    %s99 = ssub.s32 %s18, %s30
    %s100 = ssub.s32 %s19, %s26
    %s101 = sor.u32 %s99, %s100
    %p102 = scmp.eq.s32.totalorder %s101, 0
    %s104 = sadd.s32 %s103, 1
    %s105 = scalar_select %p102, %s103, %s104
    %p108 = pneg %p102
    %p109 = scmp.eq.s32.totalorder %s11, 1
    %p110 = por %p108, %p109
    %p111 = scmp.ne.s32.totalorder %s103, %s106
    %p112 = scmp.eq.s32.totalorder %s11, 0
    %p113 = por %p111, %p112
    %p114 = scmp.ne.s32.totalorder %s103, %s106
    %p115 = scmp.eq.s32.totalorder %s16, 1
    %p116 = por %p114, %p115
    %p117 = scmp.ne.s32.totalorder %s106, %s107
    %p118 = scmp.eq.s32.totalorder %s16, 0
    %p119 = por %p117, %p118
    %p120 = scmp.ne.s32.totalorder %s106, %s107
    %p121 = scmp.eq.s32.totalorder %s17, 1
    %p122 = por %p120, %p121
    %p124 = scmp.ne.s32.totalorder %s107, %s123
    %p125 = scmp.eq.s32.totalorder %s17, 0
    %p126 = por %p124, %p125
    %p127 = scmp.le.s32.totalorder 1, %s11
    %p128 = scmp.lt.s32.totalorder %s11, 3
    %p129 = pnand %p127, %p128
    %p130 = pneg %p129
    // Predicated region
    $region9: #{_lambda_.11} parent=5 // pred_check
      _
    $region10: #{_lambda_.11} parent=5 // pred_check_branch
      %132 = sbr.rel (%p129) target = $region12
    $region11: #{_lambda_.11} parent=5 // pred_region
      %s133 = ssub.s32 %s11, 1
      // Predicated region
      $region13: #{_lambda_.11} parent=11 // pred_check
        %p134 = pneg %p70
      $region14: #{_lambda_.11} parent=11 // pred_check_branch
        %136 = sbr.rel (%p134) target = $region16
      $region15: #{_lambda_.11} parent=11 // pred_region
        _
      $region16: #{_lambda_.11} parent=11 // pred_fallthru
        _
      // Predicated region
      $region17: #{_lambda_.11} parent=11 // pred_check
        %p137 = pneg %p91
      $region18: #{_lambda_.11} parent=11 // pred_check_branch
        %139 = sbr.rel (%p137) target = $region20
      $region19: #{_lambda_.11} parent=11 // pred_region
        _
      $region20: #{_lambda_.11} parent=11 // pred_fallthru
        _
    $region12: #{_lambda_.11} parent=5 // pred_fallthru
      _
    %p140 = scmp.lt.s32.totalorder %s11, 2
    // Predicated region
    $region21: #{_lambda_.11} parent=5 // pred_check
      %p141 = pneg %p140
    $region22: #{_lambda_.11} parent=5 // pred_check_branch
      %143 = sbr.rel (%p141) target = $region24
    $region23: #{_lambda_.11} parent=5 // pred_region
      // Predicated region
      $region25: #{_lambda_.11} parent=23 // pred_check
        %p144 = pneg %p43
      $region26: #{_lambda_.11} parent=23 // pred_check_branch
        %146 = sbr.rel (%p144) target = $region28
      $region27: #{_lambda_.11} parent=23 // pred_region
        %p147 = scmp.lt.s32.totalorder %s18, 1
        %s148 = scalar_select %p147, %s18, 1
        %s149 = smul.addr %s148, 6
        %s150 = smul.addr %s149, 4
        %s151 = scalar_lea.vmem %s0, %s150
      $region28: #{_lambda_.11} parent=23 // pred_fallthru
        _
    $region24: #{_lambda_.11} parent=5 // pred_fallthru
      _
    %p152 = scmp.le.s32.totalorder 1, %s11
    %p153 = scmp.lt.s32.totalorder %s11, 3
    %p154 = pnand %p152, %p153
    %p155 = pneg %p154
    // Predicated region
    $region29: #{_lambda_.11} parent=5 // pred_check
      _
    $region30: #{_lambda_.11} parent=5 // pred_check_branch
      %157 = sbr.rel (%p154) target = $region32
    $region31: #{_lambda_.11} parent=5 // pred_region
      %s158 = ssub.s32 %s11, 1
      %p159 = scmp.lt.s32.totalorder %s20, 1
      %s160 = scalar_select %p159, %s20, 1
      %s161 = smul.addr %s160, 6
      %s162 = smul.addr %s161, 4
      %s163 = scalar_lea.vmem %s0, %s162
      %p164 = pneg %p49
      %p165 = pneg %p46
      %p166 = pneg %p70
      %p167 = pneg %p67
      %p168 = pneg %p91
      %p169 = pneg %p88
      %p170 = pneg %p119
      %p171 = pneg %p116
      %s172 = smul.u32 3, %s21
      %p173 = scmp.lt.s32.totalorder %s20, 1
      %s174 = scalar_select %p173, %s20, 1
      %p175 = scmp.lt.s32.totalorder %s172, 2
      %s176 = scalar_select %p175, %s172, 2
      %s177 = smul.addr %s174, 3
      %s178 = sadd.s32 %s176, %s177
      %s179 = smul.addr %s178, 4
      %s180 = scalar_lea.vmem %s3, %s179
      %p181 = scmp.lt.s32.totalorder %s20, 1
      %s182 = scalar_select %p181, %s20, 1
      %s183 = smul.addr %s182, 6
      %s184 = smul.addr %s183, 4
      %s185 = scalar_lea.vmem %s0, %s184
      %s186 = smul.u32 3, %s21
      %p187 = scmp.lt.s32.totalorder %s20, 1
      %s188 = scalar_select %p187, %s20, 1
      %p189 = scmp.lt.s32.totalorder %s186, 2
      %s190 = scalar_select %p189, %s186, 2
      %s191 = smul.addr %s188, 3
      %s192 = sadd.s32 %s190, %s191
      %s193 = smul.addr %s192, 4
      %s194 = scalar_lea.vmem %s3, %s193
      %s195 = smul.u32 3, %s21
      %s196 = smul.u32 %s21, 3
      %s197 = smul.addr %s196, 4
      %s198 = scalar_lea.vmem %s185, %s197
      %v199 = vld [vmem:[%s198] sm:$0x3]
      %v200 = vld [vmem:[%s1] sm:$0x1]
      %v201 = vunpack.c.l.bf16 %v200
      %v202 = vunpack.c.l.bf16 %v199
      %v203 = vlaneseq
      %v204 = vshrl.u32 %v203, 7
      %v205 = vsub.s32 0, %v204
      %v206 = vrot.slane %v201, %v205
      %v207 = vmul.f32 %v202, %v206
      %vm208 = vcmask 256000
      %v209 = vsel %vm208, %v207, 0.0
      %210 = vadd.xlane.f32.xlu0 %v209
      %v211 = vpop.xlane.xlu0 %210
      %s212 = scalar_lea.vmem %s1, 1
      %v213 = vld [vmem:[%s212] sm:$0x1]
      %v214 = vunpack.c.l.bf16 %v213
      %v215 = vlaneseq
      %v216 = vshrl.u32 %v215, 7
      %v217 = vsub.s32 0, %v216
      %v218 = vrot.slane %v214, %v217
      %v219 = vmul.f32 %v202, %v218
      %vm220 = vcmask 257025
      %v221 = vsel %vm220, %v219, 0.0
      %222 = vadd.xlane.f32.xlu0 %v221
      %v223 = vpop.xlane.xlu0 %222
      %v225 = vrot.slane %v223, 1
      %v227 = vadd.f32 %v211, %v225
      %v228 = vld [vmem:[%s198] sm:$0x6]
      %s229 = scalar_lea.vmem %s1, 2
      %v230 = vld [vmem:[%s229] sm:$0x1]
      %v231 = vunpack.c.l.bf16 %v230
      %v232 = vunpack.c.l.bf16 %v228
      %v233 = vlaneseq
      %v234 = vshrl.u32 %v233, 7
      %v235 = vsub.s32 0, %v234
      %v236 = vrot.slane %v231, %v235
      %v237 = vmul.f32 %v232, %v236
      %vm238 = vcmask 258050
      %v239 = vsel %vm238, %v237, 0.0
      %240 = vadd.xlane.f32.xlu0 %v239
      %v241 = vpop.xlane.xlu0 %240
      %v243 = vrot.slane %v241, 2
      %v245 = vadd.f32 %v227, %v243
      %s246 = scalar_lea.vmem %s1, 3
      %v247 = vld [vmem:[%s246] sm:$0x1]
      %v248 = vunpack.c.l.bf16 %v247
      %v249 = vlaneseq
      %v250 = vshrl.u32 %v249, 7
      %v251 = vsub.s32 0, %v250
      %v252 = vrot.slane %v248, %v251
      %v253 = vmul.f32 %v232, %v252
      %vm254 = vcmask 259075
      %v255 = vsel %vm254, %v253, 0.0
      %256 = vadd.xlane.f32.xlu0 %v255
      %v257 = vpop.xlane.xlu0 %256
      %v259 = vrot.slane %v257, 3
      %v261 = vadd.f32 %v245, %v259
      %s262 = sadd.s32 %s196, 1
      %s263 = smul.addr %s262, 4
      %s264 = scalar_lea.vmem %s185, %s263
      %v265 = vld [vmem:[%s264] sm:$0x3]
      %s266 = scalar_lea.vmem %s1, 4
      %v267 = vld [vmem:[%s266] sm:$0x1]
      %v268 = vunpack.c.l.bf16 %v267
      %v269 = vunpack.c.l.bf16 %v265
      %v270 = vlaneseq
      %v271 = vshrl.u32 %v270, 7
      %v272 = vsub.s32 0, %v271
      %v273 = vrot.slane %v268, %v272
      %v274 = vmul.f32 %v269, %v273
      %v275 = vsel %vm208, %v274, 0.0
      %276 = vadd.xlane.f32.xlu0 %v275
      %v277 = vpop.xlane.xlu0 %276
      %v278 = vadd.f32 %v261, %v277
      %s279 = scalar_lea.vmem %s1, 5
      %v280 = vld [vmem:[%s279] sm:$0x1]
      %v281 = vunpack.c.l.bf16 %v280
      %v282 = vlaneseq
      %v283 = vshrl.u32 %v282, 7
      %v284 = vsub.s32 0, %v283
      %v285 = vrot.slane %v281, %v284
      %v286 = vmul.f32 %v269, %v285
      %v287 = vsel %vm220, %v286, 0.0
      %288 = vadd.xlane.f32.xlu0 %v287
      %v289 = vpop.xlane.xlu0 %288
      %v291 = vrot.slane %v289, 1
      %v293 = vadd.f32 %v278, %v291
      %v294 = vld [vmem:[%s264] sm:$0x6]
      %s295 = scalar_lea.vmem %s1, 6
      %v296 = vld [vmem:[%s295] sm:$0x1]
      %v297 = vunpack.c.l.bf16 %v296
      %v298 = vunpack.c.l.bf16 %v294
      %v299 = vlaneseq
      %v300 = vshrl.u32 %v299, 7
      %v301 = vsub.s32 0, %v300
      %v302 = vrot.slane %v297, %v301
      %v303 = vmul.f32 %v298, %v302
      %v304 = vsel %vm238, %v303, 0.0
      %305 = vadd.xlane.f32.xlu0 %v304
      %v306 = vpop.xlane.xlu0 %305
      %v308 = vrot.slane %v306, 2
      %v310 = vadd.f32 %v293, %v308
      %s311 = scalar_lea.vmem %s1, 7
      %v312 = vld [vmem:[%s311] sm:$0x1]
      %v313 = vunpack.c.l.bf16 %v312
      %v314 = vlaneseq
      %v315 = vshrl.u32 %v314, 7
      %v316 = vsub.s32 0, %v315
      %v317 = vrot.slane %v313, %v316
      %v318 = vmul.f32 %v298, %v317
      %v319 = vsel %vm254, %v318, 0.0
      %320 = vadd.xlane.f32.xlu0 %v319
      %v321 = vpop.xlane.xlu0 %320
      %v323 = vrot.slane %v321, 3
      %v325 = vadd.f32 %v310, %v323
      %s326 = sadd.s32 %s196, 2
      %s327 = smul.addr %s326, 4
      %s328 = scalar_lea.vmem %s185, %s327
      %v329 = vld [vmem:[%s328] sm:$0x3]
      %s330 = scalar_lea.vmem %s1, 8
      %v331 = vld [vmem:[%s330] sm:$0x1]
      %v332 = vunpack.c.l.bf16 %v331
      %v333 = vunpack.c.l.bf16 %v329
      %v334 = vlaneseq
      %v335 = vshrl.u32 %v334, 7
      %v336 = vsub.s32 0, %v335
      %v337 = vrot.slane %v332, %v336
      %v338 = vmul.f32 %v333, %v337
      %v339 = vsel %vm208, %v338, 0.0
      %340 = vadd.xlane.f32.xlu0 %v339
      %v341 = vpop.xlane.xlu0 %340
      %v342 = vadd.f32 %v325, %v341
      %s343 = scalar_lea.vmem %s1, 9
      %v344 = vld [vmem:[%s343] sm:$0x1]
      %v345 = vunpack.c.l.bf16 %v344
      %v346 = vlaneseq
      %v347 = vshrl.u32 %v346, 7
      %v348 = vsub.s32 0, %v347
      %v349 = vrot.slane %v345, %v348
      %v350 = vmul.f32 %v333, %v349
      %v351 = vsel %vm220, %v350, 0.0
      %352 = vadd.xlane.f32.xlu0 %v351
      %v353 = vpop.xlane.xlu0 %352
      %v355 = vrot.slane %v353, 1
      %v357 = vadd.f32 %v342, %v355
      %v358 = vld [vmem:[%s328] sm:$0x6]
      %s359 = scalar_lea.vmem %s1, 10
      %v360 = vld [vmem:[%s359] sm:$0x1]
      %v361 = vunpack.c.l.bf16 %v360
      %v362 = vunpack.c.l.bf16 %v358
      %v363 = vlaneseq
      %v364 = vshrl.u32 %v363, 7
      %v365 = vsub.s32 0, %v364
      %v366 = vrot.slane %v361, %v365
      %v367 = vmul.f32 %v362, %v366
      %v368 = vsel %vm238, %v367, 0.0
      %369 = vadd.xlane.f32.xlu0 %v368
      %v370 = vpop.xlane.xlu0 %369
      %v372 = vrot.slane %v370, 2
      %v374 = vadd.f32 %v357, %v372
      %s375 = scalar_lea.vmem %s1, 11
      %v376 = vld [vmem:[%s375] sm:$0x1]
      %v377 = vunpack.c.l.bf16 %v376
      %v378 = vlaneseq
      %v379 = vshrl.u32 %v378, 7
      %v380 = vsub.s32 0, %v379
      %v381 = vrot.slane %v377, %v380
      %v382 = vmul.f32 %v362, %v381
      %v383 = vsel %vm254, %v382, 0.0
      %384 = vadd.xlane.f32.xlu0 %v383
      %v385 = vpop.xlane.xlu0 %384
      %v387 = vrot.slane %v385, 3
      %v389 = vadd.f32 %v374, %v387
      %s390 = sadd.s32 %s196, 3
      %s391 = smul.addr %s390, 4
      %s392 = scalar_lea.vmem %s185, %s391
      %v393 = vld [vmem:[%s392] sm:$0x3]
      %s394 = scalar_lea.vmem %s1, 12
      %v395 = vld [vmem:[%s394] sm:$0x1]
      %v396 = vunpack.c.l.bf16 %v395
      %v397 = vunpack.c.l.bf16 %v393
      %v398 = vlaneseq
      %v399 = vshrl.u32 %v398, 7
      %v400 = vsub.s32 0, %v399
      %v401 = vrot.slane %v396, %v400
      %v402 = vmul.f32 %v397, %v401
      %v403 = vsel %vm208, %v402, 0.0
      %404 = vadd.xlane.f32.xlu0 %v403
      %v405 = vpop.xlane.xlu0 %404
      %v406 = vadd.f32 %v389, %v405
      %s407 = scalar_lea.vmem %s1, 13
      %v408 = vld [vmem:[%s407] sm:$0x1]
      %v409 = vunpack.c.l.bf16 %v408
      %v410 = vlaneseq
      %v411 = vshrl.u32 %v410, 7
      %v412 = vsub.s32 0, %v411
      %v413 = vrot.slane %v409, %v412
      %v414 = vmul.f32 %v397, %v413
      %v415 = vsel %vm220, %v414, 0.0
      %416 = vadd.xlane.f32.xlu0 %v415
      %v417 = vpop.xlane.xlu0 %416
      %v419 = vrot.slane %v417, 1
      %v421 = vadd.f32 %v406, %v419
      %v422 = vld [vmem:[%s392] sm:$0x6]
      %s423 = scalar_lea.vmem %s1, 14
      %v424 = vld [vmem:[%s423] sm:$0x1]
      %v425 = vunpack.c.l.bf16 %v424
      %v426 = vunpack.c.l.bf16 %v422
      %v427 = vlaneseq
      %v428 = vshrl.u32 %v427, 7
      %v429 = vsub.s32 0, %v428
      %v430 = vrot.slane %v425, %v429
      %v431 = vmul.f32 %v426, %v430
      %v432 = vsel %vm238, %v431, 0.0
      %433 = vadd.xlane.f32.xlu0 %v432
      %v434 = vpop.xlane.xlu0 %433
      %v436 = vrot.slane %v434, 2
      %v438 = vadd.f32 %v421, %v436
      %s439 = scalar_lea.vmem %s1, 15
      %v440 = vld [vmem:[%s439] sm:$0x1]
      %v441 = vunpack.c.l.bf16 %v440
      %v442 = vlaneseq
      %v443 = vshrl.u32 %v442, 7
      %v444 = vsub.s32 0, %v443
      %v445 = vrot.slane %v441, %v444
      %v446 = vmul.f32 %v426, %v445
      %v447 = vsel %vm254, %v446, 0.0
      %448 = vadd.xlane.f32.xlu0 %v447
      %v449 = vpop.xlane.xlu0 %448
      %v451 = vrot.slane %v449, 3
      %v453 = vadd.f32 %v438, %v451
      %v454 = vld [vmem:[#allocation2] sm:$0x1]
      %v456 = vlaneseq
      %v457 = vshrl.u32 %v456, 7
      %v458 = vsub.s32 0, %v457
      %v459 = vrot.slane %v454, %v458
      %v461 = vadd.f32 %v453, %v459
      %vm462 = vcmask 2048
      %463 = vst.msk [vmem:[%s194] sm:$0x7] %vm462, %v461
      %v464 = vld [vmem:[%s264] sm:$0x3]
      %v465 = vld [vmem:[%s1] sm:$0x1]
      %v466 = vunpack.c.l.bf16 %v465
      %v467 = vunpack.c.l.bf16 %v464
      %v468 = vlaneseq
      %v469 = vshrl.u32 %v468, 7
      %v470 = vsub.s32 0, %v469
      %v471 = vrot.slane %v466, %v470
      %v472 = vmul.f32 %v467, %v471
      %v473 = vsel %vm208, %v472, 0.0
      %474 = vadd.xlane.f32.xlu0 %v473
      %v475 = vpop.xlane.xlu0 %474
      %v476 = vld [vmem:[%s212] sm:$0x1]
      %v477 = vunpack.c.l.bf16 %v476
      %v478 = vlaneseq
      %v479 = vshrl.u32 %v478, 7
      %v480 = vsub.s32 0, %v479
      %v481 = vrot.slane %v477, %v480
      %v482 = vmul.f32 %v467, %v481
      %v483 = vsel %vm220, %v482, 0.0
      %484 = vadd.xlane.f32.xlu0 %v483
      %v485 = vpop.xlane.xlu0 %484
      %v487 = vrot.slane %v485, 1
      %v489 = vadd.f32 %v475, %v487
      %v490 = vld [vmem:[%s264] sm:$0x6]
      %v491 = vld [vmem:[%s229] sm:$0x1]
      %v492 = vunpack.c.l.bf16 %v491
      %v493 = vunpack.c.l.bf16 %v490
      %v494 = vlaneseq
      %v495 = vshrl.u32 %v494, 7
      %v496 = vsub.s32 0, %v495
      %v497 = vrot.slane %v492, %v496
      %v498 = vmul.f32 %v493, %v497
      %v499 = vsel %vm238, %v498, 0.0
      %500 = vadd.xlane.f32.xlu0 %v499
      %v501 = vpop.xlane.xlu0 %500
      %v503 = vrot.slane %v501, 2
      %v505 = vadd.f32 %v489, %v503
      %v506 = vld [vmem:[%s246] sm:$0x1]
      %v507 = vunpack.c.l.bf16 %v506
      %v508 = vlaneseq
      %v509 = vshrl.u32 %v508, 7
      %v510 = vsub.s32 0, %v509
      %v511 = vrot.slane %v507, %v510
      %v512 = vmul.f32 %v493, %v511
      %v513 = vsel %vm254, %v512, 0.0
      %514 = vadd.xlane.f32.xlu0 %v513
      %v515 = vpop.xlane.xlu0 %514
      %v517 = vrot.slane %v515, 3
      %v519 = vadd.f32 %v505, %v517
      %v520 = vld [vmem:[%s328] sm:$0x3]
      %v521 = vld [vmem:[%s266] sm:$0x1]
      %v522 = vunpack.c.l.bf16 %v521
      %v523 = vunpack.c.l.bf16 %v520
      %v524 = vlaneseq
      %v525 = vshrl.u32 %v524, 7
      %v526 = vsub.s32 0, %v525
      %v527 = vrot.slane %v522, %v526
      %v528 = vmul.f32 %v523, %v527
      %v529 = vsel %vm208, %v528, 0.0
      %530 = vadd.xlane.f32.xlu0 %v529
      %v531 = vpop.xlane.xlu0 %530
      %v532 = vadd.f32 %v519, %v531
      %v533 = vld [vmem:[%s279] sm:$0x1]
      %v534 = vunpack.c.l.bf16 %v533
      %v535 = vlaneseq
      %v536 = vshrl.u32 %v535, 7
      %v537 = vsub.s32 0, %v536
      %v538 = vrot.slane %v534, %v537
      %v539 = vmul.f32 %v523, %v538
      %v540 = vsel %vm220, %v539, 0.0
      %541 = vadd.xlane.f32.xlu0 %v540
      %v542 = vpop.xlane.xlu0 %541
      %v544 = vrot.slane %v542, 1
      %v546 = vadd.f32 %v532, %v544
      %v547 = vld [vmem:[%s328] sm:$0x6]
      %v548 = vld [vmem:[%s295] sm:$0x1]
      %v549 = vunpack.c.l.bf16 %v548
      %v550 = vunpack.c.l.bf16 %v547
      %v551 = vlaneseq
      %v552 = vshrl.u32 %v551, 7
      %v553 = vsub.s32 0, %v552
      %v554 = vrot.slane %v549, %v553
      %v555 = vmul.f32 %v550, %v554
      %v556 = vsel %vm238, %v555, 0.0
      %557 = vadd.xlane.f32.xlu0 %v556
      %v558 = vpop.xlane.xlu0 %557
      %v560 = vrot.slane %v558, 2
      %v562 = vadd.f32 %v546, %v560
      %v563 = vld [vmem:[%s311] sm:$0x1]
      %v564 = vunpack.c.l.bf16 %v563
      %v565 = vlaneseq
      %v566 = vshrl.u32 %v565, 7
      %v567 = vsub.s32 0, %v566
      %v568 = vrot.slane %v564, %v567
      %v569 = vmul.f32 %v550, %v568
      %v570 = vsel %vm254, %v569, 0.0
      %571 = vadd.xlane.f32.xlu0 %v570
      %v572 = vpop.xlane.xlu0 %571
      %v574 = vrot.slane %v572, 3
      %v576 = vadd.f32 %v562, %v574
      %v577 = vld [vmem:[%s392] sm:$0x3]
      %v578 = vld [vmem:[%s330] sm:$0x1]
      %v579 = vunpack.c.l.bf16 %v578
      %v580 = vunpack.c.l.bf16 %v577
      %v581 = vlaneseq
      %v582 = vshrl.u32 %v581, 7
      %v583 = vsub.s32 0, %v582
      %v584 = vrot.slane %v579, %v583
      %v585 = vmul.f32 %v580, %v584
      %v586 = vsel %vm208, %v585, 0.0
      %587 = vadd.xlane.f32.xlu0 %v586
      %v588 = vpop.xlane.xlu0 %587
      %v589 = vadd.f32 %v576, %v588
      %v590 = vld [vmem:[%s343] sm:$0x1]
      %v591 = vunpack.c.l.bf16 %v590
      %v592 = vlaneseq
      %v593 = vshrl.u32 %v592, 7
      %v594 = vsub.s32 0, %v593
      %v595 = vrot.slane %v591, %v594
      %v596 = vmul.f32 %v580, %v595
      %v597 = vsel %vm220, %v596, 0.0
      %598 = vadd.xlane.f32.xlu0 %v597
      %v599 = vpop.xlane.xlu0 %598
      %v601 = vrot.slane %v599, 1
      %v603 = vadd.f32 %v589, %v601
      %v604 = vld [vmem:[%s392] sm:$0x6]
      %v605 = vld [vmem:[%s359] sm:$0x1]
      %v606 = vunpack.c.l.bf16 %v605
      %v607 = vunpack.c.l.bf16 %v604
      %v608 = vlaneseq
      %v609 = vshrl.u32 %v608, 7
      %v610 = vsub.s32 0, %v609
      %v611 = vrot.slane %v606, %v610
      %v612 = vmul.f32 %v607, %v611
      %v613 = vsel %vm238, %v612, 0.0
      %614 = vadd.xlane.f32.xlu0 %v613
      %v615 = vpop.xlane.xlu0 %614
      %v617 = vrot.slane %v615, 2
      %v619 = vadd.f32 %v603, %v617
      %v620 = vld [vmem:[%s375] sm:$0x1]
      %v621 = vunpack.c.l.bf16 %v620
      %v622 = vlaneseq
      %v623 = vshrl.u32 %v622, 7
      %v624 = vsub.s32 0, %v623
      %v625 = vrot.slane %v621, %v624
      %v626 = vmul.f32 %v607, %v625
      %v627 = vsel %vm254, %v626, 0.0
      %628 = vadd.xlane.f32.xlu0 %v627
      %v629 = vpop.xlane.xlu0 %628
      %v631 = vrot.slane %v629, 3
      %v633 = vadd.f32 %v619, %v631
      %s634 = sadd.s32 %s196, 4
      %s635 = smul.addr %s634, 4
      %s636 = scalar_lea.vmem %s185, %s635
      %v637 = vld [vmem:[%s636] sm:$0x3]
      %v638 = vld [vmem:[%s394] sm:$0x1]
      %v639 = vunpack.c.l.bf16 %v638
      %v640 = vunpack.c.l.bf16 %v637
      %v641 = vlaneseq
      %v642 = vshrl.u32 %v641, 7
      %v643 = vsub.s32 0, %v642
      %v644 = vrot.slane %v639, %v643
      %v645 = vmul.f32 %v640, %v644
      %v646 = vsel %vm208, %v645, 0.0
      %647 = vadd.xlane.f32.xlu0 %v646
      %v648 = vpop.xlane.xlu0 %647
      %v649 = vadd.f32 %v633, %v648
      %v650 = vld [vmem:[%s407] sm:$0x1]
      %v651 = vunpack.c.l.bf16 %v650
      %v652 = vlaneseq
      %v653 = vshrl.u32 %v652, 7
      %v654 = vsub.s32 0, %v653
      %v655 = vrot.slane %v651, %v654
      %v656 = vmul.f32 %v640, %v655
      %v657 = vsel %vm220, %v656, 0.0
      %658 = vadd.xlane.f32.xlu0 %v657
      %v659 = vpop.xlane.xlu0 %658
      %v661 = vrot.slane %v659, 1
      %v663 = vadd.f32 %v649, %v661
      %v664 = vld [vmem:[%s636] sm:$0x6]
      %v665 = vld [vmem:[%s423] sm:$0x1]
      %v666 = vunpack.c.l.bf16 %v665
      %v667 = vunpack.c.l.bf16 %v664
      %v668 = vlaneseq
      %v669 = vshrl.u32 %v668, 7
      %v670 = vsub.s32 0, %v669
      %v671 = vrot.slane %v666, %v670
      %v672 = vmul.f32 %v667, %v671
      %v673 = vsel %vm238, %v672, 0.0
      %674 = vadd.xlane.f32.xlu0 %v673
      %v675 = vpop.xlane.xlu0 %674
      %v677 = vrot.slane %v675, 2
      %v679 = vadd.f32 %v663, %v677
      %v680 = vld [vmem:[%s439] sm:$0x1]
      %v681 = vunpack.c.l.bf16 %v680
      %v682 = vlaneseq
      %v683 = vshrl.u32 %v682, 7
      %v684 = vsub.s32 0, %v683
      %v685 = vrot.slane %v681, %v684
      %v686 = vmul.f32 %v667, %v685
      %v687 = vsel %vm254, %v686, 0.0
      %688 = vadd.xlane.f32.xlu0 %v687
      %v689 = vpop.xlane.xlu0 %688
      %v691 = vrot.slane %v689, 3
      %v693 = vadd.f32 %v679, %v691
      %v694 = vld [vmem:[#allocation2] sm:$0x1]
      %v696 = vlaneseq
      %v697 = vshrl.u32 %v696, 7
      %v698 = vsub.s32 0, %v697
      %v699 = vrot.slane %v694, %v698
      %v701 = vadd.f32 %v693, %v699
      %s702 = scalar_lea.vmem %s194, 4
      %703 = vst.msk [vmem:[%s702] sm:$0x7] %vm462, %v701
      %v704 = vld [vmem:[%s328] sm:$0x3]
      %v705 = vld [vmem:[%s1] sm:$0x1]
      %v706 = vunpack.c.l.bf16 %v705
      %v707 = vunpack.c.l.bf16 %v704
      %v708 = vlaneseq
      %v709 = vshrl.u32 %v708, 7
      %v710 = vsub.s32 0, %v709
      %v711 = vrot.slane %v706, %v710
      %v712 = vmul.f32 %v707, %v711
      %v713 = vsel %vm208, %v712, 0.0
      %714 = vadd.xlane.f32.xlu0 %v713
      %v715 = vpop.xlane.xlu0 %714
      %v716 = vld [vmem:[%s212] sm:$0x1]
      %v717 = vunpack.c.l.bf16 %v716
      %v718 = vlaneseq
      %v719 = vshrl.u32 %v718, 7
      %v720 = vsub.s32 0, %v719
      %v721 = vrot.slane %v717, %v720
      %v722 = vmul.f32 %v707, %v721
      %v723 = vsel %vm220, %v722, 0.0
      %724 = vadd.xlane.f32.xlu0 %v723
      %v725 = vpop.xlane.xlu0 %724
      %v727 = vrot.slane %v725, 1
      %v729 = vadd.f32 %v715, %v727
      %v730 = vld [vmem:[%s328] sm:$0x6]
      %v731 = vld [vmem:[%s229] sm:$0x1]
      %v732 = vunpack.c.l.bf16 %v731
      %v733 = vunpack.c.l.bf16 %v730
      %v734 = vlaneseq
      %v735 = vshrl.u32 %v734, 7
      %v736 = vsub.s32 0, %v735
      %v737 = vrot.slane %v732, %v736
      %v738 = vmul.f32 %v733, %v737
      %v739 = vsel %vm238, %v738, 0.0
      %740 = vadd.xlane.f32.xlu0 %v739
      %v741 = vpop.xlane.xlu0 %740
      %v743 = vrot.slane %v741, 2
      %v745 = vadd.f32 %v729, %v743
      %v746 = vld [vmem:[%s246] sm:$0x1]
      %v747 = vunpack.c.l.bf16 %v746
      %v748 = vlaneseq
      %v749 = vshrl.u32 %v748, 7
      %v750 = vsub.s32 0, %v749
      %v751 = vrot.slane %v747, %v750
      %v752 = vmul.f32 %v733, %v751
      %v753 = vsel %vm254, %v752, 0.0
      %754 = vadd.xlane.f32.xlu0 %v753
      %v755 = vpop.xlane.xlu0 %754
      %v757 = vrot.slane %v755, 3
      %v759 = vadd.f32 %v745, %v757
      %v760 = vld [vmem:[%s392] sm:$0x3]
      %v761 = vld [vmem:[%s266] sm:$0x1]
      %v762 = vunpack.c.l.bf16 %v761
      %v763 = vunpack.c.l.bf16 %v760
      %v764 = vlaneseq
      %v765 = vshrl.u32 %v764, 7
      %v766 = vsub.s32 0, %v765
      %v767 = vrot.slane %v762, %v766
      %v768 = vmul.f32 %v763, %v767
      %v769 = vsel %vm208, %v768, 0.0
      %770 = vadd.xlane.f32.xlu0 %v769
      %v771 = vpop.xlane.xlu0 %770
      %v772 = vadd.f32 %v759, %v771
      %v773 = vld [vmem:[%s279] sm:$0x1]
      %v774 = vunpack.c.l.bf16 %v773
      %v775 = vlaneseq
      %v776 = vshrl.u32 %v775, 7
      %v777 = vsub.s32 0, %v776
      %v778 = vrot.slane %v774, %v777
      %v779 = vmul.f32 %v763, %v778
      %v780 = vsel %vm220, %v779, 0.0
      %781 = vadd.xlane.f32.xlu0 %v780
      %v782 = vpop.xlane.xlu0 %781
      %v784 = vrot.slane %v782, 1
      %v786 = vadd.f32 %v772, %v784
      %v787 = vld [vmem:[%s392] sm:$0x6]
      %v788 = vld [vmem:[%s295] sm:$0x1]
      %v789 = vunpack.c.l.bf16 %v788
      %v790 = vunpack.c.l.bf16 %v787
      %v791 = vlaneseq
      %v792 = vshrl.u32 %v791, 7
      %v793 = vsub.s32 0, %v792
      %v794 = vrot.slane %v789, %v793
      %v795 = vmul.f32 %v790, %v794
      %v796 = vsel %vm238, %v795, 0.0
      %797 = vadd.xlane.f32.xlu0 %v796
      %v798 = vpop.xlane.xlu0 %797
      %v800 = vrot.slane %v798, 2
      %v802 = vadd.f32 %v786, %v800
      %v803 = vld [vmem:[%s311] sm:$0x1]
      %v804 = vunpack.c.l.bf16 %v803
      %v805 = vlaneseq
      %v806 = vshrl.u32 %v805, 7
      %v807 = vsub.s32 0, %v806
      %v808 = vrot.slane %v804, %v807
      %v809 = vmul.f32 %v790, %v808
      %v810 = vsel %vm254, %v809, 0.0
      %811 = vadd.xlane.f32.xlu0 %v810
      %v812 = vpop.xlane.xlu0 %811
      %v814 = vrot.slane %v812, 3
      %v816 = vadd.f32 %v802, %v814
      %v817 = vld [vmem:[%s636] sm:$0x3]
      %v818 = vld [vmem:[%s330] sm:$0x1]
      %v819 = vunpack.c.l.bf16 %v818
      %v820 = vunpack.c.l.bf16 %v817
      %v821 = vlaneseq
      %v822 = vshrl.u32 %v821, 7
      %v823 = vsub.s32 0, %v822
      %v824 = vrot.slane %v819, %v823
      %v825 = vmul.f32 %v820, %v824
      %v826 = vsel %vm208, %v825, 0.0
      %827 = vadd.xlane.f32.xlu0 %v826
      %v828 = vpop.xlane.xlu0 %827
      %v829 = vadd.f32 %v816, %v828
      %v830 = vld [vmem:[%s343] sm:$0x1]
      %v831 = vunpack.c.l.bf16 %v830
      %v832 = vlaneseq
      %v833 = vshrl.u32 %v832, 7
      %v834 = vsub.s32 0, %v833
      %v835 = vrot.slane %v831, %v834
      %v836 = vmul.f32 %v820, %v835
      %v837 = vsel %vm220, %v836, 0.0
      %838 = vadd.xlane.f32.xlu0 %v837
      %v839 = vpop.xlane.xlu0 %838
      %v841 = vrot.slane %v839, 1
      %v843 = vadd.f32 %v829, %v841
      %v844 = vld [vmem:[%s636] sm:$0x6]
      %v845 = vld [vmem:[%s359] sm:$0x1]
      %v846 = vunpack.c.l.bf16 %v845
      %v847 = vunpack.c.l.bf16 %v844
      %v848 = vlaneseq
      %v849 = vshrl.u32 %v848, 7
      %v850 = vsub.s32 0, %v849
      %v851 = vrot.slane %v846, %v850
      %v852 = vmul.f32 %v847, %v851
      %v853 = vsel %vm238, %v852, 0.0
      %854 = vadd.xlane.f32.xlu0 %v853
      %v855 = vpop.xlane.xlu0 %854
      %v857 = vrot.slane %v855, 2
      %v859 = vadd.f32 %v843, %v857
      %v860 = vld [vmem:[%s375] sm:$0x1]
      %v861 = vunpack.c.l.bf16 %v860
      %v862 = vlaneseq
      %v863 = vshrl.u32 %v862, 7
      %v864 = vsub.s32 0, %v863
      %v865 = vrot.slane %v861, %v864
      %v866 = vmul.f32 %v847, %v865
      %v867 = vsel %vm254, %v866, 0.0
      %868 = vadd.xlane.f32.xlu0 %v867
      %v869 = vpop.xlane.xlu0 %868
      %v871 = vrot.slane %v869, 3
      %v873 = vadd.f32 %v859, %v871
      %s874 = sadd.s32 %s196, 5
      %s875 = smul.addr %s874, 4
      %s876 = scalar_lea.vmem %s185, %s875
      %v877 = vld [vmem:[%s876] sm:$0x3]
      %v878 = vld [vmem:[%s394] sm:$0x1]
      %v879 = vunpack.c.l.bf16 %v878
      %v880 = vunpack.c.l.bf16 %v877
      %v881 = vlaneseq
      %v882 = vshrl.u32 %v881, 7
      %v883 = vsub.s32 0, %v882
      %v884 = vrot.slane %v879, %v883
      %v885 = vmul.f32 %v880, %v884
      %v886 = vsel %vm208, %v885, 0.0
      %887 = vadd.xlane.f32.xlu0 %v886
      %v888 = vpop.xlane.xlu0 %887
      %v889 = vadd.f32 %v873, %v888
      %v890 = vld [vmem:[%s407] sm:$0x1]
      %v891 = vunpack.c.l.bf16 %v890
      %v892 = vlaneseq
      %v893 = vshrl.u32 %v892, 7
      %v894 = vsub.s32 0, %v893
      %v895 = vrot.slane %v891, %v894
      %v896 = vmul.f32 %v880, %v895
      %v897 = vsel %vm220, %v896, 0.0
      %898 = vadd.xlane.f32.xlu0 %v897
      %v899 = vpop.xlane.xlu0 %898
      %v901 = vrot.slane %v899, 1
      %v903 = vadd.f32 %v889, %v901
      %v904 = vld [vmem:[%s876] sm:$0x6]
      %v905 = vld [vmem:[%s423] sm:$0x1]
      %v906 = vunpack.c.l.bf16 %v905
      %v907 = vunpack.c.l.bf16 %v904
      %v908 = vlaneseq
      %v909 = vshrl.u32 %v908, 7
      %v910 = vsub.s32 0, %v909
      %v911 = vrot.slane %v906, %v910
      %v912 = vmul.f32 %v907, %v911
      %v913 = vsel %vm238, %v912, 0.0
      %914 = vadd.xlane.f32.xlu0 %v913
      %v915 = vpop.xlane.xlu0 %914
      %v917 = vrot.slane %v915, 2
      %v919 = vadd.f32 %v903, %v917
      %v920 = vld [vmem:[%s439] sm:$0x1]
      %v921 = vunpack.c.l.bf16 %v920
      %v922 = vlaneseq
      %v923 = vshrl.u32 %v922, 7
      %v924 = vsub.s32 0, %v923
      %v925 = vrot.slane %v921, %v924
      %v926 = vmul.f32 %v907, %v925
      %v927 = vsel %vm254, %v926, 0.0
      %928 = vadd.xlane.f32.xlu0 %v927
      %v929 = vpop.xlane.xlu0 %928
      %v931 = vrot.slane %v929, 3
      %v933 = vadd.f32 %v919, %v931
      %v934 = vld [vmem:[#allocation2] sm:$0x1]
      %v936 = vlaneseq
      %v937 = vshrl.u32 %v936, 7
      %v938 = vsub.s32 0, %v937
      %v939 = vrot.slane %v934, %v938
      %v941 = vadd.f32 %v933, %v939
      %s942 = scalar_lea.vmem %s194, 8
      %943 = vst.msk [vmem:[%s942] sm:$0x7] %vm462, %v941
      %s944 = smul.u32 3, %s21
      %p945 = scmp.lt.s32.totalorder %s20, 1
      %s946 = scalar_select %p945, %s20, 1
      %p947 = scmp.lt.s32.totalorder %s944, 2
      %s948 = scalar_select %p947, %s944, 2
      %s949 = smul.addr %s946, 3
      %s950 = sadd.s32 %s948, %s949
      %s951 = smul.addr %s950, 4
      %s952 = scalar_lea.vmem %s3, %s951
      // Predicated region
      $region33: #{_lambda_.11} parent=31 // pred_check
        %p953 = pneg %p116
      $region34: #{_lambda_.11} parent=31 // pred_check_branch
        %955 = sbr.rel (%p953) target = $region36
      $region35: #{_lambda_.11} parent=31 // pred_region
        %s956 = smul.u32 3, %s21
      $region36: #{_lambda_.11} parent=31 // pred_fallthru
        _
    $region32: #{_lambda_.11} parent=5 // pred_fallthru
      _
    %p957 = scmp.le.s32.totalorder 2, %s11
    // Predicated region
    $region37: #{_lambda_.11} parent=5 // pred_check
      %p958 = pneg %p957
    $region38: #{_lambda_.11} parent=5 // pred_check_branch
      %960 = sbr.rel (%p958) target = $region40
    $region39: #{_lambda_.11} parent=5 // pred_region
      %s961 = ssub.s32 %s11, 2
      // Predicated region
      $region41: #{_lambda_.11} parent=39 // pred_check
        %p962 = pneg %p122
      $region42: #{_lambda_.11} parent=39 // pred_check_branch
        %964 = sbr.rel (%p962) target = $region44
      $region43: #{_lambda_.11} parent=39 // pred_region
        %s965 = smul.u32 3, %s23
        %p966 = scmp.lt.s32.totalorder %s22, 1
        %s967 = scalar_select %p966, %s22, 1
        %p968 = scmp.lt.s32.totalorder %s965, 2
        %s969 = scalar_select %p968, %s965, 2
        %s970 = smul.addr %s967, 3
        %s971 = sadd.s32 %s969, %s970
        %s972 = smul.addr %s971, 4
        %s973 = scalar_lea.vmem %s3, %s972
      $region44: #{_lambda_.11} parent=39 // pred_fallthru
        _
    $region40: #{_lambda_.11} parent=5 // pred_fallthru
      _
  $region6: #{_lambda_.11} parent=0 // loop_footer
    %s15 = sadd.s32 1, %s11
  $region7: #{_lambda_.11} parent=0 // loop_footer_branch
    %10 = sbr.rel target = $region3
  $region8: #{_lambda_.11} parent=0 // loop_exit
    _

</llo_original>
